<compile_context>
chip_gen: v5e
topology: v5e:2x2
jax: 0.10.0
libtpu: 0.0.40
codegen_flags: <defaults>
</compile_context>

<pallas_src>
import functools

import jax
import jax.numpy as jnp
from jax import lax
from jax.experimental import pallas as pl
from jax.experimental.pallas import tpu as pltpu

EPS = 1e-5


# ----------------------------------------------------------------------------
# Wrapper-side helper: block-Toeplitz weight slab for the single long-K GEMM
# ----------------------------------------------------------------------------
def _build_toeplitz(w_cl, W, dtype=jnp.bfloat16):
    """w_cl: (KD, KH, KW, Cin, Cout) -> (KD*KH*W*Cin, W*Cout) bf16 slab.

    Width-halo rows are dropped (the conv zero-padding contributes zero), so each
    (kd, kh) tap occupies a K-chunk of exactly W*Cin rows/lanes.  Row layout:
    row = ((kd*KH + kh) * W + p) * Cin + ci, where p is the data width position."""
    KD, KH, KW, Cin, Cout = w_cl.shape
    # shift[kw][p, w] = 1 iff output width w reads data width position p for tap kw
    shift = jnp.stack(
        [jnp.eye(W, W, k=1 - kw, dtype=w_cl.dtype) for kw in range(KW)])  # (KW, W, W)
    t = jnp.einsum("kpw,dhkio->dhpiwo", shift, w_cl)  # (KD, KH, W, Cin, W, Cout)
    return t.reshape(KD * KH * W * Cin, W * Cout).astype(dtype)


# ----------------------------------------------------------------------------
# Pallas kernel 1: 3-D conv as ONE lane-dense long-K GEMM
#   (+ optional fused input BN+ReLU, + fused partial BN statistics of the output)
# ----------------------------------------------------------------------------
def _conv3d_gemm_kernel(*refs, NB, D, H, WCi, WCo, fuse_bn_relu):
    """Grid = (N // NB,).  NB samples per step, M = NB*D*H rows per GEMM.

    refs (fuse_bn_relu=False): x_ref, t_ref, z_ref, stat_ref, ypad_ref, slab_ref
    refs (fuse_bn_relu=True):  x_ref, t_ref, s_ref, b_ref, z_ref, stat_ref,
                               ypad_ref, slab_ref

    x_ref   : (NB, D, H, W*Cin)       un-padded, lane-dense input block
    t_ref   : (9*W*Cin, W*Cout)       block-Toeplitz weight slab (bf16, resident)
    s_/b_ref: (1, W*Cin)              folded BN scale/bias of the input (fused path)
    z_ref   : (NB, D, H, W*Cout)      conv output (bf16)
    stat_ref: (1, 2, W*Cout)          per-step partial [sum, sumsq] of the output
    ypad_ref: (NB, D+2, H+2, W*Cin)   bf16 scratch, zero depth/height halos
    slab_ref: (NB*D*H, 9*W*Cin)       bf16 im2col slab (one GEMM operand)
    """
    if fuse_bn_relu:
        x_ref, t_ref, s_ref, b_ref, z_ref, stat_ref, ypad_ref, slab_ref = refs
    else:
        x_ref, t_ref, z_ref, stat_ref, ypad_ref, slab_ref = refs

    # Zero the padded activation scratch (re-done every step so the kernel stays
    # correct if the grid axis is ever sharded across cores).
    ypad_ref[...] = jnp.zeros(ypad_ref.shape, ypad_ref.dtype)

    # Optional fused BN+ReLU of the *input* (previous layer's BN1+ReLU); single
    # f32 pass, then one bf16 cast for everything downstream.
    x = x_ref[...].astype(jnp.float32)
    if fuse_bn_relu:
        x = jnp.maximum(x * s_ref[...] + b_ref[...], 0.0)
    ypad_ref[:, 1:D + 1, 1:H + 1, :] = x.astype(ypad_ref.dtype)

    # im2col slab build: one lane-aligned, 128-lane-multiple column block per tap.
    for n in range(NB):
        for tap in range(9):
            kd, kh = tap // 3, tap % 3
            v = ypad_ref[n, kd:kd + D, kh:kh + H, :]            # (D, H, W*Cin) bf16
            slab_ref[n * D * H:(n + 1) * D * H,
                     tap * WCi:(tap + 1) * WCi] = v.reshape(D * H, WCi)

    # Single long-K GEMM on the MXU: (NB*D*H, 9*W*Cin) @ (9*W*Cin, W*Cout), f32 acc.
    acc = jnp.dot(slab_ref[...], t_ref[...], preferred_element_type=jnp.float32)

    # Fused partial BatchNorm statistics of this conv's output (folded over W and
    # summed over grid steps in the wrapper) — avoids re-reading z from HBM.
    csum = jnp.sum(acc, axis=0, keepdims=True)                  # (1, W*Cout)
    csq = jnp.sum(acc * acc, axis=0, keepdims=True)             # (1, W*Cout)
    stat_ref[...] = jnp.concatenate([csum, csq], axis=0).reshape(1, 2, WCo)

    z_ref[...] = acc.reshape(NB, D, H, WCo).astype(z_ref.dtype)


def conv3d_bn_pallas(x, t, WCi, WCo, scale=None, bias=None,
                     out_dtype=jnp.bfloat16, samples_per_step=1):
    """x: (N, D, H, W*Cin) un-padded, lane-dense.  t: (9*W*Cin, W*Cout) bf16 slab.
    If scale/bias (shape (1, W*Cin)) are given, relu(x*scale+bias) is applied to the
    input inside the kernel.  Returns (z, stats): z (N,D,H,W*Cout) bf16,
    stats (nsteps, 2, W*Cout) f32 partial [sum, sumsq]."""
    N, D, H, _ = x.shape
    NB = samples_per_step
    assert N % NB == 0
    nsteps = N // NB
    fuse = scale is not None

    kernel = functools.partial(_conv3d_gemm_kernel, NB=NB, D=D, H=H,
                               WCi=WCi, WCo=WCo, fuse_bn_relu=fuse)

    in_specs = [pl.BlockSpec((NB, D, H, WCi), lambda s: (s, 0, 0, 0)),
                pl.BlockSpec(t.shape, lambda s: (0, 0))]          # weight slab resident
    args = [x, t]
    if fuse:
        in_specs += [pl.BlockSpec((1, WCi), lambda s: (0, 0)),
                     pl.BlockSpec((1, WCi), lambda s: (0, 0))]
        args += [scale, bias]

    scratch = [pltpu.VMEM((NB, D + 2, H + 2, WCi), jnp.bfloat16),   # padded activations
               pltpu.VMEM((NB * D * H, 9 * WCi), jnp.bfloat16)]     # im2col slab

    return pl.pallas_call(
        kernel,
        out_shape=(jax.ShapeDtypeStruct((N, D, H, WCo), out_dtype),
                   jax.ShapeDtypeStruct((nsteps, 2, WCo), jnp.float32)),
        grid=(nsteps,),
        in_specs=in_specs,
        out_specs=(pl.BlockSpec((NB, D, H, WCo), lambda s: (s, 0, 0, 0)),
                   pl.BlockSpec((1, 2, WCo), lambda s: (s, 0, 0))),
        scratch_shapes=scratch,
        compiler_params=pltpu.CompilerParams(dimension_semantics=("parallel",)),
    )(*args)


# ----------------------------------------------------------------------------
# Pallas kernel 2: fused BN2 affine + residual add + ReLU (lane-dense elementwise)
# ----------------------------------------------------------------------------
def _bn_add_relu_kernel(z_ref, r_ref, s_ref, b_ref, o_ref):
    z = z_ref[...].astype(jnp.float32)                 # z2 stored bf16 in HBM
    o_ref[...] = jnp.maximum(z * s_ref[...] + b_ref[...] + r_ref[...], 0.0)


def bn_add_relu_pallas(z, residual, scale_flat, bias_flat):
    """y = relu(z * scale + bias + residual); z bf16, residual f32, (N, D, H, W*C)."""
    N, D, H, WC = z.shape
    blk = pl.BlockSpec((1, D, H, WC), lambda n: (n, 0, 0, 0))
    vec = pl.BlockSpec((1, WC), lambda n: (0, 0))
    return pl.pallas_call(
        _bn_add_relu_kernel,
        out_shape=jax.ShapeDtypeStruct(z.shape, jnp.float32),
        grid=(N,),
        in_specs=[blk, blk, vec, vec],
        out_specs=blk,
        compiler_params=pltpu.CompilerParams(dimension_semantics=("parallel",)),
    )(z, residual, scale_flat, bias_flat)


# ----------------------------------------------------------------------------
# Glue: fold per-step partial statistics into per-channel BN scale/bias
# ----------------------------------------------------------------------------
def _fold_stats(stats, gamma, beta, count, eps=EPS):
    """stats: (nsteps, 2, W*C) partial [sum, sumsq]; returns (scale, bias) shape (C,)."""
    c = gamma.shape[0]
    tot = stats.sum(axis=0).reshape(2, -1, c).sum(axis=1)   # (2, C)
    mean = tot[0] / count
    var = tot[1] / count - mean * mean                      # biased (train-mode BN)
    scale = gamma * lax.rsqrt(var + eps)
    bias = beta - mean * scale
    return scale, bias


# ----------------------------------------------------------------------------
# BasicBlock forward (stride=1, downsample=None, in_planes == planes)
# ----------------------------------------------------------------------------
def basic_block_forward(x_ncdhw, params, eps=EPS):
    """Input / output layout: NCDHW (PyTorch convention)."""
    N, C, D, H, W = x_ncdhw.shape
    planes = params["g1"].shape[0]
    count = N * D * H * W
    WCi, WCo = W * C, W * planes

    # NCDHW -> channels-last, lane-dense (N, D, H, W*C).  No padding passes: halos
    # are built inside the conv kernel.
    x_cl = jnp.transpose(x_ncdhw, (0, 2, 3, 4, 1)).astype(jnp.float32)
    x_res = x_cl.reshape(N, D, H, WCi)

    t1 = _build_toeplitz(params["w1_cl"], W, jnp.bfloat16)
    t2 = _build_toeplitz(params["w2_cl"], W, jnp.bfloat16)

    # Fold batch into the GEMM M dimension so M = nb*D*H >= ~128 (fills MXU rows).
    nb = max(1, min(N, -(-128 // (D * H))))
    while N % nb:
        nb -= 1

    # conv1 (+ fused BN1 partial statistics); z1 kept bf16 between the two convs.
    z1, st1 = conv3d_bn_pallas(x_res, t1, WCi, WCo, out_dtype=jnp.bfloat16,
                               samples_per_step=nb)
    s1, b1 = _fold_stats(st1, params["g1"], params["b1"], count, eps)

    # conv2 with BN1+ReLU fused onto its input (+ fused BN2 partial statistics).
    s1f = jnp.tile(s1, W).reshape(1, WCo)
    b1f = jnp.tile(b1, W).reshape(1, WCo)
    z2, st2 = conv3d_bn_pallas(z1, t2, WCo, WCo, scale=s1f, bias=b1f,
                               out_dtype=jnp.bfloat16, samples_per_step=nb)
    s2, b2 = _fold_stats(st2, params["g2"], params["b2"], count, eps)

    # BN2 + residual + ReLU (single fused elementwise pass, lane-dense).
    s2f = jnp.tile(s2, W).reshape(1, WCo)
    b2f = jnp.tile(b2, W).reshape(1, WCo)
    out = bn_add_relu_pallas(z2, x_res, s2f, b2f)

    out = out.reshape(N, D, H, W, planes)
    return jnp.transpose(out, (0, 4, 1, 2, 3))  # back to NCDHW


# ----------------------------------------------------------------------------
# Pure-JAX reference (mirrors the kernel's bf16 matmul / bf16 z1,z2-storage
# precision; mathematically identical to the intended f32 module forward).
# ----------------------------------------------------------------------------
def reference_forward(x, params, eps=EPS):
    def conv(v, w):
        return lax.conv_general_dilated(
            v.astype(jnp.bfloat16), w.astype(jnp.bfloat16),
            window_strides=(1, 1, 1), padding=((1, 1),) * 3,
            dimension_numbers=("NCDHW", "OIDHW", "NCDHW"),
            preferred_element_type=jnp.float32)

    def bn_fold(z, g, b):
        mean = jnp.mean(z, axis=(0, 2, 3, 4))
        var = jnp.var(z, axis=(0, 2, 3, 4))
        s = g * lax.rsqrt(var + eps)
        return (s.reshape(1, -1, 1, 1, 1),
                (b - mean * s).reshape(1, -1, 1, 1, 1))

    z1 = conv(x, params["w1_oidhw"])
    s1, b1 = bn_fold(z1, params["g1"], params["b1"])
    z1q = z1.astype(jnp.bfloat16).astype(jnp.float32)   # kernel stores z1 in bf16
    y1 = jnp.maximum(z1q * s1 + b1, 0.0)
    z2 = conv(y1, params["w2_oidhw"])
    s2, b2 = bn_fold(z2, params["g2"], params["b2"])
    z2q = z2.astype(jnp.bfloat16).astype(jnp.float32)   # kernel stores z2 in bf16
    return jnp.maximum(z2q * s2 + b2 + x, 0.0)


if __name__ == "__main__":
    key = jax.random.PRNGKey(0)
    # Small shapes: batch=2, in_planes=planes=8, D=8, H=8, W=16 (W*C = 128 lanes).
    N, C, D, H, W = 2, 8, 8, 8, 16
    planes = C
    kx, kw1, kw2, kg1, kb1, kg2, kb2 = jax.random.split(key, 7)

    x = jax.random.normal(kx, (N, C, D, H, W), dtype=jnp.float32)

    w1 = jax.random.normal(kw1, (planes, C, 3, 3, 3), jnp.float32) / jnp.sqrt(C * 27)
    w2 = jax.random.normal(kw2, (planes, planes, 3, 3, 3), jnp.float32) / jnp.sqrt(planes * 27)

    params = {
        "w1_oidhw": w1,
        "w2_oidhw": w2,
        "w1_cl": jnp.transpose(w1, (2, 3, 4, 1, 0)),  # (KD, KH, KW, Cin, Cout)
        "w2_cl": jnp.transpose(w2, (2, 3, 4, 1, 0)),
        "g1": 0.5 + jax.random.uniform(kg1, (planes,), jnp.float32),
        "b1": 0.5 * jax.random.normal(kb1, (planes,), jnp.float32),
        "g2": 0.5 + jax.random.uniform(kg2, (planes,), jnp.float32),
        "b2": 0.5 * jax.random.normal(kb2, (planes,), jnp.float32),
    }

    out = jax.block_until_ready(jax.jit(basic_block_forward)(x, params))
    ref = jax.block_until_ready(reference_forward(x, params))

    assert out.shape == (N, planes, D, H, W), out.shape
    err = float(jnp.max(jnp.abs(out - ref)))
    # bf16 MXU operands + bf16 activation storage; the reference mirrors the same
    # quantization, so remaining error is accumulation-order / rounding-tie noise.
    assert err < 3e-2, f"max abs error vs reference: {err}"
    print("KERNEL_OK")
</pallas_src>

<mosaic_0001>
module attributes {stable_mosaic.version = 11 : i64} {
  func.func @_conv3d_gemm_kernel(%arg0: i32, %arg1: memref<2x8x8x128xf32, #tpu.memory_space<vmem>>, %arg2: memref<1152x128xbf16, #tpu.memory_space<vmem>>, %arg3: memref<2x8x8x128xbf16, #tpu.memory_space<vmem>>, %arg4: memref<1x2x128xf32, #tpu.memory_space<vmem>>, %arg5: memref<2x10x10x128xbf16, #tpu.memory_space<vmem>>, %arg6: memref<128x1152xbf16, #tpu.memory_space<vmem>>) attributes {dimension_semantics = [#tpu.dimension_semantics<parallel>], iteration_bounds = array<i64: 1>, scalar_prefetch = 0 : i64, scratch_operands = 2 : i64, tpu.core_type = #tpu.core_type<tc>, window_params = [{transform_indices = @transform_0, window_bounds = array<i64: 2, 8, 8, 128>}, {pipeline_mode = #tpu.pipeline_mode<synchronous>, transform_indices = @transform_1, window_bounds = array<i64: 1152, 128>}, {transform_indices = @transform_2, window_bounds = array<i64: 2, 8, 8, 128>}, {transform_indices = @transform_3, window_bounds = array<i64: 1, 2, 128>}]} {
    %cst = arith.constant 0.000000e+00 : bf16
    %0 = vector.broadcast %cst : bf16 to vector<2x10x10x128xbf16>
    %c0 = arith.constant 0 : index
    %c0_0 = arith.constant 0 : index
    %c0_1 = arith.constant 0 : index
    %c0_2 = arith.constant 0 : index
    %1 = vector.load %arg5[%c0, %c0_0, %c0_1, %c0_2] : memref<2x10x10x128xbf16, #tpu.memory_space<vmem>>, vector<2x10x10x128xbf16>
    tpu.vector_store %arg5[%c0, %c0_0, %c0_1, %c0_2], %0 {strides = array<i32>} : memref<2x10x10x128xbf16, #tpu.memory_space<vmem>>, vector<2x10x10x128xbf16>,
    %c0_3 = arith.constant 0 : index
    %c0_4 = arith.constant 0 : index
    %c0_5 = arith.constant 0 : index
    %c0_6 = arith.constant 0 : index
    %2 = vector.load %arg1[%c0_3, %c0_4, %c0_5, %c0_6] : memref<2x8x8x128xf32, #tpu.memory_space<vmem>>, vector<2x8x8x128xf32>
    %3 = arith.truncf %2 : vector<2x8x8x128xf32> to vector<2x8x8x128xbf16>
    %c0_7 = arith.constant 0 : index
    %c1 = arith.constant 1 : index
    %c1_8 = arith.constant 1 : index
    %c0_9 = arith.constant 0 : index
    %4 = vector.load %arg5[%c0_7, %c1, %c1_8, %c0_9] : memref<2x10x10x128xbf16, #tpu.memory_space<vmem>>, vector<2x8x8x128xbf16>
    tpu.vector_store %arg5[%c0_7, %c1, %c1_8, %c0_9], %3 {strides = array<i32>} : memref<2x10x10x128xbf16, #tpu.memory_space<vmem>>, vector<2x8x8x128xbf16>,
    %c0_10 = arith.constant 0 : index
    %c0_11 = arith.constant 0 : index
    %c0_12 = arith.constant 0 : index
    %c0_13 = arith.constant 0 : index
    %5 = vector.load %arg5[%c0_10, %c0_11, %c0_12, %c0_13] : memref<2x10x10x128xbf16, #tpu.memory_space<vmem>>, vector<1x8x8x128xbf16>
    %6 = vector.shape_cast %5 : vector<1x8x8x128xbf16> to vector<8x8x128xbf16>
    %7 = vector.shape_cast %6 : vector<8x8x128xbf16> to vector<64x128xbf16>
    %c0_14 = arith.constant 0 : index
    %c0_15 = arith.constant 0 : index
    %8 = vector.load %arg6[%c0_14, %c0_15] : memref<128x1152xbf16, #tpu.memory_space<vmem>>, vector<64x128xbf16>
    tpu.vector_store %arg6[%c0_14, %c0_15], %7 {strides = array<i32>} : memref<128x1152xbf16, #tpu.memory_space<vmem>>, vector<64x128xbf16>,
    %c0_16 = arith.constant 0 : index
    %c0_17 = arith.constant 0 : index
    %c1_18 = arith.constant 1 : index
    %c0_19 = arith.constant 0 : index
    %9 = vector.load %arg5[%c0_16, %c0_17, %c1_18, %c0_19] : memref<2x10x10x128xbf16, #tpu.memory_space<vmem>>, vector<1x8x8x128xbf16>
    %10 = vector.shape_cast %9 : vector<1x8x8x128xbf16> to vector<8x8x128xbf16>
    %11 = vector.shape_cast %10 : vector<8x8x128xbf16> to vector<64x128xbf16>
    %c0_20 = arith.constant 0 : index
    %c128 = arith.constant 128 : index
    %12 = vector.load %arg6[%c0_20, %c128] : memref<128x1152xbf16, #tpu.memory_space<vmem>>, vector<64x128xbf16>
    tpu.vector_store %arg6[%c0_20, %c128], %11 {strides = array<i32>} : memref<128x1152xbf16, #tpu.memory_space<vmem>>, vector<64x128xbf16>,
    %c0_21 = arith.constant 0 : index
    %c0_22 = arith.constant 0 : index
    %c2 = arith.constant 2 : index
    %c0_23 = arith.constant 0 : index
    %13 = vector.load %arg5[%c0_21, %c0_22, %c2, %c0_23] : memref<2x10x10x128xbf16, #tpu.memory_space<vmem>>, vector<1x8x8x128xbf16>
    %14 = vector.shape_cast %13 : vector<1x8x8x128xbf16> to vector<8x8x128xbf16>
    %15 = vector.shape_cast %14 : vector<8x8x128xbf16> to vector<64x128xbf16>
    %c0_24 = arith.constant 0 : index
    %c256 = arith.constant 256 : index
    %16 = vector.load %arg6[%c0_24, %c256] : memref<128x1152xbf16, #tpu.memory_space<vmem>>, vector<64x128xbf16>
    tpu.vector_store %arg6[%c0_24, %c256], %15 {strides = array<i32>} : memref<128x1152xbf16, #tpu.memory_space<vmem>>, vector<64x128xbf16>,
    %c0_25 = arith.constant 0 : index
    %c1_26 = arith.constant 1 : index
    %c0_27 = arith.constant 0 : index
    %c0_28 = arith.constant 0 : index
    %17 = vector.load %arg5[%c0_25, %c1_26, %c0_27, %c0_28] : memref<2x10x10x128xbf16, #tpu.memory_space<vmem>>, vector<1x8x8x128xbf16>
    %18 = vector.shape_cast %17 : vector<1x8x8x128xbf16> to vector<8x8x128xbf16>
    %19 = vector.shape_cast %18 : vector<8x8x128xbf16> to vector<64x128xbf16>
    %c0_29 = arith.constant 0 : index
    %c384 = arith.constant 384 : index
    %20 = vector.load %arg6[%c0_29, %c384] : memref<128x1152xbf16, #tpu.memory_space<vmem>>, vector<64x128xbf16>
    tpu.vector_store %arg6[%c0_29, %c384], %19 {strides = array<i32>} : memref<128x1152xbf16, #tpu.memory_space<vmem>>, vector<64x128xbf16>,
    %c0_30 = arith.constant 0 : index
    %c1_31 = arith.constant 1 : index
    %c1_32 = arith.constant 1 : index
    %c0_33 = arith.constant 0 : index
    %21 = vector.load %arg5[%c0_30, %c1_31, %c1_32, %c0_33] : memref<2x10x10x128xbf16, #tpu.memory_space<vmem>>, vector<1x8x8x128xbf16>
    %22 = vector.shape_cast %21 : vector<1x8x8x128xbf16> to vector<8x8x128xbf16>
    %23 = vector.shape_cast %22 : vector<8x8x128xbf16> to vector<64x128xbf16>
    %c0_34 = arith.constant 0 : index
    %c512 = arith.constant 512 : index
    %24 = vector.load %arg6[%c0_34, %c512] : memref<128x1152xbf16, #tpu.memory_space<vmem>>, vector<64x128xbf16>
    tpu.vector_store %arg6[%c0_34, %c512], %23 {strides = array<i32>} : memref<128x1152xbf16, #tpu.memory_space<vmem>>, vector<64x128xbf16>,
    %c0_35 = arith.constant 0 : index
    %c1_36 = arith.constant 1 : index
    %c2_37 = arith.constant 2 : index
    %c0_38 = arith.constant 0 : index
    %25 = vector.load %arg5[%c0_35, %c1_36, %c2_37, %c0_38] : memref<2x10x10x128xbf16, #tpu.memory_space<vmem>>, vector<1x8x8x128xbf16>
    %26 = vector.shape_cast %25 : vector<1x8x8x128xbf16> to vector<8x8x128xbf16>
    %27 = vector.shape_cast %26 : vector<8x8x128xbf16> to vector<64x128xbf16>
    %c0_39 = arith.constant 0 : index
    %c640 = arith.constant 640 : index
    %28 = vector.load %arg6[%c0_39, %c640] : memref<128x1152xbf16, #tpu.memory_space<vmem>>, vector<64x128xbf16>
    tpu.vector_store %arg6[%c0_39, %c640], %27 {strides = array<i32>} : memref<128x1152xbf16, #tpu.memory_space<vmem>>, vector<64x128xbf16>,
    %c0_40 = arith.constant 0 : index
    %c2_41 = arith.constant 2 : index
    %c0_42 = arith.constant 0 : index
    %c0_43 = arith.constant 0 : index
    %29 = vector.load %arg5[%c0_40, %c2_41, %c0_42, %c0_43] : memref<2x10x10x128xbf16, #tpu.memory_space<vmem>>, vector<1x8x8x128xbf16>
    %30 = vector.shape_cast %29 : vector<1x8x8x128xbf16> to vector<8x8x128xbf16>
    %31 = vector.shape_cast %30 : vector<8x8x128xbf16> to vector<64x128xbf16>
    %c0_44 = arith.constant 0 : index
    %c768 = arith.constant 768 : index
    %32 = vector.load %arg6[%c0_44, %c768] : memref<128x1152xbf16, #tpu.memory_space<vmem>>, vector<64x128xbf16>
    tpu.vector_store %arg6[%c0_44, %c768], %31 {strides = array<i32>} : memref<128x1152xbf16, #tpu.memory_space<vmem>>, vector<64x128xbf16>,
    %c0_45 = arith.constant 0 : index
    %c2_46 = arith.constant 2 : index
    %c1_47 = arith.constant 1 : index
    %c0_48 = arith.constant 0 : index
    %33 = vector.load %arg5[%c0_45, %c2_46, %c1_47, %c0_48] : memref<2x10x10x128xbf16, #tpu.memory_space<vmem>>, vector<1x8x8x128xbf16>
    %34 = vector.shape_cast %33 : vector<1x8x8x128xbf16> to vector<8x8x128xbf16>
    %35 = vector.shape_cast %34 : vector<8x8x128xbf16> to vector<64x128xbf16>
    %c0_49 = arith.constant 0 : index
    %c896 = arith.constant 896 : index
    %36 = vector.load %arg6[%c0_49, %c896] : memref<128x1152xbf16, #tpu.memory_space<vmem>>, vector<64x128xbf16>
    tpu.vector_store %arg6[%c0_49, %c896], %35 {strides = array<i32>} : memref<128x1152xbf16, #tpu.memory_space<vmem>>, vector<64x128xbf16>,
    %c0_50 = arith.constant 0 : index
    %c2_51 = arith.constant 2 : index
    %c2_52 = arith.constant 2 : index
    %c0_53 = arith.constant 0 : index
    %37 = vector.load %arg5[%c0_50, %c2_51, %c2_52, %c0_53] : memref<2x10x10x128xbf16, #tpu.memory_space<vmem>>, vector<1x8x8x128xbf16>
    %38 = vector.shape_cast %37 : vector<1x8x8x128xbf16> to vector<8x8x128xbf16>
    %39 = vector.shape_cast %38 : vector<8x8x128xbf16> to vector<64x128xbf16>
    %c0_54 = arith.constant 0 : index
    %c1024 = arith.constant 1024 : index
    %40 = vector.load %arg6[%c0_54, %c1024] : memref<128x1152xbf16, #tpu.memory_space<vmem>>, vector<64x128xbf16>
    tpu.vector_store %arg6[%c0_54, %c1024], %39 {strides = array<i32>} : memref<128x1152xbf16, #tpu.memory_space<vmem>>, vector<64x128xbf16>,
    %c1_55 = arith.constant 1 : index
    %c0_56 = arith.constant 0 : index
    %c0_57 = arith.constant 0 : index
    %c0_58 = arith.constant 0 : index
    %41 = vector.load %arg5[%c1_55, %c0_56, %c0_57, %c0_58] : memref<2x10x10x128xbf16, #tpu.memory_space<vmem>>, vector<1x8x8x128xbf16>
    %42 = vector.shape_cast %41 : vector<1x8x8x128xbf16> to vector<8x8x128xbf16>
    %43 = vector.shape_cast %42 : vector<8x8x128xbf16> to vector<64x128xbf16>
    %c64 = arith.constant 64 : index
    %c0_59 = arith.constant 0 : index
    %44 = vector.load %arg6[%c64, %c0_59] : memref<128x1152xbf16, #tpu.memory_space<vmem>>, vector<64x128xbf16>
    tpu.vector_store %arg6[%c64, %c0_59], %43 {strides = array<i32>} : memref<128x1152xbf16, #tpu.memory_space<vmem>>, vector<64x128xbf16>,
    %c1_60 = arith.constant 1 : index
    %c0_61 = arith.constant 0 : index
    %c1_62 = arith.constant 1 : index
    %c0_63 = arith.constant 0 : index
    %45 = vector.load %arg5[%c1_60, %c0_61, %c1_62, %c0_63] : memref<2x10x10x128xbf16, #tpu.memory_space<vmem>>, vector<1x8x8x128xbf16>
    %46 = vector.shape_cast %45 : vector<1x8x8x128xbf16> to vector<8x8x128xbf16>
    %47 = vector.shape_cast %46 : vector<8x8x128xbf16> to vector<64x128xbf16>
    %c64_64 = arith.constant 64 : index
    %c128_65 = arith.constant 128 : index
    %48 = vector.load %arg6[%c64_64, %c128_65] : memref<128x1152xbf16, #tpu.memory_space<vmem>>, vector<64x128xbf16>
    tpu.vector_store %arg6[%c64_64, %c128_65], %47 {strides = array<i32>} : memref<128x1152xbf16, #tpu.memory_space<vmem>>, vector<64x128xbf16>,
    %c1_66 = arith.constant 1 : index
    %c0_67 = arith.constant 0 : index
    %c2_68 = arith.constant 2 : index
    %c0_69 = arith.constant 0 : index
    %49 = vector.load %arg5[%c1_66, %c0_67, %c2_68, %c0_69] : memref<2x10x10x128xbf16, #tpu.memory_space<vmem>>, vector<1x8x8x128xbf16>
    %50 = vector.shape_cast %49 : vector<1x8x8x128xbf16> to vector<8x8x128xbf16>
    %51 = vector.shape_cast %50 : vector<8x8x128xbf16> to vector<64x128xbf16>
    %c64_70 = arith.constant 64 : index
    %c256_71 = arith.constant 256 : index
    %52 = vector.load %arg6[%c64_70, %c256_71] : memref<128x1152xbf16, #tpu.memory_space<vmem>>, vector<64x128xbf16>
    tpu.vector_store %arg6[%c64_70, %c256_71], %51 {strides = array<i32>} : memref<128x1152xbf16, #tpu.memory_space<vmem>>, vector<64x128xbf16>,
    %c1_72 = arith.constant 1 : index
    %c1_73 = arith.constant 1 : index
    %c0_74 = arith.constant 0 : index
    %c0_75 = arith.constant 0 : index
    %53 = vector.load %arg5[%c1_72, %c1_73, %c0_74, %c0_75] : memref<2x10x10x128xbf16, #tpu.memory_space<vmem>>, vector<1x8x8x128xbf16>
    %54 = vector.shape_cast %53 : vector<1x8x8x128xbf16> to vector<8x8x128xbf16>
    %55 = vector.shape_cast %54 : vector<8x8x128xbf16> to vector<64x128xbf16>
    %c64_76 = arith.constant 64 : index
    %c384_77 = arith.constant 384 : index
    %56 = vector.load %arg6[%c64_76, %c384_77] : memref<128x1152xbf16, #tpu.memory_space<vmem>>, vector<64x128xbf16>
    tpu.vector_store %arg6[%c64_76, %c384_77], %55 {strides = array<i32>} : memref<128x1152xbf16, #tpu.memory_space<vmem>>, vector<64x128xbf16>,
    %c1_78 = arith.constant 1 : index
    %c1_79 = arith.constant 1 : index
    %c1_80 = arith.constant 1 : index
    %c0_81 = arith.constant 0 : index
    %57 = vector.load %arg5[%c1_78, %c1_79, %c1_80, %c0_81] : memref<2x10x10x128xbf16, #tpu.memory_space<vmem>>, vector<1x8x8x128xbf16>
    %58 = vector.shape_cast %57 : vector<1x8x8x128xbf16> to vector<8x8x128xbf16>
    %59 = vector.shape_cast %58 : vector<8x8x128xbf16> to vector<64x128xbf16>
    %c64_82 = arith.constant 64 : index
    %c512_83 = arith.constant 512 : index
    %60 = vector.load %arg6[%c64_82, %c512_83] : memref<128x1152xbf16, #tpu.memory_space<vmem>>, vector<64x128xbf16>
    tpu.vector_store %arg6[%c64_82, %c512_83], %59 {strides = array<i32>} : memref<128x1152xbf16, #tpu.memory_space<vmem>>, vector<64x128xbf16>,
    %c1_84 = arith.constant 1 : index
    %c1_85 = arith.constant 1 : index
    %c2_86 = arith.constant 2 : index
    %c0_87 = arith.constant 0 : index
    %61 = vector.load %arg5[%c1_84, %c1_85, %c2_86, %c0_87] : memref<2x10x10x128xbf16, #tpu.memory_space<vmem>>, vector<1x8x8x128xbf16>
    %62 = vector.shape_cast %61 : vector<1x8x8x128xbf16> to vector<8x8x128xbf16>
    %63 = vector.shape_cast %62 : vector<8x8x128xbf16> to vector<64x128xbf16>
    %c64_88 = arith.constant 64 : index
    %c640_89 = arith.constant 640 : index
    %64 = vector.load %arg6[%c64_88, %c640_89] : memref<128x1152xbf16, #tpu.memory_space<vmem>>, vector<64x128xbf16>
    tpu.vector_store %arg6[%c64_88, %c640_89], %63 {strides = array<i32>} : memref<128x1152xbf16, #tpu.memory_space<vmem>>, vector<64x128xbf16>,
    %c1_90 = arith.constant 1 : index
    %c2_91 = arith.constant 2 : index
    %c0_92 = arith.constant 0 : index
    %c0_93 = arith.constant 0 : index
    %65 = vector.load %arg5[%c1_90, %c2_91, %c0_92, %c0_93] : memref<2x10x10x128xbf16, #tpu.memory_space<vmem>>, vector<1x8x8x128xbf16>
    %66 = vector.shape_cast %65 : vector<1x8x8x128xbf16> to vector<8x8x128xbf16>
    %67 = vector.shape_cast %66 : vector<8x8x128xbf16> to vector<64x128xbf16>
    %c64_94 = arith.constant 64 : index
    %c768_95 = arith.constant 768 : index
    %68 = vector.load %arg6[%c64_94, %c768_95] : memref<128x1152xbf16, #tpu.memory_space<vmem>>, vector<64x128xbf16>
    tpu.vector_store %arg6[%c64_94, %c768_95], %67 {strides = array<i32>} : memref<128x1152xbf16, #tpu.memory_space<vmem>>, vector<64x128xbf16>,
    %c1_96 = arith.constant 1 : index
    %c2_97 = arith.constant 2 : index
    %c1_98 = arith.constant 1 : index
    %c0_99 = arith.constant 0 : index
    %69 = vector.load %arg5[%c1_96, %c2_97, %c1_98, %c0_99] : memref<2x10x10x128xbf16, #tpu.memory_space<vmem>>, vector<1x8x8x128xbf16>
    %70 = vector.shape_cast %69 : vector<1x8x8x128xbf16> to vector<8x8x128xbf16>
    %71 = vector.shape_cast %70 : vector<8x8x128xbf16> to vector<64x128xbf16>
    %c64_100 = arith.constant 64 : index
    %c896_101 = arith.constant 896 : index
    %72 = vector.load %arg6[%c64_100, %c896_101] : memref<128x1152xbf16, #tpu.memory_space<vmem>>, vector<64x128xbf16>
    tpu.vector_store %arg6[%c64_100, %c896_101], %71 {strides = array<i32>} : memref<128x1152xbf16, #tpu.memory_space<vmem>>, vector<64x128xbf16>,
    %c1_102 = arith.constant 1 : index
    %c2_103 = arith.constant 2 : index
    %c2_104 = arith.constant 2 : index
    %c0_105 = arith.constant 0 : index
    %73 = vector.load %arg5[%c1_102, %c2_103, %c2_104, %c0_105] : memref<2x10x10x128xbf16, #tpu.memory_space<vmem>>, vector<1x8x8x128xbf16>
    %74 = vector.shape_cast %73 : vector<1x8x8x128xbf16> to vector<8x8x128xbf16>
    %75 = vector.shape_cast %74 : vector<8x8x128xbf16> to vector<64x128xbf16>
    %c64_106 = arith.constant 64 : index
    %c1024_107 = arith.constant 1024 : index
    %76 = vector.load %arg6[%c64_106, %c1024_107] : memref<128x1152xbf16, #tpu.memory_space<vmem>>, vector<64x128xbf16>
    tpu.vector_store %arg6[%c64_106, %c1024_107], %75 {strides = array<i32>} : memref<128x1152xbf16, #tpu.memory_space<vmem>>, vector<64x128xbf16>,
    %c0_108 = arith.constant 0 : index
    %c0_109 = arith.constant 0 : index
    %77 = vector.load %arg6[%c0_108, %c0_109] : memref<128x1152xbf16, #tpu.memory_space<vmem>>, vector<128x1152xbf16>
    %c0_110 = arith.constant 0 : index
    %c0_111 = arith.constant 0 : index
    %78 = vector.load %arg2[%c0_110, %c0_111] : memref<1152x128xbf16, #tpu.memory_space<vmem>>, vector<1152x128xbf16>
    %cst_112 = arith.constant dense<0.000000e+00> : vector<128x128xf32>
    %79 = tpu.matmul %77, %78, %cst_112 {dimension_numbers = #tpu.dot_dimension_numbers<[1], [0], [0], [1], [0, 0, 1, 1], [], []>} : vector<128x1152xbf16>, vector<1152x128xbf16>, vector<128x128xf32> -> vector<128x128xf32>
    %cst_113 = arith.constant dense<0.000000e+00> : vector<128xf32>
    %80 = vector.multi_reduction <add>, %79, %cst_113 [0] : vector<128x128xf32> to vector<128xf32>
    %81 = vector.shape_cast %80 : vector<128xf32> to vector<1x128xf32>
    %82 = arith.mulf %79, %79 : vector<128x128xf32>
    %cst_114 = arith.constant dense<0.000000e+00> : vector<128xf32>
    %83 = vector.multi_reduction <add>, %82, %cst_114 [0] : vector<128x128xf32> to vector<128xf32>
    %84 = vector.shape_cast %83 : vector<128xf32> to vector<1x128xf32>
    %85 = tpu.concatenate %81, %84 in 0 : vector<1x128xf32>, vector<1x128xf32> -> vector<2x128xf32>
    %86 = vector.shape_cast %85 : vector<2x128xf32> to vector<1x2x128xf32>
    %c0_115 = arith.constant 0 : index
    %c0_116 = arith.constant 0 : index
    %c0_117 = arith.constant 0 : index
    %87 = vector.load %arg4[%c0_115, %c0_116, %c0_117] : memref<1x2x128xf32, #tpu.memory_space<vmem>>, vector<1x2x128xf32>
    tpu.vector_store %arg4[%c0_115, %c0_116, %c0_117], %86 {strides = array<i32>} : memref<1x2x128xf32, #tpu.memory_space<vmem>>, vector<1x2x128xf32>,
    %88 = vector.shape_cast %79 : vector<128x128xf32> to vector<2x8x8x128xf32>
    %89 = arith.truncf %88 : vector<2x8x8x128xf32> to vector<2x8x8x128xbf16>
    %c0_118 = arith.constant 0 : index
    %c0_119 = arith.constant 0 : index
    %c0_120 = arith.constant 0 : index
    %c0_121 = arith.constant 0 : index
    %90 = vector.load %arg3[%c0_118, %c0_119, %c0_120, %c0_121] : memref<2x8x8x128xbf16, #tpu.memory_space<vmem>>, vector<2x8x8x128xbf16>
    tpu.vector_store %arg3[%c0_118, %c0_119, %c0_120, %c0_121], %89 {strides = array<i32>} : memref<2x8x8x128xbf16, #tpu.memory_space<vmem>>, vector<2x8x8x128xbf16>,
    return
  }
  func.func @transform_0(%arg0: i32) -> (i32, i32, i32, i32) {
    %c0_i32 = arith.constant 0 : i32
    %c0_i32_0 = arith.constant 0 : i32
    %c0_i32_1 = arith.constant 0 : i32
    %c0_i32_2 = arith.constant 0 : i32
    return %arg0, %c0_i32, %c0_i32_0, %c0_i32_1 : i32, i32, i32, i32
  }
  func.func @transform_1(%arg0: i32) -> (i32, i32) {
    %c0_i32 = arith.constant 0 : i32
    %c0_i32_0 = arith.constant 0 : i32
    %c0_i32_1 = arith.constant 0 : i32
    return %c0_i32, %c0_i32_0 : i32, i32
  }
  func.func @transform_2(%arg0: i32) -> (i32, i32, i32, i32) {
    %c0_i32 = arith.constant 0 : i32
    %c0_i32_0 = arith.constant 0 : i32
    %c0_i32_1 = arith.constant 0 : i32
    %c0_i32_2 = arith.constant 0 : i32
    return %arg0, %c0_i32, %c0_i32_0, %c0_i32_1 : i32, i32, i32, i32
  }
  func.func @transform_3(%arg0: i32) -> (i32, i32, i32) {
    %c0_i32 = arith.constant 0 : i32
    %c0_i32_0 = arith.constant 0 : i32
    %c0_i32_1 = arith.constant 0 : i32
    return %arg0, %c0_i32, %c0_i32_0 : i32, i32, i32
  }
}

module attributes {stable_mosaic.version = 11 : i64} {
  func.func @_conv3d_gemm_kernel(%arg0: i32, %arg1: memref<2x8x8x128xbf16, #tpu.memory_space<vmem>>, %arg2: memref<1152x128xbf16, #tpu.memory_space<vmem>>, %arg3: memref<1x128xf32, #tpu.memory_space<vmem>>, %arg4: memref<1x128xf32, #tpu.memory_space<vmem>>, %arg5: memref<2x8x8x128xbf16, #tpu.memory_space<vmem>>, %arg6: memref<1x2x128xf32, #tpu.memory_space<vmem>>, %arg7: memref<2x10x10x128xbf16, #tpu.memory_space<vmem>>, %arg8: memref<128x1152xbf16, #tpu.memory_space<vmem>>) attributes {dimension_semantics = [#tpu.dimension_semantics<parallel>], iteration_bounds = array<i64: 1>, scalar_prefetch = 0 : i64, scratch_operands = 2 : i64, tpu.core_type = #tpu.core_type<tc>, window_params = [{transform_indices = @transform_0, window_bounds = array<i64: 2, 8, 8, 128>}, {pipeline_mode = #tpu.pipeline_mode<synchronous>, transform_indices = @transform_1, window_bounds = array<i64: 1152, 128>}, {pipeline_mode = #tpu.pipeline_mode<synchronous>, transform_indices = @transform_2, window_bounds = array<i64: 1, 128>}, {pipeline_mode = #tpu.pipeline_mode<synchronous>, transform_indices = @transform_3, window_bounds = array<i64: 1, 128>}, {transform_indices = @transform_4, window_bounds = array<i64: 2, 8, 8, 128>}, {transform_indices = @transform_5, window_bounds = array<i64: 1, 2, 128>}]} {
    %cst = arith.constant 0.000000e+00 : bf16
    %0 = vector.broadcast %cst : bf16 to vector<2x10x10x128xbf16>
    %c0 = arith.constant 0 : index
    %c0_0 = arith.constant 0 : index
    %c0_1 = arith.constant 0 : index
    %c0_2 = arith.constant 0 : index
    %1 = vector.load %arg7[%c0, %c0_0, %c0_1, %c0_2] : memref<2x10x10x128xbf16, #tpu.memory_space<vmem>>, vector<2x10x10x128xbf16>
    tpu.vector_store %arg7[%c0, %c0_0, %c0_1, %c0_2], %0 {strides = array<i32>} : memref<2x10x10x128xbf16, #tpu.memory_space<vmem>>, vector<2x10x10x128xbf16>,
    %c0_3 = arith.constant 0 : index
    %c0_4 = arith.constant 0 : index
    %c0_5 = arith.constant 0 : index
    %c0_6 = arith.constant 0 : index
    %2 = vector.load %arg1[%c0_3, %c0_4, %c0_5, %c0_6] : memref<2x8x8x128xbf16, #tpu.memory_space<vmem>>, vector<2x8x8x128xbf16>
    %3 = arith.extf %2 : vector<2x8x8x128xbf16> to vector<2x8x8x128xf32>
    %c0_7 = arith.constant 0 : index
    %c0_8 = arith.constant 0 : index
    %4 = vector.load %arg3[%c0_7, %c0_8] : memref<1x128xf32, #tpu.memory_space<vmem>>, vector<1x128xf32>
    %5 = vector.shape_cast %4 : vector<1x128xf32> to vector<1x1x1x128xf32>
    %6 = vector.broadcast %5 : vector<1x1x1x128xf32> to vector<2x8x8x128xf32>
    %7 = arith.mulf %3, %6 : vector<2x8x8x128xf32>
    %c0_9 = arith.constant 0 : index
    %c0_10 = arith.constant 0 : index
    %8 = vector.load %arg4[%c0_9, %c0_10] : memref<1x128xf32, #tpu.memory_space<vmem>>, vector<1x128xf32>
    %9 = vector.shape_cast %8 : vector<1x128xf32> to vector<1x1x1x128xf32>
    %10 = vector.broadcast %9 : vector<1x1x1x128xf32> to vector<2x8x8x128xf32>
    %11 = arith.addf %7, %10 : vector<2x8x8x128xf32>
    %cst_11 = arith.constant 0.000000e+00 : f32
    %12 = vector.broadcast %cst_11 : f32 to vector<2x8x8x128xf32>
    %13 = arith.maximumf %11, %12 : vector<2x8x8x128xf32>
    %14 = arith.truncf %13 : vector<2x8x8x128xf32> to vector<2x8x8x128xbf16>
    %c0_12 = arith.constant 0 : index
    %c1 = arith.constant 1 : index
    %c1_13 = arith.constant 1 : index
    %c0_14 = arith.constant 0 : index
    %15 = vector.load %arg7[%c0_12, %c1, %c1_13, %c0_14] : memref<2x10x10x128xbf16, #tpu.memory_space<vmem>>, vector<2x8x8x128xbf16>
    tpu.vector_store %arg7[%c0_12, %c1, %c1_13, %c0_14], %14 {strides = array<i32>} : memref<2x10x10x128xbf16, #tpu.memory_space<vmem>>, vector<2x8x8x128xbf16>,
    %c0_15 = arith.constant 0 : index
    %c0_16 = arith.constant 0 : index
    %c0_17 = arith.constant 0 : index
    %c0_18 = arith.constant 0 : index
    %16 = vector.load %arg7[%c0_15, %c0_16, %c0_17, %c0_18] : memref<2x10x10x128xbf16, #tpu.memory_space<vmem>>, vector<1x8x8x128xbf16>
    %17 = vector.shape_cast %16 : vector<1x8x8x128xbf16> to vector<8x8x128xbf16>
    %18 = vector.shape_cast %17 : vector<8x8x128xbf16> to vector<64x128xbf16>
    %c0_19 = arith.constant 0 : index
    %c0_20 = arith.constant 0 : index
    %19 = vector.load %arg8[%c0_19, %c0_20] : memref<128x1152xbf16, #tpu.memory_space<vmem>>, vector<64x128xbf16>
    tpu.vector_store %arg8[%c0_19, %c0_20], %18 {strides = array<i32>} : memref<128x1152xbf16, #tpu.memory_space<vmem>>, vector<64x128xbf16>,
    %c0_21 = arith.constant 0 : index
    %c0_22 = arith.constant 0 : index
    %c1_23 = arith.constant 1 : index
    %c0_24 = arith.constant 0 : index
    %20 = vector.load %arg7[%c0_21, %c0_22, %c1_23, %c0_24] : memref<2x10x10x128xbf16, #tpu.memory_space<vmem>>, vector<1x8x8x128xbf16>
    %21 = vector.shape_cast %20 : vector<1x8x8x128xbf16> to vector<8x8x128xbf16>
    %22 = vector.shape_cast %21 : vector<8x8x128xbf16> to vector<64x128xbf16>
    %c0_25 = arith.constant 0 : index
    %c128 = arith.constant 128 : index
    %23 = vector.load %arg8[%c0_25, %c128] : memref<128x1152xbf16, #tpu.memory_space<vmem>>, vector<64x128xbf16>
    tpu.vector_store %arg8[%c0_25, %c128], %22 {strides = array<i32>} : memref<128x1152xbf16, #tpu.memory_space<vmem>>, vector<64x128xbf16>,
    %c0_26 = arith.constant 0 : index
    %c0_27 = arith.constant 0 : index
    %c2 = arith.constant 2 : index
    %c0_28 = arith.constant 0 : index
    %24 = vector.load %arg7[%c0_26, %c0_27, %c2, %c0_28] : memref<2x10x10x128xbf16, #tpu.memory_space<vmem>>, vector<1x8x8x128xbf16>
    %25 = vector.shape_cast %24 : vector<1x8x8x128xbf16> to vector<8x8x128xbf16>
    %26 = vector.shape_cast %25 : vector<8x8x128xbf16> to vector<64x128xbf16>
    %c0_29 = arith.constant 0 : index
    %c256 = arith.constant 256 : index
    %27 = vector.load %arg8[%c0_29, %c256] : memref<128x1152xbf16, #tpu.memory_space<vmem>>, vector<64x128xbf16>
    tpu.vector_store %arg8[%c0_29, %c256], %26 {strides = array<i32>} : memref<128x1152xbf16, #tpu.memory_space<vmem>>, vector<64x128xbf16>,
    %c0_30 = arith.constant 0 : index
    %c1_31 = arith.constant 1 : index
    %c0_32 = arith.constant 0 : index
    %c0_33 = arith.constant 0 : index
    %28 = vector.load %arg7[%c0_30, %c1_31, %c0_32, %c0_33] : memref<2x10x10x128xbf16, #tpu.memory_space<vmem>>, vector<1x8x8x128xbf16>
    %29 = vector.shape_cast %28 : vector<1x8x8x128xbf16> to vector<8x8x128xbf16>
    %30 = vector.shape_cast %29 : vector<8x8x128xbf16> to vector<64x128xbf16>
    %c0_34 = arith.constant 0 : index
    %c384 = arith.constant 384 : index
    %31 = vector.load %arg8[%c0_34, %c384] : memref<128x1152xbf16, #tpu.memory_space<vmem>>, vector<64x128xbf16>
    tpu.vector_store %arg8[%c0_34, %c384], %30 {strides = array<i32>} : memref<128x1152xbf16, #tpu.memory_space<vmem>>, vector<64x128xbf16>,
    %c0_35 = arith.constant 0 : index
    %c1_36 = arith.constant 1 : index
    %c1_37 = arith.constant 1 : index
    %c0_38 = arith.constant 0 : index
    %32 = vector.load %arg7[%c0_35, %c1_36, %c1_37, %c0_38] : memref<2x10x10x128xbf16, #tpu.memory_space<vmem>>, vector<1x8x8x128xbf16>
    %33 = vector.shape_cast %32 : vector<1x8x8x128xbf16> to vector<8x8x128xbf16>
    %34 = vector.shape_cast %33 : vector<8x8x128xbf16> to vector<64x128xbf16>
    %c0_39 = arith.constant 0 : index
    %c512 = arith.constant 512 : index
    %35 = vector.load %arg8[%c0_39, %c512] : memref<128x1152xbf16, #tpu.memory_space<vmem>>, vector<64x128xbf16>
    tpu.vector_store %arg8[%c0_39, %c512], %34 {strides = array<i32>} : memref<128x1152xbf16, #tpu.memory_space<vmem>>, vector<64x128xbf16>,
    %c0_40 = arith.constant 0 : index
    %c1_41 = arith.constant 1 : index
    %c2_42 = arith.constant 2 : index
    %c0_43 = arith.constant 0 : index
    %36 = vector.load %arg7[%c0_40, %c1_41, %c2_42, %c0_43] : memref<2x10x10x128xbf16, #tpu.memory_space<vmem>>, vector<1x8x8x128xbf16>
    %37 = vector.shape_cast %36 : vector<1x8x8x128xbf16> to vector<8x8x128xbf16>
    %38 = vector.shape_cast %37 : vector<8x8x128xbf16> to vector<64x128xbf16>
    %c0_44 = arith.constant 0 : index
    %c640 = arith.constant 640 : index
    %39 = vector.load %arg8[%c0_44, %c640] : memref<128x1152xbf16, #tpu.memory_space<vmem>>, vector<64x128xbf16>
    tpu.vector_store %arg8[%c0_44, %c640], %38 {strides = array<i32>} : memref<128x1152xbf16, #tpu.memory_space<vmem>>, vector<64x128xbf16>,
    %c0_45 = arith.constant 0 : index
    %c2_46 = arith.constant 2 : index
    %c0_47 = arith.constant 0 : index
    %c0_48 = arith.constant 0 : index
    %40 = vector.load %arg7[%c0_45, %c2_46, %c0_47, %c0_48] : memref<2x10x10x128xbf16, #tpu.memory_space<vmem>>, vector<1x8x8x128xbf16>
    %41 = vector.shape_cast %40 : vector<1x8x8x128xbf16> to vector<8x8x128xbf16>
    %42 = vector.shape_cast %41 : vector<8x8x128xbf16> to vector<64x128xbf16>
    %c0_49 = arith.constant 0 : index
    %c768 = arith.constant 768 : index
    %43 = vector.load %arg8[%c0_49, %c768] : memref<128x1152xbf16, #tpu.memory_space<vmem>>, vector<64x128xbf16>
    tpu.vector_store %arg8[%c0_49, %c768], %42 {strides = array<i32>} : memref<128x1152xbf16, #tpu.memory_space<vmem>>, vector<64x128xbf16>,
    %c0_50 = arith.constant 0 : index
    %c2_51 = arith.constant 2 : index
    %c1_52 = arith.constant 1 : index
    %c0_53 = arith.constant 0 : index
    %44 = vector.load %arg7[%c0_50, %c2_51, %c1_52, %c0_53] : memref<2x10x10x128xbf16, #tpu.memory_space<vmem>>, vector<1x8x8x128xbf16>
    %45 = vector.shape_cast %44 : vector<1x8x8x128xbf16> to vector<8x8x128xbf16>
    %46 = vector.shape_cast %45 : vector<8x8x128xbf16> to vector<64x128xbf16>
    %c0_54 = arith.constant 0 : index
    %c896 = arith.constant 896 : index
    %47 = vector.load %arg8[%c0_54, %c896] : memref<128x1152xbf16, #tpu.memory_space<vmem>>, vector<64x128xbf16>
    tpu.vector_store %arg8[%c0_54, %c896], %46 {strides = array<i32>} : memref<128x1152xbf16, #tpu.memory_space<vmem>>, vector<64x128xbf16>,
    %c0_55 = arith.constant 0 : index
    %c2_56 = arith.constant 2 : index
    %c2_57 = arith.constant 2 : index
    %c0_58 = arith.constant 0 : index
    %48 = vector.load %arg7[%c0_55, %c2_56, %c2_57, %c0_58] : memref<2x10x10x128xbf16, #tpu.memory_space<vmem>>, vector<1x8x8x128xbf16>
    %49 = vector.shape_cast %48 : vector<1x8x8x128xbf16> to vector<8x8x128xbf16>
    %50 = vector.shape_cast %49 : vector<8x8x128xbf16> to vector<64x128xbf16>
    %c0_59 = arith.constant 0 : index
    %c1024 = arith.constant 1024 : index
    %51 = vector.load %arg8[%c0_59, %c1024] : memref<128x1152xbf16, #tpu.memory_space<vmem>>, vector<64x128xbf16>
    tpu.vector_store %arg8[%c0_59, %c1024], %50 {strides = array<i32>} : memref<128x1152xbf16, #tpu.memory_space<vmem>>, vector<64x128xbf16>,
    %c1_60 = arith.constant 1 : index
    %c0_61 = arith.constant 0 : index
    %c0_62 = arith.constant 0 : index
    %c0_63 = arith.constant 0 : index
    %52 = vector.load %arg7[%c1_60, %c0_61, %c0_62, %c0_63] : memref<2x10x10x128xbf16, #tpu.memory_space<vmem>>, vector<1x8x8x128xbf16>
    %53 = vector.shape_cast %52 : vector<1x8x8x128xbf16> to vector<8x8x128xbf16>
    %54 = vector.shape_cast %53 : vector<8x8x128xbf16> to vector<64x128xbf16>
    %c64 = arith.constant 64 : index
    %c0_64 = arith.constant 0 : index
    %55 = vector.load %arg8[%c64, %c0_64] : memref<128x1152xbf16, #tpu.memory_space<vmem>>, vector<64x128xbf16>
    tpu.vector_store %arg8[%c64, %c0_64], %54 {strides = array<i32>} : memref<128x1152xbf16, #tpu.memory_space<vmem>>, vector<64x128xbf16>,
    %c1_65 = arith.constant 1 : index
    %c0_66 = arith.constant 0 : index
    %c1_67 = arith.constant 1 : index
    %c0_68 = arith.constant 0 : index
    %56 = vector.load %arg7[%c1_65, %c0_66, %c1_67, %c0_68] : memref<2x10x10x128xbf16, #tpu.memory_space<vmem>>, vector<1x8x8x128xbf16>
    %57 = vector.shape_cast %56 : vector<1x8x8x128xbf16> to vector<8x8x128xbf16>
    %58 = vector.shape_cast %57 : vector<8x8x128xbf16> to vector<64x128xbf16>
    %c64_69 = arith.constant 64 : index
    %c128_70 = arith.constant 128 : index
    %59 = vector.load %arg8[%c64_69, %c128_70] : memref<128x1152xbf16, #tpu.memory_space<vmem>>, vector<64x128xbf16>
    tpu.vector_store %arg8[%c64_69, %c128_70], %58 {strides = array<i32>} : memref<128x1152xbf16, #tpu.memory_space<vmem>>, vector<64x128xbf16>,
    %c1_71 = arith.constant 1 : index
    %c0_72 = arith.constant 0 : index
    %c2_73 = arith.constant 2 : index
    %c0_74 = arith.constant 0 : index
    %60 = vector.load %arg7[%c1_71, %c0_72, %c2_73, %c0_74] : memref<2x10x10x128xbf16, #tpu.memory_space<vmem>>, vector<1x8x8x128xbf16>
    %61 = vector.shape_cast %60 : vector<1x8x8x128xbf16> to vector<8x8x128xbf16>
    %62 = vector.shape_cast %61 : vector<8x8x128xbf16> to vector<64x128xbf16>
    %c64_75 = arith.constant 64 : index
    %c256_76 = arith.constant 256 : index
    %63 = vector.load %arg8[%c64_75, %c256_76] : memref<128x1152xbf16, #tpu.memory_space<vmem>>, vector<64x128xbf16>
    tpu.vector_store %arg8[%c64_75, %c256_76], %62 {strides = array<i32>} : memref<128x1152xbf16, #tpu.memory_space<vmem>>, vector<64x128xbf16>,
    %c1_77 = arith.constant 1 : index
    %c1_78 = arith.constant 1 : index
    %c0_79 = arith.constant 0 : index
    %c0_80 = arith.constant 0 : index
    %64 = vector.load %arg7[%c1_77, %c1_78, %c0_79, %c0_80] : memref<2x10x10x128xbf16, #tpu.memory_space<vmem>>, vector<1x8x8x128xbf16>
    %65 = vector.shape_cast %64 : vector<1x8x8x128xbf16> to vector<8x8x128xbf16>
    %66 = vector.shape_cast %65 : vector<8x8x128xbf16> to vector<64x128xbf16>
    %c64_81 = arith.constant 64 : index
    %c384_82 = arith.constant 384 : index
    %67 = vector.load %arg8[%c64_81, %c384_82] : memref<128x1152xbf16, #tpu.memory_space<vmem>>, vector<64x128xbf16>
    tpu.vector_store %arg8[%c64_81, %c384_82], %66 {strides = array<i32>} : memref<128x1152xbf16, #tpu.memory_space<vmem>>, vector<64x128xbf16>,
    %c1_83 = arith.constant 1 : index
    %c1_84 = arith.constant 1 : index
    %c1_85 = arith.constant 1 : index
    %c0_86 = arith.constant 0 : index
    %68 = vector.load %arg7[%c1_83, %c1_84, %c1_85, %c0_86] : memref<2x10x10x128xbf16, #tpu.memory_space<vmem>>, vector<1x8x8x128xbf16>
    %69 = vector.shape_cast %68 : vector<1x8x8x128xbf16> to vector<8x8x128xbf16>
    %70 = vector.shape_cast %69 : vector<8x8x128xbf16> to vector<64x128xbf16>
    %c64_87 = arith.constant 64 : index
    %c512_88 = arith.constant 512 : index
    %71 = vector.load %arg8[%c64_87, %c512_88] : memref<128x1152xbf16, #tpu.memory_space<vmem>>, vector<64x128xbf16>
    tpu.vector_store %arg8[%c64_87, %c512_88], %70 {strides = array<i32>} : memref<128x1152xbf16, #tpu.memory_space<vmem>>, vector<64x128xbf16>,
    %c1_89 = arith.constant 1 : index
    %c1_90 = arith.constant 1 : index
    %c2_91 = arith.constant 2 : index
    %c0_92 = arith.constant 0 : index
    %72 = vector.load %arg7[%c1_89, %c1_90, %c2_91, %c0_92] : memref<2x10x10x128xbf16, #tpu.memory_space<vmem>>, vector<1x8x8x128xbf16>
    %73 = vector.shape_cast %72 : vector<1x8x8x128xbf16> to vector<8x8x128xbf16>
    %74 = vector.shape_cast %73 : vector<8x8x128xbf16> to vector<64x128xbf16>
    %c64_93 = arith.constant 64 : index
    %c640_94 = arith.constant 640 : index
    %75 = vector.load %arg8[%c64_93, %c640_94] : memref<128x1152xbf16, #tpu.memory_space<vmem>>, vector<64x128xbf16>
    tpu.vector_store %arg8[%c64_93, %c640_94], %74 {strides = array<i32>} : memref<128x1152xbf16, #tpu.memory_space<vmem>>, vector<64x128xbf16>,
    %c1_95 = arith.constant 1 : index
    %c2_96 = arith.constant 2 : index
    %c0_97 = arith.constant 0 : index
    %c0_98 = arith.constant 0 : index
    %76 = vector.load %arg7[%c1_95, %c2_96, %c0_97, %c0_98] : memref<2x10x10x128xbf16, #tpu.memory_space<vmem>>, vector<1x8x8x128xbf16>
    %77 = vector.shape_cast %76 : vector<1x8x8x128xbf16> to vector<8x8x128xbf16>
    %78 = vector.shape_cast %77 : vector<8x8x128xbf16> to vector<64x128xbf16>
    %c64_99 = arith.constant 64 : index
    %c768_100 = arith.constant 768 : index
    %79 = vector.load %arg8[%c64_99, %c768_100] : memref<128x1152xbf16, #tpu.memory_space<vmem>>, vector<64x128xbf16>
    tpu.vector_store %arg8[%c64_99, %c768_100], %78 {strides = array<i32>} : memref<128x1152xbf16, #tpu.memory_space<vmem>>, vector<64x128xbf16>,
    %c1_101 = arith.constant 1 : index
    %c2_102 = arith.constant 2 : index
    %c1_103 = arith.constant 1 : index
    %c0_104 = arith.constant 0 : index
    %80 = vector.load %arg7[%c1_101, %c2_102, %c1_103, %c0_104] : memref<2x10x10x128xbf16, #tpu.memory_space<vmem>>, vector<1x8x8x128xbf16>
    %81 = vector.shape_cast %80 : vector<1x8x8x128xbf16> to vector<8x8x128xbf16>
    %82 = vector.shape_cast %81 : vector<8x8x128xbf16> to vector<64x128xbf16>
    %c64_105 = arith.constant 64 : index
    %c896_106 = arith.constant 896 : index
    %83 = vector.load %arg8[%c64_105, %c896_106] : memref<128x1152xbf16, #tpu.memory_space<vmem>>, vector<64x128xbf16>
    tpu.vector_store %arg8[%c64_105, %c896_106], %82 {strides = array<i32>} : memref<128x1152xbf16, #tpu.memory_space<vmem>>, vector<64x128xbf16>,
    %c1_107 = arith.constant 1 : index
    %c2_108 = arith.constant 2 : index
    %c2_109 = arith.constant 2 : index
    %c0_110 = arith.constant 0 : index
    %84 = vector.load %arg7[%c1_107, %c2_108, %c2_109, %c0_110] : memref<2x10x10x128xbf16, #tpu.memory_space<vmem>>, vector<1x8x8x128xbf16>
    %85 = vector.shape_cast %84 : vector<1x8x8x128xbf16> to vector<8x8x128xbf16>
    %86 = vector.shape_cast %85 : vector<8x8x128xbf16> to vector<64x128xbf16>
    %c64_111 = arith.constant 64 : index
    %c1024_112 = arith.constant 1024 : index
    %87 = vector.load %arg8[%c64_111, %c1024_112] : memref<128x1152xbf16, #tpu.memory_space<vmem>>, vector<64x128xbf16>
    tpu.vector_store %arg8[%c64_111, %c1024_112], %86 {strides = array<i32>} : memref<128x1152xbf16, #tpu.memory_space<vmem>>, vector<64x128xbf16>,
    %c0_113 = arith.constant 0 : index
    %c0_114 = arith.constant 0 : index
    %88 = vector.load %arg8[%c0_113, %c0_114] : memref<128x1152xbf16, #tpu.memory_space<vmem>>, vector<128x1152xbf16>
    %c0_115 = arith.constant 0 : index
    %c0_116 = arith.constant 0 : index
    %89 = vector.load %arg2[%c0_115, %c0_116] : memref<1152x128xbf16, #tpu.memory_space<vmem>>, vector<1152x128xbf16>
    %cst_117 = arith.constant dense<0.000000e+00> : vector<128x128xf32>
    %90 = tpu.matmul %88, %89, %cst_117 {dimension_numbers = #tpu.dot_dimension_numbers<[1], [0], [0], [1], [0, 0, 1, 1], [], []>} : vector<128x1152xbf16>, vector<1152x128xbf16>, vector<128x128xf32> -> vector<128x128xf32>
    %cst_118 = arith.constant dense<0.000000e+00> : vector<128xf32>
    %91 = vector.multi_reduction <add>, %90, %cst_118 [0] : vector<128x128xf32> to vector<128xf32>
    %92 = vector.shape_cast %91 : vector<128xf32> to vector<1x128xf32>
    %93 = arith.mulf %90, %90 : vector<128x128xf32>
    %cst_119 = arith.constant dense<0.000000e+00> : vector<128xf32>
    %94 = vector.multi_reduction <add>, %93, %cst_119 [0] : vector<128x128xf32> to vector<128xf32>
    %95 = vector.shape_cast %94 : vector<128xf32> to vector<1x128xf32>
    %96 = tpu.concatenate %92, %95 in 0 : vector<1x128xf32>, vector<1x128xf32> -> vector<2x128xf32>
    %97 = vector.shape_cast %96 : vector<2x128xf32> to vector<1x2x128xf32>
    %c0_120 = arith.constant 0 : index
    %c0_121 = arith.constant 0 : index
    %c0_122 = arith.constant 0 : index
    %98 = vector.load %arg6[%c0_120, %c0_121, %c0_122] : memref<1x2x128xf32, #tpu.memory_space<vmem>>, vector<1x2x128xf32>
    tpu.vector_store %arg6[%c0_120, %c0_121, %c0_122], %97 {strides = array<i32>} : memref<1x2x128xf32, #tpu.memory_space<vmem>>, vector<1x2x128xf32>,
    %99 = vector.shape_cast %90 : vector<128x128xf32> to vector<2x8x8x128xf32>
    %100 = arith.truncf %99 : vector<2x8x8x128xf32> to vector<2x8x8x128xbf16>
    %c0_123 = arith.constant 0 : index
    %c0_124 = arith.constant 0 : index
    %c0_125 = arith.constant 0 : index
    %c0_126 = arith.constant 0 : index
    %101 = vector.load %arg5[%c0_123, %c0_124, %c0_125, %c0_126] : memref<2x8x8x128xbf16, #tpu.memory_space<vmem>>, vector<2x8x8x128xbf16>
    tpu.vector_store %arg5[%c0_123, %c0_124, %c0_125, %c0_126], %100 {strides = array<i32>} : memref<2x8x8x128xbf16, #tpu.memory_space<vmem>>, vector<2x8x8x128xbf16>,
    return
  }
  func.func @transform_0(%arg0: i32) -> (i32, i32, i32, i32) {
    %c0_i32 = arith.constant 0 : i32
    %c0_i32_0 = arith.constant 0 : i32
    %c0_i32_1 = arith.constant 0 : i32
    %c0_i32_2 = arith.constant 0 : i32
    return %arg0, %c0_i32, %c0_i32_0, %c0_i32_1 : i32, i32, i32, i32
  }
  func.func @transform_1(%arg0: i32) -> (i32, i32) {
    %c0_i32 = arith.constant 0 : i32
    %c0_i32_0 = arith.constant 0 : i32
    %c0_i32_1 = arith.constant 0 : i32
    return %c0_i32, %c0_i32_0 : i32, i32
  }
  func.func @transform_2(%arg0: i32) -> (i32, i32) {
    %c0_i32 = arith.constant 0 : i32
    %c0_i32_0 = arith.constant 0 : i32
    %c0_i32_1 = arith.constant 0 : i32
    return %c0_i32, %c0_i32_0 : i32, i32
  }
  func.func @transform_3(%arg0: i32) -> (i32, i32) {
    %c0_i32 = arith.constant 0 : i32
    %c0_i32_0 = arith.constant 0 : i32
    %c0_i32_1 = arith.constant 0 : i32
    return %c0_i32, %c0_i32_0 : i32, i32
  }
  func.func @transform_4(%arg0: i32) -> (i32, i32, i32, i32) {
    %c0_i32 = arith.constant 0 : i32
    %c0_i32_0 = arith.constant 0 : i32
    %c0_i32_1 = arith.constant 0 : i32
    %c0_i32_2 = arith.constant 0 : i32
    return %arg0, %c0_i32, %c0_i32_0, %c0_i32_1 : i32, i32, i32, i32
  }
  func.func @transform_5(%arg0: i32) -> (i32, i32, i32) {
    %c0_i32 = arith.constant 0 : i32
    %c0_i32_0 = arith.constant 0 : i32
    %c0_i32_1 = arith.constant 0 : i32
    return %arg0, %c0_i32, %c0_i32_0 : i32, i32, i32
  }
}

module attributes {stable_mosaic.version = 11 : i64} {
  func.func @_bn_add_relu_kernel(%arg0: i32, %arg1: memref<1x8x8x128xbf16, #tpu.memory_space<vmem>>, %arg2: memref<1x8x8x128xf32, #tpu.memory_space<vmem>>, %arg3: memref<1x128xf32, #tpu.memory_space<vmem>>, %arg4: memref<1x128xf32, #tpu.memory_space<vmem>>, %arg5: memref<1x8x8x128xf32, #tpu.memory_space<vmem>>) attributes {dimension_semantics = [#tpu.dimension_semantics<parallel>], iteration_bounds = array<i64: 2>, scalar_prefetch = 0 : i64, scratch_operands = 0 : i64, tpu.core_type = #tpu.core_type<tc>, window_params = [{transform_indices = @transform_0, window_bounds = array<i64: 1, 8, 8, 128>}, {transform_indices = @transform_1, window_bounds = array<i64: 1, 8, 8, 128>}, {pipeline_mode = #tpu.pipeline_mode<synchronous>, transform_indices = @transform_2, window_bounds = array<i64: 1, 128>}, {pipeline_mode = #tpu.pipeline_mode<synchronous>, transform_indices = @transform_3, window_bounds = array<i64: 1, 128>}, {transform_indices = @transform_4, window_bounds = array<i64: 1, 8, 8, 128>}]} {
    %c0 = arith.constant 0 : index
    %c0_0 = arith.constant 0 : index
    %c0_1 = arith.constant 0 : index
    %c0_2 = arith.constant 0 : index
    %0 = vector.load %arg1[%c0, %c0_0, %c0_1, %c0_2] : memref<1x8x8x128xbf16, #tpu.memory_space<vmem>>, vector<1x8x8x128xbf16>
    %1 = arith.extf %0 : vector<1x8x8x128xbf16> to vector<1x8x8x128xf32>
    %c0_3 = arith.constant 0 : index
    %c0_4 = arith.constant 0 : index
    %2 = vector.load %arg3[%c0_3, %c0_4] : memref<1x128xf32, #tpu.memory_space<vmem>>, vector<1x128xf32>
    %3 = vector.shape_cast %2 : vector<1x128xf32> to vector<1x1x1x128xf32>
    %4 = vector.broadcast %3 : vector<1x1x1x128xf32> to vector<1x8x8x128xf32>
    %5 = arith.mulf %1, %4 : vector<1x8x8x128xf32>
    %c0_5 = arith.constant 0 : index
    %c0_6 = arith.constant 0 : index
    %6 = vector.load %arg4[%c0_5, %c0_6] : memref<1x128xf32, #tpu.memory_space<vmem>>, vector<1x128xf32>
    %7 = vector.shape_cast %6 : vector<1x128xf32> to vector<1x1x1x128xf32>
    %8 = vector.broadcast %7 : vector<1x1x1x128xf32> to vector<1x8x8x128xf32>
    %9 = arith.addf %5, %8 : vector<1x8x8x128xf32>
    %c0_7 = arith.constant 0 : index
    %c0_8 = arith.constant 0 : index
    %c0_9 = arith.constant 0 : index
    %c0_10 = arith.constant 0 : index
    %10 = vector.load %arg2[%c0_7, %c0_8, %c0_9, %c0_10] : memref<1x8x8x128xf32, #tpu.memory_space<vmem>>, vector<1x8x8x128xf32>
    %11 = arith.addf %9, %10 : vector<1x8x8x128xf32>
    %cst = arith.constant 0.000000e+00 : f32
    %12 = vector.broadcast %cst : f32 to vector<1x8x8x128xf32>
    %13 = arith.maximumf %11, %12 : vector<1x8x8x128xf32>
    %c0_11 = arith.constant 0 : index
    %c0_12 = arith.constant 0 : index
    %c0_13 = arith.constant 0 : index
    %c0_14 = arith.constant 0 : index
    %14 = vector.load %arg5[%c0_11, %c0_12, %c0_13, %c0_14] : memref<1x8x8x128xf32, #tpu.memory_space<vmem>>, vector<1x8x8x128xf32>
    tpu.vector_store %arg5[%c0_11, %c0_12, %c0_13, %c0_14], %13 {strides = array<i32>} : memref<1x8x8x128xf32, #tpu.memory_space<vmem>>, vector<1x8x8x128xf32>,
    return
  }
  func.func @transform_0(%arg0: i32) -> (i32, i32, i32, i32) {
    %c0_i32 = arith.constant 0 : i32
    %c0_i32_0 = arith.constant 0 : i32
    %c0_i32_1 = arith.constant 0 : i32
    %c0_i32_2 = arith.constant 0 : i32
    return %arg0, %c0_i32, %c0_i32_0, %c0_i32_1 : i32, i32, i32, i32
  }
  func.func @transform_1(%arg0: i32) -> (i32, i32, i32, i32) {
    %c0_i32 = arith.constant 0 : i32
    %c0_i32_0 = arith.constant 0 : i32
    %c0_i32_1 = arith.constant 0 : i32
    %c0_i32_2 = arith.constant 0 : i32
    return %arg0, %c0_i32, %c0_i32_0, %c0_i32_1 : i32, i32, i32, i32
  }
  func.func @transform_2(%arg0: i32) -> (i32, i32) {
    %c0_i32 = arith.constant 0 : i32
    %c0_i32_0 = arith.constant 0 : i32
    %c0_i32_1 = arith.constant 0 : i32
    return %c0_i32, %c0_i32_0 : i32, i32
  }
  func.func @transform_3(%arg0: i32) -> (i32, i32) {
    %c0_i32 = arith.constant 0 : i32
    %c0_i32_0 = arith.constant 0 : i32
    %c0_i32_1 = arith.constant 0 : i32
    return %c0_i32, %c0_i32_0 : i32, i32
  }
  func.func @transform_4(%arg0: i32) -> (i32, i32, i32, i32) {
    %c0_i32 = arith.constant 0 : i32
    %c0_i32_0 = arith.constant 0 : i32
    %c0_i32_1 = arith.constant 0 : i32
    %c0_i32_2 = arith.constant 0 : i32
    return %arg0, %c0_i32, %c0_i32_0, %c0_i32_1 : i32, i32, i32, i32
  }
}

</mosaic_0001>

<llo_original>
// kernel: tile.23
$region0: #{tile.23}
  #allocation0 [shape = 's32[1]{0}', space=sflag, size = 0x4, scoped, tag = 'scoped memory for tile.23']
  %s0 = inlined_call_operand.vmem [shape: f32[8], index: 0, kind: input, shape index: {}]
  %s1 = inlined_call_operand.vmem [shape: f32[16,8], index: 1, kind: output, shape index: {}]
  // Predicated region
  $region2: #{tile.23} parent=0 // pred_check
    _
  $region3: #{tile.23} parent=0 // pred_check_branch
    %3 = sbr.rel (0) target = $region5
  $region4: #{tile.23} parent=0 // pred_region
    _
  $region5: #{tile.23} parent=0 // pred_fallthru
    _
  %v4 = vld [vmem:[%s0] ss:$0 sm:$0xff]
  %5 = vst [vmem:[%s1] sm:$0xff] %v4
  %s6 = scalar_lea.vmem %s1, 8
  %7 = vst [vmem:[%s6] sm:$0xff] %v4

// kernel: tile.24
$region0: #{tile.24}
  %s0 = inlined_call_operand.vmem [shape: f32[16,8], index: 0, kind: input, shape index: {}]
  %s1 = inlined_call_operand.vmem [shape: f32[1,128], index: 1, kind: output, shape index: {}]
  $region1: #{tile.24} parent=0
    #allocation0 [shape = 'u8[4096]{0}', space=vmem, size = 0x1000, scoped, tag = 'scoped mem for output reshape']
    %v2 = vld [vmem:[%s0] sm:$0x1]
    %vm3 = vcmask 64512
    %4 = vst.msk [vmem:[#allocation0] sm:$0x1] %vm3, %v2
    %s5 = scalar_lea.vmem %s0, 15
    %v6 = vld [vmem:[%s5] sm:$0x1]
    %7 = vrot.lane.b32.xlu0 %v6, 120
    %v8 = vpop.permute.xlu0 %7
    %vm9 = vcmask 1048512
    %10 = vst.msk [vmem:[#allocation0] sm:$0x1] %vm9, %v8
    %s11 = scalar_lea.vmem %s0, 14
    %v12 = vld [vmem:[%s11] sm:$0x1]
    %13 = vrot.lane.b32.xlu0 %v12, 112
    %v14 = vpop.permute.xlu0 %13
    %vm15 = vcmask 982912
    %16 = vst.msk [vmem:[#allocation0] sm:$0x1] %vm15, %v14
    %s17 = scalar_lea.vmem %s0, 13
    %v18 = vld [vmem:[%s17] sm:$0x1]
    %19 = vrot.lane.b32.xlu0 %v18, 104
    %v20 = vpop.permute.xlu0 %19
    %vm21 = vcmask 917312
    %22 = vst.msk [vmem:[#allocation0] sm:$0x1] %vm21, %v20
    %s23 = scalar_lea.vmem %s0, 12
    %v24 = vld [vmem:[%s23] sm:$0x1]
    %25 = vrot.lane.b32.xlu0 %v24, 96
    %v26 = vpop.permute.xlu0 %25
    %vm27 = vcmask 851712
    %28 = vst.msk [vmem:[#allocation0] sm:$0x1] %vm27, %v26
    %s29 = scalar_lea.vmem %s0, 11
    %v30 = vld [vmem:[%s29] sm:$0x1]
    %31 = vrot.lane.b32.xlu0 %v30, 88
    %v32 = vpop.permute.xlu0 %31
    %vm33 = vcmask 786112
    %34 = vst.msk [vmem:[#allocation0] sm:$0x1] %vm33, %v32
    %s35 = scalar_lea.vmem %s0, 10
    %v36 = vld [vmem:[%s35] sm:$0x1]
    %37 = vrot.lane.b32.xlu0 %v36, 80
    %v38 = vpop.permute.xlu0 %37
    %vm39 = vcmask 720512
    %40 = vst.msk [vmem:[#allocation0] sm:$0x1] %vm39, %v38
    %s41 = scalar_lea.vmem %s0, 9
    %v42 = vld [vmem:[%s41] sm:$0x1]
    %43 = vrot.lane.b32.xlu0 %v42, 72
    %v44 = vpop.permute.xlu0 %43
    %vm45 = vcmask 654912
    %46 = vst.msk [vmem:[#allocation0] sm:$0x1] %vm45, %v44
    %s47 = scalar_lea.vmem %s0, 8
    %v48 = vld [vmem:[%s47] sm:$0x1]
    %49 = vrot.lane.b32.xlu0 %v48, 64
    %v50 = vpop.permute.xlu0 %49
    %vm51 = vcmask 589312
    %52 = vst.msk [vmem:[#allocation0] sm:$0x1] %vm51, %v50
    %s53 = scalar_lea.vmem %s0, 7
    %v54 = vld [vmem:[%s53] sm:$0x1]
    %55 = vrot.lane.b32.xlu0 %v54, 56
    %v56 = vpop.permute.xlu0 %55
    %vm57 = vcmask 523712
    %58 = vst.msk [vmem:[#allocation0] sm:$0x1] %vm57, %v56
    %s59 = scalar_lea.vmem %s0, 6
    %v60 = vld [vmem:[%s59] sm:$0x1]
    %61 = vrot.lane.b32.xlu0 %v60, 48
    %v62 = vpop.permute.xlu0 %61
    %vm63 = vcmask 458112
    %64 = vst.msk [vmem:[#allocation0] sm:$0x1] %vm63, %v62
    %s65 = scalar_lea.vmem %s0, 5
    %v66 = vld [vmem:[%s65] sm:$0x1]
    %67 = vrot.lane.b32.xlu0 %v66, 40
    %v68 = vpop.permute.xlu0 %67
    %vm69 = vcmask 392512
    %70 = vst.msk [vmem:[#allocation0] sm:$0x1] %vm69, %v68
    %s71 = scalar_lea.vmem %s0, 4
    %v72 = vld [vmem:[%s71] sm:$0x1]
    %73 = vrot.lane.b32.xlu0 %v72, 32
    %v74 = vpop.permute.xlu0 %73
    %vm75 = vcmask 326912
    %76 = vst.msk [vmem:[#allocation0] sm:$0x1] %vm75, %v74
    %s77 = scalar_lea.vmem %s0, 3
    %v78 = vld [vmem:[%s77] sm:$0x1]
    %79 = vrot.lane.b32.xlu0 %v78, 24
    %v80 = vpop.permute.xlu0 %79
    %vm81 = vcmask 261312
    %82 = vst.msk [vmem:[#allocation0] sm:$0x1] %vm81, %v80
    %s83 = scalar_lea.vmem %s0, 2
    %v84 = vld [vmem:[%s83] sm:$0x1]
    %85 = vrot.lane.b32.xlu0 %v84, 16
    %v86 = vpop.permute.xlu0 %85
    %vm87 = vcmask 195712
    %88 = vst.msk [vmem:[#allocation0] sm:$0x1] %vm87, %v86
    %s89 = scalar_lea.vmem %s0, 1
    %v90 = vld [vmem:[%s89] sm:$0x1]
    %91 = vrot.lane.b32.xlu0 %v90, 8
    %v92 = vpop.permute.xlu0 %91
    %vm93 = vcmask 130112
    %94 = vst.msk [vmem:[#allocation0] sm:$0x1] %vm93, %v92
    %s96 = ssub.s32 2, 1
    %v97 = vld [vmem:[#allocation0] sm:%s96]
    %s99 = ssub.s32 2, 1
    %100 = vst [vmem:[%s1] sm:%s99] %v97

// kernel: basic_block_forward.3
$region0: #{basic_block_forward.3}
  #allocation0 [shape = 'u32[]', space=smem, size = 0x4, offset = 0x4, fixed_abs, tag = 'smem constant byte address 0x4 - core index']
  #allocation1 [shape = 'u32[72,128]{1,0:T(1,128)}', space=vmem, size = 0x9000, scoped, tag = 'internal scratch']
  #allocation2 [shape = 'bf16[2,10,10,128]{3,2,1,0:T(8,128)(2,1)}', space=vmem, size = 0x14000, scoped, tag = 'scratch operand']
  #allocation3 [shape = 'bf16[128,1152]{1,0:T(8,128)(2,1)}', space=vmem, size = 0x48000, scoped, tag = 'scratch operand']
  %s0 = inlined_call_operand.vmem [shape: f32[2,8,8,128], index: 0, kind: input, shape index: {}]
  %s1 = inlined_call_operand.vmem [shape: bf16[1152,128], index: 1, kind: input, shape index: {}]
  %s2 = inlined_call_operand.vmem [shape: bf16[2,8,8,128], index: 2, kind: output, shape index: {0}]
  %s3 = inlined_call_operand.vmem [shape: f32[1,2,128], index: 3, kind: output, shape index: {1}]
  %4 = xla_tuple %s2, %s3
  %s5 = sld [smem:[#allocation0]]
  $region26: #{basic_block_forward.3} parent=0
    _
  %s7 = ssub.s32 1, %s5
  %s8 = scalar_select 0, %s7, %s5
  // Predicated region
  $region2: #{basic_block_forward.3} parent=0 // pred_check
    _
  $region3: #{basic_block_forward.3} parent=0 // pred_check_branch
    %10 = sbr.rel (0) target = $region5
  $region4: #{basic_block_forward.3} parent=0 // pred_region
    _
  $region5: #{basic_block_forward.3} parent=0 // pred_fallthru
    _
  // Predicated region
  $region6: #{basic_block_forward.3} parent=0 // pred_check
    _
  $region7: #{basic_block_forward.3} parent=0 // pred_check_branch
    %12 = sbr.rel (0) target = $region9
  $region8: #{basic_block_forward.3} parent=0 // pred_region
    _
  $region9: #{basic_block_forward.3} parent=0 // pred_fallthru
    _
  %14 = vst [vmem:[#allocation2] sm:$0xf] 0
  %15 = vst [vmem:[#allocation2 + $0x4] sm:$0x1] 0
  %16 = vst [vmem:[#allocation2 + $0x8] sm:$0xf] 0
  %17 = vst [vmem:[#allocation2 + $0xc] sm:$0x1] 0
  %18 = vst [vmem:[#allocation2 + $0x10] sm:$0xf] 0
  %19 = vst [vmem:[#allocation2 + $0x14] sm:$0x1] 0
  %20 = vst [vmem:[#allocation2 + $0x18] sm:$0xf] 0
  %21 = vst [vmem:[#allocation2 + $0x1c] sm:$0x1] 0
  %22 = vst [vmem:[#allocation2 + $0x20] sm:$0xf] 0
  %23 = vst [vmem:[#allocation2 + $0x24] sm:$0x1] 0
  %24 = vst [vmem:[#allocation2 + $0x28] sm:$0xf] 0
  %25 = vst [vmem:[#allocation2 + $0x2c] sm:$0x1] 0
  %26 = vst [vmem:[#allocation2 + $0x30] sm:$0xf] 0
  %27 = vst [vmem:[#allocation2 + $0x34] sm:$0x1] 0
  %28 = vst [vmem:[#allocation2 + $0x38] sm:$0xf] 0
  %29 = vst [vmem:[#allocation2 + $0x3c] sm:$0x1] 0
  %30 = vst [vmem:[#allocation2 + $0x40] sm:$0xf] 0
  %31 = vst [vmem:[#allocation2 + $0x44] sm:$0x1] 0
  %32 = vst [vmem:[#allocation2 + $0x48] sm:$0xf] 0
  %33 = vst [vmem:[#allocation2 + $0x4c] sm:$0x1] 0
  %34 = vst [vmem:[#allocation2 + $0x50] sm:$0xf] 0
  %35 = vst [vmem:[#allocation2 + $0x54] sm:$0x1] 0
  %36 = vst [vmem:[#allocation2 + $0x58] sm:$0xf] 0
  %37 = vst [vmem:[#allocation2 + $0x5c] sm:$0x1] 0
  %38 = vst [vmem:[#allocation2 + $0x60] sm:$0xf] 0
  %39 = vst [vmem:[#allocation2 + $0x64] sm:$0x1] 0
  %40 = vst [vmem:[#allocation2 + $0x68] sm:$0xf] 0
  %41 = vst [vmem:[#allocation2 + $0x6c] sm:$0x1] 0
  %42 = vst [vmem:[#allocation2 + $0x70] sm:$0xf] 0
  %43 = vst [vmem:[#allocation2 + $0x74] sm:$0x1] 0
  %44 = vst [vmem:[#allocation2 + $0x78] sm:$0xf] 0
  %45 = vst [vmem:[#allocation2 + $0x7c] sm:$0x1] 0
  %46 = vst [vmem:[#allocation2 + $0x80] sm:$0xf] 0
  %47 = vst [vmem:[#allocation2 + $0x84] sm:$0x1] 0
  %48 = vst [vmem:[#allocation2 + $0x88] sm:$0xf] 0
  %49 = vst [vmem:[#allocation2 + $0x8c] sm:$0x1] 0
  %50 = vst [vmem:[#allocation2 + $0x90] sm:$0xf] 0
  %51 = vst [vmem:[#allocation2 + $0x94] sm:$0x1] 0
  %52 = vst [vmem:[#allocation2 + $0x98] sm:$0xf] 0
  %53 = vst [vmem:[#allocation2 + $0x9c] sm:$0x1] 0
  %v54 = vld [vmem:[%s0] sm:$0xff]
  %v55 = vld [vmem:[%s0 + $0x8] sm:$0xff]
  %v56 = vld [vmem:[%s0 + $0x10] sm:$0xff]
  %v57 = vld [vmem:[%s0 + $0x18] sm:$0xff]
  %v58 = vld [vmem:[%s0 + $0x20] sm:$0xff]
  %v59 = vld [vmem:[%s0 + $0x28] sm:$0xff]
  %v60 = vld [vmem:[%s0 + $0x30] sm:$0xff]
  %v61 = vld [vmem:[%s0 + $0x38] sm:$0xff]
  %v62 = vld [vmem:[%s0 + $0x40] sm:$0xff]
  %v63 = vld [vmem:[%s0 + $0x48] sm:$0xff]
  %v64 = vld [vmem:[%s0 + $0x50] sm:$0xff]
  %v65 = vld [vmem:[%s0 + $0x58] sm:$0xff]
  %v66 = vld [vmem:[%s0 + $0x60] sm:$0xff]
  %v67 = vld [vmem:[%s0 + $0x68] sm:$0xff]
  %v68 = vld [vmem:[%s0 + $0x70] sm:$0xff]
  %v69 = vld [vmem:[%s0 + $0x78] sm:$0xff]
  %v70 = vpack.c.bf16 %v54, %v54
  %v71 = vpack.c.bf16 %v55, %v55
  %v72 = vpack.c.bf16 %v56, %v56
  %v73 = vpack.c.bf16 %v57, %v57
  %v74 = vpack.c.bf16 %v58, %v58
  %v75 = vpack.c.bf16 %v59, %v59
  %v76 = vpack.c.bf16 %v60, %v60
  %v77 = vpack.c.bf16 %v61, %v61
  %v78 = vpack.c.bf16 %v62, %v62
  %v79 = vpack.c.bf16 %v63, %v63
  %v80 = vpack.c.bf16 %v64, %v64
  %v81 = vpack.c.bf16 %v65, %v65
  %v82 = vpack.c.bf16 %v66, %v66
  %v83 = vpack.c.bf16 %v67, %v67
  %v84 = vpack.c.bf16 %v68, %v68
  %v85 = vpack.c.bf16 %v69, %v69
  %v87 = vshrl.u32 %v70, 16
  %v89 = vrot.slane %v87, 7
  %v90 = vshll.u32 %v70, 16
  %v92 = vor.u32 %v89, %v90
  %v93 = vrot.slane %v89, 4
  %v95 = vshrl.u32 %v71, 16
  %v97 = vrot.slane %v95, 7
  %v98 = vshll.u32 %v71, 16
  %v100 = vor.u32 %v97, %v98
  %v101 = vrot.slane %v97, 4
  %v103 = vshrl.u32 %v72, 16
  %v105 = vrot.slane %v103, 7
  %v106 = vshll.u32 %v72, 16
  %v108 = vor.u32 %v105, %v106
  %v109 = vrot.slane %v105, 4
  %v111 = vshrl.u32 %v73, 16
  %v113 = vrot.slane %v111, 7
  %v114 = vshll.u32 %v73, 16
  %v116 = vor.u32 %v113, %v114
  %v117 = vrot.slane %v113, 4
  %v119 = vshrl.u32 %v74, 16
  %v121 = vrot.slane %v119, 7
  %v122 = vshll.u32 %v74, 16
  %v124 = vor.u32 %v121, %v122
  %v125 = vrot.slane %v121, 4
  %v127 = vshrl.u32 %v75, 16
  %v129 = vrot.slane %v127, 7
  %v130 = vshll.u32 %v75, 16
  %v132 = vor.u32 %v129, %v130
  %v133 = vrot.slane %v129, 4
  %v135 = vshrl.u32 %v76, 16
  %v137 = vrot.slane %v135, 7
  %v138 = vshll.u32 %v76, 16
  %v140 = vor.u32 %v137, %v138
  %v141 = vrot.slane %v137, 4
  %v143 = vshrl.u32 %v77, 16
  %v145 = vrot.slane %v143, 7
  %v146 = vshll.u32 %v77, 16
  %v148 = vor.u32 %v145, %v146
  %v149 = vrot.slane %v145, 4
  %v151 = vshrl.u32 %v78, 16
  %v153 = vrot.slane %v151, 7
  %v154 = vshll.u32 %v78, 16
  %v156 = vor.u32 %v153, %v154
  %v157 = vrot.slane %v153, 4
  %v159 = vshrl.u32 %v79, 16
  %v161 = vrot.slane %v159, 7
  %v162 = vshll.u32 %v79, 16
  %v164 = vor.u32 %v161, %v162
  %v165 = vrot.slane %v161, 4
  %v167 = vshrl.u32 %v80, 16
  %v169 = vrot.slane %v167, 7
  %v170 = vshll.u32 %v80, 16
  %v172 = vor.u32 %v169, %v170
  %v173 = vrot.slane %v169, 4
  %v175 = vshrl.u32 %v81, 16
  %v177 = vrot.slane %v175, 7
  %v178 = vshll.u32 %v81, 16
  %v180 = vor.u32 %v177, %v178
  %v181 = vrot.slane %v177, 4
  %v183 = vshrl.u32 %v82, 16
  %v185 = vrot.slane %v183, 7
  %v186 = vshll.u32 %v82, 16
  %v188 = vor.u32 %v185, %v186
  %v189 = vrot.slane %v185, 4
  %v191 = vshrl.u32 %v83, 16
  %v193 = vrot.slane %v191, 7
  %v194 = vshll.u32 %v83, 16
  %v196 = vor.u32 %v193, %v194
  %v197 = vrot.slane %v193, 4
  %v199 = vshrl.u32 %v84, 16
  %v201 = vrot.slane %v199, 7
  %v202 = vshll.u32 %v84, 16
  %v204 = vor.u32 %v201, %v202
  %v205 = vrot.slane %v201, 4
  %v207 = vshrl.u32 %v85, 16
  %v209 = vrot.slane %v207, 7
  %v210 = vshll.u32 %v85, 16
  %v212 = vor.u32 %v209, %v210
  %v213 = vrot.slane %v209, 4
  %s246 = scalar_lea.vmem [#allocation2], 8
  %vm247 = vcmask 1043456
  %vm248 = vsmask.f32 7938
  %vm249 = vmand %vm247, %vm248
  %v250 = vld [vmem:[%s246] sm:$0xf]
  %v251 = vsel %vm249, %v92, %v250
  %252 = vst [vmem:[%s246] sm:$0xf] %v251
  %vm253 = vcmask 1040384
  %vm254 = vsmask.f32 256
  %vm255 = vmand %vm253, %vm254
  %v256 = vld [vmem:[%s246 + $0x4] sm:$0x1]
  %v257 = vsel %vm255, %v93, %v256
  %258 = vst [vmem:[%s246 + $0x4] sm:$0x1] %v257
  %v259 = vld [vmem:[%s246 + $0x8] sm:$0xf]
  %v260 = vsel %vm249, %v100, %v259
  %261 = vst [vmem:[%s246 + $0x8] sm:$0xf] %v260
  %v262 = vld [vmem:[%s246 + $0xc] sm:$0x1]
  %v263 = vsel %vm255, %v101, %v262
  %264 = vst [vmem:[%s246 + $0xc] sm:$0x1] %v263
  %v265 = vld [vmem:[%s246 + $0x10] sm:$0xf]
  %v266 = vsel %vm249, %v108, %v265
  %267 = vst [vmem:[%s246 + $0x10] sm:$0xf] %v266
  %v268 = vld [vmem:[%s246 + $0x14] sm:$0x1]
  %v269 = vsel %vm255, %v109, %v268
  %270 = vst [vmem:[%s246 + $0x14] sm:$0x1] %v269
  %v271 = vld [vmem:[%s246 + $0x18] sm:$0xf]
  %v272 = vsel %vm249, %v116, %v271
  %273 = vst [vmem:[%s246 + $0x18] sm:$0xf] %v272
  %v274 = vld [vmem:[%s246 + $0x1c] sm:$0x1]
  %v275 = vsel %vm255, %v117, %v274
  %276 = vst [vmem:[%s246 + $0x1c] sm:$0x1] %v275
  %v277 = vld [vmem:[%s246 + $0x20] sm:$0xf]
  %v278 = vsel %vm249, %v124, %v277
  %279 = vst [vmem:[%s246 + $0x20] sm:$0xf] %v278
  %v280 = vld [vmem:[%s246 + $0x24] sm:$0x1]
  %v281 = vsel %vm255, %v125, %v280
  %282 = vst [vmem:[%s246 + $0x24] sm:$0x1] %v281
  %v283 = vld [vmem:[%s246 + $0x28] sm:$0xf]
  %v284 = vsel %vm249, %v132, %v283
  %285 = vst [vmem:[%s246 + $0x28] sm:$0xf] %v284
  %v286 = vld [vmem:[%s246 + $0x2c] sm:$0x1]
  %v287 = vsel %vm255, %v133, %v286
  %288 = vst [vmem:[%s246 + $0x2c] sm:$0x1] %v287
  %v289 = vld [vmem:[%s246 + $0x30] sm:$0xf]
  %v290 = vsel %vm249, %v140, %v289
  %291 = vst [vmem:[%s246 + $0x30] sm:$0xf] %v290
  %v292 = vld [vmem:[%s246 + $0x34] sm:$0x1]
  %v293 = vsel %vm255, %v141, %v292
  %294 = vst [vmem:[%s246 + $0x34] sm:$0x1] %v293
  %v295 = vld [vmem:[%s246 + $0x38] sm:$0xf]
  %v296 = vsel %vm249, %v148, %v295
  %297 = vst [vmem:[%s246 + $0x38] sm:$0xf] %v296
  %v298 = vld [vmem:[%s246 + $0x3c] sm:$0x1]
  %v299 = vsel %vm255, %v149, %v298
  %300 = vst [vmem:[%s246 + $0x3c] sm:$0x1] %v299
  %v301 = vld [vmem:[%s246 + $0x50] sm:$0xf]
  %v302 = vsel %vm249, %v156, %v301
  %303 = vst [vmem:[%s246 + $0x50] sm:$0xf] %v302
  %v304 = vld [vmem:[%s246 + $0x54] sm:$0x1]
  %v305 = vsel %vm255, %v157, %v304
  %306 = vst [vmem:[%s246 + $0x54] sm:$0x1] %v305
  %v307 = vld [vmem:[%s246 + $0x58] sm:$0xf]
  %v308 = vsel %vm249, %v164, %v307
  %309 = vst [vmem:[%s246 + $0x58] sm:$0xf] %v308
  %v310 = vld [vmem:[%s246 + $0x5c] sm:$0x1]
  %v311 = vsel %vm255, %v165, %v310
  %312 = vst [vmem:[%s246 + $0x5c] sm:$0x1] %v311
  %v313 = vld [vmem:[%s246 + $0x60] sm:$0xf]
  %v314 = vsel %vm249, %v172, %v313
  %315 = vst [vmem:[%s246 + $0x60] sm:$0xf] %v314
  %v316 = vld [vmem:[%s246 + $0x64] sm:$0x1]
  %v317 = vsel %vm255, %v173, %v316
  %318 = vst [vmem:[%s246 + $0x64] sm:$0x1] %v317
  %v319 = vld [vmem:[%s246 + $0x68] sm:$0xf]
  %v320 = vsel %vm249, %v180, %v319
  %321 = vst [vmem:[%s246 + $0x68] sm:$0xf] %v320
  %v322 = vld [vmem:[%s246 + $0x6c] sm:$0x1]
  %v323 = vsel %vm255, %v181, %v322
  %324 = vst [vmem:[%s246 + $0x6c] sm:$0x1] %v323
  %v325 = vld [vmem:[%s246 + $0x70] sm:$0xf]
  %v326 = vsel %vm249, %v188, %v325
  %327 = vst [vmem:[%s246 + $0x70] sm:$0xf] %v326
  %v328 = vld [vmem:[%s246 + $0x74] sm:$0x1]
  %v329 = vsel %vm255, %v189, %v328
  %330 = vst [vmem:[%s246 + $0x74] sm:$0x1] %v329
  %v331 = vld [vmem:[%s246 + $0x78] sm:$0xf]
  %v332 = vsel %vm249, %v196, %v331
  %333 = vst [vmem:[%s246 + $0x78] sm:$0xf] %v332
  %v334 = vld [vmem:[%s246 + $0x7c] sm:$0x1]
  %v335 = vsel %vm255, %v197, %v334
  %336 = vst [vmem:[%s246 + $0x7c] sm:$0x1] %v335
  %v337 = vld [vmem:[%s246 + $0x80] sm:$0xf]
  %v338 = vsel %vm249, %v204, %v337
  %339 = vst [vmem:[%s246 + $0x80] sm:$0xf] %v338
  %v340 = vld [vmem:[%s246 + $0x84] sm:$0x1]
  %v341 = vsel %vm255, %v205, %v340
  %342 = vst [vmem:[%s246 + $0x84] sm:$0x1] %v341
  %v343 = vld [vmem:[%s246 + $0x88] sm:$0xf]
  %v344 = vsel %vm249, %v212, %v343
  %345 = vst [vmem:[%s246 + $0x88] sm:$0xf] %v344
  %v346 = vld [vmem:[%s246 + $0x8c] sm:$0x1]
  %v347 = vsel %vm255, %v213, %v346
  %348 = vst [vmem:[%s246 + $0x8c] sm:$0x1] %v347
  %v349 = vld [vmem:[#allocation2] sm:$0xf]
  %v350 = vld [vmem:[#allocation2 + $0x8] sm:$0xf]
  %v351 = vld [vmem:[#allocation2 + $0x10] sm:$0xf]
  %v352 = vld [vmem:[#allocation2 + $0x18] sm:$0xf]
  %v353 = vld [vmem:[#allocation2 + $0x20] sm:$0xf]
  %v354 = vld [vmem:[#allocation2 + $0x28] sm:$0xf]
  %v355 = vld [vmem:[#allocation2 + $0x30] sm:$0xf]
  %v356 = vld [vmem:[#allocation2 + $0x38] sm:$0xf]
  %357 = vst [vmem:[#allocation3] sm:$0xf] %v349
  %358 = vst [vmem:[#allocation3 + $0x24] sm:$0xf] %v350
  %359 = vst [vmem:[#allocation3 + $0x48] sm:$0xf] %v351
  %360 = vst [vmem:[#allocation3 + $0x6c] sm:$0xf] %v352
  %361 = vst [vmem:[#allocation3 + $0x90] sm:$0xf] %v353
  %362 = vst [vmem:[#allocation3 + $0xb4] sm:$0xf] %v354
  %363 = vst [vmem:[#allocation3 + $0xd8] sm:$0xf] %v355
  %364 = vst [vmem:[#allocation3 + $0xfc] sm:$0xf] %v356
  %v365 = vld [vmem:[#allocation2] sm:$0xf]
  %v366 = vld [vmem:[#allocation2 + $0x4] sm:$0x1]
  %v367 = vld [vmem:[#allocation2 + $0x8] sm:$0xf]
  %v368 = vld [vmem:[#allocation2 + $0xc] sm:$0x1]
  %v369 = vld [vmem:[#allocation2 + $0x10] sm:$0xf]
  %v370 = vld [vmem:[#allocation2 + $0x14] sm:$0x1]
  %v371 = vld [vmem:[#allocation2 + $0x18] sm:$0xf]
  %v372 = vld [vmem:[#allocation2 + $0x1c] sm:$0x1]
  %v373 = vld [vmem:[#allocation2 + $0x20] sm:$0xf]
  %v374 = vld [vmem:[#allocation2 + $0x24] sm:$0x1]
  %v375 = vld [vmem:[#allocation2 + $0x28] sm:$0xf]
  %v376 = vld [vmem:[#allocation2 + $0x2c] sm:$0x1]
  %v377 = vld [vmem:[#allocation2 + $0x30] sm:$0xf]
  %v378 = vld [vmem:[#allocation2 + $0x34] sm:$0x1]
  %v379 = vld [vmem:[#allocation2 + $0x38] sm:$0xf]
  %v380 = vld [vmem:[#allocation2 + $0x3c] sm:$0x1]
  %vm381 = vsmask.f32 3328
  %vm382 = vsmask.f32 7440
  %vm383 = vmor %vm381, %vm382
  %v385 = vshrl.u32 %v365, 16
  %v387 = vrot.slane %v385, 4
  %v388 = vshll.u32 %v365, 16
  %v390 = vrot.slane %v388, 5
  %v391 = vor.u32 %v387, %v390
  %v392 = vrot.slane %v391, 4
  %v394 = vshll.u32 %v366, 16
  %v396 = vrot.slane %v394, 5
  %v397 = vsel %vm383, %v392, %v396
  %v399 = vshrl.u32 %v367, 16
  %v401 = vrot.slane %v399, 4
  %v402 = vshll.u32 %v367, 16
  %v404 = vrot.slane %v402, 5
  %v405 = vor.u32 %v401, %v404
  %v406 = vrot.slane %v405, 4
  %v408 = vshll.u32 %v368, 16
  %v410 = vrot.slane %v408, 5
  %v411 = vsel %vm383, %v406, %v410
  %v413 = vshrl.u32 %v369, 16
  %v415 = vrot.slane %v413, 4
  %v416 = vshll.u32 %v369, 16
  %v418 = vrot.slane %v416, 5
  %v419 = vor.u32 %v415, %v418
  %v420 = vrot.slane %v419, 4
  %v422 = vshll.u32 %v370, 16
  %v424 = vrot.slane %v422, 5
  %v425 = vsel %vm383, %v420, %v424
  %v427 = vshrl.u32 %v371, 16
  %v429 = vrot.slane %v427, 4
  %v430 = vshll.u32 %v371, 16
  %v432 = vrot.slane %v430, 5
  %v433 = vor.u32 %v429, %v432
  %v434 = vrot.slane %v433, 4
  %v436 = vshll.u32 %v372, 16
  %v438 = vrot.slane %v436, 5
  %v439 = vsel %vm383, %v434, %v438
  %v441 = vshrl.u32 %v373, 16
  %v443 = vrot.slane %v441, 4
  %v444 = vshll.u32 %v373, 16
  %v446 = vrot.slane %v444, 5
  %v447 = vor.u32 %v443, %v446
  %v448 = vrot.slane %v447, 4
  %v450 = vshll.u32 %v374, 16
  %v452 = vrot.slane %v450, 5
  %v453 = vsel %vm383, %v448, %v452
  %v455 = vshrl.u32 %v375, 16
  %v457 = vrot.slane %v455, 4
  %v458 = vshll.u32 %v375, 16
  %v460 = vrot.slane %v458, 5
  %v461 = vor.u32 %v457, %v460
  %v462 = vrot.slane %v461, 4
  %v464 = vshll.u32 %v376, 16
  %v466 = vrot.slane %v464, 5
  %v467 = vsel %vm383, %v462, %v466
  %v469 = vshrl.u32 %v377, 16
  %v471 = vrot.slane %v469, 4
  %v472 = vshll.u32 %v377, 16
  %v474 = vrot.slane %v472, 5
  %v475 = vor.u32 %v471, %v474
  %v476 = vrot.slane %v475, 4
  %v478 = vshll.u32 %v378, 16
  %v480 = vrot.slane %v478, 5
  %v481 = vsel %vm383, %v476, %v480
  %v483 = vshrl.u32 %v379, 16
  %v485 = vrot.slane %v483, 4
  %v486 = vshll.u32 %v379, 16
  %v488 = vrot.slane %v486, 5
  %v489 = vor.u32 %v485, %v488
  %v490 = vrot.slane %v489, 4
  %v492 = vshll.u32 %v380, 16
  %v494 = vrot.slane %v492, 5
  %v495 = vsel %vm383, %v490, %v494
  %504 = vst [vmem:[#allocation3 + $0x4] sm:$0xf] %v397
  %505 = vst [vmem:[#allocation3 + $0x28] sm:$0xf] %v411
  %506 = vst [vmem:[#allocation3 + $0x4c] sm:$0xf] %v425
  %507 = vst [vmem:[#allocation3 + $0x70] sm:$0xf] %v439
  %508 = vst [vmem:[#allocation3 + $0x94] sm:$0xf] %v453
  %509 = vst [vmem:[#allocation3 + $0xb8] sm:$0xf] %v467
  %510 = vst [vmem:[#allocation3 + $0xdc] sm:$0xf] %v481
  %511 = vst [vmem:[#allocation3 + $0x100] sm:$0xf] %v495
  %v512 = vld [vmem:[#allocation2] sm:$0xe]
  %v513 = vld [vmem:[#allocation2 + $0x4] sm:$0x1]
  %v514 = vld [vmem:[#allocation2 + $0x8] sm:$0xe]
  %v515 = vld [vmem:[#allocation2 + $0xc] sm:$0x1]
  %v516 = vld [vmem:[#allocation2 + $0x10] sm:$0xe]
  %v517 = vld [vmem:[#allocation2 + $0x14] sm:$0x1]
  %v518 = vld [vmem:[#allocation2 + $0x18] sm:$0xe]
  %v519 = vld [vmem:[#allocation2 + $0x1c] sm:$0x1]
  %v520 = vld [vmem:[#allocation2 + $0x20] sm:$0xe]
  %v521 = vld [vmem:[#allocation2 + $0x24] sm:$0x1]
  %v522 = vld [vmem:[#allocation2 + $0x28] sm:$0xe]
  %v523 = vld [vmem:[#allocation2 + $0x2c] sm:$0x1]
  %v524 = vld [vmem:[#allocation2 + $0x30] sm:$0xe]
  %v525 = vld [vmem:[#allocation2 + $0x34] sm:$0x1]
  %v526 = vld [vmem:[#allocation2 + $0x38] sm:$0xe]
  %v527 = vld [vmem:[#allocation2 + $0x3c] sm:$0x1]
  %vm544 = vcmask 1042432
  %vm545 = vcmask 1046532
  %vm546 = vmor %vm544, %vm545
  %v547 = vrot.slane %v512, 5
  %v548 = vrot.slane %v547, 4
  %v549 = vrot.slane %v513, 5
  %v550 = vsel %vm546, %v548, %v549
  %v551 = vrot.slane %v514, 5
  %v552 = vrot.slane %v551, 4
  %v553 = vrot.slane %v515, 5
  %v554 = vsel %vm546, %v552, %v553
  %v555 = vrot.slane %v516, 5
  %v556 = vrot.slane %v555, 4
  %v557 = vrot.slane %v517, 5
  %v558 = vsel %vm546, %v556, %v557
  %v559 = vrot.slane %v518, 5
  %v560 = vrot.slane %v559, 4
  %v561 = vrot.slane %v519, 5
  %v562 = vsel %vm546, %v560, %v561
  %v563 = vrot.slane %v520, 5
  %v564 = vrot.slane %v563, 4
  %v565 = vrot.slane %v521, 5
  %v566 = vsel %vm546, %v564, %v565
  %v567 = vrot.slane %v522, 5
  %v568 = vrot.slane %v567, 4
  %v569 = vrot.slane %v523, 5
  %v570 = vsel %vm546, %v568, %v569
  %v571 = vrot.slane %v524, 5
  %v572 = vrot.slane %v571, 4
  %v573 = vrot.slane %v525, 5
  %v574 = vsel %vm546, %v572, %v573
  %v575 = vrot.slane %v526, 5
  %v576 = vrot.slane %v575, 4
  %v577 = vrot.slane %v527, 5
  %v578 = vsel %vm546, %v576, %v577
  %587 = vst [vmem:[#allocation3 + $0x8] sm:$0xf] %v550
  %588 = vst [vmem:[#allocation3 + $0x2c] sm:$0xf] %v554
  %589 = vst [vmem:[#allocation3 + $0x50] sm:$0xf] %v558
  %590 = vst [vmem:[#allocation3 + $0x74] sm:$0xf] %v562
  %591 = vst [vmem:[#allocation3 + $0x98] sm:$0xf] %v566
  %592 = vst [vmem:[#allocation3 + $0xbc] sm:$0xf] %v570
  %593 = vst [vmem:[#allocation3 + $0xe0] sm:$0xf] %v574
  %594 = vst [vmem:[#allocation3 + $0x104] sm:$0xf] %v578
  %v595 = vld [vmem:[%s246] sm:$0xf]
  %v596 = vld [vmem:[%s246 + $0x8] sm:$0xf]
  %v597 = vld [vmem:[%s246 + $0x10] sm:$0xf]
  %v598 = vld [vmem:[%s246 + $0x18] sm:$0xf]
  %v599 = vld [vmem:[%s246 + $0x20] sm:$0xf]
  %v600 = vld [vmem:[%s246 + $0x28] sm:$0xf]
  %v601 = vld [vmem:[%s246 + $0x30] sm:$0xf]
  %v602 = vld [vmem:[%s246 + $0x38] sm:$0xf]
  %603 = vst [vmem:[#allocation3 + $0xc] sm:$0xf] %v595
  %604 = vst [vmem:[#allocation3 + $0x30] sm:$0xf] %v596
  %605 = vst [vmem:[#allocation3 + $0x54] sm:$0xf] %v597
  %606 = vst [vmem:[#allocation3 + $0x78] sm:$0xf] %v598
  %607 = vst [vmem:[#allocation3 + $0x9c] sm:$0xf] %v599
  %608 = vst [vmem:[#allocation3 + $0xc0] sm:$0xf] %v600
  %609 = vst [vmem:[#allocation3 + $0xe4] sm:$0xf] %v601
  %610 = vst [vmem:[#allocation3 + $0x108] sm:$0xf] %v602
  %v611 = vld [vmem:[%s246] sm:$0xf]
  %v612 = vld [vmem:[%s246 + $0x4] sm:$0x1]
  %v613 = vld [vmem:[%s246 + $0x8] sm:$0xf]
  %v614 = vld [vmem:[%s246 + $0xc] sm:$0x1]
  %v615 = vld [vmem:[%s246 + $0x10] sm:$0xf]
  %v616 = vld [vmem:[%s246 + $0x14] sm:$0x1]
  %v617 = vld [vmem:[%s246 + $0x18] sm:$0xf]
  %v618 = vld [vmem:[%s246 + $0x1c] sm:$0x1]
  %v619 = vld [vmem:[%s246 + $0x20] sm:$0xf]
  %v620 = vld [vmem:[%s246 + $0x24] sm:$0x1]
  %v621 = vld [vmem:[%s246 + $0x28] sm:$0xf]
  %v622 = vld [vmem:[%s246 + $0x2c] sm:$0x1]
  %v623 = vld [vmem:[%s246 + $0x30] sm:$0xf]
  %v624 = vld [vmem:[%s246 + $0x34] sm:$0x1]
  %v625 = vld [vmem:[%s246 + $0x38] sm:$0xf]
  %v626 = vld [vmem:[%s246 + $0x3c] sm:$0x1]
  %v628 = vshrl.u32 %v611, 16
  %v630 = vrot.slane %v628, 4
  %v631 = vshll.u32 %v611, 16
  %v633 = vrot.slane %v631, 5
  %v634 = vor.u32 %v630, %v633
  %v635 = vrot.slane %v634, 4
  %v637 = vshll.u32 %v612, 16
  %v639 = vrot.slane %v637, 5
  %v640 = vsel %vm383, %v635, %v639
  %v642 = vshrl.u32 %v613, 16
  %v644 = vrot.slane %v642, 4
  %v645 = vshll.u32 %v613, 16
  %v647 = vrot.slane %v645, 5
  %v648 = vor.u32 %v644, %v647
  %v649 = vrot.slane %v648, 4
  %v651 = vshll.u32 %v614, 16
  %v653 = vrot.slane %v651, 5
  %v654 = vsel %vm383, %v649, %v653
  %v656 = vshrl.u32 %v615, 16
  %v658 = vrot.slane %v656, 4
  %v659 = vshll.u32 %v615, 16
  %v661 = vrot.slane %v659, 5
  %v662 = vor.u32 %v658, %v661
  %v663 = vrot.slane %v662, 4
  %v665 = vshll.u32 %v616, 16
  %v667 = vrot.slane %v665, 5
  %v668 = vsel %vm383, %v663, %v667
  %v670 = vshrl.u32 %v617, 16
  %v672 = vrot.slane %v670, 4
  %v673 = vshll.u32 %v617, 16
  %v675 = vrot.slane %v673, 5
  %v676 = vor.u32 %v672, %v675
  %v677 = vrot.slane %v676, 4
  %v679 = vshll.u32 %v618, 16
  %v681 = vrot.slane %v679, 5
  %v682 = vsel %vm383, %v677, %v681
  %v684 = vshrl.u32 %v619, 16
  %v686 = vrot.slane %v684, 4
  %v687 = vshll.u32 %v619, 16
  %v689 = vrot.slane %v687, 5
  %v690 = vor.u32 %v686, %v689
  %v691 = vrot.slane %v690, 4
  %v693 = vshll.u32 %v620, 16
  %v695 = vrot.slane %v693, 5
  %v696 = vsel %vm383, %v691, %v695
  %v698 = vshrl.u32 %v621, 16
  %v700 = vrot.slane %v698, 4
  %v701 = vshll.u32 %v621, 16
  %v703 = vrot.slane %v701, 5
  %v704 = vor.u32 %v700, %v703
  %v705 = vrot.slane %v704, 4
  %v707 = vshll.u32 %v622, 16
  %v709 = vrot.slane %v707, 5
  %v710 = vsel %vm383, %v705, %v709
  %v712 = vshrl.u32 %v623, 16
  %v714 = vrot.slane %v712, 4
  %v715 = vshll.u32 %v623, 16
  %v717 = vrot.slane %v715, 5
  %v718 = vor.u32 %v714, %v717
  %v719 = vrot.slane %v718, 4
  %v721 = vshll.u32 %v624, 16
  %v723 = vrot.slane %v721, 5
  %v724 = vsel %vm383, %v719, %v723
  %v726 = vshrl.u32 %v625, 16
  %v728 = vrot.slane %v726, 4
  %v729 = vshll.u32 %v625, 16
  %v731 = vrot.slane %v729, 5
  %v732 = vor.u32 %v728, %v731
  %v733 = vrot.slane %v732, 4
  %v735 = vshll.u32 %v626, 16
  %v737 = vrot.slane %v735, 5
  %v738 = vsel %vm383, %v733, %v737
  %747 = vst [vmem:[#allocation3 + $0x10] sm:$0xf] %v640
  %748 = vst [vmem:[#allocation3 + $0x34] sm:$0xf] %v654
  %749 = vst [vmem:[#allocation3 + $0x58] sm:$0xf] %v668
  %750 = vst [vmem:[#allocation3 + $0x7c] sm:$0xf] %v682
  %751 = vst [vmem:[#allocation3 + $0xa0] sm:$0xf] %v696
  %752 = vst [vmem:[#allocation3 + $0xc4] sm:$0xf] %v710
  %753 = vst [vmem:[#allocation3 + $0xe8] sm:$0xf] %v724
  %754 = vst [vmem:[#allocation3 + $0x10c] sm:$0xf] %v738
  %v755 = vld [vmem:[%s246] sm:$0xe]
  %v756 = vld [vmem:[%s246 + $0x4] sm:$0x1]
  %v757 = vld [vmem:[%s246 + $0x8] sm:$0xe]
  %v758 = vld [vmem:[%s246 + $0xc] sm:$0x1]
  %v759 = vld [vmem:[%s246 + $0x10] sm:$0xe]
  %v760 = vld [vmem:[%s246 + $0x14] sm:$0x1]
  %v761 = vld [vmem:[%s246 + $0x18] sm:$0xe]
  %v762 = vld [vmem:[%s246 + $0x1c] sm:$0x1]
  %v763 = vld [vmem:[%s246 + $0x20] sm:$0xe]
  %v764 = vld [vmem:[%s246 + $0x24] sm:$0x1]
  %v765 = vld [vmem:[%s246 + $0x28] sm:$0xe]
  %v766 = vld [vmem:[%s246 + $0x2c] sm:$0x1]
  %v767 = vld [vmem:[%s246 + $0x30] sm:$0xe]
  %v768 = vld [vmem:[%s246 + $0x34] sm:$0x1]
  %v769 = vld [vmem:[%s246 + $0x38] sm:$0xe]
  %v770 = vld [vmem:[%s246 + $0x3c] sm:$0x1]
  %v787 = vrot.slane %v755, 5
  %v788 = vrot.slane %v787, 4
  %v789 = vrot.slane %v756, 5
  %v790 = vsel %vm546, %v788, %v789
  %v791 = vrot.slane %v757, 5
  %v792 = vrot.slane %v791, 4
  %v793 = vrot.slane %v758, 5
  %v794 = vsel %vm546, %v792, %v793
  %v795 = vrot.slane %v759, 5
  %v796 = vrot.slane %v795, 4
  %v797 = vrot.slane %v760, 5
  %v798 = vsel %vm546, %v796, %v797
  %v799 = vrot.slane %v761, 5
  %v800 = vrot.slane %v799, 4
  %v801 = vrot.slane %v762, 5
  %v802 = vsel %vm546, %v800, %v801
  %v803 = vrot.slane %v763, 5
  %v804 = vrot.slane %v803, 4
  %v805 = vrot.slane %v764, 5
  %v806 = vsel %vm546, %v804, %v805
  %v807 = vrot.slane %v765, 5
  %v808 = vrot.slane %v807, 4
  %v809 = vrot.slane %v766, 5
  %v810 = vsel %vm546, %v808, %v809
  %v811 = vrot.slane %v767, 5
  %v812 = vrot.slane %v811, 4
  %v813 = vrot.slane %v768, 5
  %v814 = vsel %vm546, %v812, %v813
  %v815 = vrot.slane %v769, 5
  %v816 = vrot.slane %v815, 4
  %v817 = vrot.slane %v770, 5
  %v818 = vsel %vm546, %v816, %v817
  %827 = vst [vmem:[#allocation3 + $0x14] sm:$0xf] %v790
  %828 = vst [vmem:[#allocation3 + $0x38] sm:$0xf] %v794
  %829 = vst [vmem:[#allocation3 + $0x5c] sm:$0xf] %v798
  %830 = vst [vmem:[#allocation3 + $0x80] sm:$0xf] %v802
  %831 = vst [vmem:[#allocation3 + $0xa4] sm:$0xf] %v806
  %832 = vst [vmem:[#allocation3 + $0xc8] sm:$0xf] %v810
  %833 = vst [vmem:[#allocation3 + $0xec] sm:$0xf] %v814
  %834 = vst [vmem:[#allocation3 + $0x110] sm:$0xf] %v818
  %s835 = scalar_lea.vmem [#allocation2], 16
  %v836 = vld [vmem:[%s835] sm:$0xf]
  %v837 = vld [vmem:[%s835 + $0x8] sm:$0xf]
  %v838 = vld [vmem:[%s835 + $0x10] sm:$0xf]
  %v839 = vld [vmem:[%s835 + $0x18] sm:$0xf]
  %v840 = vld [vmem:[%s835 + $0x20] sm:$0xf]
  %v841 = vld [vmem:[%s835 + $0x28] sm:$0xf]
  %v842 = vld [vmem:[%s835 + $0x30] sm:$0xf]
  %v843 = vld [vmem:[%s835 + $0x38] sm:$0xf]
  %844 = vst [vmem:[#allocation3 + $0x18] sm:$0xf] %v836
  %845 = vst [vmem:[#allocation3 + $0x3c] sm:$0xf] %v837
  %846 = vst [vmem:[#allocation3 + $0x60] sm:$0xf] %v838
  %847 = vst [vmem:[#allocation3 + $0x84] sm:$0xf] %v839
  %848 = vst [vmem:[#allocation3 + $0xa8] sm:$0xf] %v840
  %849 = vst [vmem:[#allocation3 + $0xcc] sm:$0xf] %v841
  %850 = vst [vmem:[#allocation3 + $0xf0] sm:$0xf] %v842
  %851 = vst [vmem:[#allocation3 + $0x114] sm:$0xf] %v843
  %v852 = vld [vmem:[%s835] sm:$0xf]
  %v853 = vld [vmem:[%s835 + $0x4] sm:$0x1]
  %v854 = vld [vmem:[%s835 + $0x8] sm:$0xf]
  %v855 = vld [vmem:[%s835 + $0xc] sm:$0x1]
  %v856 = vld [vmem:[%s835 + $0x10] sm:$0xf]
  %v857 = vld [vmem:[%s835 + $0x14] sm:$0x1]
  %v858 = vld [vmem:[%s835 + $0x18] sm:$0xf]
  %v859 = vld [vmem:[%s835 + $0x1c] sm:$0x1]
  %v860 = vld [vmem:[%s835 + $0x20] sm:$0xf]
  %v861 = vld [vmem:[%s835 + $0x24] sm:$0x1]
  %v862 = vld [vmem:[%s835 + $0x28] sm:$0xf]
  %v863 = vld [vmem:[%s835 + $0x2c] sm:$0x1]
  %v864 = vld [vmem:[%s835 + $0x30] sm:$0xf]
  %v865 = vld [vmem:[%s835 + $0x34] sm:$0x1]
  %v866 = vld [vmem:[%s835 + $0x38] sm:$0xf]
  %v867 = vld [vmem:[%s835 + $0x3c] sm:$0x1]
  %v869 = vshrl.u32 %v852, 16
  %v871 = vrot.slane %v869, 4
  %v872 = vshll.u32 %v852, 16
  %v874 = vrot.slane %v872, 5
  %v875 = vor.u32 %v871, %v874
  %v876 = vrot.slane %v875, 4
  %v878 = vshll.u32 %v853, 16
  %v880 = vrot.slane %v878, 5
  %v881 = vsel %vm383, %v876, %v880
  %v883 = vshrl.u32 %v854, 16
  %v885 = vrot.slane %v883, 4
  %v886 = vshll.u32 %v854, 16
  %v888 = vrot.slane %v886, 5
  %v889 = vor.u32 %v885, %v888
  %v890 = vrot.slane %v889, 4
  %v892 = vshll.u32 %v855, 16
  %v894 = vrot.slane %v892, 5
  %v895 = vsel %vm383, %v890, %v894
  %v897 = vshrl.u32 %v856, 16
  %v899 = vrot.slane %v897, 4
  %v900 = vshll.u32 %v856, 16
  %v902 = vrot.slane %v900, 5
  %v903 = vor.u32 %v899, %v902
  %v904 = vrot.slane %v903, 4
  %v906 = vshll.u32 %v857, 16
  %v908 = vrot.slane %v906, 5
  %v909 = vsel %vm383, %v904, %v908
  %v911 = vshrl.u32 %v858, 16
  %v913 = vrot.slane %v911, 4
  %v914 = vshll.u32 %v858, 16
  %v916 = vrot.slane %v914, 5
  %v917 = vor.u32 %v913, %v916
  %v918 = vrot.slane %v917, 4
  %v920 = vshll.u32 %v859, 16
  %v922 = vrot.slane %v920, 5
  %v923 = vsel %vm383, %v918, %v922
  %v925 = vshrl.u32 %v860, 16
  %v927 = vrot.slane %v925, 4
  %v928 = vshll.u32 %v860, 16
  %v930 = vrot.slane %v928, 5
  %v931 = vor.u32 %v927, %v930
  %v932 = vrot.slane %v931, 4
  %v934 = vshll.u32 %v861, 16
  %v936 = vrot.slane %v934, 5
  %v937 = vsel %vm383, %v932, %v936
  %v939 = vshrl.u32 %v862, 16
  %v941 = vrot.slane %v939, 4
  %v942 = vshll.u32 %v862, 16
  %v944 = vrot.slane %v942, 5
  %v945 = vor.u32 %v941, %v944
  %v946 = vrot.slane %v945, 4
  %v948 = vshll.u32 %v863, 16
  %v950 = vrot.slane %v948, 5
  %v951 = vsel %vm383, %v946, %v950
  %v953 = vshrl.u32 %v864, 16
  %v955 = vrot.slane %v953, 4
  %v956 = vshll.u32 %v864, 16
  %v958 = vrot.slane %v956, 5
  %v959 = vor.u32 %v955, %v958
  %v960 = vrot.slane %v959, 4
  %v962 = vshll.u32 %v865, 16
  %v964 = vrot.slane %v962, 5
  %v965 = vsel %vm383, %v960, %v964
  %v967 = vshrl.u32 %v866, 16
  %v969 = vrot.slane %v967, 4
  %v970 = vshll.u32 %v866, 16
  %v972 = vrot.slane %v970, 5
  %v973 = vor.u32 %v969, %v972
  %v974 = vrot.slane %v973, 4
  %v976 = vshll.u32 %v867, 16
  %v978 = vrot.slane %v976, 5
  %v979 = vsel %vm383, %v974, %v978
  %988 = vst [vmem:[#allocation3 + $0x1c] sm:$0xf] %v881
  %989 = vst [vmem:[#allocation3 + $0x40] sm:$0xf] %v895
  %990 = vst [vmem:[#allocation3 + $0x64] sm:$0xf] %v909
  %991 = vst [vmem:[#allocation3 + $0x88] sm:$0xf] %v923
  %992 = vst [vmem:[#allocation3 + $0xac] sm:$0xf] %v937
  %993 = vst [vmem:[#allocation3 + $0xd0] sm:$0xf] %v951
  %994 = vst [vmem:[#allocation3 + $0xf4] sm:$0xf] %v965
  %995 = vst [vmem:[#allocation3 + $0x118] sm:$0xf] %v979
  %v996 = vld [vmem:[%s835] sm:$0xe]
  %v997 = vld [vmem:[%s835 + $0x4] sm:$0x1]
  %v998 = vld [vmem:[%s835 + $0x8] sm:$0xe]
  %v999 = vld [vmem:[%s835 + $0xc] sm:$0x1]
  %v1000 = vld [vmem:[%s835 + $0x10] sm:$0xe]
  %v1001 = vld [vmem:[%s835 + $0x14] sm:$0x1]
  %v1002 = vld [vmem:[%s835 + $0x18] sm:$0xe]
  %v1003 = vld [vmem:[%s835 + $0x1c] sm:$0x1]
  %v1004 = vld [vmem:[%s835 + $0x20] sm:$0xe]
  %v1005 = vld [vmem:[%s835 + $0x24] sm:$0x1]
  %v1006 = vld [vmem:[%s835 + $0x28] sm:$0xe]
  %v1007 = vld [vmem:[%s835 + $0x2c] sm:$0x1]
  %v1008 = vld [vmem:[%s835 + $0x30] sm:$0xe]
  %v1009 = vld [vmem:[%s835 + $0x34] sm:$0x1]
  %v1010 = vld [vmem:[%s835 + $0x38] sm:$0xe]
  %v1011 = vld [vmem:[%s835 + $0x3c] sm:$0x1]
  %v1028 = vrot.slane %v996, 5
  %v1029 = vrot.slane %v1028, 4
  %v1030 = vrot.slane %v997, 5
  %v1031 = vsel %vm546, %v1029, %v1030
  %v1032 = vrot.slane %v998, 5
  %v1033 = vrot.slane %v1032, 4
  %v1034 = vrot.slane %v999, 5
  %v1035 = vsel %vm546, %v1033, %v1034
  %v1036 = vrot.slane %v1000, 5
  %v1037 = vrot.slane %v1036, 4
  %v1038 = vrot.slane %v1001, 5
  %v1039 = vsel %vm546, %v1037, %v1038
  %v1040 = vrot.slane %v1002, 5
  %v1041 = vrot.slane %v1040, 4
  %v1042 = vrot.slane %v1003, 5
  %v1043 = vsel %vm546, %v1041, %v1042
  %v1044 = vrot.slane %v1004, 5
  %v1045 = vrot.slane %v1044, 4
  %v1046 = vrot.slane %v1005, 5
  %v1047 = vsel %vm546, %v1045, %v1046
  %v1048 = vrot.slane %v1006, 5
  %v1049 = vrot.slane %v1048, 4
  %v1050 = vrot.slane %v1007, 5
  %v1051 = vsel %vm546, %v1049, %v1050
  %v1052 = vrot.slane %v1008, 5
  %v1053 = vrot.slane %v1052, 4
  %v1054 = vrot.slane %v1009, 5
  %v1055 = vsel %vm546, %v1053, %v1054
  %v1056 = vrot.slane %v1010, 5
  %v1057 = vrot.slane %v1056, 4
  %v1058 = vrot.slane %v1011, 5
  %v1059 = vsel %vm546, %v1057, %v1058
  %1068 = vst [vmem:[#allocation3 + $0x20] sm:$0xf] %v1031
  %1069 = vst [vmem:[#allocation3 + $0x44] sm:$0xf] %v1035
  %1070 = vst [vmem:[#allocation3 + $0x68] sm:$0xf] %v1039
  %1071 = vst [vmem:[#allocation3 + $0x8c] sm:$0xf] %v1043
  %1072 = vst [vmem:[#allocation3 + $0xb0] sm:$0xf] %v1047
  %1073 = vst [vmem:[#allocation3 + $0xd4] sm:$0xf] %v1051
  %1074 = vst [vmem:[#allocation3 + $0xf8] sm:$0xf] %v1055
  %1075 = vst [vmem:[#allocation3 + $0x11c] sm:$0xf] %v1059
  %s1076 = scalar_lea.vmem [#allocation2], 80
  %v1077 = vld [vmem:[%s1076] sm:$0xf]
  %v1078 = vld [vmem:[%s1076 + $0x8] sm:$0xf]
  %v1079 = vld [vmem:[%s1076 + $0x10] sm:$0xf]
  %v1080 = vld [vmem:[%s1076 + $0x18] sm:$0xf]
  %v1081 = vld [vmem:[%s1076 + $0x20] sm:$0xf]
  %v1082 = vld [vmem:[%s1076 + $0x28] sm:$0xf]
  %v1083 = vld [vmem:[%s1076 + $0x30] sm:$0xf]
  %v1084 = vld [vmem:[%s1076 + $0x38] sm:$0xf]
  %1085 = vst [vmem:[#allocation3 + $0x120] sm:$0xf] %v1077
  %1086 = vst [vmem:[#allocation3 + $0x144] sm:$0xf] %v1078
  %1087 = vst [vmem:[#allocation3 + $0x168] sm:$0xf] %v1079
  %1088 = vst [vmem:[#allocation3 + $0x18c] sm:$0xf] %v1080
  %1089 = vst [vmem:[#allocation3 + $0x1b0] sm:$0xf] %v1081
  %1090 = vst [vmem:[#allocation3 + $0x1d4] sm:$0xf] %v1082
  %1091 = vst [vmem:[#allocation3 + $0x1f8] sm:$0xf] %v1083
  %1092 = vst [vmem:[#allocation3 + $0x21c] sm:$0xf] %v1084
  %v1093 = vld [vmem:[%s1076] sm:$0xf]
  %v1094 = vld [vmem:[%s1076 + $0x4] sm:$0x1]
  %v1095 = vld [vmem:[%s1076 + $0x8] sm:$0xf]
  %v1096 = vld [vmem:[%s1076 + $0xc] sm:$0x1]
  %v1097 = vld [vmem:[%s1076 + $0x10] sm:$0xf]
  %v1098 = vld [vmem:[%s1076 + $0x14] sm:$0x1]
  %v1099 = vld [vmem:[%s1076 + $0x18] sm:$0xf]
  %v1100 = vld [vmem:[%s1076 + $0x1c] sm:$0x1]
  %v1101 = vld [vmem:[%s1076 + $0x20] sm:$0xf]
  %v1102 = vld [vmem:[%s1076 + $0x24] sm:$0x1]
  %v1103 = vld [vmem:[%s1076 + $0x28] sm:$0xf]
  %v1104 = vld [vmem:[%s1076 + $0x2c] sm:$0x1]
  %v1105 = vld [vmem:[%s1076 + $0x30] sm:$0xf]
  %v1106 = vld [vmem:[%s1076 + $0x34] sm:$0x1]
  %v1107 = vld [vmem:[%s1076 + $0x38] sm:$0xf]
  %v1108 = vld [vmem:[%s1076 + $0x3c] sm:$0x1]
  %v1110 = vshrl.u32 %v1093, 16
  %v1112 = vrot.slane %v1110, 4
  %v1113 = vshll.u32 %v1093, 16
  %v1115 = vrot.slane %v1113, 5
  %v1116 = vor.u32 %v1112, %v1115
  %v1117 = vrot.slane %v1116, 4
  %v1119 = vshll.u32 %v1094, 16
  %v1121 = vrot.slane %v1119, 5
  %v1122 = vsel %vm383, %v1117, %v1121
  %v1124 = vshrl.u32 %v1095, 16
  %v1126 = vrot.slane %v1124, 4
  %v1127 = vshll.u32 %v1095, 16
  %v1129 = vrot.slane %v1127, 5
  %v1130 = vor.u32 %v1126, %v1129
  %v1131 = vrot.slane %v1130, 4
  %v1133 = vshll.u32 %v1096, 16
  %v1135 = vrot.slane %v1133, 5
  %v1136 = vsel %vm383, %v1131, %v1135
  %v1138 = vshrl.u32 %v1097, 16
  %v1140 = vrot.slane %v1138, 4
  %v1141 = vshll.u32 %v1097, 16
  %v1143 = vrot.slane %v1141, 5
  %v1144 = vor.u32 %v1140, %v1143
  %v1145 = vrot.slane %v1144, 4
  %v1147 = vshll.u32 %v1098, 16
  %v1149 = vrot.slane %v1147, 5
  %v1150 = vsel %vm383, %v1145, %v1149
  %v1152 = vshrl.u32 %v1099, 16
  %v1154 = vrot.slane %v1152, 4
  %v1155 = vshll.u32 %v1099, 16
  %v1157 = vrot.slane %v1155, 5
  %v1158 = vor.u32 %v1154, %v1157
  %v1159 = vrot.slane %v1158, 4
  %v1161 = vshll.u32 %v1100, 16
  %v1163 = vrot.slane %v1161, 5
  %v1164 = vsel %vm383, %v1159, %v1163
  %v1166 = vshrl.u32 %v1101, 16
  %v1168 = vrot.slane %v1166, 4
  %v1169 = vshll.u32 %v1101, 16
  %v1171 = vrot.slane %v1169, 5
  %v1172 = vor.u32 %v1168, %v1171
  %v1173 = vrot.slane %v1172, 4
  %v1175 = vshll.u32 %v1102, 16
  %v1177 = vrot.slane %v1175, 5
  %v1178 = vsel %vm383, %v1173, %v1177
  %v1180 = vshrl.u32 %v1103, 16
  %v1182 = vrot.slane %v1180, 4
  %v1183 = vshll.u32 %v1103, 16
  %v1185 = vrot.slane %v1183, 5
  %v1186 = vor.u32 %v1182, %v1185
  %v1187 = vrot.slane %v1186, 4
  %v1189 = vshll.u32 %v1104, 16
  %v1191 = vrot.slane %v1189, 5
  %v1192 = vsel %vm383, %v1187, %v1191
  %v1194 = vshrl.u32 %v1105, 16
  %v1196 = vrot.slane %v1194, 4
  %v1197 = vshll.u32 %v1105, 16
  %v1199 = vrot.slane %v1197, 5
  %v1200 = vor.u32 %v1196, %v1199
  %v1201 = vrot.slane %v1200, 4
  %v1203 = vshll.u32 %v1106, 16
  %v1205 = vrot.slane %v1203, 5
  %v1206 = vsel %vm383, %v1201, %v1205
  %v1208 = vshrl.u32 %v1107, 16
  %v1210 = vrot.slane %v1208, 4
  %v1211 = vshll.u32 %v1107, 16
  %v1213 = vrot.slane %v1211, 5
  %v1214 = vor.u32 %v1210, %v1213
  %v1215 = vrot.slane %v1214, 4
  %v1217 = vshll.u32 %v1108, 16
  %v1219 = vrot.slane %v1217, 5
  %v1220 = vsel %vm383, %v1215, %v1219
  %1229 = vst [vmem:[#allocation3 + $0x124] sm:$0xf] %v1122
  %1230 = vst [vmem:[#allocation3 + $0x148] sm:$0xf] %v1136
  %1231 = vst [vmem:[#allocation3 + $0x16c] sm:$0xf] %v1150
  %1232 = vst [vmem:[#allocation3 + $0x190] sm:$0xf] %v1164
  %1233 = vst [vmem:[#allocation3 + $0x1b4] sm:$0xf] %v1178
  %1234 = vst [vmem:[#allocation3 + $0x1d8] sm:$0xf] %v1192
  %1235 = vst [vmem:[#allocation3 + $0x1fc] sm:$0xf] %v1206
  %1236 = vst [vmem:[#allocation3 + $0x220] sm:$0xf] %v1220
  %v1237 = vld [vmem:[%s1076] sm:$0xe]
  %v1238 = vld [vmem:[%s1076 + $0x4] sm:$0x1]
  %v1239 = vld [vmem:[%s1076 + $0x8] sm:$0xe]
  %v1240 = vld [vmem:[%s1076 + $0xc] sm:$0x1]
  %v1241 = vld [vmem:[%s1076 + $0x10] sm:$0xe]
  %v1242 = vld [vmem:[%s1076 + $0x14] sm:$0x1]
  %v1243 = vld [vmem:[%s1076 + $0x18] sm:$0xe]
  %v1244 = vld [vmem:[%s1076 + $0x1c] sm:$0x1]
  %v1245 = vld [vmem:[%s1076 + $0x20] sm:$0xe]
  %v1246 = vld [vmem:[%s1076 + $0x24] sm:$0x1]
  %v1247 = vld [vmem:[%s1076 + $0x28] sm:$0xe]
  %v1248 = vld [vmem:[%s1076 + $0x2c] sm:$0x1]
  %v1249 = vld [vmem:[%s1076 + $0x30] sm:$0xe]
  %v1250 = vld [vmem:[%s1076 + $0x34] sm:$0x1]
  %v1251 = vld [vmem:[%s1076 + $0x38] sm:$0xe]
  %v1252 = vld [vmem:[%s1076 + $0x3c] sm:$0x1]
  %v1269 = vrot.slane %v1237, 5
  %v1270 = vrot.slane %v1269, 4
  %v1271 = vrot.slane %v1238, 5
  %v1272 = vsel %vm546, %v1270, %v1271
  %v1273 = vrot.slane %v1239, 5
  %v1274 = vrot.slane %v1273, 4
  %v1275 = vrot.slane %v1240, 5
  %v1276 = vsel %vm546, %v1274, %v1275
  %v1277 = vrot.slane %v1241, 5
  %v1278 = vrot.slane %v1277, 4
  %v1279 = vrot.slane %v1242, 5
  %v1280 = vsel %vm546, %v1278, %v1279
  %v1281 = vrot.slane %v1243, 5
  %v1282 = vrot.slane %v1281, 4
  %v1283 = vrot.slane %v1244, 5
  %v1284 = vsel %vm546, %v1282, %v1283
  %v1285 = vrot.slane %v1245, 5
  %v1286 = vrot.slane %v1285, 4
  %v1287 = vrot.slane %v1246, 5
  %v1288 = vsel %vm546, %v1286, %v1287
  %v1289 = vrot.slane %v1247, 5
  %v1290 = vrot.slane %v1289, 4
  %v1291 = vrot.slane %v1248, 5
  %v1292 = vsel %vm546, %v1290, %v1291
  %v1293 = vrot.slane %v1249, 5
  %v1294 = vrot.slane %v1293, 4
  %v1295 = vrot.slane %v1250, 5
  %v1296 = vsel %vm546, %v1294, %v1295
  %v1297 = vrot.slane %v1251, 5
  %v1298 = vrot.slane %v1297, 4
  %v1299 = vrot.slane %v1252, 5
  %v1300 = vsel %vm546, %v1298, %v1299
  %1309 = vst [vmem:[#allocation3 + $0x128] sm:$0xf] %v1272
  %1310 = vst [vmem:[#allocation3 + $0x14c] sm:$0xf] %v1276
  %1311 = vst [vmem:[#allocation3 + $0x170] sm:$0xf] %v1280
  %1312 = vst [vmem:[#allocation3 + $0x194] sm:$0xf] %v1284
  %1313 = vst [vmem:[#allocation3 + $0x1b8] sm:$0xf] %v1288
  %1314 = vst [vmem:[#allocation3 + $0x1dc] sm:$0xf] %v1292
  %1315 = vst [vmem:[#allocation3 + $0x200] sm:$0xf] %v1296
  %1316 = vst [vmem:[#allocation3 + $0x224] sm:$0xf] %v1300
  %s1317 = scalar_lea.vmem [#allocation2], 88
  %v1318 = vld [vmem:[%s1317] sm:$0xf]
  %v1319 = vld [vmem:[%s1317 + $0x8] sm:$0xf]
  %v1320 = vld [vmem:[%s1317 + $0x10] sm:$0xf]
  %v1321 = vld [vmem:[%s1317 + $0x18] sm:$0xf]
  %v1322 = vld [vmem:[%s1317 + $0x20] sm:$0xf]
  %v1323 = vld [vmem:[%s1317 + $0x28] sm:$0xf]
  %v1324 = vld [vmem:[%s1317 + $0x30] sm:$0xf]
  %v1325 = vld [vmem:[%s1317 + $0x38] sm:$0xf]
  %1326 = vst [vmem:[#allocation3 + $0x12c] sm:$0xf] %v1318
  %1327 = vst [vmem:[#allocation3 + $0x150] sm:$0xf] %v1319
  %1328 = vst [vmem:[#allocation3 + $0x174] sm:$0xf] %v1320
  %1329 = vst [vmem:[#allocation3 + $0x198] sm:$0xf] %v1321
  %1330 = vst [vmem:[#allocation3 + $0x1bc] sm:$0xf] %v1322
  %1331 = vst [vmem:[#allocation3 + $0x1e0] sm:$0xf] %v1323
  %1332 = vst [vmem:[#allocation3 + $0x204] sm:$0xf] %v1324
  %1333 = vst [vmem:[#allocation3 + $0x228] sm:$0xf] %v1325
  %v1334 = vld [vmem:[%s1317] sm:$0xf]
  %v1335 = vld [vmem:[%s1317 + $0x4] sm:$0x1]
  %v1336 = vld [vmem:[%s1317 + $0x8] sm:$0xf]
  %v1337 = vld [vmem:[%s1317 + $0xc] sm:$0x1]
  %v1338 = vld [vmem:[%s1317 + $0x10] sm:$0xf]
  %v1339 = vld [vmem:[%s1317 + $0x14] sm:$0x1]
  %v1340 = vld [vmem:[%s1317 + $0x18] sm:$0xf]
  %v1341 = vld [vmem:[%s1317 + $0x1c] sm:$0x1]
  %v1342 = vld [vmem:[%s1317 + $0x20] sm:$0xf]
  %v1343 = vld [vmem:[%s1317 + $0x24] sm:$0x1]
  %v1344 = vld [vmem:[%s1317 + $0x28] sm:$0xf]
  %v1345 = vld [vmem:[%s1317 + $0x2c] sm:$0x1]
  %v1346 = vld [vmem:[%s1317 + $0x30] sm:$0xf]
  %v1347 = vld [vmem:[%s1317 + $0x34] sm:$0x1]
  %v1348 = vld [vmem:[%s1317 + $0x38] sm:$0xf]
  %v1349 = vld [vmem:[%s1317 + $0x3c] sm:$0x1]
  %v1351 = vshrl.u32 %v1334, 16
  %v1353 = vrot.slane %v1351, 4
  %v1354 = vshll.u32 %v1334, 16
  %v1356 = vrot.slane %v1354, 5
  %v1357 = vor.u32 %v1353, %v1356
  %v1358 = vrot.slane %v1357, 4
  %v1360 = vshll.u32 %v1335, 16
  %v1362 = vrot.slane %v1360, 5
  %v1363 = vsel %vm383, %v1358, %v1362
  %v1365 = vshrl.u32 %v1336, 16
  %v1367 = vrot.slane %v1365, 4
  %v1368 = vshll.u32 %v1336, 16
  %v1370 = vrot.slane %v1368, 5
  %v1371 = vor.u32 %v1367, %v1370
  %v1372 = vrot.slane %v1371, 4
  %v1374 = vshll.u32 %v1337, 16
  %v1376 = vrot.slane %v1374, 5
  %v1377 = vsel %vm383, %v1372, %v1376
  %v1379 = vshrl.u32 %v1338, 16
  %v1381 = vrot.slane %v1379, 4
  %v1382 = vshll.u32 %v1338, 16
  %v1384 = vrot.slane %v1382, 5
  %v1385 = vor.u32 %v1381, %v1384
  %v1386 = vrot.slane %v1385, 4
  %v1388 = vshll.u32 %v1339, 16
  %v1390 = vrot.slane %v1388, 5
  %v1391 = vsel %vm383, %v1386, %v1390
  %v1393 = vshrl.u32 %v1340, 16
  %v1395 = vrot.slane %v1393, 4
  %v1396 = vshll.u32 %v1340, 16
  %v1398 = vrot.slane %v1396, 5
  %v1399 = vor.u32 %v1395, %v1398
  %v1400 = vrot.slane %v1399, 4
  %v1402 = vshll.u32 %v1341, 16
  %v1404 = vrot.slane %v1402, 5
  %v1405 = vsel %vm383, %v1400, %v1404
  %v1407 = vshrl.u32 %v1342, 16
  %v1409 = vrot.slane %v1407, 4
  %v1410 = vshll.u32 %v1342, 16
  %v1412 = vrot.slane %v1410, 5
  %v1413 = vor.u32 %v1409, %v1412
  %v1414 = vrot.slane %v1413, 4
  %v1416 = vshll.u32 %v1343, 16
  %v1418 = vrot.slane %v1416, 5
  %v1419 = vsel %vm383, %v1414, %v1418
  %v1421 = vshrl.u32 %v1344, 16
  %v1423 = vrot.slane %v1421, 4
  %v1424 = vshll.u32 %v1344, 16
  %v1426 = vrot.slane %v1424, 5
  %v1427 = vor.u32 %v1423, %v1426
  %v1428 = vrot.slane %v1427, 4
  %v1430 = vshll.u32 %v1345, 16
  %v1432 = vrot.slane %v1430, 5
  %v1433 = vsel %vm383, %v1428, %v1432
  %v1435 = vshrl.u32 %v1346, 16
  %v1437 = vrot.slane %v1435, 4
  %v1438 = vshll.u32 %v1346, 16
  %v1440 = vrot.slane %v1438, 5
  %v1441 = vor.u32 %v1437, %v1440
  %v1442 = vrot.slane %v1441, 4
  %v1444 = vshll.u32 %v1347, 16
  %v1446 = vrot.slane %v1444, 5
  %v1447 = vsel %vm383, %v1442, %v1446
  %v1449 = vshrl.u32 %v1348, 16
  %v1451 = vrot.slane %v1449, 4
  %v1452 = vshll.u32 %v1348, 16
  %v1454 = vrot.slane %v1452, 5
  %v1455 = vor.u32 %v1451, %v1454
  %v1456 = vrot.slane %v1455, 4
  %v1458 = vshll.u32 %v1349, 16
  %v1460 = vrot.slane %v1458, 5
  %v1461 = vsel %vm383, %v1456, %v1460
  %1470 = vst [vmem:[#allocation3 + $0x130] sm:$0xf] %v1363
  %1471 = vst [vmem:[#allocation3 + $0x154] sm:$0xf] %v1377
  %1472 = vst [vmem:[#allocation3 + $0x178] sm:$0xf] %v1391
  %1473 = vst [vmem:[#allocation3 + $0x19c] sm:$0xf] %v1405
  %1474 = vst [vmem:[#allocation3 + $0x1c0] sm:$0xf] %v1419
  %1475 = vst [vmem:[#allocation3 + $0x1e4] sm:$0xf] %v1433
  %1476 = vst [vmem:[#allocation3 + $0x208] sm:$0xf] %v1447
  %1477 = vst [vmem:[#allocation3 + $0x22c] sm:$0xf] %v1461
  %v1478 = vld [vmem:[%s1317] sm:$0xe]
  %v1479 = vld [vmem:[%s1317 + $0x4] sm:$0x1]
  %v1480 = vld [vmem:[%s1317 + $0x8] sm:$0xe]
  %v1481 = vld [vmem:[%s1317 + $0xc] sm:$0x1]
  %v1482 = vld [vmem:[%s1317 + $0x10] sm:$0xe]
  %v1483 = vld [vmem:[%s1317 + $0x14] sm:$0x1]
  %v1484 = vld [vmem:[%s1317 + $0x18] sm:$0xe]
  %v1485 = vld [vmem:[%s1317 + $0x1c] sm:$0x1]
  %v1486 = vld [vmem:[%s1317 + $0x20] sm:$0xe]
  %v1487 = vld [vmem:[%s1317 + $0x24] sm:$0x1]
  %v1488 = vld [vmem:[%s1317 + $0x28] sm:$0xe]
  %v1489 = vld [vmem:[%s1317 + $0x2c] sm:$0x1]
  %v1490 = vld [vmem:[%s1317 + $0x30] sm:$0xe]
  %v1491 = vld [vmem:[%s1317 + $0x34] sm:$0x1]
  %v1492 = vld [vmem:[%s1317 + $0x38] sm:$0xe]
  %v1493 = vld [vmem:[%s1317 + $0x3c] sm:$0x1]
  %v1510 = vrot.slane %v1478, 5
  %v1511 = vrot.slane %v1510, 4
  %v1512 = vrot.slane %v1479, 5
  %v1513 = vsel %vm546, %v1511, %v1512
  %v1514 = vrot.slane %v1480, 5
  %v1515 = vrot.slane %v1514, 4
  %v1516 = vrot.slane %v1481, 5
  %v1517 = vsel %vm546, %v1515, %v1516
  %v1518 = vrot.slane %v1482, 5
  %v1519 = vrot.slane %v1518, 4
  %v1520 = vrot.slane %v1483, 5
  %v1521 = vsel %vm546, %v1519, %v1520
  %v1522 = vrot.slane %v1484, 5
  %v1523 = vrot.slane %v1522, 4
  %v1524 = vrot.slane %v1485, 5
  %v1525 = vsel %vm546, %v1523, %v1524
  %v1526 = vrot.slane %v1486, 5
  %v1527 = vrot.slane %v1526, 4
  %v1528 = vrot.slane %v1487, 5
  %v1529 = vsel %vm546, %v1527, %v1528
  %v1530 = vrot.slane %v1488, 5
  %v1531 = vrot.slane %v1530, 4
  %v1532 = vrot.slane %v1489, 5
  %v1533 = vsel %vm546, %v1531, %v1532
  %v1534 = vrot.slane %v1490, 5
  %v1535 = vrot.slane %v1534, 4
  %v1536 = vrot.slane %v1491, 5
  %v1537 = vsel %vm546, %v1535, %v1536
  %v1538 = vrot.slane %v1492, 5
  %v1539 = vrot.slane %v1538, 4
  %v1540 = vrot.slane %v1493, 5
  %v1541 = vsel %vm546, %v1539, %v1540
  %1550 = vst [vmem:[#allocation3 + $0x134] sm:$0xf] %v1513
  %1551 = vst [vmem:[#allocation3 + $0x158] sm:$0xf] %v1517
  %1552 = vst [vmem:[#allocation3 + $0x17c] sm:$0xf] %v1521
  %1553 = vst [vmem:[#allocation3 + $0x1a0] sm:$0xf] %v1525
  %1554 = vst [vmem:[#allocation3 + $0x1c4] sm:$0xf] %v1529
  %1555 = vst [vmem:[#allocation3 + $0x1e8] sm:$0xf] %v1533
  %1556 = vst [vmem:[#allocation3 + $0x20c] sm:$0xf] %v1537
  %1557 = vst [vmem:[#allocation3 + $0x230] sm:$0xf] %v1541
  %s1558 = scalar_lea.vmem [#allocation2], 96
  %v1559 = vld [vmem:[%s1558] sm:$0xf]
  %v1560 = vld [vmem:[%s1558 + $0x8] sm:$0xf]
  %v1561 = vld [vmem:[%s1558 + $0x10] sm:$0xf]
  %v1562 = vld [vmem:[%s1558 + $0x18] sm:$0xf]
  %v1563 = vld [vmem:[%s1558 + $0x20] sm:$0xf]
  %v1564 = vld [vmem:[%s1558 + $0x28] sm:$0xf]
  %v1565 = vld [vmem:[%s1558 + $0x30] sm:$0xf]
  %v1566 = vld [vmem:[%s1558 + $0x38] sm:$0xf]
  %1567 = vst [vmem:[#allocation3 + $0x138] sm:$0xf] %v1559
  %1568 = vst [vmem:[#allocation3 + $0x15c] sm:$0xf] %v1560
  %1569 = vst [vmem:[#allocation3 + $0x180] sm:$0xf] %v1561
  %1570 = vst [vmem:[#allocation3 + $0x1a4] sm:$0xf] %v1562
  %1571 = vst [vmem:[#allocation3 + $0x1c8] sm:$0xf] %v1563
  %1572 = vst [vmem:[#allocation3 + $0x1ec] sm:$0xf] %v1564
  %1573 = vst [vmem:[#allocation3 + $0x210] sm:$0xf] %v1565
  %1574 = vst [vmem:[#allocation3 + $0x234] sm:$0xf] %v1566
  %v1575 = vld [vmem:[%s1558] sm:$0xf]
  %v1576 = vld [vmem:[%s1558 + $0x4] sm:$0x1]
  %v1577 = vld [vmem:[%s1558 + $0x8] sm:$0xf]
  %v1578 = vld [vmem:[%s1558 + $0xc] sm:$0x1]
  %v1579 = vld [vmem:[%s1558 + $0x10] sm:$0xf]
  %v1580 = vld [vmem:[%s1558 + $0x14] sm:$0x1]
  %v1581 = vld [vmem:[%s1558 + $0x18] sm:$0xf]
  %v1582 = vld [vmem:[%s1558 + $0x1c] sm:$0x1]
  %v1583 = vld [vmem:[%s1558 + $0x20] sm:$0xf]
  %v1584 = vld [vmem:[%s1558 + $0x24] sm:$0x1]
  %v1585 = vld [vmem:[%s1558 + $0x28] sm:$0xf]
  %v1586 = vld [vmem:[%s1558 + $0x2c] sm:$0x1]
  %v1587 = vld [vmem:[%s1558 + $0x30] sm:$0xf]
  %v1588 = vld [vmem:[%s1558 + $0x34] sm:$0x1]
  %v1589 = vld [vmem:[%s1558 + $0x38] sm:$0xf]
  %v1590 = vld [vmem:[%s1558 + $0x3c] sm:$0x1]
  %v1592 = vshrl.u32 %v1575, 16
  %v1594 = vrot.slane %v1592, 4
  %v1595 = vshll.u32 %v1575, 16
  %v1597 = vrot.slane %v1595, 5
  %v1598 = vor.u32 %v1594, %v1597
  %v1599 = vrot.slane %v1598, 4
  %v1601 = vshll.u32 %v1576, 16
  %v1603 = vrot.slane %v1601, 5
  %v1604 = vsel %vm383, %v1599, %v1603
  %v1606 = vshrl.u32 %v1577, 16
  %v1608 = vrot.slane %v1606, 4
  %v1609 = vshll.u32 %v1577, 16
  %v1611 = vrot.slane %v1609, 5
  %v1612 = vor.u32 %v1608, %v1611
  %v1613 = vrot.slane %v1612, 4
  %v1615 = vshll.u32 %v1578, 16
  %v1617 = vrot.slane %v1615, 5
  %v1618 = vsel %vm383, %v1613, %v1617
  %v1620 = vshrl.u32 %v1579, 16
  %v1622 = vrot.slane %v1620, 4
  %v1623 = vshll.u32 %v1579, 16
  %v1625 = vrot.slane %v1623, 5
  %v1626 = vor.u32 %v1622, %v1625
  %v1627 = vrot.slane %v1626, 4
  %v1629 = vshll.u32 %v1580, 16
  %v1631 = vrot.slane %v1629, 5
  %v1632 = vsel %vm383, %v1627, %v1631
  %v1634 = vshrl.u32 %v1581, 16
  %v1636 = vrot.slane %v1634, 4
  %v1637 = vshll.u32 %v1581, 16
  %v1639 = vrot.slane %v1637, 5
  %v1640 = vor.u32 %v1636, %v1639
  %v1641 = vrot.slane %v1640, 4
  %v1643 = vshll.u32 %v1582, 16
  %v1645 = vrot.slane %v1643, 5
  %v1646 = vsel %vm383, %v1641, %v1645
  %v1648 = vshrl.u32 %v1583, 16
  %v1650 = vrot.slane %v1648, 4
  %v1651 = vshll.u32 %v1583, 16
  %v1653 = vrot.slane %v1651, 5
  %v1654 = vor.u32 %v1650, %v1653
  %v1655 = vrot.slane %v1654, 4
  %v1657 = vshll.u32 %v1584, 16
  %v1659 = vrot.slane %v1657, 5
  %v1660 = vsel %vm383, %v1655, %v1659
  %v1662 = vshrl.u32 %v1585, 16
  %v1664 = vrot.slane %v1662, 4
  %v1665 = vshll.u32 %v1585, 16
  %v1667 = vrot.slane %v1665, 5
  %v1668 = vor.u32 %v1664, %v1667
  %v1669 = vrot.slane %v1668, 4
  %v1671 = vshll.u32 %v1586, 16
  %v1673 = vrot.slane %v1671, 5
  %v1674 = vsel %vm383, %v1669, %v1673
  %v1676 = vshrl.u32 %v1587, 16
  %v1678 = vrot.slane %v1676, 4
  %v1679 = vshll.u32 %v1587, 16
  %v1681 = vrot.slane %v1679, 5
  %v1682 = vor.u32 %v1678, %v1681
  %v1683 = vrot.slane %v1682, 4
  %v1685 = vshll.u32 %v1588, 16
  %v1687 = vrot.slane %v1685, 5
  %v1688 = vsel %vm383, %v1683, %v1687
  %v1690 = vshrl.u32 %v1589, 16
  %v1692 = vrot.slane %v1690, 4
  %v1693 = vshll.u32 %v1589, 16
  %v1695 = vrot.slane %v1693, 5
  %v1696 = vor.u32 %v1692, %v1695
  %v1697 = vrot.slane %v1696, 4
  %v1699 = vshll.u32 %v1590, 16
  %v1701 = vrot.slane %v1699, 5
  %v1702 = vsel %vm383, %v1697, %v1701
  %1711 = vst [vmem:[#allocation3 + $0x13c] sm:$0xf] %v1604
  %1712 = vst [vmem:[#allocation3 + $0x160] sm:$0xf] %v1618
  %1713 = vst [vmem:[#allocation3 + $0x184] sm:$0xf] %v1632
  %1714 = vst [vmem:[#allocation3 + $0x1a8] sm:$0xf] %v1646
  %1715 = vst [vmem:[#allocation3 + $0x1cc] sm:$0xf] %v1660
  %1716 = vst [vmem:[#allocation3 + $0x1f0] sm:$0xf] %v1674
  %1717 = vst [vmem:[#allocation3 + $0x214] sm:$0xf] %v1688
  %1718 = vst [vmem:[#allocation3 + $0x238] sm:$0xf] %v1702
  %v1719 = vld [vmem:[%s1558] sm:$0xe]
  %v1720 = vld [vmem:[%s1558 + $0x4] sm:$0x1]
  %v1721 = vld [vmem:[%s1558 + $0x8] sm:$0xe]
  %v1722 = vld [vmem:[%s1558 + $0xc] sm:$0x1]
  %v1723 = vld [vmem:[%s1558 + $0x10] sm:$0xe]
  %v1724 = vld [vmem:[%s1558 + $0x14] sm:$0x1]
  %v1725 = vld [vmem:[%s1558 + $0x18] sm:$0xe]
  %v1726 = vld [vmem:[%s1558 + $0x1c] sm:$0x1]
  %v1727 = vld [vmem:[%s1558 + $0x20] sm:$0xe]
  %v1728 = vld [vmem:[%s1558 + $0x24] sm:$0x1]
  %v1729 = vld [vmem:[%s1558 + $0x28] sm:$0xe]
  %v1730 = vld [vmem:[%s1558 + $0x2c] sm:$0x1]
  %v1731 = vld [vmem:[%s1558 + $0x30] sm:$0xe]
  %v1732 = vld [vmem:[%s1558 + $0x34] sm:$0x1]
  %v1733 = vld [vmem:[%s1558 + $0x38] sm:$0xe]
  %v1734 = vld [vmem:[%s1558 + $0x3c] sm:$0x1]
  %v1751 = vrot.slane %v1719, 5
  %v1752 = vrot.slane %v1751, 4
  %v1753 = vrot.slane %v1720, 5
  %v1754 = vsel %vm546, %v1752, %v1753
  %v1755 = vrot.slane %v1721, 5
  %v1756 = vrot.slane %v1755, 4
  %v1757 = vrot.slane %v1722, 5
  %v1758 = vsel %vm546, %v1756, %v1757
  %v1759 = vrot.slane %v1723, 5
  %v1760 = vrot.slane %v1759, 4
  %v1761 = vrot.slane %v1724, 5
  %v1762 = vsel %vm546, %v1760, %v1761
  %v1763 = vrot.slane %v1725, 5
  %v1764 = vrot.slane %v1763, 4
  %v1765 = vrot.slane %v1726, 5
  %v1766 = vsel %vm546, %v1764, %v1765
  %v1767 = vrot.slane %v1727, 5
  %v1768 = vrot.slane %v1767, 4
  %v1769 = vrot.slane %v1728, 5
  %v1770 = vsel %vm546, %v1768, %v1769
  %v1771 = vrot.slane %v1729, 5
  %v1772 = vrot.slane %v1771, 4
  %v1773 = vrot.slane %v1730, 5
  %v1774 = vsel %vm546, %v1772, %v1773
  %v1775 = vrot.slane %v1731, 5
  %v1776 = vrot.slane %v1775, 4
  %v1777 = vrot.slane %v1732, 5
  %v1778 = vsel %vm546, %v1776, %v1777
  %v1779 = vrot.slane %v1733, 5
  %v1780 = vrot.slane %v1779, 4
  %v1781 = vrot.slane %v1734, 5
  %v1782 = vsel %vm546, %v1780, %v1781
  %1791 = vst [vmem:[#allocation3 + $0x140] sm:$0xf] %v1754
  %1792 = vst [vmem:[#allocation3 + $0x164] sm:$0xf] %v1758
  %1793 = vst [vmem:[#allocation3 + $0x188] sm:$0xf] %v1762
  %1794 = vst [vmem:[#allocation3 + $0x1ac] sm:$0xf] %v1766
  %1795 = vst [vmem:[#allocation3 + $0x1d0] sm:$0xf] %v1770
  %1796 = vst [vmem:[#allocation3 + $0x1f4] sm:$0xf] %v1774
  %1797 = vst [vmem:[#allocation3 + $0x218] sm:$0xf] %v1778
  %1798 = vst [vmem:[#allocation3 + $0x23c] sm:$0xf] %v1782
  %v1799 = vld [vmem:[#allocation3] sm:$0xff]
  %v1800 = vld [vmem:[#allocation3 + $0x8] sm:$0xff]
  %v1801 = vld [vmem:[#allocation3 + $0x10] sm:$0xff]
  %v1802 = vld [vmem:[#allocation3 + $0x18] sm:$0xff]
  %v1803 = vld [vmem:[#allocation3 + $0x20] sm:$0xf]
  %v1804 = vld [vmem:[#allocation3 + $0x24] sm:$0xff]
  %v1805 = vld [vmem:[#allocation3 + $0x2c] sm:$0xff]
  %v1806 = vld [vmem:[#allocation3 + $0x34] sm:$0xff]
  %v1807 = vld [vmem:[#allocation3 + $0x3c] sm:$0xff]
  %v1808 = vld [vmem:[#allocation3 + $0x44] sm:$0xf]
  %v1809 = vld [vmem:[#allocation3 + $0x48] sm:$0xff]
  %v1810 = vld [vmem:[#allocation3 + $0x50] sm:$0xff]
  %v1811 = vld [vmem:[#allocation3 + $0x58] sm:$0xff]
  %v1812 = vld [vmem:[#allocation3 + $0x60] sm:$0xff]
  %v1813 = vld [vmem:[#allocation3 + $0x68] sm:$0xf]
  %v1814 = vld [vmem:[#allocation3 + $0x6c] sm:$0xff]
  %v1815 = vld [vmem:[#allocation3 + $0x74] sm:$0xff]
  %v1816 = vld [vmem:[#allocation3 + $0x7c] sm:$0xff]
  %v1817 = vld [vmem:[#allocation3 + $0x84] sm:$0xff]
  %v1818 = vld [vmem:[#allocation3 + $0x8c] sm:$0xf]
  %v1819 = vld [vmem:[#allocation3 + $0x90] sm:$0xff]
  %v1820 = vld [vmem:[#allocation3 + $0x98] sm:$0xff]
  %v1821 = vld [vmem:[#allocation3 + $0xa0] sm:$0xff]
  %v1822 = vld [vmem:[#allocation3 + $0xa8] sm:$0xff]
  %v1823 = vld [vmem:[#allocation3 + $0xb0] sm:$0xf]
  %v1824 = vld [vmem:[#allocation3 + $0xb4] sm:$0xff]
  %v1825 = vld [vmem:[#allocation3 + $0xbc] sm:$0xff]
  %v1826 = vld [vmem:[#allocation3 + $0xc4] sm:$0xff]
  %v1827 = vld [vmem:[#allocation3 + $0xcc] sm:$0xff]
  %v1828 = vld [vmem:[#allocation3 + $0xd4] sm:$0xf]
  %v1829 = vld [vmem:[#allocation3 + $0xd8] sm:$0xff]
  %v1830 = vld [vmem:[#allocation3 + $0xe0] sm:$0xff]
  %v1831 = vld [vmem:[#allocation3 + $0xe8] sm:$0xff]
  %v1832 = vld [vmem:[#allocation3 + $0xf0] sm:$0xff]
  %v1833 = vld [vmem:[#allocation3 + $0xf8] sm:$0xf]
  %v1834 = vld [vmem:[#allocation3 + $0xfc] sm:$0xff]
  %v1835 = vld [vmem:[#allocation3 + $0x104] sm:$0xff]
  %v1836 = vld [vmem:[#allocation3 + $0x10c] sm:$0xff]
  %v1837 = vld [vmem:[#allocation3 + $0x114] sm:$0xff]
  %v1838 = vld [vmem:[#allocation3 + $0x11c] sm:$0xf]
  %v1839 = vld [vmem:[#allocation3 + $0x120] sm:$0xff]
  %v1840 = vld [vmem:[#allocation3 + $0x128] sm:$0xff]
  %v1841 = vld [vmem:[#allocation3 + $0x130] sm:$0xff]
  %v1842 = vld [vmem:[#allocation3 + $0x138] sm:$0xff]
  %v1843 = vld [vmem:[#allocation3 + $0x140] sm:$0xf]
  %v1844 = vld [vmem:[#allocation3 + $0x144] sm:$0xff]
  %v1845 = vld [vmem:[#allocation3 + $0x14c] sm:$0xff]
  %v1846 = vld [vmem:[#allocation3 + $0x154] sm:$0xff]
  %v1847 = vld [vmem:[#allocation3 + $0x15c] sm:$0xff]
  %v1848 = vld [vmem:[#allocation3 + $0x164] sm:$0xf]
  %v1849 = vld [vmem:[#allocation3 + $0x168] sm:$0xff]
  %v1850 = vld [vmem:[#allocation3 + $0x170] sm:$0xff]
  %v1851 = vld [vmem:[#allocation3 + $0x178] sm:$0xff]
  %v1852 = vld [vmem:[#allocation3 + $0x180] sm:$0xff]
  %v1853 = vld [vmem:[#allocation3 + $0x188] sm:$0xf]
  %v1854 = vld [vmem:[#allocation3 + $0x18c] sm:$0xff]
  %v1855 = vld [vmem:[#allocation3 + $0x194] sm:$0xff]
  %v1856 = vld [vmem:[#allocation3 + $0x19c] sm:$0xff]
  %v1857 = vld [vmem:[#allocation3 + $0x1a4] sm:$0xff]
  %v1858 = vld [vmem:[#allocation3 + $0x1ac] sm:$0xf]
  %v1859 = vld [vmem:[#allocation3 + $0x1b0] sm:$0xff]
  %v1860 = vld [vmem:[#allocation3 + $0x1b8] sm:$0xff]
  %v1861 = vld [vmem:[#allocation3 + $0x1c0] sm:$0xff]
  %v1862 = vld [vmem:[#allocation3 + $0x1c8] sm:$0xff]
  %v1863 = vld [vmem:[#allocation3 + $0x1d0] sm:$0xf]
  %v1864 = vld [vmem:[#allocation3 + $0x1d4] sm:$0xff]
  %v1865 = vld [vmem:[#allocation3 + $0x1dc] sm:$0xff]
  %v1866 = vld [vmem:[#allocation3 + $0x1e4] sm:$0xff]
  %v1867 = vld [vmem:[#allocation3 + $0x1ec] sm:$0xff]
  %v1868 = vld [vmem:[#allocation3 + $0x1f4] sm:$0xf]
  %v1869 = vld [vmem:[#allocation3 + $0x1f8] sm:$0xff]
  %v1870 = vld [vmem:[#allocation3 + $0x200] sm:$0xff]
  %v1871 = vld [vmem:[#allocation3 + $0x208] sm:$0xff]
  %v1872 = vld [vmem:[#allocation3 + $0x210] sm:$0xff]
  %v1873 = vld [vmem:[#allocation3 + $0x218] sm:$0xf]
  %v1874 = vld [vmem:[#allocation3 + $0x21c] sm:$0xff]
  %v1875 = vld [vmem:[#allocation3 + $0x224] sm:$0xff]
  %v1876 = vld [vmem:[#allocation3 + $0x22c] sm:$0xff]
  %v1877 = vld [vmem:[#allocation3 + $0x234] sm:$0xff]
  %v1878 = vld [vmem:[#allocation3 + $0x23c] sm:$0xf]
  %v1879 = vld [vmem:[%s1] sm:$0xf]
  %v1880 = vld [vmem:[%s1 + $0x4] sm:$0xf]
  %v1881 = vld [vmem:[%s1 + $0x8] sm:$0xf]
  %v1882 = vld [vmem:[%s1 + $0xc] sm:$0xf]
  %v1883 = vld [vmem:[%s1 + $0x10] sm:$0xf]
  %v1884 = vld [vmem:[%s1 + $0x14] sm:$0xf]
  %v1885 = vld [vmem:[%s1 + $0x18] sm:$0xf]
  %v1886 = vld [vmem:[%s1 + $0x1c] sm:$0xf]
  %v1887 = vld [vmem:[%s1 + $0x20] sm:$0xf]
  %v1888 = vld [vmem:[%s1 + $0x24] sm:$0xf]
  %v1889 = vld [vmem:[%s1 + $0x28] sm:$0xf]
  %v1890 = vld [vmem:[%s1 + $0x2c] sm:$0xf]
  %v1891 = vld [vmem:[%s1 + $0x30] sm:$0xf]
  %v1892 = vld [vmem:[%s1 + $0x34] sm:$0xf]
  %v1893 = vld [vmem:[%s1 + $0x38] sm:$0xf]
  %v1894 = vld [vmem:[%s1 + $0x3c] sm:$0xf]
  %v1895 = vld [vmem:[%s1 + $0x40] sm:$0xf]
  %v1896 = vld [vmem:[%s1 + $0x44] sm:$0xf]
  %v1897 = vld [vmem:[%s1 + $0x48] sm:$0xf]
  %v1898 = vld [vmem:[%s1 + $0x4c] sm:$0xf]
  %v1899 = vld [vmem:[%s1 + $0x50] sm:$0xf]
  %v1900 = vld [vmem:[%s1 + $0x54] sm:$0xf]
  %v1901 = vld [vmem:[%s1 + $0x58] sm:$0xf]
  %v1902 = vld [vmem:[%s1 + $0x5c] sm:$0xf]
  %v1903 = vld [vmem:[%s1 + $0x60] sm:$0xf]
  %v1904 = vld [vmem:[%s1 + $0x64] sm:$0xf]
  %v1905 = vld [vmem:[%s1 + $0x68] sm:$0xf]
  %v1906 = vld [vmem:[%s1 + $0x6c] sm:$0xf]
  %v1907 = vld [vmem:[%s1 + $0x70] sm:$0xf]
  %v1908 = vld [vmem:[%s1 + $0x74] sm:$0xf]
  %v1909 = vld [vmem:[%s1 + $0x78] sm:$0xf]
  %v1910 = vld [vmem:[%s1 + $0x7c] sm:$0xf]
  %v1911 = vld [vmem:[%s1 + $0x80] sm:$0xf]
  %v1912 = vld [vmem:[%s1 + $0x84] sm:$0xf]
  %v1913 = vld [vmem:[%s1 + $0x88] sm:$0xf]
  %v1914 = vld [vmem:[%s1 + $0x8c] sm:$0xf]
  %v1915 = vld [vmem:[%s1 + $0x90] sm:$0xf]
  %v1916 = vld [vmem:[%s1 + $0x94] sm:$0xf]
  %v1917 = vld [vmem:[%s1 + $0x98] sm:$0xf]
  %v1918 = vld [vmem:[%s1 + $0x9c] sm:$0xf]
  %v1919 = vld [vmem:[%s1 + $0xa0] sm:$0xf]
  %v1920 = vld [vmem:[%s1 + $0xa4] sm:$0xf]
  %v1921 = vld [vmem:[%s1 + $0xa8] sm:$0xf]
  %v1922 = vld [vmem:[%s1 + $0xac] sm:$0xf]
  %v1923 = vld [vmem:[%s1 + $0xb0] sm:$0xf]
  %v1924 = vld [vmem:[%s1 + $0xb4] sm:$0xf]
  %v1925 = vld [vmem:[%s1 + $0xb8] sm:$0xf]
  %v1926 = vld [vmem:[%s1 + $0xbc] sm:$0xf]
  %v1927 = vld [vmem:[%s1 + $0xc0] sm:$0xf]
  %v1928 = vld [vmem:[%s1 + $0xc4] sm:$0xf]
  %v1929 = vld [vmem:[%s1 + $0xc8] sm:$0xf]
  %v1930 = vld [vmem:[%s1 + $0xcc] sm:$0xf]
  %v1931 = vld [vmem:[%s1 + $0xd0] sm:$0xf]
  %v1932 = vld [vmem:[%s1 + $0xd4] sm:$0xf]
  %v1933 = vld [vmem:[%s1 + $0xd8] sm:$0xf]
  %v1934 = vld [vmem:[%s1 + $0xdc] sm:$0xf]
  %v1935 = vld [vmem:[%s1 + $0xe0] sm:$0xf]
  %v1936 = vld [vmem:[%s1 + $0xe4] sm:$0xf]
  %v1937 = vld [vmem:[%s1 + $0xe8] sm:$0xf]
  %v1938 = vld [vmem:[%s1 + $0xec] sm:$0xf]
  %v1939 = vld [vmem:[%s1 + $0xf0] sm:$0xf]
  %v1940 = vld [vmem:[%s1 + $0xf4] sm:$0xf]
  %v1941 = vld [vmem:[%s1 + $0xf8] sm:$0xf]
  %v1942 = vld [vmem:[%s1 + $0xfc] sm:$0xf]
  %v1943 = vld [vmem:[%s1 + $0x100] sm:$0xf]
  %v1944 = vld [vmem:[%s1 + $0x104] sm:$0xf]
  %v1945 = vld [vmem:[%s1 + $0x108] sm:$0xf]
  %v1946 = vld [vmem:[%s1 + $0x10c] sm:$0xf]
  %v1947 = vld [vmem:[%s1 + $0x110] sm:$0xf]
  %v1948 = vld [vmem:[%s1 + $0x114] sm:$0xf]
  %v1949 = vld [vmem:[%s1 + $0x118] sm:$0xf]
  %v1950 = vld [vmem:[%s1 + $0x11c] sm:$0xf]
  %v1951 = vld [vmem:[%s1 + $0x120] sm:$0xf]
  %v1952 = vld [vmem:[%s1 + $0x124] sm:$0xf]
  %v1953 = vld [vmem:[%s1 + $0x128] sm:$0xf]
  %v1954 = vld [vmem:[%s1 + $0x12c] sm:$0xf]
  %v1955 = vld [vmem:[%s1 + $0x130] sm:$0xf]
  %v1956 = vld [vmem:[%s1 + $0x134] sm:$0xf]
  %v1957 = vld [vmem:[%s1 + $0x138] sm:$0xf]
  %v1958 = vld [vmem:[%s1 + $0x13c] sm:$0xf]
  %v1959 = vld [vmem:[%s1 + $0x140] sm:$0xf]
  %v1960 = vld [vmem:[%s1 + $0x144] sm:$0xf]
  %v1961 = vld [vmem:[%s1 + $0x148] sm:$0xf]
  %v1962 = vld [vmem:[%s1 + $0x14c] sm:$0xf]
  %v1963 = vld [vmem:[%s1 + $0x150] sm:$0xf]
  %v1964 = vld [vmem:[%s1 + $0x154] sm:$0xf]
  %v1965 = vld [vmem:[%s1 + $0x158] sm:$0xf]
  %v1966 = vld [vmem:[%s1 + $0x15c] sm:$0xf]
  %v1967 = vld [vmem:[%s1 + $0x160] sm:$0xf]
  %v1968 = vld [vmem:[%s1 + $0x164] sm:$0xf]
  %v1969 = vld [vmem:[%s1 + $0x168] sm:$0xf]
  %v1970 = vld [vmem:[%s1 + $0x16c] sm:$0xf]
  %v1971 = vld [vmem:[%s1 + $0x170] sm:$0xf]
  %v1972 = vld [vmem:[%s1 + $0x174] sm:$0xf]
  %v1973 = vld [vmem:[%s1 + $0x178] sm:$0xf]
  %v1974 = vld [vmem:[%s1 + $0x17c] sm:$0xf]
  %v1975 = vld [vmem:[%s1 + $0x180] sm:$0xf]
  %v1976 = vld [vmem:[%s1 + $0x184] sm:$0xf]
  %v1977 = vld [vmem:[%s1 + $0x188] sm:$0xf]
  %v1978 = vld [vmem:[%s1 + $0x18c] sm:$0xf]
  %v1979 = vld [vmem:[%s1 + $0x190] sm:$0xf]
  %v1980 = vld [vmem:[%s1 + $0x194] sm:$0xf]
  %v1981 = vld [vmem:[%s1 + $0x198] sm:$0xf]
  %v1982 = vld [vmem:[%s1 + $0x19c] sm:$0xf]
  %v1983 = vld [vmem:[%s1 + $0x1a0] sm:$0xf]
  %v1984 = vld [vmem:[%s1 + $0x1a4] sm:$0xf]
  %v1985 = vld [vmem:[%s1 + $0x1a8] sm:$0xf]
  %v1986 = vld [vmem:[%s1 + $0x1ac] sm:$0xf]
  %v1987 = vld [vmem:[%s1 + $0x1b0] sm:$0xf]
  %v1988 = vld [vmem:[%s1 + $0x1b4] sm:$0xf]
  %v1989 = vld [vmem:[%s1 + $0x1b8] sm:$0xf]
  %v1990 = vld [vmem:[%s1 + $0x1bc] sm:$0xf]
  %v1991 = vld [vmem:[%s1 + $0x1c0] sm:$0xf]
  %v1992 = vld [vmem:[%s1 + $0x1c4] sm:$0xf]
  %v1993 = vld [vmem:[%s1 + $0x1c8] sm:$0xf]
  %v1994 = vld [vmem:[%s1 + $0x1cc] sm:$0xf]
  %v1995 = vld [vmem:[%s1 + $0x1d0] sm:$0xf]
  %v1996 = vld [vmem:[%s1 + $0x1d4] sm:$0xf]
  %v1997 = vld [vmem:[%s1 + $0x1d8] sm:$0xf]
  %v1998 = vld [vmem:[%s1 + $0x1dc] sm:$0xf]
  %v1999 = vld [vmem:[%s1 + $0x1e0] sm:$0xf]
  %v2000 = vld [vmem:[%s1 + $0x1e4] sm:$0xf]
  %v2001 = vld [vmem:[%s1 + $0x1e8] sm:$0xf]
  %v2002 = vld [vmem:[%s1 + $0x1ec] sm:$0xf]
  %v2003 = vld [vmem:[%s1 + $0x1f0] sm:$0xf]
  %v2004 = vld [vmem:[%s1 + $0x1f4] sm:$0xf]
  %v2005 = vld [vmem:[%s1 + $0x1f8] sm:$0xf]
  %v2006 = vld [vmem:[%s1 + $0x1fc] sm:$0xf]
  %v2007 = vld [vmem:[%s1 + $0x200] sm:$0xf]
  %v2008 = vld [vmem:[%s1 + $0x204] sm:$0xf]
  %v2009 = vld [vmem:[%s1 + $0x208] sm:$0xf]
  %v2010 = vld [vmem:[%s1 + $0x20c] sm:$0xf]
  %v2011 = vld [vmem:[%s1 + $0x210] sm:$0xf]
  %v2012 = vld [vmem:[%s1 + $0x214] sm:$0xf]
  %v2013 = vld [vmem:[%s1 + $0x218] sm:$0xf]
  %v2014 = vld [vmem:[%s1 + $0x21c] sm:$0xf]
  %v2015 = vld [vmem:[%s1 + $0x220] sm:$0xf]
  %v2016 = vld [vmem:[%s1 + $0x224] sm:$0xf]
  %v2017 = vld [vmem:[%s1 + $0x228] sm:$0xf]
  %v2018 = vld [vmem:[%s1 + $0x22c] sm:$0xf]
  %v2019 = vld [vmem:[%s1 + $0x230] sm:$0xf]
  %v2020 = vld [vmem:[%s1 + $0x234] sm:$0xf]
  %v2021 = vld [vmem:[%s1 + $0x238] sm:$0xf]
  %v2022 = vld [vmem:[%s1 + $0x23c] sm:$0xf]
  %v2103 = vunpack.c.l.b16 %v1799
  %v2104 = vunpack.c.h.b16 %v1799
  %v2105 = vunpack.c.l.b16 %v1800
  %v2106 = vunpack.c.h.b16 %v1800
  %v2107 = vunpack.c.l.b16 %v1801
  %v2108 = vunpack.c.h.b16 %v1801
  %v2109 = vunpack.c.l.b16 %v1802
  %v2110 = vunpack.c.h.b16 %v1802
  %v2111 = vunpack.c.l.b16 %v1803
  %v2112 = vunpack.c.l.b16 %v1804
  %v2113 = vunpack.c.h.b16 %v1804
  %v2114 = vunpack.c.l.b16 %v1805
  %v2115 = vunpack.c.h.b16 %v1805
  %v2116 = vunpack.c.l.b16 %v1806
  %v2117 = vunpack.c.h.b16 %v1806
  %v2118 = vunpack.c.l.b16 %v1807
  %v2119 = vunpack.c.h.b16 %v1807
  %v2120 = vunpack.c.l.b16 %v1808
  %v2121 = vunpack.c.l.b16 %v1809
  %v2122 = vunpack.c.h.b16 %v1809
  %v2123 = vunpack.c.l.b16 %v1810
  %v2124 = vunpack.c.h.b16 %v1810
  %v2125 = vunpack.c.l.b16 %v1811
  %v2126 = vunpack.c.h.b16 %v1811
  %v2127 = vunpack.c.l.b16 %v1812
  %v2128 = vunpack.c.h.b16 %v1812
  %v2129 = vunpack.c.l.b16 %v1813
  %v2130 = vunpack.c.l.b16 %v1814
  %v2131 = vunpack.c.h.b16 %v1814
  %v2132 = vunpack.c.l.b16 %v1815
  %v2133 = vunpack.c.h.b16 %v1815
  %v2134 = vunpack.c.l.b16 %v1816
  %v2135 = vunpack.c.h.b16 %v1816
  %v2136 = vunpack.c.l.b16 %v1817
  %v2137 = vunpack.c.h.b16 %v1817
  %v2138 = vunpack.c.l.b16 %v1818
  %v2139 = vunpack.c.l.b16 %v1819
  %v2140 = vunpack.c.h.b16 %v1819
  %v2141 = vunpack.c.l.b16 %v1820
  %v2142 = vunpack.c.h.b16 %v1820
  %v2143 = vunpack.c.l.b16 %v1821
  %v2144 = vunpack.c.h.b16 %v1821
  %v2145 = vunpack.c.l.b16 %v1822
  %v2146 = vunpack.c.h.b16 %v1822
  %v2147 = vunpack.c.l.b16 %v1823
  %v2148 = vunpack.c.l.b16 %v1824
  %v2149 = vunpack.c.h.b16 %v1824
  %v2150 = vunpack.c.l.b16 %v1825
  %v2151 = vunpack.c.h.b16 %v1825
  %v2152 = vunpack.c.l.b16 %v1826
  %v2153 = vunpack.c.h.b16 %v1826
  %v2154 = vunpack.c.l.b16 %v1827
  %v2155 = vunpack.c.h.b16 %v1827
  %v2156 = vunpack.c.l.b16 %v1828
  %v2157 = vunpack.c.l.b16 %v1829
  %v2158 = vunpack.c.h.b16 %v1829
  %v2159 = vunpack.c.l.b16 %v1830
  %v2160 = vunpack.c.h.b16 %v1830
  %v2161 = vunpack.c.l.b16 %v1831
  %v2162 = vunpack.c.h.b16 %v1831
  %v2163 = vunpack.c.l.b16 %v1832
  %v2164 = vunpack.c.h.b16 %v1832
  %v2165 = vunpack.c.l.b16 %v1833
  %v2166 = vunpack.c.l.b16 %v1834
  %v2167 = vunpack.c.h.b16 %v1834
  %v2168 = vunpack.c.l.b16 %v1835
  %v2169 = vunpack.c.h.b16 %v1835
  %v2170 = vunpack.c.l.b16 %v1836
  %v2171 = vunpack.c.h.b16 %v1836
  %v2172 = vunpack.c.l.b16 %v1837
  %v2173 = vunpack.c.h.b16 %v1837
  %v2174 = vunpack.c.l.b16 %v1838
  %v2175 = vunpack.c.l.b16 %v1839
  %v2176 = vunpack.c.h.b16 %v1839
  %v2177 = vunpack.c.l.b16 %v1840
  %v2178 = vunpack.c.h.b16 %v1840
  %v2179 = vunpack.c.l.b16 %v1841
  %v2180 = vunpack.c.h.b16 %v1841
  %v2181 = vunpack.c.l.b16 %v1842
  %v2182 = vunpack.c.h.b16 %v1842
  %v2183 = vunpack.c.l.b16 %v1843
  %v2184 = vunpack.c.l.b16 %v1844
  %v2185 = vunpack.c.h.b16 %v1844
  %v2186 = vunpack.c.l.b16 %v1845
  %v2187 = vunpack.c.h.b16 %v1845
  %v2188 = vunpack.c.l.b16 %v1846
  %v2189 = vunpack.c.h.b16 %v1846
  %v2190 = vunpack.c.l.b16 %v1847
  %v2191 = vunpack.c.h.b16 %v1847
  %v2192 = vunpack.c.l.b16 %v1848
  %v2193 = vunpack.c.l.b16 %v1849
  %v2194 = vunpack.c.h.b16 %v1849
  %v2195 = vunpack.c.l.b16 %v1850
  %v2196 = vunpack.c.h.b16 %v1850
  %v2197 = vunpack.c.l.b16 %v1851
  %v2198 = vunpack.c.h.b16 %v1851
  %v2199 = vunpack.c.l.b16 %v1852
  %v2200 = vunpack.c.h.b16 %v1852
  %v2201 = vunpack.c.l.b16 %v1853
  %v2202 = vunpack.c.l.b16 %v1854
  %v2203 = vunpack.c.h.b16 %v1854
  %v2204 = vunpack.c.l.b16 %v1855
  %v2205 = vunpack.c.h.b16 %v1855
  %v2206 = vunpack.c.l.b16 %v1856
  %v2207 = vunpack.c.h.b16 %v1856
  %v2208 = vunpack.c.l.b16 %v1857
  %v2209 = vunpack.c.h.b16 %v1857
  %v2210 = vunpack.c.l.b16 %v1858
  %v2211 = vunpack.c.l.b16 %v1859
  %v2212 = vunpack.c.h.b16 %v1859
  %v2213 = vunpack.c.l.b16 %v1860
  %v2214 = vunpack.c.h.b16 %v1860
  %v2215 = vunpack.c.l.b16 %v1861
  %v2216 = vunpack.c.h.b16 %v1861
  %v2217 = vunpack.c.l.b16 %v1862
  %v2218 = vunpack.c.h.b16 %v1862
  %v2219 = vunpack.c.l.b16 %v1863
  %v2220 = vunpack.c.l.b16 %v1864
  %v2221 = vunpack.c.h.b16 %v1864
  %v2222 = vunpack.c.l.b16 %v1865
  %v2223 = vunpack.c.h.b16 %v1865
  %v2224 = vunpack.c.l.b16 %v1866
  %v2225 = vunpack.c.h.b16 %v1866
  %v2226 = vunpack.c.l.b16 %v1867
  %v2227 = vunpack.c.h.b16 %v1867
  %v2228 = vunpack.c.l.b16 %v1868
  %v2229 = vunpack.c.l.b16 %v1869
  %v2230 = vunpack.c.h.b16 %v1869
  %v2231 = vunpack.c.l.b16 %v1870
  %v2232 = vunpack.c.h.b16 %v1870
  %v2233 = vunpack.c.l.b16 %v1871
  %v2234 = vunpack.c.h.b16 %v1871
  %v2235 = vunpack.c.l.b16 %v1872
  %v2236 = vunpack.c.h.b16 %v1872
  %v2237 = vunpack.c.l.b16 %v1873
  %v2238 = vunpack.c.l.b16 %v1874
  %v2239 = vunpack.c.h.b16 %v1874
  %v2240 = vunpack.c.l.b16 %v1875
  %v2241 = vunpack.c.h.b16 %v1875
  %v2242 = vunpack.c.l.b16 %v1876
  %v2243 = vunpack.c.h.b16 %v1876
  %v2244 = vunpack.c.l.b16 %v1877
  %v2245 = vunpack.c.h.b16 %v1877
  %v2246 = vunpack.c.l.b16 %v1878
  %v2247 = vpack.c.b16 %v2112, %v2103
  %v2248 = vpack.c.b16 %v2113, %v2104
  %v2249 = vpack.c.b16 %v2114, %v2105
  %v2250 = vpack.c.b16 %v2115, %v2106
  %v2251 = vpack.c.b16 %v2116, %v2107
  %v2252 = vpack.c.b16 %v2117, %v2108
  %v2253 = vpack.c.b16 %v2118, %v2109
  %v2254 = vpack.c.b16 %v2119, %v2110
  %v2255 = vpack.c.b16 %v2120, %v2111
  %v2256 = vpack.c.b16 %v2130, %v2121
  %v2257 = vpack.c.b16 %v2131, %v2122
  %v2258 = vpack.c.b16 %v2132, %v2123
  %v2259 = vpack.c.b16 %v2133, %v2124
  %v2260 = vpack.c.b16 %v2134, %v2125
  %v2261 = vpack.c.b16 %v2135, %v2126
  %v2262 = vpack.c.b16 %v2136, %v2127
  %v2263 = vpack.c.b16 %v2137, %v2128
  %v2264 = vpack.c.b16 %v2138, %v2129
  %v2265 = vpack.c.b16 %v2148, %v2139
  %v2266 = vpack.c.b16 %v2149, %v2140
  %v2267 = vpack.c.b16 %v2150, %v2141
  %v2268 = vpack.c.b16 %v2151, %v2142
  %v2269 = vpack.c.b16 %v2152, %v2143
  %v2270 = vpack.c.b16 %v2153, %v2144
  %v2271 = vpack.c.b16 %v2154, %v2145
  %v2272 = vpack.c.b16 %v2155, %v2146
  %v2273 = vpack.c.b16 %v2156, %v2147
  %v2274 = vpack.c.b16 %v2166, %v2157
  %v2275 = vpack.c.b16 %v2167, %v2158
  %v2276 = vpack.c.b16 %v2168, %v2159
  %v2277 = vpack.c.b16 %v2169, %v2160
  %v2278 = vpack.c.b16 %v2170, %v2161
  %v2279 = vpack.c.b16 %v2171, %v2162
  %v2280 = vpack.c.b16 %v2172, %v2163
  %v2281 = vpack.c.b16 %v2173, %v2164
  %v2282 = vpack.c.b16 %v2174, %v2165
  %v2283 = vpack.c.b16 %v2184, %v2175
  %v2284 = vpack.c.b16 %v2185, %v2176
  %v2285 = vpack.c.b16 %v2186, %v2177
  %v2286 = vpack.c.b16 %v2187, %v2178
  %v2287 = vpack.c.b16 %v2188, %v2179
  %v2288 = vpack.c.b16 %v2189, %v2180
  %v2289 = vpack.c.b16 %v2190, %v2181
  %v2290 = vpack.c.b16 %v2191, %v2182
  %v2291 = vpack.c.b16 %v2192, %v2183
  %v2292 = vpack.c.b16 %v2202, %v2193
  %v2293 = vpack.c.b16 %v2203, %v2194
  %v2294 = vpack.c.b16 %v2204, %v2195
  %v2295 = vpack.c.b16 %v2205, %v2196
  %v2296 = vpack.c.b16 %v2206, %v2197
  %v2297 = vpack.c.b16 %v2207, %v2198
  %v2298 = vpack.c.b16 %v2208, %v2199
  %v2299 = vpack.c.b16 %v2209, %v2200
  %v2300 = vpack.c.b16 %v2210, %v2201
  %v2301 = vpack.c.b16 %v2220, %v2211
  %v2302 = vpack.c.b16 %v2221, %v2212
  %v2303 = vpack.c.b16 %v2222, %v2213
  %v2304 = vpack.c.b16 %v2223, %v2214
  %v2305 = vpack.c.b16 %v2224, %v2215
  %v2306 = vpack.c.b16 %v2225, %v2216
  %v2307 = vpack.c.b16 %v2226, %v2217
  %v2308 = vpack.c.b16 %v2227, %v2218
  %v2309 = vpack.c.b16 %v2228, %v2219
  %v2310 = vpack.c.b16 %v2238, %v2229
  %v2311 = vpack.c.b16 %v2239, %v2230
  %v2312 = vpack.c.b16 %v2240, %v2231
  %v2313 = vpack.c.b16 %v2241, %v2232
  %v2314 = vpack.c.b16 %v2242, %v2233
  %v2315 = vpack.c.b16 %v2243, %v2234
  %v2316 = vpack.c.b16 %v2244, %v2235
  %v2317 = vpack.c.b16 %v2245, %v2236
  %v2318 = vpack.c.b16 %v2246, %v2237
  %v2535 = vunpack.c.l.b16 %v1879
  %v2536 = vunpack.c.l.b16 %v1880
  %v2537 = vunpack.c.l.b16 %v1881
  %v2538 = vunpack.c.l.b16 %v1882
  %v2539 = vunpack.c.l.b16 %v1883
  %v2540 = vunpack.c.l.b16 %v1884
  %v2541 = vunpack.c.l.b16 %v1885
  %v2542 = vunpack.c.l.b16 %v1886
  %v2543 = vunpack.c.l.b16 %v1887
  %v2544 = vunpack.c.l.b16 %v1888
  %v2545 = vunpack.c.l.b16 %v1889
  %v2546 = vunpack.c.l.b16 %v1890
  %v2547 = vunpack.c.l.b16 %v1891
  %v2548 = vunpack.c.l.b16 %v1892
  %v2549 = vunpack.c.l.b16 %v1893
  %v2550 = vunpack.c.l.b16 %v1894
  %v2551 = vunpack.c.l.b16 %v1895
  %v2552 = vunpack.c.l.b16 %v1896
  %v2553 = vunpack.c.l.b16 %v1897
  %v2554 = vunpack.c.l.b16 %v1898
  %v2555 = vunpack.c.l.b16 %v1899
  %v2556 = vunpack.c.l.b16 %v1900
  %v2557 = vunpack.c.l.b16 %v1901
  %v2558 = vunpack.c.l.b16 %v1902
  %v2559 = vunpack.c.l.b16 %v1903
  %v2560 = vunpack.c.l.b16 %v1904
  %v2561 = vunpack.c.l.b16 %v1905
  %v2562 = vunpack.c.l.b16 %v1906
  %v2563 = vunpack.c.l.b16 %v1907
  %v2564 = vunpack.c.l.b16 %v1908
  %v2565 = vunpack.c.l.b16 %v1909
  %v2566 = vunpack.c.l.b16 %v1910
  %v2567 = vunpack.c.l.b16 %v1911
  %v2568 = vunpack.c.l.b16 %v1912
  %v2569 = vunpack.c.l.b16 %v1913
  %v2570 = vunpack.c.l.b16 %v1914
  %v2571 = vunpack.c.l.b16 %v1915
  %v2572 = vunpack.c.l.b16 %v1916
  %v2573 = vunpack.c.l.b16 %v1917
  %v2574 = vunpack.c.l.b16 %v1918
  %v2575 = vunpack.c.l.b16 %v1919
  %v2576 = vunpack.c.l.b16 %v1920
  %v2577 = vunpack.c.l.b16 %v1921
  %v2578 = vunpack.c.l.b16 %v1922
  %v2579 = vunpack.c.l.b16 %v1923
  %v2580 = vunpack.c.l.b16 %v1924
  %v2581 = vunpack.c.l.b16 %v1925
  %v2582 = vunpack.c.l.b16 %v1926
  %v2583 = vunpack.c.l.b16 %v1927
  %v2584 = vunpack.c.l.b16 %v1928
  %v2585 = vunpack.c.l.b16 %v1929
  %v2586 = vunpack.c.l.b16 %v1930
  %v2587 = vunpack.c.l.b16 %v1931
  %v2588 = vunpack.c.l.b16 %v1932
  %v2589 = vunpack.c.l.b16 %v1933
  %v2590 = vunpack.c.l.b16 %v1934
  %v2591 = vunpack.c.l.b16 %v1935
  %v2592 = vunpack.c.l.b16 %v1936
  %v2593 = vunpack.c.l.b16 %v1937
  %v2594 = vunpack.c.l.b16 %v1938
  %v2595 = vunpack.c.l.b16 %v1939
  %v2596 = vunpack.c.l.b16 %v1940
  %v2597 = vunpack.c.l.b16 %v1941
  %v2598 = vunpack.c.l.b16 %v1942
  %v2599 = vunpack.c.l.b16 %v1943
  %v2600 = vunpack.c.l.b16 %v1944
  %v2601 = vunpack.c.l.b16 %v1945
  %v2602 = vunpack.c.l.b16 %v1946
  %v2603 = vunpack.c.l.b16 %v1947
  %v2604 = vunpack.c.l.b16 %v1948
  %v2605 = vunpack.c.l.b16 %v1949
  %v2606 = vunpack.c.l.b16 %v1950
  %v2607 = vunpack.c.l.b16 %v1951
  %v2608 = vunpack.c.l.b16 %v1952
  %v2609 = vunpack.c.l.b16 %v1953
  %v2610 = vunpack.c.l.b16 %v1954
  %v2611 = vunpack.c.l.b16 %v1955
  %v2612 = vunpack.c.l.b16 %v1956
  %v2613 = vunpack.c.l.b16 %v1957
  %v2614 = vunpack.c.l.b16 %v1958
  %v2615 = vunpack.c.l.b16 %v1959
  %v2616 = vunpack.c.l.b16 %v1960
  %v2617 = vunpack.c.l.b16 %v1961
  %v2618 = vunpack.c.l.b16 %v1962
  %v2619 = vunpack.c.l.b16 %v1963
  %v2620 = vunpack.c.l.b16 %v1964
  %v2621 = vunpack.c.l.b16 %v1965
  %v2622 = vunpack.c.l.b16 %v1966
  %v2623 = vunpack.c.l.b16 %v1967
  %v2624 = vunpack.c.l.b16 %v1968
  %v2625 = vunpack.c.l.b16 %v1969
  %v2626 = vunpack.c.l.b16 %v1970
  %v2627 = vunpack.c.l.b16 %v1971
  %v2628 = vunpack.c.l.b16 %v1972
  %v2629 = vunpack.c.l.b16 %v1973
  %v2630 = vunpack.c.l.b16 %v1974
  %v2631 = vunpack.c.l.b16 %v1975
  %v2632 = vunpack.c.l.b16 %v1976
  %v2633 = vunpack.c.l.b16 %v1977
  %v2634 = vunpack.c.l.b16 %v1978
  %v2635 = vunpack.c.l.b16 %v1979
  %v2636 = vunpack.c.l.b16 %v1980
  %v2637 = vunpack.c.l.b16 %v1981
  %v2638 = vunpack.c.l.b16 %v1982
  %v2639 = vunpack.c.l.b16 %v1983
  %v2640 = vunpack.c.l.b16 %v1984
  %v2641 = vunpack.c.l.b16 %v1985
  %v2642 = vunpack.c.l.b16 %v1986
  %v2643 = vunpack.c.l.b16 %v1987
  %v2644 = vunpack.c.l.b16 %v1988
  %v2645 = vunpack.c.l.b16 %v1989
  %v2646 = vunpack.c.l.b16 %v1990
  %v2647 = vunpack.c.l.b16 %v1991
  %v2648 = vunpack.c.l.b16 %v1992
  %v2649 = vunpack.c.l.b16 %v1993
  %v2650 = vunpack.c.l.b16 %v1994
  %v2651 = vunpack.c.l.b16 %v1995
  %v2652 = vunpack.c.l.b16 %v1996
  %v2653 = vunpack.c.l.b16 %v1997
  %v2654 = vunpack.c.l.b16 %v1998
  %v2655 = vunpack.c.l.b16 %v1999
  %v2656 = vunpack.c.l.b16 %v2000
  %v2657 = vunpack.c.l.b16 %v2001
  %v2658 = vunpack.c.l.b16 %v2002
  %v2659 = vunpack.c.l.b16 %v2003
  %v2660 = vunpack.c.l.b16 %v2004
  %v2661 = vunpack.c.l.b16 %v2005
  %v2662 = vunpack.c.l.b16 %v2006
  %v2663 = vunpack.c.l.b16 %v2007
  %v2664 = vunpack.c.l.b16 %v2008
  %v2665 = vunpack.c.l.b16 %v2009
  %v2666 = vunpack.c.l.b16 %v2010
  %v2667 = vunpack.c.l.b16 %v2011
  %v2668 = vunpack.c.l.b16 %v2012
  %v2669 = vunpack.c.l.b16 %v2013
  %v2670 = vunpack.c.l.b16 %v2014
  %v2671 = vunpack.c.l.b16 %v2015
  %v2672 = vunpack.c.l.b16 %v2016
  %v2673 = vunpack.c.l.b16 %v2017
  %v2674 = vunpack.c.l.b16 %v2018
  %v2675 = vunpack.c.l.b16 %v2019
  %v2676 = vunpack.c.l.b16 %v2020
  %v2677 = vunpack.c.l.b16 %v2021
  %v2678 = vunpack.c.l.b16 %v2022
  %v2679 = vpack.c.b16 %v2536, %v2535
  %v2680 = vpack.c.b16 %v2538, %v2537
  %v2681 = vpack.c.b16 %v2540, %v2539
  %v2682 = vpack.c.b16 %v2542, %v2541
  %v2683 = vpack.c.b16 %v2544, %v2543
  %v2684 = vpack.c.b16 %v2546, %v2545
  %v2685 = vpack.c.b16 %v2548, %v2547
  %v2686 = vpack.c.b16 %v2550, %v2549
  %v2687 = vpack.c.b16 %v2552, %v2551
  %v2688 = vpack.c.b16 %v2554, %v2553
  %v2689 = vpack.c.b16 %v2556, %v2555
  %v2690 = vpack.c.b16 %v2558, %v2557
  %v2691 = vpack.c.b16 %v2560, %v2559
  %v2692 = vpack.c.b16 %v2562, %v2561
  %v2693 = vpack.c.b16 %v2564, %v2563
  %v2694 = vpack.c.b16 %v2566, %v2565
  %v2695 = vpack.c.b16 %v2568, %v2567
  %v2696 = vpack.c.b16 %v2570, %v2569
  %v2697 = vpack.c.b16 %v2572, %v2571
  %v2698 = vpack.c.b16 %v2574, %v2573
  %v2699 = vpack.c.b16 %v2576, %v2575
  %v2700 = vpack.c.b16 %v2578, %v2577
  %v2701 = vpack.c.b16 %v2580, %v2579
  %v2702 = vpack.c.b16 %v2582, %v2581
  %v2703 = vpack.c.b16 %v2584, %v2583
  %v2704 = vpack.c.b16 %v2586, %v2585
  %v2705 = vpack.c.b16 %v2588, %v2587
  %v2706 = vpack.c.b16 %v2590, %v2589
  %v2707 = vpack.c.b16 %v2592, %v2591
  %v2708 = vpack.c.b16 %v2594, %v2593
  %v2709 = vpack.c.b16 %v2596, %v2595
  %v2710 = vpack.c.b16 %v2598, %v2597
  %v2711 = vpack.c.b16 %v2600, %v2599
  %v2712 = vpack.c.b16 %v2602, %v2601
  %v2713 = vpack.c.b16 %v2604, %v2603
  %v2714 = vpack.c.b16 %v2606, %v2605
  %v2715 = vpack.c.b16 %v2608, %v2607
  %v2716 = vpack.c.b16 %v2610, %v2609
  %v2717 = vpack.c.b16 %v2612, %v2611
  %v2718 = vpack.c.b16 %v2614, %v2613
  %v2719 = vpack.c.b16 %v2616, %v2615
  %v2720 = vpack.c.b16 %v2618, %v2617
  %v2721 = vpack.c.b16 %v2620, %v2619
  %v2722 = vpack.c.b16 %v2622, %v2621
  %v2723 = vpack.c.b16 %v2624, %v2623
  %v2724 = vpack.c.b16 %v2626, %v2625
  %v2725 = vpack.c.b16 %v2628, %v2627
  %v2726 = vpack.c.b16 %v2630, %v2629
  %v2727 = vpack.c.b16 %v2632, %v2631
  %v2728 = vpack.c.b16 %v2634, %v2633
  %v2729 = vpack.c.b16 %v2636, %v2635
  %v2730 = vpack.c.b16 %v2638, %v2637
  %v2731 = vpack.c.b16 %v2640, %v2639
  %v2732 = vpack.c.b16 %v2642, %v2641
  %v2733 = vpack.c.b16 %v2644, %v2643
  %v2734 = vpack.c.b16 %v2646, %v2645
  %v2735 = vpack.c.b16 %v2648, %v2647
  %v2736 = vpack.c.b16 %v2650, %v2649
  %v2737 = vpack.c.b16 %v2652, %v2651
  %v2738 = vpack.c.b16 %v2654, %v2653
  %v2739 = vpack.c.b16 %v2656, %v2655
  %v2740 = vpack.c.b16 %v2658, %v2657
  %v2741 = vpack.c.b16 %v2660, %v2659
  %v2742 = vpack.c.b16 %v2662, %v2661
  %v2743 = vpack.c.b16 %v2664, %v2663
  %v2744 = vpack.c.b16 %v2666, %v2665
  %v2745 = vpack.c.b16 %v2668, %v2667
  %v2746 = vpack.c.b16 %v2670, %v2669
  %v2747 = vpack.c.b16 %v2672, %v2671
  %v2748 = vpack.c.b16 %v2674, %v2673
  %v2749 = vpack.c.b16 %v2676, %v2675
  %v2750 = vpack.c.b16 %v2678, %v2677
  %2823 = vmatpush.bf16.msra.mxu0 %v2686
  %2824 = vmatpush.bf16.msra.mxu0 %v2685
  %2825 = vmatpush.bf16.msra.mxu0 %v2684
  %2826 = vmatpush.bf16.msra.mxu0 %v2683
  %2827 = vmatpush.bf16.msra.mxu0 %v2682
  %2828 = vmatpush.bf16.msra.mxu0 %v2681
  %2829 = vmatpush.bf16.msra.mxu0 %v2680
  %2830 = vmatpush.bf16.msra.mxu0 %v2679
  %2831 = vmatmul.bf16.gmra.mxu0 %v2247
  %v2832 = vpop.f32.mrf.mxu0
  %v2833 = vadd.f32 0.0, %v2832
  %v2834 = vpop.f32.mrf.mxu0
  %v2835 = vadd.f32 0.0, %v2834
  %2836 = vmatmul.bf16.gmra.mxu0 %v2256
  %v2837 = vpop.f32.mrf.mxu0
  %v2838 = vadd.f32 0.0, %v2837
  %v2839 = vpop.f32.mrf.mxu0
  %v2840 = vadd.f32 0.0, %v2839
  %2841 = vmatmul.bf16.gmra.mxu0 %v2265
  %v2842 = vpop.f32.mrf.mxu0
  %v2843 = vadd.f32 0.0, %v2842
  %v2844 = vpop.f32.mrf.mxu0
  %v2845 = vadd.f32 0.0, %v2844
  %2846 = vmatmul.bf16.gmra.mxu0 %v2274
  %v2847 = vpop.f32.mrf.mxu0
  %v2848 = vadd.f32 0.0, %v2847
  %v2849 = vpop.f32.mrf.mxu0
  %v2850 = vadd.f32 0.0, %v2849
  %2851 = vmatmul.bf16.gmra.mxu0 %v2283
  %v2852 = vpop.f32.mrf.mxu0
  %v2853 = vadd.f32 0.0, %v2852
  %v2854 = vpop.f32.mrf.mxu0
  %v2855 = vadd.f32 0.0, %v2854
  %2856 = vmatmul.bf16.gmra.mxu0 %v2292
  %v2857 = vpop.f32.mrf.mxu0
  %v2858 = vadd.f32 0.0, %v2857
  %v2859 = vpop.f32.mrf.mxu0
  %v2860 = vadd.f32 0.0, %v2859
  %2861 = vmatmul.bf16.gmra.mxu0 %v2301
  %v2862 = vpop.f32.mrf.mxu0
  %v2863 = vadd.f32 0.0, %v2862
  %v2864 = vpop.f32.mrf.mxu0
  %v2865 = vadd.f32 0.0, %v2864
  %2866 = vmatmul.bf16.gmra.mxu0 %v2310
  %v2867 = vpop.f32.mrf.mxu0
  %v2868 = vadd.f32 0.0, %v2867
  %v2869 = vpop.f32.mrf.mxu0
  %v2870 = vadd.f32 0.0, %v2869
  %2871 = vdwg.mxu0
  %2872 = vmatpush.bf16.msra.mxu0 %v2694
  %2873 = vmatpush.bf16.msra.mxu0 %v2693
  %2874 = vmatpush.bf16.msra.mxu0 %v2692
  %2875 = vmatpush.bf16.msra.mxu0 %v2691
  %2876 = vmatpush.bf16.msra.mxu0 %v2690
  %2877 = vmatpush.bf16.msra.mxu0 %v2689
  %2878 = vmatpush.bf16.msra.mxu0 %v2688
  %2879 = vmatpush.bf16.msra.mxu0 %v2687
  %2880 = vmatmul.bf16.gmra.mxu0 %v2248
  %v2881 = vpop.f32.mrf.mxu0
  %v2882 = vadd.f32 %v2833, %v2881
  %v2883 = vpop.f32.mrf.mxu0
  %v2884 = vadd.f32 %v2835, %v2883
  %2885 = vmatmul.bf16.gmra.mxu0 %v2257
  %v2886 = vpop.f32.mrf.mxu0
  %v2887 = vadd.f32 %v2838, %v2886
  %v2888 = vpop.f32.mrf.mxu0
  %v2889 = vadd.f32 %v2840, %v2888
  %2890 = vmatmul.bf16.gmra.mxu0 %v2266
  %v2891 = vpop.f32.mrf.mxu0
  %v2892 = vadd.f32 %v2843, %v2891
  %v2893 = vpop.f32.mrf.mxu0
  %v2894 = vadd.f32 %v2845, %v2893
  %2895 = vmatmul.bf16.gmra.mxu0 %v2275
  %v2896 = vpop.f32.mrf.mxu0
  %v2897 = vadd.f32 %v2848, %v2896
  %v2898 = vpop.f32.mrf.mxu0
  %v2899 = vadd.f32 %v2850, %v2898
  %2900 = vmatmul.bf16.gmra.mxu0 %v2284
  %v2901 = vpop.f32.mrf.mxu0
  %v2902 = vadd.f32 %v2853, %v2901
  %v2903 = vpop.f32.mrf.mxu0
  %v2904 = vadd.f32 %v2855, %v2903
  %2905 = vmatmul.bf16.gmra.mxu0 %v2293
  %v2906 = vpop.f32.mrf.mxu0
  %v2907 = vadd.f32 %v2858, %v2906
  %v2908 = vpop.f32.mrf.mxu0
  %v2909 = vadd.f32 %v2860, %v2908
  %2910 = vmatmul.bf16.gmra.mxu0 %v2302
  %v2911 = vpop.f32.mrf.mxu0
  %v2912 = vadd.f32 %v2863, %v2911
  %v2913 = vpop.f32.mrf.mxu0
  %v2914 = vadd.f32 %v2865, %v2913
  %2915 = vmatmul.bf16.gmra.mxu0 %v2311
  %v2916 = vpop.f32.mrf.mxu0
  %v2917 = vadd.f32 %v2868, %v2916
  %v2918 = vpop.f32.mrf.mxu0
  %v2919 = vadd.f32 %v2870, %v2918
  %2920 = vdwg.mxu0
  %2921 = vmatpush.bf16.msra.mxu0 %v2702
  %2922 = vmatpush.bf16.msra.mxu0 %v2701
  %2923 = vmatpush.bf16.msra.mxu0 %v2700
  %2924 = vmatpush.bf16.msra.mxu0 %v2699
  %2925 = vmatpush.bf16.msra.mxu0 %v2698
  %2926 = vmatpush.bf16.msra.mxu0 %v2697
  %2927 = vmatpush.bf16.msra.mxu0 %v2696
  %2928 = vmatpush.bf16.msra.mxu0 %v2695
  %2929 = vmatmul.bf16.gmra.mxu0 %v2249
  %v2930 = vpop.f32.mrf.mxu0
  %v2931 = vadd.f32 %v2882, %v2930
  %v2932 = vpop.f32.mrf.mxu0
  %v2933 = vadd.f32 %v2884, %v2932
  %2934 = vmatmul.bf16.gmra.mxu0 %v2258
  %v2935 = vpop.f32.mrf.mxu0
  %v2936 = vadd.f32 %v2887, %v2935
  %v2937 = vpop.f32.mrf.mxu0
  %v2938 = vadd.f32 %v2889, %v2937
  %2939 = vmatmul.bf16.gmra.mxu0 %v2267
  %v2940 = vpop.f32.mrf.mxu0
  %v2941 = vadd.f32 %v2892, %v2940
  %v2942 = vpop.f32.mrf.mxu0
  %v2943 = vadd.f32 %v2894, %v2942
  %2944 = vmatmul.bf16.gmra.mxu0 %v2276
  %v2945 = vpop.f32.mrf.mxu0
  %v2946 = vadd.f32 %v2897, %v2945
  %v2947 = vpop.f32.mrf.mxu0
  %v2948 = vadd.f32 %v2899, %v2947
  %2949 = vmatmul.bf16.gmra.mxu0 %v2285
  %v2950 = vpop.f32.mrf.mxu0
  %v2951 = vadd.f32 %v2902, %v2950
  %v2952 = vpop.f32.mrf.mxu0
  %v2953 = vadd.f32 %v2904, %v2952
  %2954 = vmatmul.bf16.gmra.mxu0 %v2294
  %v2955 = vpop.f32.mrf.mxu0
  %v2956 = vadd.f32 %v2907, %v2955
  %v2957 = vpop.f32.mrf.mxu0
  %v2958 = vadd.f32 %v2909, %v2957
  %2959 = vmatmul.bf16.gmra.mxu0 %v2303
  %v2960 = vpop.f32.mrf.mxu0
  %v2961 = vadd.f32 %v2912, %v2960
  %v2962 = vpop.f32.mrf.mxu0
  %v2963 = vadd.f32 %v2914, %v2962
  %2964 = vmatmul.bf16.gmra.mxu0 %v2312
  %v2965 = vpop.f32.mrf.mxu0
  %v2966 = vadd.f32 %v2917, %v2965
  %v2967 = vpop.f32.mrf.mxu0
  %v2968 = vadd.f32 %v2919, %v2967
  %2969 = vdwg.mxu0
  %2970 = vmatpush.bf16.msra.mxu0 %v2710
  %2971 = vmatpush.bf16.msra.mxu0 %v2709
  %2972 = vmatpush.bf16.msra.mxu0 %v2708
  %2973 = vmatpush.bf16.msra.mxu0 %v2707
  %2974 = vmatpush.bf16.msra.mxu0 %v2706
  %2975 = vmatpush.bf16.msra.mxu0 %v2705
  %2976 = vmatpush.bf16.msra.mxu0 %v2704
  %2977 = vmatpush.bf16.msra.mxu0 %v2703
  %2978 = vmatmul.bf16.gmra.mxu0 %v2250
  %v2979 = vpop.f32.mrf.mxu0
  %v2980 = vadd.f32 %v2931, %v2979
  %v2981 = vpop.f32.mrf.mxu0
  %v2982 = vadd.f32 %v2933, %v2981
  %2983 = vmatmul.bf16.gmra.mxu0 %v2259
  %v2984 = vpop.f32.mrf.mxu0
  %v2985 = vadd.f32 %v2936, %v2984
  %v2986 = vpop.f32.mrf.mxu0
  %v2987 = vadd.f32 %v2938, %v2986
  %2988 = vmatmul.bf16.gmra.mxu0 %v2268
  %v2989 = vpop.f32.mrf.mxu0
  %v2990 = vadd.f32 %v2941, %v2989
  %v2991 = vpop.f32.mrf.mxu0
  %v2992 = vadd.f32 %v2943, %v2991
  %2993 = vmatmul.bf16.gmra.mxu0 %v2277
  %v2994 = vpop.f32.mrf.mxu0
  %v2995 = vadd.f32 %v2946, %v2994
  %v2996 = vpop.f32.mrf.mxu0
  %v2997 = vadd.f32 %v2948, %v2996
  %2998 = vmatmul.bf16.gmra.mxu0 %v2286
  %v2999 = vpop.f32.mrf.mxu0
  %v3000 = vadd.f32 %v2951, %v2999
  %v3001 = vpop.f32.mrf.mxu0
  %v3002 = vadd.f32 %v2953, %v3001
  %3003 = vmatmul.bf16.gmra.mxu0 %v2295
  %v3004 = vpop.f32.mrf.mxu0
  %v3005 = vadd.f32 %v2956, %v3004
  %v3006 = vpop.f32.mrf.mxu0
  %v3007 = vadd.f32 %v2958, %v3006
  %3008 = vmatmul.bf16.gmra.mxu0 %v2304
  %v3009 = vpop.f32.mrf.mxu0
  %v3010 = vadd.f32 %v2961, %v3009
  %v3011 = vpop.f32.mrf.mxu0
  %v3012 = vadd.f32 %v2963, %v3011
  %3013 = vmatmul.bf16.gmra.mxu0 %v2313
  %v3014 = vpop.f32.mrf.mxu0
  %v3015 = vadd.f32 %v2966, %v3014
  %v3016 = vpop.f32.mrf.mxu0
  %v3017 = vadd.f32 %v2968, %v3016
  %3018 = vdwg.mxu0
  %3019 = vmatpush.bf16.msra.mxu0 %v2718
  %3020 = vmatpush.bf16.msra.mxu0 %v2717
  %3021 = vmatpush.bf16.msra.mxu0 %v2716
  %3022 = vmatpush.bf16.msra.mxu0 %v2715
  %3023 = vmatpush.bf16.msra.mxu0 %v2714
  %3024 = vmatpush.bf16.msra.mxu0 %v2713
  %3025 = vmatpush.bf16.msra.mxu0 %v2712
  %3026 = vmatpush.bf16.msra.mxu0 %v2711
  %3027 = vmatmul.bf16.gmra.mxu0 %v2251
  %v3028 = vpop.f32.mrf.mxu0
  %v3029 = vadd.f32 %v2980, %v3028
  %v3030 = vpop.f32.mrf.mxu0
  %v3031 = vadd.f32 %v2982, %v3030
  %3032 = vmatmul.bf16.gmra.mxu0 %v2260
  %v3033 = vpop.f32.mrf.mxu0
  %v3034 = vadd.f32 %v2985, %v3033
  %v3035 = vpop.f32.mrf.mxu0
  %v3036 = vadd.f32 %v2987, %v3035
  %3037 = vmatmul.bf16.gmra.mxu0 %v2269
  %v3038 = vpop.f32.mrf.mxu0
  %v3039 = vadd.f32 %v2990, %v3038
  %v3040 = vpop.f32.mrf.mxu0
  %v3041 = vadd.f32 %v2992, %v3040
  %3042 = vmatmul.bf16.gmra.mxu0 %v2278
  %v3043 = vpop.f32.mrf.mxu0
  %v3044 = vadd.f32 %v2995, %v3043
  %v3045 = vpop.f32.mrf.mxu0
  %v3046 = vadd.f32 %v2997, %v3045
  %3047 = vmatmul.bf16.gmra.mxu0 %v2287
  %v3048 = vpop.f32.mrf.mxu0
  %v3049 = vadd.f32 %v3000, %v3048
  %v3050 = vpop.f32.mrf.mxu0
  %v3051 = vadd.f32 %v3002, %v3050
  %3052 = vmatmul.bf16.gmra.mxu0 %v2296
  %v3053 = vpop.f32.mrf.mxu0
  %v3054 = vadd.f32 %v3005, %v3053
  %v3055 = vpop.f32.mrf.mxu0
  %v3056 = vadd.f32 %v3007, %v3055
  %3057 = vmatmul.bf16.gmra.mxu0 %v2305
  %v3058 = vpop.f32.mrf.mxu0
  %v3059 = vadd.f32 %v3010, %v3058
  %v3060 = vpop.f32.mrf.mxu0
  %v3061 = vadd.f32 %v3012, %v3060
  %3062 = vmatmul.bf16.gmra.mxu0 %v2314
  %v3063 = vpop.f32.mrf.mxu0
  %v3064 = vadd.f32 %v3015, %v3063
  %v3065 = vpop.f32.mrf.mxu0
  %v3066 = vadd.f32 %v3017, %v3065
  %3067 = vdwg.mxu0
  %3068 = vmatpush.bf16.msra.mxu0 %v2726
  %3069 = vmatpush.bf16.msra.mxu0 %v2725
  %3070 = vmatpush.bf16.msra.mxu0 %v2724
  %3071 = vmatpush.bf16.msra.mxu0 %v2723
  %3072 = vmatpush.bf16.msra.mxu0 %v2722
  %3073 = vmatpush.bf16.msra.mxu0 %v2721
  %3074 = vmatpush.bf16.msra.mxu0 %v2720
  %3075 = vmatpush.bf16.msra.mxu0 %v2719
  %3076 = vmatmul.bf16.gmra.mxu0 %v2252
  %v3077 = vpop.f32.mrf.mxu0
  %v3078 = vadd.f32 %v3029, %v3077
  %v3079 = vpop.f32.mrf.mxu0
  %v3080 = vadd.f32 %v3031, %v3079
  %3081 = vmatmul.bf16.gmra.mxu0 %v2261
  %v3082 = vpop.f32.mrf.mxu0
  %v3083 = vadd.f32 %v3034, %v3082
  %v3084 = vpop.f32.mrf.mxu0
  %v3085 = vadd.f32 %v3036, %v3084
  %3086 = vmatmul.bf16.gmra.mxu0 %v2270
  %v3087 = vpop.f32.mrf.mxu0
  %v3088 = vadd.f32 %v3039, %v3087
  %v3089 = vpop.f32.mrf.mxu0
  %v3090 = vadd.f32 %v3041, %v3089
  %3091 = vmatmul.bf16.gmra.mxu0 %v2279
  %v3092 = vpop.f32.mrf.mxu0
  %v3093 = vadd.f32 %v3044, %v3092
  %v3094 = vpop.f32.mrf.mxu0
  %v3095 = vadd.f32 %v3046, %v3094
  %3096 = vmatmul.bf16.gmra.mxu0 %v2288
  %v3097 = vpop.f32.mrf.mxu0
  %v3098 = vadd.f32 %v3049, %v3097
  %v3099 = vpop.f32.mrf.mxu0
  %v3100 = vadd.f32 %v3051, %v3099
  %3101 = vmatmul.bf16.gmra.mxu0 %v2297
  %v3102 = vpop.f32.mrf.mxu0
  %v3103 = vadd.f32 %v3054, %v3102
  %v3104 = vpop.f32.mrf.mxu0
  %v3105 = vadd.f32 %v3056, %v3104
  %3106 = vmatmul.bf16.gmra.mxu0 %v2306
  %v3107 = vpop.f32.mrf.mxu0
  %v3108 = vadd.f32 %v3059, %v3107
  %v3109 = vpop.f32.mrf.mxu0
  %v3110 = vadd.f32 %v3061, %v3109
  %3111 = vmatmul.bf16.gmra.mxu0 %v2315
  %v3112 = vpop.f32.mrf.mxu0
  %v3113 = vadd.f32 %v3064, %v3112
  %v3114 = vpop.f32.mrf.mxu0
  %v3115 = vadd.f32 %v3066, %v3114
  %3116 = vdwg.mxu0
  %3117 = vmatpush.bf16.msra.mxu0 %v2734
  %3118 = vmatpush.bf16.msra.mxu0 %v2733
  %3119 = vmatpush.bf16.msra.mxu0 %v2732
  %3120 = vmatpush.bf16.msra.mxu0 %v2731
  %3121 = vmatpush.bf16.msra.mxu0 %v2730
  %3122 = vmatpush.bf16.msra.mxu0 %v2729
  %3123 = vmatpush.bf16.msra.mxu0 %v2728
  %3124 = vmatpush.bf16.msra.mxu0 %v2727
  %3125 = vmatmul.bf16.gmra.mxu0 %v2253
  %v3126 = vpop.f32.mrf.mxu0
  %v3127 = vadd.f32 %v3078, %v3126
  %v3128 = vpop.f32.mrf.mxu0
  %v3129 = vadd.f32 %v3080, %v3128
  %3130 = vmatmul.bf16.gmra.mxu0 %v2262
  %v3131 = vpop.f32.mrf.mxu0
  %v3132 = vadd.f32 %v3083, %v3131
  %v3133 = vpop.f32.mrf.mxu0
  %v3134 = vadd.f32 %v3085, %v3133
  %3135 = vmatmul.bf16.gmra.mxu0 %v2271
  %v3136 = vpop.f32.mrf.mxu0
  %v3137 = vadd.f32 %v3088, %v3136
  %v3138 = vpop.f32.mrf.mxu0
  %v3139 = vadd.f32 %v3090, %v3138
  %3140 = vmatmul.bf16.gmra.mxu0 %v2280
  %v3141 = vpop.f32.mrf.mxu0
  %v3142 = vadd.f32 %v3093, %v3141
  %v3143 = vpop.f32.mrf.mxu0
  %v3144 = vadd.f32 %v3095, %v3143
  %3145 = vmatmul.bf16.gmra.mxu0 %v2289
  %v3146 = vpop.f32.mrf.mxu0
  %v3147 = vadd.f32 %v3098, %v3146
  %v3148 = vpop.f32.mrf.mxu0
  %v3149 = vadd.f32 %v3100, %v3148
  %3150 = vmatmul.bf16.gmra.mxu0 %v2298
  %v3151 = vpop.f32.mrf.mxu0
  %v3152 = vadd.f32 %v3103, %v3151
  %v3153 = vpop.f32.mrf.mxu0
  %v3154 = vadd.f32 %v3105, %v3153
  %3155 = vmatmul.bf16.gmra.mxu0 %v2307
  %v3156 = vpop.f32.mrf.mxu0
  %v3157 = vadd.f32 %v3108, %v3156
  %v3158 = vpop.f32.mrf.mxu0
  %v3159 = vadd.f32 %v3110, %v3158
  %3160 = vmatmul.bf16.gmra.mxu0 %v2316
  %v3161 = vpop.f32.mrf.mxu0
  %v3162 = vadd.f32 %v3113, %v3161
  %v3163 = vpop.f32.mrf.mxu0
  %v3164 = vadd.f32 %v3115, %v3163
  %3165 = vdwg.mxu0
  %3166 = vmatpush.bf16.msra.mxu0 %v2742
  %3167 = vmatpush.bf16.msra.mxu0 %v2741
  %3168 = vmatpush.bf16.msra.mxu0 %v2740
  %3169 = vmatpush.bf16.msra.mxu0 %v2739
  %3170 = vmatpush.bf16.msra.mxu0 %v2738
  %3171 = vmatpush.bf16.msra.mxu0 %v2737
  %3172 = vmatpush.bf16.msra.mxu0 %v2736
  %3173 = vmatpush.bf16.msra.mxu0 %v2735
  %3174 = vmatmul.bf16.gmra.mxu0 %v2254
  %v3175 = vpop.f32.mrf.mxu0
  %v3176 = vadd.f32 %v3127, %v3175
  %v3177 = vpop.f32.mrf.mxu0
  %v3178 = vadd.f32 %v3129, %v3177
  %3179 = vmatmul.bf16.gmra.mxu0 %v2263
  %v3180 = vpop.f32.mrf.mxu0
  %v3181 = vadd.f32 %v3132, %v3180
  %v3182 = vpop.f32.mrf.mxu0
  %v3183 = vadd.f32 %v3134, %v3182
  %3184 = vmatmul.bf16.gmra.mxu0 %v2272
  %v3185 = vpop.f32.mrf.mxu0
  %v3186 = vadd.f32 %v3137, %v3185
  %v3187 = vpop.f32.mrf.mxu0
  %v3188 = vadd.f32 %v3139, %v3187
  %3189 = vmatmul.bf16.gmra.mxu0 %v2281
  %v3190 = vpop.f32.mrf.mxu0
  %v3191 = vadd.f32 %v3142, %v3190
  %v3192 = vpop.f32.mrf.mxu0
  %v3193 = vadd.f32 %v3144, %v3192
  %3194 = vmatmul.bf16.gmra.mxu0 %v2290
  %v3195 = vpop.f32.mrf.mxu0
  %v3196 = vadd.f32 %v3147, %v3195
  %v3197 = vpop.f32.mrf.mxu0
  %v3198 = vadd.f32 %v3149, %v3197
  %3199 = vmatmul.bf16.gmra.mxu0 %v2299
  %v3200 = vpop.f32.mrf.mxu0
  %v3201 = vadd.f32 %v3152, %v3200
  %v3202 = vpop.f32.mrf.mxu0
  %v3203 = vadd.f32 %v3154, %v3202
  %3204 = vmatmul.bf16.gmra.mxu0 %v2308
  %v3205 = vpop.f32.mrf.mxu0
  %v3206 = vadd.f32 %v3157, %v3205
  %v3207 = vpop.f32.mrf.mxu0
  %v3208 = vadd.f32 %v3159, %v3207
  %3209 = vmatmul.bf16.gmra.mxu0 %v2317
  %v3210 = vpop.f32.mrf.mxu0
  %v3211 = vadd.f32 %v3162, %v3210
  %v3212 = vpop.f32.mrf.mxu0
  %v3213 = vadd.f32 %v3164, %v3212
  %3214 = vdwg.mxu0
  %3215 = vmatpush.bf16.msra.mxu0 %v2750
  %3216 = vmatpush.bf16.msra.mxu0 %v2749
  %3217 = vmatpush.bf16.msra.mxu0 %v2748
  %3218 = vmatpush.bf16.msra.mxu0 %v2747
  %3219 = vmatpush.bf16.msra.mxu0 %v2746
  %3220 = vmatpush.bf16.msra.mxu0 %v2745
  %3221 = vmatpush.bf16.msra.mxu0 %v2744
  %3222 = vmatpush.bf16.msra.mxu0 %v2743
  %3223 = vmatmul.bf16.gmra.mxu0 %v2255
  %v3224 = vpop.f32.mrf.mxu0
  %v3225 = vadd.f32 %v3176, %v3224
  %v3226 = vpop.f32.mrf.mxu0
  %v3227 = vadd.f32 %v3178, %v3226
  %3228 = vmatmul.bf16.gmra.mxu0 %v2264
  %v3229 = vpop.f32.mrf.mxu0
  %v3230 = vadd.f32 %v3181, %v3229
  %v3231 = vpop.f32.mrf.mxu0
  %v3232 = vadd.f32 %v3183, %v3231
  %3233 = vmatmul.bf16.gmra.mxu0 %v2273
  %v3234 = vpop.f32.mrf.mxu0
  %v3235 = vadd.f32 %v3186, %v3234
  %v3236 = vpop.f32.mrf.mxu0
  %v3237 = vadd.f32 %v3188, %v3236
  %3238 = vmatmul.bf16.gmra.mxu0 %v2282
  %v3239 = vpop.f32.mrf.mxu0
  %v3240 = vadd.f32 %v3191, %v3239
  %v3241 = vpop.f32.mrf.mxu0
  %v3242 = vadd.f32 %v3193, %v3241
  %3243 = vmatmul.bf16.gmra.mxu0 %v2291
  %v3244 = vpop.f32.mrf.mxu0
  %v3245 = vadd.f32 %v3196, %v3244
  %v3246 = vpop.f32.mrf.mxu0
  %v3247 = vadd.f32 %v3198, %v3246
  %3248 = vmatmul.bf16.gmra.mxu0 %v2300
  %v3249 = vpop.f32.mrf.mxu0
  %v3250 = vadd.f32 %v3201, %v3249
  %v3251 = vpop.f32.mrf.mxu0
  %v3252 = vadd.f32 %v3203, %v3251
  %3253 = vmatmul.bf16.gmra.mxu0 %v2309
  %v3254 = vpop.f32.mrf.mxu0
  %v3255 = vadd.f32 %v3206, %v3254
  %v3256 = vpop.f32.mrf.mxu0
  %v3257 = vadd.f32 %v3208, %v3256
  %3258 = vmatmul.bf16.gmra.mxu0 %v2318
  %v3259 = vpop.f32.mrf.mxu0
  %v3260 = vadd.f32 %v3211, %v3259
  %v3261 = vpop.f32.mrf.mxu0
  %v3262 = vadd.f32 %v3213, %v3261
  %3263 = vdwg.mxu0
  %v3264 = vadd.f32 %v3225, %v3227
  %v3265 = vadd.f32 %v3264, %v3230
  %v3266 = vadd.f32 %v3265, %v3232
  %v3267 = vadd.f32 %v3266, %v3235
  %v3268 = vadd.f32 %v3267, %v3237
  %v3269 = vadd.f32 %v3268, %v3240
  %v3270 = vadd.f32 %v3269, %v3242
  %v3271 = vadd.f32 %v3270, %v3245
  %v3272 = vadd.f32 %v3271, %v3247
  %v3273 = vadd.f32 %v3272, %v3250
  %v3274 = vadd.f32 %v3273, %v3252
  %v3275 = vadd.f32 %v3274, %v3255
  %v3276 = vadd.f32 %v3275, %v3257
  %v3277 = vadd.f32 %v3276, %v3260
  %v3278 = vadd.f32 %v3277, %v3262
  %v3279 = vrot.slane %v3278, 4
  %v3280 = vadd.f32 %v3278, %v3279
  %v3281 = vrot.slane %v3280, 2
  %v3282 = vadd.f32 %v3280, %v3281
  %v3283 = vrot.slane %v3282, 1
  %v3284 = vadd.f32 %v3282, %v3283
  %v3285 = vmul.f32 %v3225, %v3225
  %v3286 = vmul.f32 %v3227, %v3227
  %v3287 = vmul.f32 %v3230, %v3230
  %v3288 = vmul.f32 %v3232, %v3232
  %v3289 = vmul.f32 %v3235, %v3235
  %v3290 = vmul.f32 %v3237, %v3237
  %v3291 = vmul.f32 %v3240, %v3240
  %v3292 = vmul.f32 %v3242, %v3242
  %v3293 = vmul.f32 %v3245, %v3245
  %v3294 = vmul.f32 %v3247, %v3247
  %v3295 = vmul.f32 %v3250, %v3250
  %v3296 = vmul.f32 %v3252, %v3252
  %v3297 = vmul.f32 %v3255, %v3255
  %v3298 = vmul.f32 %v3257, %v3257
  %v3299 = vmul.f32 %v3260, %v3260
  %v3300 = vmul.f32 %v3262, %v3262
  %v3301 = vadd.f32 %v3285, %v3286
  %v3302 = vadd.f32 %v3301, %v3287
  %v3303 = vadd.f32 %v3302, %v3288
  %v3304 = vadd.f32 %v3303, %v3289
  %v3305 = vadd.f32 %v3304, %v3290
  %v3306 = vadd.f32 %v3305, %v3291
  %v3307 = vadd.f32 %v3306, %v3292
  %v3308 = vadd.f32 %v3307, %v3293
  %v3309 = vadd.f32 %v3308, %v3294
  %v3310 = vadd.f32 %v3309, %v3295
  %v3311 = vadd.f32 %v3310, %v3296
  %v3312 = vadd.f32 %v3311, %v3297
  %v3313 = vadd.f32 %v3312, %v3298
  %v3314 = vadd.f32 %v3313, %v3299
  %v3315 = vadd.f32 %v3314, %v3300
  %v3316 = vrot.slane %v3315, 4
  %v3317 = vadd.f32 %v3315, %v3316
  %v3318 = vrot.slane %v3317, 2
  %v3319 = vadd.f32 %v3317, %v3318
  %v3320 = vrot.slane %v3319, 1
  %v3321 = vadd.f32 %v3319, %v3320
  %vm3322 = vcmask 1040384
  %v3323 = vsel %vm3322, %v3284, %v3321
  %3324 = vst [vmem:[%s3] sm:$0x3] %v3323
  %v3325 = vpack.c.bf16 %v3225, %v3225
  %v3326 = vpack.c.bf16 %v3227, %v3227
  %v3327 = vpack.c.bf16 %v3230, %v3230
  %v3328 = vpack.c.bf16 %v3232, %v3232
  %v3329 = vpack.c.bf16 %v3235, %v3235
  %v3330 = vpack.c.bf16 %v3237, %v3237
  %v3331 = vpack.c.bf16 %v3240, %v3240
  %v3332 = vpack.c.bf16 %v3242, %v3242
  %v3333 = vpack.c.bf16 %v3245, %v3245
  %v3334 = vpack.c.bf16 %v3247, %v3247
  %v3335 = vpack.c.bf16 %v3250, %v3250
  %v3336 = vpack.c.bf16 %v3252, %v3252
  %v3337 = vpack.c.bf16 %v3255, %v3255
  %v3338 = vpack.c.bf16 %v3257, %v3257
  %v3339 = vpack.c.bf16 %v3260, %v3260
  %v3340 = vpack.c.bf16 %v3262, %v3262
  %3341 = vst [vmem:[%s2] sm:$0xf] %v3325
  %3342 = vst [vmem:[%s2 + $0x4] sm:$0xf] %v3326
  %3343 = vst [vmem:[%s2 + $0x8] sm:$0xf] %v3327
  %3344 = vst [vmem:[%s2 + $0xc] sm:$0xf] %v3328
  %3345 = vst [vmem:[%s2 + $0x10] sm:$0xf] %v3329
  %3346 = vst [vmem:[%s2 + $0x14] sm:$0xf] %v3330
  %3347 = vst [vmem:[%s2 + $0x18] sm:$0xf] %v3331
  %3348 = vst [vmem:[%s2 + $0x1c] sm:$0xf] %v3332
  %3349 = vst [vmem:[%s2 + $0x20] sm:$0xf] %v3333
  %3350 = vst [vmem:[%s2 + $0x24] sm:$0xf] %v3334
  %3351 = vst [vmem:[%s2 + $0x28] sm:$0xf] %v3335
  %3352 = vst [vmem:[%s2 + $0x2c] sm:$0xf] %v3336
  %3353 = vst [vmem:[%s2 + $0x30] sm:$0xf] %v3337
  %3354 = vst [vmem:[%s2 + $0x34] sm:$0xf] %v3338
  %3355 = vst [vmem:[%s2 + $0x38] sm:$0xf] %v3339
  %3356 = vst [vmem:[%s2 + $0x3c] sm:$0xf] %v3340
  // Predicated region
  $region10: #{basic_block_forward.3} parent=0 // pred_check
    _
  $region11: #{basic_block_forward.3} parent=0 // pred_check_branch
    %3358 = sbr.rel (0) target = $region13
  $region12: #{basic_block_forward.3} parent=0 // pred_region
    _
  $region13: #{basic_block_forward.3} parent=0 // pred_fallthru
    _
  // Predicated region
  $region14: #{basic_block_forward.3} parent=0 // pred_check
    _
  $region15: #{basic_block_forward.3} parent=0 // pred_check_branch
    %3360 = sbr.rel (0) target = $region17
  $region16: #{basic_block_forward.3} parent=0 // pred_region
    _
  $region17: #{basic_block_forward.3} parent=0 // pred_fallthru
    _
  // Predicated region
  $region18: #{basic_block_forward.3} parent=0 // pred_check
    _
  $region19: #{basic_block_forward.3} parent=0 // pred_check_branch
    %3362 = sbr.rel (0) target = $region21
  $region20: #{basic_block_forward.3} parent=0 // pred_region
    _
  $region21: #{basic_block_forward.3} parent=0 // pred_fallthru
    _
  // Predicated region
  $region22: #{basic_block_forward.3} parent=0 // pred_check
    _
  $region23: #{basic_block_forward.3} parent=0 // pred_check_branch
    %3364 = sbr.rel (0) target = $region25
  $region24: #{basic_block_forward.3} parent=0 // pred_region
    _
  $region25: #{basic_block_forward.3} parent=0 // pred_fallthru
    _

// kernel: basic_block_forward.5
$region0: #{basic_block_forward.5}
  #allocation0 [shape = 'u32[]', space=smem, size = 0x4, offset = 0x4, fixed_abs, tag = 'smem constant byte address 0x4 - core index']
  #allocation1 [shape = 'u32[72,128]{1,0:T(1,128)}', space=vmem, size = 0x9000, scoped, tag = 'internal scratch']
  %s0 = inlined_call_operand.vmem [shape: bf16[2,8,8,128], index: 0, kind: input, shape index: {}]
  %s1 = inlined_call_operand.vmem [shape: f32[2,8,8,128], index: 1, kind: input, shape index: {}]
  %s2 = inlined_call_operand.vmem [shape: f32[1,128], index: 2, kind: input, shape index: {}]
  %s3 = inlined_call_operand.vmem [shape: f32[1,128], index: 3, kind: input, shape index: {}]
  %s4 = inlined_call_operand.vmem [shape: f32[2,8,8,128], index: 4, kind: output, shape index: {}]
  %s5 = sld [smem:[#allocation0]]
  $region49: #{basic_block_forward.5} parent=0
    _
  %s7 = ssub.s32 1, %s5
  %s8 = scalar_select 0, %s7, %s5
  loop: start=0, step=1, limit=4
  $region2: #{basic_block_forward.5} parent=0 // loop_pre_header
    _
  $region3: #{basic_block_forward.5} parent=0 // loop_header
    %s10 = sphi 0, %s14
    %p11 = scmp.ge.s32.totalorder %s10, 4
    %s20 = sphi 0, %s22
    %s23 = sphi 0, %s20
    %s24 = sphi 0, %s23
    %s40 = sphi 0, %s24
    %s46 = sphi 0, %s48
    %s49 = sphi 0, %s46
    %s50 = sphi 0, %s49
    %s66 = sphi 0, %s50
    %s70 = sphi 0, %s70
    %s72 = sphi 0, %s70
    %s73 = sphi 0, %s72
    %s87 = sphi 0, %s73
    %s91 = sphi 0, %s91
    %s93 = sphi 0, %s91
    %s94 = sphi 0, %s93
    %s108 = sphi 0, %s94
    %s114 = sphi 0, %s116
    %s117 = sphi 0, %s114
    %s118 = sphi 0, %s117
    %s134 = sphi 0, %s118
  $region4: #{basic_block_forward.5} parent=0 // loop_header_branch
    %13 = sbr.rel (%p11) target = $region8
  $region5: #{basic_block_forward.5} parent=0 // loop_body
    %s15 = ssub.s32 %s10, 1
    %s16 = ssub.s32 %s10, 2
    %s17 = sadd.s32 %s10, 1
    %s18 = ssub.s32 %s10, %s17
    %p19 = scmp.eq.s32.totalorder %s18, 0
    %s21 = sadd.s32 %s20, 1
    %s22 = scalar_select %p19, %s20, %s21
    %p25 = pneg %p19
    %p26 = scmp.eq.s32.totalorder %s10, 1
    %p27 = por %p25, %p26
    %p28 = scmp.ne.s32.totalorder %s20, %s23
    %p29 = scmp.eq.s32.totalorder %s10, 0
    %p30 = por %p28, %p29
    %p31 = scmp.ne.s32.totalorder %s20, %s23
    %p32 = scmp.eq.s32.totalorder %s15, 1
    %p33 = por %p31, %p32
    %p34 = scmp.ne.s32.totalorder %s23, %s24
    %p35 = scmp.eq.s32.totalorder %s15, 0
    %p36 = por %p34, %p35
    %p37 = scmp.ne.s32.totalorder %s23, %s24
    %p38 = scmp.eq.s32.totalorder %s16, 1
    %p39 = por %p37, %p38
    %p41 = scmp.ne.s32.totalorder %s24, %s40
    %p42 = scmp.eq.s32.totalorder %s16, 0
    %p43 = por %p41, %p42
    %s44 = ssub.s32 %s10, %s17
    %p45 = scmp.eq.s32.totalorder %s44, 0
    %s47 = sadd.s32 %s46, 1
    %s48 = scalar_select %p45, %s46, %s47
    %p51 = pneg %p45
    %p52 = scmp.eq.s32.totalorder %s10, 1
    %p53 = por %p51, %p52
    %p54 = scmp.ne.s32.totalorder %s46, %s49
    %p55 = scmp.eq.s32.totalorder %s10, 0
    %p56 = por %p54, %p55
    %p57 = scmp.ne.s32.totalorder %s46, %s49
    %p58 = scmp.eq.s32.totalorder %s15, 1
    %p59 = por %p57, %p58
    %p60 = scmp.ne.s32.totalorder %s49, %s50
    %p61 = scmp.eq.s32.totalorder %s15, 0
    %p62 = por %p60, %p61
    %p63 = scmp.ne.s32.totalorder %s49, %s50
    %p64 = scmp.eq.s32.totalorder %s16, 1
    %p65 = por %p63, %p64
    %p67 = scmp.ne.s32.totalorder %s50, %s66
    %p68 = scmp.eq.s32.totalorder %s16, 0
    %p69 = por %p67, %p68
    %s71 = sadd.s32 %s70, 1
    %p74 = scmp.eq.s32.totalorder %s10, 1
    %p75 = scmp.ne.s32.totalorder %s70, %s72
    %p76 = scmp.eq.s32.totalorder %s10, 0
    %p77 = por %p75, %p76
    %p78 = scmp.ne.s32.totalorder %s70, %s72
    %p79 = scmp.eq.s32.totalorder %s15, 1
    %p80 = por %p78, %p79
    %p81 = scmp.ne.s32.totalorder %s72, %s73
    %p82 = scmp.eq.s32.totalorder %s15, 0
    %p83 = por %p81, %p82
    %p84 = scmp.ne.s32.totalorder %s72, %s73
    %p85 = scmp.eq.s32.totalorder %s16, 1
    %p86 = por %p84, %p85
    %p88 = scmp.ne.s32.totalorder %s73, %s87
    %p89 = scmp.eq.s32.totalorder %s16, 0
    %p90 = por %p88, %p89
    %s92 = sadd.s32 %s91, 1
    %p95 = scmp.eq.s32.totalorder %s10, 1
    %p96 = scmp.ne.s32.totalorder %s91, %s93
    %p97 = scmp.eq.s32.totalorder %s10, 0
    %p98 = por %p96, %p97
    %p99 = scmp.ne.s32.totalorder %s91, %s93
    %p100 = scmp.eq.s32.totalorder %s15, 1
    %p101 = por %p99, %p100
    %p102 = scmp.ne.s32.totalorder %s93, %s94
    %p103 = scmp.eq.s32.totalorder %s15, 0
    %p104 = por %p102, %p103
    %p105 = scmp.ne.s32.totalorder %s93, %s94
    %p106 = scmp.eq.s32.totalorder %s16, 1
    %p107 = por %p105, %p106
    %p109 = scmp.ne.s32.totalorder %s94, %s108
    %p110 = scmp.eq.s32.totalorder %s16, 0
    %p111 = por %p109, %p110
    %s112 = ssub.s32 %s10, %s17
    %p113 = scmp.eq.s32.totalorder %s112, 0
    %s115 = sadd.s32 %s114, 1
    %s116 = scalar_select %p113, %s114, %s115
    %p119 = pneg %p113
    %p120 = scmp.eq.s32.totalorder %s10, 1
    %p121 = por %p119, %p120
    %p122 = scmp.ne.s32.totalorder %s114, %s117
    %p123 = scmp.eq.s32.totalorder %s10, 0
    %p124 = por %p122, %p123
    %p125 = scmp.ne.s32.totalorder %s114, %s117
    %p126 = scmp.eq.s32.totalorder %s15, 1
    %p127 = por %p125, %p126
    %p128 = scmp.ne.s32.totalorder %s117, %s118
    %p129 = scmp.eq.s32.totalorder %s15, 0
    %p130 = por %p128, %p129
    %p131 = scmp.ne.s32.totalorder %s117, %s118
    %p132 = scmp.eq.s32.totalorder %s16, 1
    %p133 = por %p131, %p132
    %p135 = scmp.ne.s32.totalorder %s118, %s134
    %p136 = scmp.eq.s32.totalorder %s16, 0
    %p137 = por %p135, %p136
    %p138 = scmp.le.s32.totalorder 1, %s10
    %p139 = scmp.lt.s32.totalorder %s10, 3
    %p140 = pnand %p138, %p139
    %p141 = pneg %p140
    // Predicated region
    $region9: #{basic_block_forward.5} parent=5 // pred_check
      _
    $region10: #{basic_block_forward.5} parent=5 // pred_check_branch
      %143 = sbr.rel (%p140) target = $region12
    $region11: #{basic_block_forward.5} parent=5 // pred_region
      %s144 = ssub.s32 %s10, 1
      // Predicated region
      $region13: #{basic_block_forward.5} parent=11 // pred_check
        %p145 = pneg %p83
      $region14: #{basic_block_forward.5} parent=11 // pred_check_branch
        %147 = sbr.rel (%p145) target = $region16
      $region15: #{basic_block_forward.5} parent=11 // pred_region
        _
      $region16: #{basic_block_forward.5} parent=11 // pred_fallthru
        _
      // Predicated region
      $region17: #{basic_block_forward.5} parent=11 // pred_check
        %p148 = pneg %p104
      $region18: #{basic_block_forward.5} parent=11 // pred_check_branch
        %150 = sbr.rel (%p148) target = $region20
      $region19: #{basic_block_forward.5} parent=11 // pred_region
        _
      $region20: #{basic_block_forward.5} parent=11 // pred_fallthru
        _
    $region12: #{basic_block_forward.5} parent=5 // pred_fallthru
      _
    %p151 = scmp.lt.s32.totalorder %s10, 2
    // Predicated region
    $region21: #{basic_block_forward.5} parent=5 // pred_check
      %p152 = pneg %p151
    $region22: #{basic_block_forward.5} parent=5 // pred_check_branch
      %154 = sbr.rel (%p152) target = $region24
    $region23: #{basic_block_forward.5} parent=5 // pred_region
      // Predicated region
      $region25: #{basic_block_forward.5} parent=23 // pred_check
        %p155 = pneg %p30
      $region26: #{basic_block_forward.5} parent=23 // pred_check_branch
        %157 = sbr.rel (%p155) target = $region28
      $region27: #{basic_block_forward.5} parent=23 // pred_region
        %p158 = scmp.lt.s32.totalorder %s10, 1
        %s159 = scalar_select %p158, %s10, 1
        %s160 = smul.addr %s159, 8
        %s161 = smul.addr %s160, 4
        %s162 = scalar_lea.vmem %s0, %s161
      $region28: #{basic_block_forward.5} parent=23 // pred_fallthru
        _
      // Predicated region
      $region29: #{basic_block_forward.5} parent=23 // pred_check
        %p163 = pneg %p56
      $region30: #{basic_block_forward.5} parent=23 // pred_check_branch
        %165 = sbr.rel (%p163) target = $region32
      $region31: #{basic_block_forward.5} parent=23 // pred_region
        %p166 = scmp.lt.s32.totalorder %s10, 1
        %s167 = scalar_select %p166, %s10, 1
        %s168 = smul.addr %s167, 8
        %s169 = smul.addr %s168, 8
        %s170 = scalar_lea.vmem %s1, %s169
      $region32: #{basic_block_forward.5} parent=23 // pred_fallthru
        _
    $region24: #{basic_block_forward.5} parent=5 // pred_fallthru
      _
    %p171 = scmp.le.s32.totalorder 1, %s10
    %p172 = scmp.lt.s32.totalorder %s10, 3
    %p173 = pnand %p171, %p172
    %p174 = pneg %p173
    // Predicated region
    $region33: #{basic_block_forward.5} parent=5 // pred_check
      _
    $region34: #{basic_block_forward.5} parent=5 // pred_check_branch
      %176 = sbr.rel (%p173) target = $region36
    $region35: #{basic_block_forward.5} parent=5 // pred_region
      %s177 = ssub.s32 %s10, 1
      %p178 = scmp.lt.s32.totalorder %s15, 1
      %s179 = scalar_select %p178, %s15, 1
      %s180 = smul.addr %s179, 8
      %s181 = smul.addr %s180, 4
      %s182 = scalar_lea.vmem %s0, %s181
      %p183 = pneg %p36
      %p184 = pneg %p33
      %p185 = scmp.lt.s32.totalorder %s15, 1
      %s186 = scalar_select %p185, %s15, 1
      %s187 = smul.addr %s186, 8
      %s188 = smul.addr %s187, 8
      %s189 = scalar_lea.vmem %s1, %s188
      %p190 = pneg %p62
      %p191 = pneg %p59
      %p192 = pneg %p83
      %p193 = pneg %p80
      %p194 = pneg %p104
      %p195 = pneg %p101
      %p196 = pneg %p130
      %p197 = pneg %p127
      %p198 = scmp.lt.s32.totalorder %s15, 1
      %s199 = scalar_select %p198, %s15, 1
      %s200 = smul.addr %s199, 8
      %s201 = smul.addr %s200, 8
      %s202 = scalar_lea.vmem %s4, %s201
      %p203 = scmp.lt.s32.totalorder %s15, 1
      %s204 = scalar_select %p203, %s15, 1
      %s205 = smul.addr %s204, 8
      %s206 = smul.addr %s205, 4
      %s207 = scalar_lea.vmem %s0, %s206
      %p208 = scmp.lt.s32.totalorder %s15, 1
      %s209 = scalar_select %p208, %s15, 1
      %s210 = smul.addr %s209, 8
      %s211 = smul.addr %s210, 8
      %s212 = scalar_lea.vmem %s1, %s211
      %p213 = scmp.lt.s32.totalorder %s15, 1
      %s214 = scalar_select %p213, %s15, 1
      %s215 = smul.addr %s214, 8
      %s216 = smul.addr %s215, 8
      %s217 = scalar_lea.vmem %s4, %s216
      %v218 = vld [vmem:[%s207] sm:$0xf]
      %v219 = vld [vmem:[%s207 + $0x4] sm:$0xf]
      %v220 = vld [vmem:[%s207 + $0x8] sm:$0xf]
      %v221 = vld [vmem:[%s207 + $0xc] sm:$0xf]
      %v222 = vld [vmem:[%s207 + $0x10] sm:$0xf]
      %v223 = vld [vmem:[%s207 + $0x14] sm:$0xf]
      %v224 = vld [vmem:[%s207 + $0x18] sm:$0xf]
      %v225 = vld [vmem:[%s207 + $0x1c] sm:$0xf]
      %v226 = vunpack.c.l.bf16 %v218
      %v227 = vunpack.c.l.bf16 %v219
      %v228 = vunpack.c.l.bf16 %v220
      %v229 = vunpack.c.l.bf16 %v221
      %v230 = vunpack.c.l.bf16 %v222
      %v231 = vunpack.c.l.bf16 %v223
      %v232 = vunpack.c.l.bf16 %v224
      %v233 = vunpack.c.l.bf16 %v225
      %v234 = vld [vmem:[%s2] sm:$0x1]
      %v236 = vperm.slane %v234, 0
      %v238 = vmul.f32 %v226, %v236
      %v239 = vmul.f32 %v227, %v236
      %v240 = vmul.f32 %v228, %v236
      %v241 = vmul.f32 %v229, %v236
      %v242 = vmul.f32 %v230, %v236
      %v243 = vmul.f32 %v231, %v236
      %v244 = vmul.f32 %v232, %v236
      %v245 = vmul.f32 %v233, %v236
      %v246 = vld [vmem:[%s3] sm:$0x1]
      %v248 = vperm.slane %v246, 0
      %v250 = vadd.f32 %v238, %v248
      %v251 = vadd.f32 %v239, %v248
      %v252 = vadd.f32 %v240, %v248
      %v253 = vadd.f32 %v241, %v248
      %v254 = vadd.f32 %v242, %v248
      %v255 = vadd.f32 %v243, %v248
      %v256 = vadd.f32 %v244, %v248
      %v257 = vadd.f32 %v245, %v248
      %v258 = vld [vmem:[%s212] sm:$0xff]
      %v259 = vld [vmem:[%s212 + $0x8] sm:$0xff]
      %v260 = vld [vmem:[%s212 + $0x10] sm:$0xff]
      %v261 = vld [vmem:[%s212 + $0x18] sm:$0xff]
      %v262 = vld [vmem:[%s212 + $0x20] sm:$0xff]
      %v263 = vld [vmem:[%s212 + $0x28] sm:$0xff]
      %v264 = vld [vmem:[%s212 + $0x30] sm:$0xff]
      %v265 = vld [vmem:[%s212 + $0x38] sm:$0xff]
      %v266 = vadd.f32 %v250, %v258
      %v267 = vadd.f32 %v251, %v259
      %v268 = vadd.f32 %v252, %v260
      %v269 = vadd.f32 %v253, %v261
      %v270 = vadd.f32 %v254, %v262
      %v271 = vadd.f32 %v255, %v263
      %v272 = vadd.f32 %v256, %v264
      %v273 = vadd.f32 %v257, %v265
      %v274 = vmax.f32 %v266, 0.0
      %v275 = vmax.f32 %v267, 0.0
      %v276 = vmax.f32 %v268, 0.0
      %v277 = vmax.f32 %v269, 0.0
      %v278 = vmax.f32 %v270, 0.0
      %v279 = vmax.f32 %v271, 0.0
      %v280 = vmax.f32 %v272, 0.0
      %v281 = vmax.f32 %v273, 0.0
      %282 = vst [vmem:[%s217] sm:$0xff] %v274
      %283 = vst [vmem:[%s217 + $0x8] sm:$0xff] %v275
      %284 = vst [vmem:[%s217 + $0x10] sm:$0xff] %v276
      %285 = vst [vmem:[%s217 + $0x18] sm:$0xff] %v277
      %286 = vst [vmem:[%s217 + $0x20] sm:$0xff] %v278
      %287 = vst [vmem:[%s217 + $0x28] sm:$0xff] %v279
      %288 = vst [vmem:[%s217 + $0x30] sm:$0xff] %v280
      %289 = vst [vmem:[%s217 + $0x38] sm:$0xff] %v281
      %p290 = scmp.lt.s32.totalorder %s15, 1
      %s291 = scalar_select %p290, %s15, 1
      %s292 = smul.addr %s291, 8
      %s293 = smul.addr %s292, 8
      %s294 = scalar_lea.vmem %s4, %s293
      // Predicated region
      $region37: #{basic_block_forward.5} parent=35 // pred_check
        %p295 = pneg %p127
      $region38: #{basic_block_forward.5} parent=35 // pred_check_branch
        %297 = sbr.rel (%p295) target = $region40
      $region39: #{basic_block_forward.5} parent=35 // pred_region
        _
      $region40: #{basic_block_forward.5} parent=35 // pred_fallthru
        _
    $region36: #{basic_block_forward.5} parent=5 // pred_fallthru
      _
    %p298 = scmp.le.s32.totalorder 2, %s10
    // Predicated region
    $region41: #{basic_block_forward.5} parent=5 // pred_check
      %p299 = pneg %p298
    $region42: #{basic_block_forward.5} parent=5 // pred_check_branch
      %301 = sbr.rel (%p299) target = $region44
    $region43: #{basic_block_forward.5} parent=5 // pred_region
      %s302 = ssub.s32 %s10, 2
      // Predicated region
      $region45: #{basic_block_forward.5} parent=43 // pred_check
        %p303 = pneg %p133
      $region46: #{basic_block_forward.5} parent=43 // pred_check_branch
        %305 = sbr.rel (%p303) target = $region48
      $region47: #{basic_block_forward.5} parent=43 // pred_region
        %p306 = scmp.lt.s32.totalorder %s16, 1
        %s307 = scalar_select %p306, %s16, 1
        %s308 = smul.addr %s307, 8
        %s309 = smul.addr %s308, 8
        %s310 = scalar_lea.vmem %s4, %s309
      $region48: #{basic_block_forward.5} parent=43 // pred_fallthru
        _
    $region44: #{basic_block_forward.5} parent=5 // pred_fallthru
      _
  $region6: #{basic_block_forward.5} parent=0 // loop_footer
    %s14 = sadd.s32 1, %s10
  $region7: #{basic_block_forward.5} parent=0 // loop_footer_branch
    %9 = sbr.rel target = $region3
  $region8: #{basic_block_forward.5} parent=0 // loop_exit
    _

// kernel: basic_block_forward.4
$region0: #{basic_block_forward.4}
  #allocation0 [shape = 'u32[]', space=smem, size = 0x4, offset = 0x4, fixed_abs, tag = 'smem constant byte address 0x4 - core index']
  #allocation1 [shape = 'u32[72,128]{1,0:T(1,128)}', space=vmem, size = 0x9000, scoped, tag = 'internal scratch']
  #allocation2 [shape = 'bf16[2,10,10,128]{3,2,1,0:T(8,128)(2,1)}', space=vmem, size = 0x14000, scoped, tag = 'scratch operand']
  #allocation3 [shape = 'bf16[128,1152]{1,0:T(8,128)(2,1)}', space=vmem, size = 0x48000, scoped, tag = 'scratch operand']
  %s0 = inlined_call_operand.vmem [shape: bf16[2,8,8,128], index: 0, kind: input, shape index: {}]
  %s1 = inlined_call_operand.vmem [shape: bf16[1152,128], index: 1, kind: input, shape index: {}]
  %s2 = inlined_call_operand.vmem [shape: f32[1,128], index: 2, kind: input, shape index: {}]
  %s3 = inlined_call_operand.vmem [shape: f32[1,128], index: 3, kind: input, shape index: {}]
  %s4 = inlined_call_operand.vmem [shape: bf16[2,8,8,128], index: 4, kind: output, shape index: {0}]
  %s5 = inlined_call_operand.vmem [shape: f32[1,2,128], index: 5, kind: output, shape index: {1}]
  %6 = xla_tuple %s4, %s5
  %s7 = sld [smem:[#allocation0]]
  $region34: #{basic_block_forward.4} parent=0
    _
  %s9 = ssub.s32 1, %s7
  %s10 = scalar_select 0, %s9, %s7
  // Predicated region
  $region2: #{basic_block_forward.4} parent=0 // pred_check
    _
  $region3: #{basic_block_forward.4} parent=0 // pred_check_branch
    %12 = sbr.rel (0) target = $region5
  $region4: #{basic_block_forward.4} parent=0 // pred_region
    _
  $region5: #{basic_block_forward.4} parent=0 // pred_fallthru
    _
  // Predicated region
  $region6: #{basic_block_forward.4} parent=0 // pred_check
    _
  $region7: #{basic_block_forward.4} parent=0 // pred_check_branch
    %14 = sbr.rel (0) target = $region9
  $region8: #{basic_block_forward.4} parent=0 // pred_region
    _
  $region9: #{basic_block_forward.4} parent=0 // pred_fallthru
    _
  // Predicated region
  $region10: #{basic_block_forward.4} parent=0 // pred_check
    _
  $region11: #{basic_block_forward.4} parent=0 // pred_check_branch
    %16 = sbr.rel (0) target = $region13
  $region12: #{basic_block_forward.4} parent=0 // pred_region
    _
  $region13: #{basic_block_forward.4} parent=0 // pred_fallthru
    _
  // Predicated region
  $region14: #{basic_block_forward.4} parent=0 // pred_check
    _
  $region15: #{basic_block_forward.4} parent=0 // pred_check_branch
    %18 = sbr.rel (0) target = $region17
  $region16: #{basic_block_forward.4} parent=0 // pred_region
    _
  $region17: #{basic_block_forward.4} parent=0 // pred_fallthru
    _
  %20 = vst [vmem:[#allocation2] sm:$0xf] 0
  %21 = vst [vmem:[#allocation2 + $0x4] sm:$0x1] 0
  %22 = vst [vmem:[#allocation2 + $0x8] sm:$0xf] 0
  %23 = vst [vmem:[#allocation2 + $0xc] sm:$0x1] 0
  %24 = vst [vmem:[#allocation2 + $0x10] sm:$0xf] 0
  %25 = vst [vmem:[#allocation2 + $0x14] sm:$0x1] 0
  %26 = vst [vmem:[#allocation2 + $0x18] sm:$0xf] 0
  %27 = vst [vmem:[#allocation2 + $0x1c] sm:$0x1] 0
  %28 = vst [vmem:[#allocation2 + $0x20] sm:$0xf] 0
  %29 = vst [vmem:[#allocation2 + $0x24] sm:$0x1] 0
  %30 = vst [vmem:[#allocation2 + $0x28] sm:$0xf] 0
  %31 = vst [vmem:[#allocation2 + $0x2c] sm:$0x1] 0
  %32 = vst [vmem:[#allocation2 + $0x30] sm:$0xf] 0
  %33 = vst [vmem:[#allocation2 + $0x34] sm:$0x1] 0
  %34 = vst [vmem:[#allocation2 + $0x38] sm:$0xf] 0
  %35 = vst [vmem:[#allocation2 + $0x3c] sm:$0x1] 0
  %36 = vst [vmem:[#allocation2 + $0x40] sm:$0xf] 0
  %37 = vst [vmem:[#allocation2 + $0x44] sm:$0x1] 0
  %38 = vst [vmem:[#allocation2 + $0x48] sm:$0xf] 0
  %39 = vst [vmem:[#allocation2 + $0x4c] sm:$0x1] 0
  %40 = vst [vmem:[#allocation2 + $0x50] sm:$0xf] 0
  %41 = vst [vmem:[#allocation2 + $0x54] sm:$0x1] 0
  %42 = vst [vmem:[#allocation2 + $0x58] sm:$0xf] 0
  %43 = vst [vmem:[#allocation2 + $0x5c] sm:$0x1] 0
  %44 = vst [vmem:[#allocation2 + $0x60] sm:$0xf] 0
  %45 = vst [vmem:[#allocation2 + $0x64] sm:$0x1] 0
  %46 = vst [vmem:[#allocation2 + $0x68] sm:$0xf] 0
  %47 = vst [vmem:[#allocation2 + $0x6c] sm:$0x1] 0
  %48 = vst [vmem:[#allocation2 + $0x70] sm:$0xf] 0
  %49 = vst [vmem:[#allocation2 + $0x74] sm:$0x1] 0
  %50 = vst [vmem:[#allocation2 + $0x78] sm:$0xf] 0
  %51 = vst [vmem:[#allocation2 + $0x7c] sm:$0x1] 0
  %52 = vst [vmem:[#allocation2 + $0x80] sm:$0xf] 0
  %53 = vst [vmem:[#allocation2 + $0x84] sm:$0x1] 0
  %54 = vst [vmem:[#allocation2 + $0x88] sm:$0xf] 0
  %55 = vst [vmem:[#allocation2 + $0x8c] sm:$0x1] 0
  %56 = vst [vmem:[#allocation2 + $0x90] sm:$0xf] 0
  %57 = vst [vmem:[#allocation2 + $0x94] sm:$0x1] 0
  %58 = vst [vmem:[#allocation2 + $0x98] sm:$0xf] 0
  %59 = vst [vmem:[#allocation2 + $0x9c] sm:$0x1] 0
  %v60 = vld [vmem:[%s0] sm:$0xf]
  %v61 = vld [vmem:[%s0 + $0x4] sm:$0xf]
  %v62 = vld [vmem:[%s0 + $0x8] sm:$0xf]
  %v63 = vld [vmem:[%s0 + $0xc] sm:$0xf]
  %v64 = vld [vmem:[%s0 + $0x10] sm:$0xf]
  %v65 = vld [vmem:[%s0 + $0x14] sm:$0xf]
  %v66 = vld [vmem:[%s0 + $0x18] sm:$0xf]
  %v67 = vld [vmem:[%s0 + $0x1c] sm:$0xf]
  %v68 = vld [vmem:[%s0 + $0x20] sm:$0xf]
  %v69 = vld [vmem:[%s0 + $0x24] sm:$0xf]
  %v70 = vld [vmem:[%s0 + $0x28] sm:$0xf]
  %v71 = vld [vmem:[%s0 + $0x2c] sm:$0xf]
  %v72 = vld [vmem:[%s0 + $0x30] sm:$0xf]
  %v73 = vld [vmem:[%s0 + $0x34] sm:$0xf]
  %v74 = vld [vmem:[%s0 + $0x38] sm:$0xf]
  %v75 = vld [vmem:[%s0 + $0x3c] sm:$0xf]
  %v76 = vunpack.c.l.bf16 %v60
  %v77 = vunpack.c.l.bf16 %v61
  %v78 = vunpack.c.l.bf16 %v62
  %v79 = vunpack.c.l.bf16 %v63
  %v80 = vunpack.c.l.bf16 %v64
  %v81 = vunpack.c.l.bf16 %v65
  %v82 = vunpack.c.l.bf16 %v66
  %v83 = vunpack.c.l.bf16 %v67
  %v84 = vunpack.c.l.bf16 %v68
  %v85 = vunpack.c.l.bf16 %v69
  %v86 = vunpack.c.l.bf16 %v70
  %v87 = vunpack.c.l.bf16 %v71
  %v88 = vunpack.c.l.bf16 %v72
  %v89 = vunpack.c.l.bf16 %v73
  %v90 = vunpack.c.l.bf16 %v74
  %v91 = vunpack.c.l.bf16 %v75
  %v92 = vld [vmem:[%s2] sm:$0x1]
  %v94 = vperm.slane %v92, 0
  %v96 = vmul.f32 %v76, %v94
  %v97 = vmul.f32 %v77, %v94
  %v98 = vmul.f32 %v78, %v94
  %v99 = vmul.f32 %v79, %v94
  %v100 = vmul.f32 %v80, %v94
  %v101 = vmul.f32 %v81, %v94
  %v102 = vmul.f32 %v82, %v94
  %v103 = vmul.f32 %v83, %v94
  %v104 = vmul.f32 %v84, %v94
  %v105 = vmul.f32 %v85, %v94
  %v106 = vmul.f32 %v86, %v94
  %v107 = vmul.f32 %v87, %v94
  %v108 = vmul.f32 %v88, %v94
  %v109 = vmul.f32 %v89, %v94
  %v110 = vmul.f32 %v90, %v94
  %v111 = vmul.f32 %v91, %v94
  %v112 = vld [vmem:[%s3] sm:$0x1]
  %v114 = vperm.slane %v112, 0
  %v116 = vadd.f32 %v96, %v114
  %v117 = vadd.f32 %v97, %v114
  %v118 = vadd.f32 %v98, %v114
  %v119 = vadd.f32 %v99, %v114
  %v120 = vadd.f32 %v100, %v114
  %v121 = vadd.f32 %v101, %v114
  %v122 = vadd.f32 %v102, %v114
  %v123 = vadd.f32 %v103, %v114
  %v124 = vadd.f32 %v104, %v114
  %v125 = vadd.f32 %v105, %v114
  %v126 = vadd.f32 %v106, %v114
  %v127 = vadd.f32 %v107, %v114
  %v128 = vadd.f32 %v108, %v114
  %v129 = vadd.f32 %v109, %v114
  %v130 = vadd.f32 %v110, %v114
  %v131 = vadd.f32 %v111, %v114
  %v132 = vmax.f32 %v116, 0.0
  %v133 = vmax.f32 %v117, 0.0
  %v134 = vmax.f32 %v118, 0.0
  %v135 = vmax.f32 %v119, 0.0
  %v136 = vmax.f32 %v120, 0.0
  %v137 = vmax.f32 %v121, 0.0
  %v138 = vmax.f32 %v122, 0.0
  %v139 = vmax.f32 %v123, 0.0
  %v140 = vmax.f32 %v124, 0.0
  %v141 = vmax.f32 %v125, 0.0
  %v142 = vmax.f32 %v126, 0.0
  %v143 = vmax.f32 %v127, 0.0
  %v144 = vmax.f32 %v128, 0.0
  %v145 = vmax.f32 %v129, 0.0
  %v146 = vmax.f32 %v130, 0.0
  %v147 = vmax.f32 %v131, 0.0
  %v148 = vpack.c.bf16 %v132, %v132
  %v149 = vpack.c.bf16 %v133, %v133
  %v150 = vpack.c.bf16 %v134, %v134
  %v151 = vpack.c.bf16 %v135, %v135
  %v152 = vpack.c.bf16 %v136, %v136
  %v153 = vpack.c.bf16 %v137, %v137
  %v154 = vpack.c.bf16 %v138, %v138
  %v155 = vpack.c.bf16 %v139, %v139
  %v156 = vpack.c.bf16 %v140, %v140
  %v157 = vpack.c.bf16 %v141, %v141
  %v158 = vpack.c.bf16 %v142, %v142
  %v159 = vpack.c.bf16 %v143, %v143
  %v160 = vpack.c.bf16 %v144, %v144
  %v161 = vpack.c.bf16 %v145, %v145
  %v162 = vpack.c.bf16 %v146, %v146
  %v163 = vpack.c.bf16 %v147, %v147
  %v165 = vshrl.u32 %v148, 16
  %v167 = vrot.slane %v165, 7
  %v168 = vshll.u32 %v148, 16
  %v170 = vor.u32 %v167, %v168
  %v171 = vrot.slane %v167, 4
  %v173 = vshrl.u32 %v149, 16
  %v175 = vrot.slane %v173, 7
  %v176 = vshll.u32 %v149, 16
  %v178 = vor.u32 %v175, %v176
  %v179 = vrot.slane %v175, 4
  %v181 = vshrl.u32 %v150, 16
  %v183 = vrot.slane %v181, 7
  %v184 = vshll.u32 %v150, 16
  %v186 = vor.u32 %v183, %v184
  %v187 = vrot.slane %v183, 4
  %v189 = vshrl.u32 %v151, 16
  %v191 = vrot.slane %v189, 7
  %v192 = vshll.u32 %v151, 16
  %v194 = vor.u32 %v191, %v192
  %v195 = vrot.slane %v191, 4
  %v197 = vshrl.u32 %v152, 16
  %v199 = vrot.slane %v197, 7
  %v200 = vshll.u32 %v152, 16
  %v202 = vor.u32 %v199, %v200
  %v203 = vrot.slane %v199, 4
  %v205 = vshrl.u32 %v153, 16
  %v207 = vrot.slane %v205, 7
  %v208 = vshll.u32 %v153, 16
  %v210 = vor.u32 %v207, %v208
  %v211 = vrot.slane %v207, 4
  %v213 = vshrl.u32 %v154, 16
  %v215 = vrot.slane %v213, 7
  %v216 = vshll.u32 %v154, 16
  %v218 = vor.u32 %v215, %v216
  %v219 = vrot.slane %v215, 4
  %v221 = vshrl.u32 %v155, 16
  %v223 = vrot.slane %v221, 7
  %v224 = vshll.u32 %v155, 16
  %v226 = vor.u32 %v223, %v224
  %v227 = vrot.slane %v223, 4
  %v229 = vshrl.u32 %v156, 16
  %v231 = vrot.slane %v229, 7
  %v232 = vshll.u32 %v156, 16
  %v234 = vor.u32 %v231, %v232
  %v235 = vrot.slane %v231, 4
  %v237 = vshrl.u32 %v157, 16
  %v239 = vrot.slane %v237, 7
  %v240 = vshll.u32 %v157, 16
  %v242 = vor.u32 %v239, %v240
  %v243 = vrot.slane %v239, 4
  %v245 = vshrl.u32 %v158, 16
  %v247 = vrot.slane %v245, 7
  %v248 = vshll.u32 %v158, 16
  %v250 = vor.u32 %v247, %v248
  %v251 = vrot.slane %v247, 4
  %v253 = vshrl.u32 %v159, 16
  %v255 = vrot.slane %v253, 7
  %v256 = vshll.u32 %v159, 16
  %v258 = vor.u32 %v255, %v256
  %v259 = vrot.slane %v255, 4
  %v261 = vshrl.u32 %v160, 16
  %v263 = vrot.slane %v261, 7
  %v264 = vshll.u32 %v160, 16
  %v266 = vor.u32 %v263, %v264
  %v267 = vrot.slane %v263, 4
  %v269 = vshrl.u32 %v161, 16
  %v271 = vrot.slane %v269, 7
  %v272 = vshll.u32 %v161, 16
  %v274 = vor.u32 %v271, %v272
  %v275 = vrot.slane %v271, 4
  %v277 = vshrl.u32 %v162, 16
  %v279 = vrot.slane %v277, 7
  %v280 = vshll.u32 %v162, 16
  %v282 = vor.u32 %v279, %v280
  %v283 = vrot.slane %v279, 4
  %v285 = vshrl.u32 %v163, 16
  %v287 = vrot.slane %v285, 7
  %v288 = vshll.u32 %v163, 16
  %v290 = vor.u32 %v287, %v288
  %v291 = vrot.slane %v287, 4
  %s324 = scalar_lea.vmem [#allocation2], 8
  %vm325 = vcmask 1043456
  %vm326 = vsmask.f32 7938
  %vm327 = vmand %vm325, %vm326
  %v328 = vld [vmem:[%s324] sm:$0xf]
  %v329 = vsel %vm327, %v170, %v328
  %330 = vst [vmem:[%s324] sm:$0xf] %v329
  %vm331 = vcmask 1040384
  %vm332 = vsmask.f32 256
  %vm333 = vmand %vm331, %vm332
  %v334 = vld [vmem:[%s324 + $0x4] sm:$0x1]
  %v335 = vsel %vm333, %v171, %v334
  %336 = vst [vmem:[%s324 + $0x4] sm:$0x1] %v335
  %v337 = vld [vmem:[%s324 + $0x8] sm:$0xf]
  %v338 = vsel %vm327, %v178, %v337
  %339 = vst [vmem:[%s324 + $0x8] sm:$0xf] %v338
  %v340 = vld [vmem:[%s324 + $0xc] sm:$0x1]
  %v341 = vsel %vm333, %v179, %v340
  %342 = vst [vmem:[%s324 + $0xc] sm:$0x1] %v341
  %v343 = vld [vmem:[%s324 + $0x10] sm:$0xf]
  %v344 = vsel %vm327, %v186, %v343
  %345 = vst [vmem:[%s324 + $0x10] sm:$0xf] %v344
  %v346 = vld [vmem:[%s324 + $0x14] sm:$0x1]
  %v347 = vsel %vm333, %v187, %v346
  %348 = vst [vmem:[%s324 + $0x14] sm:$0x1] %v347
  %v349 = vld [vmem:[%s324 + $0x18] sm:$0xf]
  %v350 = vsel %vm327, %v194, %v349
  %351 = vst [vmem:[%s324 + $0x18] sm:$0xf] %v350
  %v352 = vld [vmem:[%s324 + $0x1c] sm:$0x1]
  %v353 = vsel %vm333, %v195, %v352
  %354 = vst [vmem:[%s324 + $0x1c] sm:$0x1] %v353
  %v355 = vld [vmem:[%s324 + $0x20] sm:$0xf]
  %v356 = vsel %vm327, %v202, %v355
  %357 = vst [vmem:[%s324 + $0x20] sm:$0xf] %v356
  %v358 = vld [vmem:[%s324 + $0x24] sm:$0x1]
  %v359 = vsel %vm333, %v203, %v358
  %360 = vst [vmem:[%s324 + $0x24] sm:$0x1] %v359
  %v361 = vld [vmem:[%s324 + $0x28] sm:$0xf]
  %v362 = vsel %vm327, %v210, %v361
  %363 = vst [vmem:[%s324 + $0x28] sm:$0xf] %v362
  %v364 = vld [vmem:[%s324 + $0x2c] sm:$0x1]
  %v365 = vsel %vm333, %v211, %v364
  %366 = vst [vmem:[%s324 + $0x2c] sm:$0x1] %v365
  %v367 = vld [vmem:[%s324 + $0x30] sm:$0xf]
  %v368 = vsel %vm327, %v218, %v367
  %369 = vst [vmem:[%s324 + $0x30] sm:$0xf] %v368
  %v370 = vld [vmem:[%s324 + $0x34] sm:$0x1]
  %v371 = vsel %vm333, %v219, %v370
  %372 = vst [vmem:[%s324 + $0x34] sm:$0x1] %v371
  %v373 = vld [vmem:[%s324 + $0x38] sm:$0xf]
  %v374 = vsel %vm327, %v226, %v373
  %375 = vst [vmem:[%s324 + $0x38] sm:$0xf] %v374
  %v376 = vld [vmem:[%s324 + $0x3c] sm:$0x1]
  %v377 = vsel %vm333, %v227, %v376
  %378 = vst [vmem:[%s324 + $0x3c] sm:$0x1] %v377
  %v379 = vld [vmem:[%s324 + $0x50] sm:$0xf]
  %v380 = vsel %vm327, %v234, %v379
  %381 = vst [vmem:[%s324 + $0x50] sm:$0xf] %v380
  %v382 = vld [vmem:[%s324 + $0x54] sm:$0x1]
  %v383 = vsel %vm333, %v235, %v382
  %384 = vst [vmem:[%s324 + $0x54] sm:$0x1] %v383
  %v385 = vld [vmem:[%s324 + $0x58] sm:$0xf]
  %v386 = vsel %vm327, %v242, %v385
  %387 = vst [vmem:[%s324 + $0x58] sm:$0xf] %v386
  %v388 = vld [vmem:[%s324 + $0x5c] sm:$0x1]
  %v389 = vsel %vm333, %v243, %v388
  %390 = vst [vmem:[%s324 + $0x5c] sm:$0x1] %v389
  %v391 = vld [vmem:[%s324 + $0x60] sm:$0xf]
  %v392 = vsel %vm327, %v250, %v391
  %393 = vst [vmem:[%s324 + $0x60] sm:$0xf] %v392
  %v394 = vld [vmem:[%s324 + $0x64] sm:$0x1]
  %v395 = vsel %vm333, %v251, %v394
  %396 = vst [vmem:[%s324 + $0x64] sm:$0x1] %v395
  %v397 = vld [vmem:[%s324 + $0x68] sm:$0xf]
  %v398 = vsel %vm327, %v258, %v397
  %399 = vst [vmem:[%s324 + $0x68] sm:$0xf] %v398
  %v400 = vld [vmem:[%s324 + $0x6c] sm:$0x1]
  %v401 = vsel %vm333, %v259, %v400
  %402 = vst [vmem:[%s324 + $0x6c] sm:$0x1] %v401
  %v403 = vld [vmem:[%s324 + $0x70] sm:$0xf]
  %v404 = vsel %vm327, %v266, %v403
  %405 = vst [vmem:[%s324 + $0x70] sm:$0xf] %v404
  %v406 = vld [vmem:[%s324 + $0x74] sm:$0x1]
  %v407 = vsel %vm333, %v267, %v406
  %408 = vst [vmem:[%s324 + $0x74] sm:$0x1] %v407
  %v409 = vld [vmem:[%s324 + $0x78] sm:$0xf]
  %v410 = vsel %vm327, %v274, %v409
  %411 = vst [vmem:[%s324 + $0x78] sm:$0xf] %v410
  %v412 = vld [vmem:[%s324 + $0x7c] sm:$0x1]
  %v413 = vsel %vm333, %v275, %v412
  %414 = vst [vmem:[%s324 + $0x7c] sm:$0x1] %v413
  %v415 = vld [vmem:[%s324 + $0x80] sm:$0xf]
  %v416 = vsel %vm327, %v282, %v415
  %417 = vst [vmem:[%s324 + $0x80] sm:$0xf] %v416
  %v418 = vld [vmem:[%s324 + $0x84] sm:$0x1]
  %v419 = vsel %vm333, %v283, %v418
  %420 = vst [vmem:[%s324 + $0x84] sm:$0x1] %v419
  %v421 = vld [vmem:[%s324 + $0x88] sm:$0xf]
  %v422 = vsel %vm327, %v290, %v421
  %423 = vst [vmem:[%s324 + $0x88] sm:$0xf] %v422
  %v424 = vld [vmem:[%s324 + $0x8c] sm:$0x1]
  %v425 = vsel %vm333, %v291, %v424
  %426 = vst [vmem:[%s324 + $0x8c] sm:$0x1] %v425
  %v427 = vld [vmem:[#allocation2] sm:$0xf]
  %v428 = vld [vmem:[#allocation2 + $0x8] sm:$0xf]
  %v429 = vld [vmem:[#allocation2 + $0x10] sm:$0xf]
  %v430 = vld [vmem:[#allocation2 + $0x18] sm:$0xf]
  %v431 = vld [vmem:[#allocation2 + $0x20] sm:$0xf]
  %v432 = vld [vmem:[#allocation2 + $0x28] sm:$0xf]
  %v433 = vld [vmem:[#allocation2 + $0x30] sm:$0xf]
  %v434 = vld [vmem:[#allocation2 + $0x38] sm:$0xf]
  %435 = vst [vmem:[#allocation3] sm:$0xf] %v427
  %436 = vst [vmem:[#allocation3 + $0x24] sm:$0xf] %v428
  %437 = vst [vmem:[#allocation3 + $0x48] sm:$0xf] %v429
  %438 = vst [vmem:[#allocation3 + $0x6c] sm:$0xf] %v430
  %439 = vst [vmem:[#allocation3 + $0x90] sm:$0xf] %v431
  %440 = vst [vmem:[#allocation3 + $0xb4] sm:$0xf] %v432
  %441 = vst [vmem:[#allocation3 + $0xd8] sm:$0xf] %v433
  %442 = vst [vmem:[#allocation3 + $0xfc] sm:$0xf] %v434
  %v443 = vld [vmem:[#allocation2] sm:$0xf]
  %v444 = vld [vmem:[#allocation2 + $0x4] sm:$0x1]
  %v445 = vld [vmem:[#allocation2 + $0x8] sm:$0xf]
  %v446 = vld [vmem:[#allocation2 + $0xc] sm:$0x1]
  %v447 = vld [vmem:[#allocation2 + $0x10] sm:$0xf]
  %v448 = vld [vmem:[#allocation2 + $0x14] sm:$0x1]
  %v449 = vld [vmem:[#allocation2 + $0x18] sm:$0xf]
  %v450 = vld [vmem:[#allocation2 + $0x1c] sm:$0x1]
  %v451 = vld [vmem:[#allocation2 + $0x20] sm:$0xf]
  %v452 = vld [vmem:[#allocation2 + $0x24] sm:$0x1]
  %v453 = vld [vmem:[#allocation2 + $0x28] sm:$0xf]
  %v454 = vld [vmem:[#allocation2 + $0x2c] sm:$0x1]
  %v455 = vld [vmem:[#allocation2 + $0x30] sm:$0xf]
  %v456 = vld [vmem:[#allocation2 + $0x34] sm:$0x1]
  %v457 = vld [vmem:[#allocation2 + $0x38] sm:$0xf]
  %v458 = vld [vmem:[#allocation2 + $0x3c] sm:$0x1]
  %vm459 = vsmask.f32 3328
  %vm460 = vsmask.f32 7440
  %vm461 = vmor %vm459, %vm460
  %v463 = vshrl.u32 %v443, 16
  %v465 = vrot.slane %v463, 4
  %v466 = vshll.u32 %v443, 16
  %v468 = vrot.slane %v466, 5
  %v469 = vor.u32 %v465, %v468
  %v470 = vrot.slane %v469, 4
  %v472 = vshll.u32 %v444, 16
  %v474 = vrot.slane %v472, 5
  %v475 = vsel %vm461, %v470, %v474
  %v477 = vshrl.u32 %v445, 16
  %v479 = vrot.slane %v477, 4
  %v480 = vshll.u32 %v445, 16
  %v482 = vrot.slane %v480, 5
  %v483 = vor.u32 %v479, %v482
  %v484 = vrot.slane %v483, 4
  %v486 = vshll.u32 %v446, 16
  %v488 = vrot.slane %v486, 5
  %v489 = vsel %vm461, %v484, %v488
  %v491 = vshrl.u32 %v447, 16
  %v493 = vrot.slane %v491, 4
  %v494 = vshll.u32 %v447, 16
  %v496 = vrot.slane %v494, 5
  %v497 = vor.u32 %v493, %v496
  %v498 = vrot.slane %v497, 4
  %v500 = vshll.u32 %v448, 16
  %v502 = vrot.slane %v500, 5
  %v503 = vsel %vm461, %v498, %v502
  %v505 = vshrl.u32 %v449, 16
  %v507 = vrot.slane %v505, 4
  %v508 = vshll.u32 %v449, 16
  %v510 = vrot.slane %v508, 5
  %v511 = vor.u32 %v507, %v510
  %v512 = vrot.slane %v511, 4
  %v514 = vshll.u32 %v450, 16
  %v516 = vrot.slane %v514, 5
  %v517 = vsel %vm461, %v512, %v516
  %v519 = vshrl.u32 %v451, 16
  %v521 = vrot.slane %v519, 4
  %v522 = vshll.u32 %v451, 16
  %v524 = vrot.slane %v522, 5
  %v525 = vor.u32 %v521, %v524
  %v526 = vrot.slane %v525, 4
  %v528 = vshll.u32 %v452, 16
  %v530 = vrot.slane %v528, 5
  %v531 = vsel %vm461, %v526, %v530
  %v533 = vshrl.u32 %v453, 16
  %v535 = vrot.slane %v533, 4
  %v536 = vshll.u32 %v453, 16
  %v538 = vrot.slane %v536, 5
  %v539 = vor.u32 %v535, %v538
  %v540 = vrot.slane %v539, 4
  %v542 = vshll.u32 %v454, 16
  %v544 = vrot.slane %v542, 5
  %v545 = vsel %vm461, %v540, %v544
  %v547 = vshrl.u32 %v455, 16
  %v549 = vrot.slane %v547, 4
  %v550 = vshll.u32 %v455, 16
  %v552 = vrot.slane %v550, 5
  %v553 = vor.u32 %v549, %v552
  %v554 = vrot.slane %v553, 4
  %v556 = vshll.u32 %v456, 16
  %v558 = vrot.slane %v556, 5
  %v559 = vsel %vm461, %v554, %v558
  %v561 = vshrl.u32 %v457, 16
  %v563 = vrot.slane %v561, 4
  %v564 = vshll.u32 %v457, 16
  %v566 = vrot.slane %v564, 5
  %v567 = vor.u32 %v563, %v566
  %v568 = vrot.slane %v567, 4
  %v570 = vshll.u32 %v458, 16
  %v572 = vrot.slane %v570, 5
  %v573 = vsel %vm461, %v568, %v572
  %582 = vst [vmem:[#allocation3 + $0x4] sm:$0xf] %v475
  %583 = vst [vmem:[#allocation3 + $0x28] sm:$0xf] %v489
  %584 = vst [vmem:[#allocation3 + $0x4c] sm:$0xf] %v503
  %585 = vst [vmem:[#allocation3 + $0x70] sm:$0xf] %v517
  %586 = vst [vmem:[#allocation3 + $0x94] sm:$0xf] %v531
  %587 = vst [vmem:[#allocation3 + $0xb8] sm:$0xf] %v545
  %588 = vst [vmem:[#allocation3 + $0xdc] sm:$0xf] %v559
  %589 = vst [vmem:[#allocation3 + $0x100] sm:$0xf] %v573
  %v590 = vld [vmem:[#allocation2] sm:$0xe]
  %v591 = vld [vmem:[#allocation2 + $0x4] sm:$0x1]
  %v592 = vld [vmem:[#allocation2 + $0x8] sm:$0xe]
  %v593 = vld [vmem:[#allocation2 + $0xc] sm:$0x1]
  %v594 = vld [vmem:[#allocation2 + $0x10] sm:$0xe]
  %v595 = vld [vmem:[#allocation2 + $0x14] sm:$0x1]
  %v596 = vld [vmem:[#allocation2 + $0x18] sm:$0xe]
  %v597 = vld [vmem:[#allocation2 + $0x1c] sm:$0x1]
  %v598 = vld [vmem:[#allocation2 + $0x20] sm:$0xe]
  %v599 = vld [vmem:[#allocation2 + $0x24] sm:$0x1]
  %v600 = vld [vmem:[#allocation2 + $0x28] sm:$0xe]
  %v601 = vld [vmem:[#allocation2 + $0x2c] sm:$0x1]
  %v602 = vld [vmem:[#allocation2 + $0x30] sm:$0xe]
  %v603 = vld [vmem:[#allocation2 + $0x34] sm:$0x1]
  %v604 = vld [vmem:[#allocation2 + $0x38] sm:$0xe]
  %v605 = vld [vmem:[#allocation2 + $0x3c] sm:$0x1]
  %vm622 = vcmask 1042432
  %vm623 = vcmask 1046532
  %vm624 = vmor %vm622, %vm623
  %v625 = vrot.slane %v590, 5
  %v626 = vrot.slane %v625, 4
  %v627 = vrot.slane %v591, 5
  %v628 = vsel %vm624, %v626, %v627
  %v629 = vrot.slane %v592, 5
  %v630 = vrot.slane %v629, 4
  %v631 = vrot.slane %v593, 5
  %v632 = vsel %vm624, %v630, %v631
  %v633 = vrot.slane %v594, 5
  %v634 = vrot.slane %v633, 4
  %v635 = vrot.slane %v595, 5
  %v636 = vsel %vm624, %v634, %v635
  %v637 = vrot.slane %v596, 5
  %v638 = vrot.slane %v637, 4
  %v639 = vrot.slane %v597, 5
  %v640 = vsel %vm624, %v638, %v639
  %v641 = vrot.slane %v598, 5
  %v642 = vrot.slane %v641, 4
  %v643 = vrot.slane %v599, 5
  %v644 = vsel %vm624, %v642, %v643
  %v645 = vrot.slane %v600, 5
  %v646 = vrot.slane %v645, 4
  %v647 = vrot.slane %v601, 5
  %v648 = vsel %vm624, %v646, %v647
  %v649 = vrot.slane %v602, 5
  %v650 = vrot.slane %v649, 4
  %v651 = vrot.slane %v603, 5
  %v652 = vsel %vm624, %v650, %v651
  %v653 = vrot.slane %v604, 5
  %v654 = vrot.slane %v653, 4
  %v655 = vrot.slane %v605, 5
  %v656 = vsel %vm624, %v654, %v655
  %665 = vst [vmem:[#allocation3 + $0x8] sm:$0xf] %v628
  %666 = vst [vmem:[#allocation3 + $0x2c] sm:$0xf] %v632
  %667 = vst [vmem:[#allocation3 + $0x50] sm:$0xf] %v636
  %668 = vst [vmem:[#allocation3 + $0x74] sm:$0xf] %v640
  %669 = vst [vmem:[#allocation3 + $0x98] sm:$0xf] %v644
  %670 = vst [vmem:[#allocation3 + $0xbc] sm:$0xf] %v648
  %671 = vst [vmem:[#allocation3 + $0xe0] sm:$0xf] %v652
  %672 = vst [vmem:[#allocation3 + $0x104] sm:$0xf] %v656
  %v673 = vld [vmem:[%s324] sm:$0xf]
  %v674 = vld [vmem:[%s324 + $0x8] sm:$0xf]
  %v675 = vld [vmem:[%s324 + $0x10] sm:$0xf]
  %v676 = vld [vmem:[%s324 + $0x18] sm:$0xf]
  %v677 = vld [vmem:[%s324 + $0x20] sm:$0xf]
  %v678 = vld [vmem:[%s324 + $0x28] sm:$0xf]
  %v679 = vld [vmem:[%s324 + $0x30] sm:$0xf]
  %v680 = vld [vmem:[%s324 + $0x38] sm:$0xf]
  %681 = vst [vmem:[#allocation3 + $0xc] sm:$0xf] %v673
  %682 = vst [vmem:[#allocation3 + $0x30] sm:$0xf] %v674
  %683 = vst [vmem:[#allocation3 + $0x54] sm:$0xf] %v675
  %684 = vst [vmem:[#allocation3 + $0x78] sm:$0xf] %v676
  %685 = vst [vmem:[#allocation3 + $0x9c] sm:$0xf] %v677
  %686 = vst [vmem:[#allocation3 + $0xc0] sm:$0xf] %v678
  %687 = vst [vmem:[#allocation3 + $0xe4] sm:$0xf] %v679
  %688 = vst [vmem:[#allocation3 + $0x108] sm:$0xf] %v680
  %v689 = vld [vmem:[%s324] sm:$0xf]
  %v690 = vld [vmem:[%s324 + $0x4] sm:$0x1]
  %v691 = vld [vmem:[%s324 + $0x8] sm:$0xf]
  %v692 = vld [vmem:[%s324 + $0xc] sm:$0x1]
  %v693 = vld [vmem:[%s324 + $0x10] sm:$0xf]
  %v694 = vld [vmem:[%s324 + $0x14] sm:$0x1]
  %v695 = vld [vmem:[%s324 + $0x18] sm:$0xf]
  %v696 = vld [vmem:[%s324 + $0x1c] sm:$0x1]
  %v697 = vld [vmem:[%s324 + $0x20] sm:$0xf]
  %v698 = vld [vmem:[%s324 + $0x24] sm:$0x1]
  %v699 = vld [vmem:[%s324 + $0x28] sm:$0xf]
  %v700 = vld [vmem:[%s324 + $0x2c] sm:$0x1]
  %v701 = vld [vmem:[%s324 + $0x30] sm:$0xf]
  %v702 = vld [vmem:[%s324 + $0x34] sm:$0x1]
  %v703 = vld [vmem:[%s324 + $0x38] sm:$0xf]
  %v704 = vld [vmem:[%s324 + $0x3c] sm:$0x1]
  %v706 = vshrl.u32 %v689, 16
  %v708 = vrot.slane %v706, 4
  %v709 = vshll.u32 %v689, 16
  %v711 = vrot.slane %v709, 5
  %v712 = vor.u32 %v708, %v711
  %v713 = vrot.slane %v712, 4
  %v715 = vshll.u32 %v690, 16
  %v717 = vrot.slane %v715, 5
  %v718 = vsel %vm461, %v713, %v717
  %v720 = vshrl.u32 %v691, 16
  %v722 = vrot.slane %v720, 4
  %v723 = vshll.u32 %v691, 16
  %v725 = vrot.slane %v723, 5
  %v726 = vor.u32 %v722, %v725
  %v727 = vrot.slane %v726, 4
  %v729 = vshll.u32 %v692, 16
  %v731 = vrot.slane %v729, 5
  %v732 = vsel %vm461, %v727, %v731
  %v734 = vshrl.u32 %v693, 16
  %v736 = vrot.slane %v734, 4
  %v737 = vshll.u32 %v693, 16
  %v739 = vrot.slane %v737, 5
  %v740 = vor.u32 %v736, %v739
  %v741 = vrot.slane %v740, 4
  %v743 = vshll.u32 %v694, 16
  %v745 = vrot.slane %v743, 5
  %v746 = vsel %vm461, %v741, %v745
  %v748 = vshrl.u32 %v695, 16
  %v750 = vrot.slane %v748, 4
  %v751 = vshll.u32 %v695, 16
  %v753 = vrot.slane %v751, 5
  %v754 = vor.u32 %v750, %v753
  %v755 = vrot.slane %v754, 4
  %v757 = vshll.u32 %v696, 16
  %v759 = vrot.slane %v757, 5
  %v760 = vsel %vm461, %v755, %v759
  %v762 = vshrl.u32 %v697, 16
  %v764 = vrot.slane %v762, 4
  %v765 = vshll.u32 %v697, 16
  %v767 = vrot.slane %v765, 5
  %v768 = vor.u32 %v764, %v767
  %v769 = vrot.slane %v768, 4
  %v771 = vshll.u32 %v698, 16
  %v773 = vrot.slane %v771, 5
  %v774 = vsel %vm461, %v769, %v773
  %v776 = vshrl.u32 %v699, 16
  %v778 = vrot.slane %v776, 4
  %v779 = vshll.u32 %v699, 16
  %v781 = vrot.slane %v779, 5
  %v782 = vor.u32 %v778, %v781
  %v783 = vrot.slane %v782, 4
  %v785 = vshll.u32 %v700, 16
  %v787 = vrot.slane %v785, 5
  %v788 = vsel %vm461, %v783, %v787
  %v790 = vshrl.u32 %v701, 16
  %v792 = vrot.slane %v790, 4
  %v793 = vshll.u32 %v701, 16
  %v795 = vrot.slane %v793, 5
  %v796 = vor.u32 %v792, %v795
  %v797 = vrot.slane %v796, 4
  %v799 = vshll.u32 %v702, 16
  %v801 = vrot.slane %v799, 5
  %v802 = vsel %vm461, %v797, %v801
  %v804 = vshrl.u32 %v703, 16
  %v806 = vrot.slane %v804, 4
  %v807 = vshll.u32 %v703, 16
  %v809 = vrot.slane %v807, 5
  %v810 = vor.u32 %v806, %v809
  %v811 = vrot.slane %v810, 4
  %v813 = vshll.u32 %v704, 16
  %v815 = vrot.slane %v813, 5
  %v816 = vsel %vm461, %v811, %v815
  %825 = vst [vmem:[#allocation3 + $0x10] sm:$0xf] %v718
  %826 = vst [vmem:[#allocation3 + $0x34] sm:$0xf] %v732
  %827 = vst [vmem:[#allocation3 + $0x58] sm:$0xf] %v746
  %828 = vst [vmem:[#allocation3 + $0x7c] sm:$0xf] %v760
  %829 = vst [vmem:[#allocation3 + $0xa0] sm:$0xf] %v774
  %830 = vst [vmem:[#allocation3 + $0xc4] sm:$0xf] %v788
  %831 = vst [vmem:[#allocation3 + $0xe8] sm:$0xf] %v802
  %832 = vst [vmem:[#allocation3 + $0x10c] sm:$0xf] %v816
  %v833 = vld [vmem:[%s324] sm:$0xe]
  %v834 = vld [vmem:[%s324 + $0x4] sm:$0x1]
  %v835 = vld [vmem:[%s324 + $0x8] sm:$0xe]
  %v836 = vld [vmem:[%s324 + $0xc] sm:$0x1]
  %v837 = vld [vmem:[%s324 + $0x10] sm:$0xe]
  %v838 = vld [vmem:[%s324 + $0x14] sm:$0x1]
  %v839 = vld [vmem:[%s324 + $0x18] sm:$0xe]
  %v840 = vld [vmem:[%s324 + $0x1c] sm:$0x1]
  %v841 = vld [vmem:[%s324 + $0x20] sm:$0xe]
  %v842 = vld [vmem:[%s324 + $0x24] sm:$0x1]
  %v843 = vld [vmem:[%s324 + $0x28] sm:$0xe]
  %v844 = vld [vmem:[%s324 + $0x2c] sm:$0x1]
  %v845 = vld [vmem:[%s324 + $0x30] sm:$0xe]
  %v846 = vld [vmem:[%s324 + $0x34] sm:$0x1]
  %v847 = vld [vmem:[%s324 + $0x38] sm:$0xe]
  %v848 = vld [vmem:[%s324 + $0x3c] sm:$0x1]
  %v865 = vrot.slane %v833, 5
  %v866 = vrot.slane %v865, 4
  %v867 = vrot.slane %v834, 5
  %v868 = vsel %vm624, %v866, %v867
  %v869 = vrot.slane %v835, 5
  %v870 = vrot.slane %v869, 4
  %v871 = vrot.slane %v836, 5
  %v872 = vsel %vm624, %v870, %v871
  %v873 = vrot.slane %v837, 5
  %v874 = vrot.slane %v873, 4
  %v875 = vrot.slane %v838, 5
  %v876 = vsel %vm624, %v874, %v875
  %v877 = vrot.slane %v839, 5
  %v878 = vrot.slane %v877, 4
  %v879 = vrot.slane %v840, 5
  %v880 = vsel %vm624, %v878, %v879
  %v881 = vrot.slane %v841, 5
  %v882 = vrot.slane %v881, 4
  %v883 = vrot.slane %v842, 5
  %v884 = vsel %vm624, %v882, %v883
  %v885 = vrot.slane %v843, 5
  %v886 = vrot.slane %v885, 4
  %v887 = vrot.slane %v844, 5
  %v888 = vsel %vm624, %v886, %v887
  %v889 = vrot.slane %v845, 5
  %v890 = vrot.slane %v889, 4
  %v891 = vrot.slane %v846, 5
  %v892 = vsel %vm624, %v890, %v891
  %v893 = vrot.slane %v847, 5
  %v894 = vrot.slane %v893, 4
  %v895 = vrot.slane %v848, 5
  %v896 = vsel %vm624, %v894, %v895
  %905 = vst [vmem:[#allocation3 + $0x14] sm:$0xf] %v868
  %906 = vst [vmem:[#allocation3 + $0x38] sm:$0xf] %v872
  %907 = vst [vmem:[#allocation3 + $0x5c] sm:$0xf] %v876
  %908 = vst [vmem:[#allocation3 + $0x80] sm:$0xf] %v880
  %909 = vst [vmem:[#allocation3 + $0xa4] sm:$0xf] %v884
  %910 = vst [vmem:[#allocation3 + $0xc8] sm:$0xf] %v888
  %911 = vst [vmem:[#allocation3 + $0xec] sm:$0xf] %v892
  %912 = vst [vmem:[#allocation3 + $0x110] sm:$0xf] %v896
  %s913 = scalar_lea.vmem [#allocation2], 16
  %v914 = vld [vmem:[%s913] sm:$0xf]
  %v915 = vld [vmem:[%s913 + $0x8] sm:$0xf]
  %v916 = vld [vmem:[%s913 + $0x10] sm:$0xf]
  %v917 = vld [vmem:[%s913 + $0x18] sm:$0xf]
  %v918 = vld [vmem:[%s913 + $0x20] sm:$0xf]
  %v919 = vld [vmem:[%s913 + $0x28] sm:$0xf]
  %v920 = vld [vmem:[%s913 + $0x30] sm:$0xf]
  %v921 = vld [vmem:[%s913 + $0x38] sm:$0xf]
  %922 = vst [vmem:[#allocation3 + $0x18] sm:$0xf] %v914
  %923 = vst [vmem:[#allocation3 + $0x3c] sm:$0xf] %v915
  %924 = vst [vmem:[#allocation3 + $0x60] sm:$0xf] %v916
  %925 = vst [vmem:[#allocation3 + $0x84] sm:$0xf] %v917
  %926 = vst [vmem:[#allocation3 + $0xa8] sm:$0xf] %v918
  %927 = vst [vmem:[#allocation3 + $0xcc] sm:$0xf] %v919
  %928 = vst [vmem:[#allocation3 + $0xf0] sm:$0xf] %v920
  %929 = vst [vmem:[#allocation3 + $0x114] sm:$0xf] %v921
  %v930 = vld [vmem:[%s913] sm:$0xf]
  %v931 = vld [vmem:[%s913 + $0x4] sm:$0x1]
  %v932 = vld [vmem:[%s913 + $0x8] sm:$0xf]
  %v933 = vld [vmem:[%s913 + $0xc] sm:$0x1]
  %v934 = vld [vmem:[%s913 + $0x10] sm:$0xf]
  %v935 = vld [vmem:[%s913 + $0x14] sm:$0x1]
  %v936 = vld [vmem:[%s913 + $0x18] sm:$0xf]
  %v937 = vld [vmem:[%s913 + $0x1c] sm:$0x1]
  %v938 = vld [vmem:[%s913 + $0x20] sm:$0xf]
  %v939 = vld [vmem:[%s913 + $0x24] sm:$0x1]
  %v940 = vld [vmem:[%s913 + $0x28] sm:$0xf]
  %v941 = vld [vmem:[%s913 + $0x2c] sm:$0x1]
  %v942 = vld [vmem:[%s913 + $0x30] sm:$0xf]
  %v943 = vld [vmem:[%s913 + $0x34] sm:$0x1]
  %v944 = vld [vmem:[%s913 + $0x38] sm:$0xf]
  %v945 = vld [vmem:[%s913 + $0x3c] sm:$0x1]
  %v947 = vshrl.u32 %v930, 16
  %v949 = vrot.slane %v947, 4
  %v950 = vshll.u32 %v930, 16
  %v952 = vrot.slane %v950, 5
  %v953 = vor.u32 %v949, %v952
  %v954 = vrot.slane %v953, 4
  %v956 = vshll.u32 %v931, 16
  %v958 = vrot.slane %v956, 5
  %v959 = vsel %vm461, %v954, %v958
  %v961 = vshrl.u32 %v932, 16
  %v963 = vrot.slane %v961, 4
  %v964 = vshll.u32 %v932, 16
  %v966 = vrot.slane %v964, 5
  %v967 = vor.u32 %v963, %v966
  %v968 = vrot.slane %v967, 4
  %v970 = vshll.u32 %v933, 16
  %v972 = vrot.slane %v970, 5
  %v973 = vsel %vm461, %v968, %v972
  %v975 = vshrl.u32 %v934, 16
  %v977 = vrot.slane %v975, 4
  %v978 = vshll.u32 %v934, 16
  %v980 = vrot.slane %v978, 5
  %v981 = vor.u32 %v977, %v980
  %v982 = vrot.slane %v981, 4
  %v984 = vshll.u32 %v935, 16
  %v986 = vrot.slane %v984, 5
  %v987 = vsel %vm461, %v982, %v986
  %v989 = vshrl.u32 %v936, 16
  %v991 = vrot.slane %v989, 4
  %v992 = vshll.u32 %v936, 16
  %v994 = vrot.slane %v992, 5
  %v995 = vor.u32 %v991, %v994
  %v996 = vrot.slane %v995, 4
  %v998 = vshll.u32 %v937, 16
  %v1000 = vrot.slane %v998, 5
  %v1001 = vsel %vm461, %v996, %v1000
  %v1003 = vshrl.u32 %v938, 16
  %v1005 = vrot.slane %v1003, 4
  %v1006 = vshll.u32 %v938, 16
  %v1008 = vrot.slane %v1006, 5
  %v1009 = vor.u32 %v1005, %v1008
  %v1010 = vrot.slane %v1009, 4
  %v1012 = vshll.u32 %v939, 16
  %v1014 = vrot.slane %v1012, 5
  %v1015 = vsel %vm461, %v1010, %v1014
  %v1017 = vshrl.u32 %v940, 16
  %v1019 = vrot.slane %v1017, 4
  %v1020 = vshll.u32 %v940, 16
  %v1022 = vrot.slane %v1020, 5
  %v1023 = vor.u32 %v1019, %v1022
  %v1024 = vrot.slane %v1023, 4
  %v1026 = vshll.u32 %v941, 16
  %v1028 = vrot.slane %v1026, 5
  %v1029 = vsel %vm461, %v1024, %v1028
  %v1031 = vshrl.u32 %v942, 16
  %v1033 = vrot.slane %v1031, 4
  %v1034 = vshll.u32 %v942, 16
  %v1036 = vrot.slane %v1034, 5
  %v1037 = vor.u32 %v1033, %v1036
  %v1038 = vrot.slane %v1037, 4
  %v1040 = vshll.u32 %v943, 16
  %v1042 = vrot.slane %v1040, 5
  %v1043 = vsel %vm461, %v1038, %v1042
  %v1045 = vshrl.u32 %v944, 16
  %v1047 = vrot.slane %v1045, 4
  %v1048 = vshll.u32 %v944, 16
  %v1050 = vrot.slane %v1048, 5
  %v1051 = vor.u32 %v1047, %v1050
  %v1052 = vrot.slane %v1051, 4
  %v1054 = vshll.u32 %v945, 16
  %v1056 = vrot.slane %v1054, 5
  %v1057 = vsel %vm461, %v1052, %v1056
  %1066 = vst [vmem:[#allocation3 + $0x1c] sm:$0xf] %v959
  %1067 = vst [vmem:[#allocation3 + $0x40] sm:$0xf] %v973
  %1068 = vst [vmem:[#allocation3 + $0x64] sm:$0xf] %v987
  %1069 = vst [vmem:[#allocation3 + $0x88] sm:$0xf] %v1001
  %1070 = vst [vmem:[#allocation3 + $0xac] sm:$0xf] %v1015
  %1071 = vst [vmem:[#allocation3 + $0xd0] sm:$0xf] %v1029
  %1072 = vst [vmem:[#allocation3 + $0xf4] sm:$0xf] %v1043
  %1073 = vst [vmem:[#allocation3 + $0x118] sm:$0xf] %v1057
  %v1074 = vld [vmem:[%s913] sm:$0xe]
  %v1075 = vld [vmem:[%s913 + $0x4] sm:$0x1]
  %v1076 = vld [vmem:[%s913 + $0x8] sm:$0xe]
  %v1077 = vld [vmem:[%s913 + $0xc] sm:$0x1]
  %v1078 = vld [vmem:[%s913 + $0x10] sm:$0xe]
  %v1079 = vld [vmem:[%s913 + $0x14] sm:$0x1]
  %v1080 = vld [vmem:[%s913 + $0x18] sm:$0xe]
  %v1081 = vld [vmem:[%s913 + $0x1c] sm:$0x1]
  %v1082 = vld [vmem:[%s913 + $0x20] sm:$0xe]
  %v1083 = vld [vmem:[%s913 + $0x24] sm:$0x1]
  %v1084 = vld [vmem:[%s913 + $0x28] sm:$0xe]
  %v1085 = vld [vmem:[%s913 + $0x2c] sm:$0x1]
  %v1086 = vld [vmem:[%s913 + $0x30] sm:$0xe]
  %v1087 = vld [vmem:[%s913 + $0x34] sm:$0x1]
  %v1088 = vld [vmem:[%s913 + $0x38] sm:$0xe]
  %v1089 = vld [vmem:[%s913 + $0x3c] sm:$0x1]
  %v1106 = vrot.slane %v1074, 5
  %v1107 = vrot.slane %v1106, 4
  %v1108 = vrot.slane %v1075, 5
  %v1109 = vsel %vm624, %v1107, %v1108
  %v1110 = vrot.slane %v1076, 5
  %v1111 = vrot.slane %v1110, 4
  %v1112 = vrot.slane %v1077, 5
  %v1113 = vsel %vm624, %v1111, %v1112
  %v1114 = vrot.slane %v1078, 5
  %v1115 = vrot.slane %v1114, 4
  %v1116 = vrot.slane %v1079, 5
  %v1117 = vsel %vm624, %v1115, %v1116
  %v1118 = vrot.slane %v1080, 5
  %v1119 = vrot.slane %v1118, 4
  %v1120 = vrot.slane %v1081, 5
  %v1121 = vsel %vm624, %v1119, %v1120
  %v1122 = vrot.slane %v1082, 5
  %v1123 = vrot.slane %v1122, 4
  %v1124 = vrot.slane %v1083, 5
  %v1125 = vsel %vm624, %v1123, %v1124
  %v1126 = vrot.slane %v1084, 5
  %v1127 = vrot.slane %v1126, 4
  %v1128 = vrot.slane %v1085, 5
  %v1129 = vsel %vm624, %v1127, %v1128
  %v1130 = vrot.slane %v1086, 5
  %v1131 = vrot.slane %v1130, 4
  %v1132 = vrot.slane %v1087, 5
  %v1133 = vsel %vm624, %v1131, %v1132
  %v1134 = vrot.slane %v1088, 5
  %v1135 = vrot.slane %v1134, 4
  %v1136 = vrot.slane %v1089, 5
  %v1137 = vsel %vm624, %v1135, %v1136
  %1146 = vst [vmem:[#allocation3 + $0x20] sm:$0xf] %v1109
  %1147 = vst [vmem:[#allocation3 + $0x44] sm:$0xf] %v1113
  %1148 = vst [vmem:[#allocation3 + $0x68] sm:$0xf] %v1117
  %1149 = vst [vmem:[#allocation3 + $0x8c] sm:$0xf] %v1121
  %1150 = vst [vmem:[#allocation3 + $0xb0] sm:$0xf] %v1125
  %1151 = vst [vmem:[#allocation3 + $0xd4] sm:$0xf] %v1129
  %1152 = vst [vmem:[#allocation3 + $0xf8] sm:$0xf] %v1133
  %1153 = vst [vmem:[#allocation3 + $0x11c] sm:$0xf] %v1137
  %s1154 = scalar_lea.vmem [#allocation2], 80
  %v1155 = vld [vmem:[%s1154] sm:$0xf]
  %v1156 = vld [vmem:[%s1154 + $0x8] sm:$0xf]
  %v1157 = vld [vmem:[%s1154 + $0x10] sm:$0xf]
  %v1158 = vld [vmem:[%s1154 + $0x18] sm:$0xf]
  %v1159 = vld [vmem:[%s1154 + $0x20] sm:$0xf]
  %v1160 = vld [vmem:[%s1154 + $0x28] sm:$0xf]
  %v1161 = vld [vmem:[%s1154 + $0x30] sm:$0xf]
  %v1162 = vld [vmem:[%s1154 + $0x38] sm:$0xf]
  %1163 = vst [vmem:[#allocation3 + $0x120] sm:$0xf] %v1155
  %1164 = vst [vmem:[#allocation3 + $0x144] sm:$0xf] %v1156
  %1165 = vst [vmem:[#allocation3 + $0x168] sm:$0xf] %v1157
  %1166 = vst [vmem:[#allocation3 + $0x18c] sm:$0xf] %v1158
  %1167 = vst [vmem:[#allocation3 + $0x1b0] sm:$0xf] %v1159
  %1168 = vst [vmem:[#allocation3 + $0x1d4] sm:$0xf] %v1160
  %1169 = vst [vmem:[#allocation3 + $0x1f8] sm:$0xf] %v1161
  %1170 = vst [vmem:[#allocation3 + $0x21c] sm:$0xf] %v1162
  %v1171 = vld [vmem:[%s1154] sm:$0xf]
  %v1172 = vld [vmem:[%s1154 + $0x4] sm:$0x1]
  %v1173 = vld [vmem:[%s1154 + $0x8] sm:$0xf]
  %v1174 = vld [vmem:[%s1154 + $0xc] sm:$0x1]
  %v1175 = vld [vmem:[%s1154 + $0x10] sm:$0xf]
  %v1176 = vld [vmem:[%s1154 + $0x14] sm:$0x1]
  %v1177 = vld [vmem:[%s1154 + $0x18] sm:$0xf]
  %v1178 = vld [vmem:[%s1154 + $0x1c] sm:$0x1]
  %v1179 = vld [vmem:[%s1154 + $0x20] sm:$0xf]
  %v1180 = vld [vmem:[%s1154 + $0x24] sm:$0x1]
  %v1181 = vld [vmem:[%s1154 + $0x28] sm:$0xf]
  %v1182 = vld [vmem:[%s1154 + $0x2c] sm:$0x1]
  %v1183 = vld [vmem:[%s1154 + $0x30] sm:$0xf]
  %v1184 = vld [vmem:[%s1154 + $0x34] sm:$0x1]
  %v1185 = vld [vmem:[%s1154 + $0x38] sm:$0xf]
  %v1186 = vld [vmem:[%s1154 + $0x3c] sm:$0x1]
  %v1188 = vshrl.u32 %v1171, 16
  %v1190 = vrot.slane %v1188, 4
  %v1191 = vshll.u32 %v1171, 16
  %v1193 = vrot.slane %v1191, 5
  %v1194 = vor.u32 %v1190, %v1193
  %v1195 = vrot.slane %v1194, 4
  %v1197 = vshll.u32 %v1172, 16
  %v1199 = vrot.slane %v1197, 5
  %v1200 = vsel %vm461, %v1195, %v1199
  %v1202 = vshrl.u32 %v1173, 16
  %v1204 = vrot.slane %v1202, 4
  %v1205 = vshll.u32 %v1173, 16
  %v1207 = vrot.slane %v1205, 5
  %v1208 = vor.u32 %v1204, %v1207
  %v1209 = vrot.slane %v1208, 4
  %v1211 = vshll.u32 %v1174, 16
  %v1213 = vrot.slane %v1211, 5
  %v1214 = vsel %vm461, %v1209, %v1213
  %v1216 = vshrl.u32 %v1175, 16
  %v1218 = vrot.slane %v1216, 4
  %v1219 = vshll.u32 %v1175, 16
  %v1221 = vrot.slane %v1219, 5
  %v1222 = vor.u32 %v1218, %v1221
  %v1223 = vrot.slane %v1222, 4
  %v1225 = vshll.u32 %v1176, 16
  %v1227 = vrot.slane %v1225, 5
  %v1228 = vsel %vm461, %v1223, %v1227
  %v1230 = vshrl.u32 %v1177, 16
  %v1232 = vrot.slane %v1230, 4
  %v1233 = vshll.u32 %v1177, 16
  %v1235 = vrot.slane %v1233, 5
  %v1236 = vor.u32 %v1232, %v1235
  %v1237 = vrot.slane %v1236, 4
  %v1239 = vshll.u32 %v1178, 16
  %v1241 = vrot.slane %v1239, 5
  %v1242 = vsel %vm461, %v1237, %v1241
  %v1244 = vshrl.u32 %v1179, 16
  %v1246 = vrot.slane %v1244, 4
  %v1247 = vshll.u32 %v1179, 16
  %v1249 = vrot.slane %v1247, 5
  %v1250 = vor.u32 %v1246, %v1249
  %v1251 = vrot.slane %v1250, 4
  %v1253 = vshll.u32 %v1180, 16
  %v1255 = vrot.slane %v1253, 5
  %v1256 = vsel %vm461, %v1251, %v1255
  %v1258 = vshrl.u32 %v1181, 16
  %v1260 = vrot.slane %v1258, 4
  %v1261 = vshll.u32 %v1181, 16
  %v1263 = vrot.slane %v1261, 5
  %v1264 = vor.u32 %v1260, %v1263
  %v1265 = vrot.slane %v1264, 4
  %v1267 = vshll.u32 %v1182, 16
  %v1269 = vrot.slane %v1267, 5
  %v1270 = vsel %vm461, %v1265, %v1269
  %v1272 = vshrl.u32 %v1183, 16
  %v1274 = vrot.slane %v1272, 4
  %v1275 = vshll.u32 %v1183, 16
  %v1277 = vrot.slane %v1275, 5
  %v1278 = vor.u32 %v1274, %v1277
  %v1279 = vrot.slane %v1278, 4
  %v1281 = vshll.u32 %v1184, 16
  %v1283 = vrot.slane %v1281, 5
  %v1284 = vsel %vm461, %v1279, %v1283
  %v1286 = vshrl.u32 %v1185, 16
  %v1288 = vrot.slane %v1286, 4
  %v1289 = vshll.u32 %v1185, 16
  %v1291 = vrot.slane %v1289, 5
  %v1292 = vor.u32 %v1288, %v1291
  %v1293 = vrot.slane %v1292, 4
  %v1295 = vshll.u32 %v1186, 16
  %v1297 = vrot.slane %v1295, 5
  %v1298 = vsel %vm461, %v1293, %v1297
  %1307 = vst [vmem:[#allocation3 + $0x124] sm:$0xf] %v1200
  %1308 = vst [vmem:[#allocation3 + $0x148] sm:$0xf] %v1214
  %1309 = vst [vmem:[#allocation3 + $0x16c] sm:$0xf] %v1228
  %1310 = vst [vmem:[#allocation3 + $0x190] sm:$0xf] %v1242
  %1311 = vst [vmem:[#allocation3 + $0x1b4] sm:$0xf] %v1256
  %1312 = vst [vmem:[#allocation3 + $0x1d8] sm:$0xf] %v1270
  %1313 = vst [vmem:[#allocation3 + $0x1fc] sm:$0xf] %v1284
  %1314 = vst [vmem:[#allocation3 + $0x220] sm:$0xf] %v1298
  %v1315 = vld [vmem:[%s1154] sm:$0xe]
  %v1316 = vld [vmem:[%s1154 + $0x4] sm:$0x1]
  %v1317 = vld [vmem:[%s1154 + $0x8] sm:$0xe]
  %v1318 = vld [vmem:[%s1154 + $0xc] sm:$0x1]
  %v1319 = vld [vmem:[%s1154 + $0x10] sm:$0xe]
  %v1320 = vld [vmem:[%s1154 + $0x14] sm:$0x1]
  %v1321 = vld [vmem:[%s1154 + $0x18] sm:$0xe]
  %v1322 = vld [vmem:[%s1154 + $0x1c] sm:$0x1]
  %v1323 = vld [vmem:[%s1154 + $0x20] sm:$0xe]
  %v1324 = vld [vmem:[%s1154 + $0x24] sm:$0x1]
  %v1325 = vld [vmem:[%s1154 + $0x28] sm:$0xe]
  %v1326 = vld [vmem:[%s1154 + $0x2c] sm:$0x1]
  %v1327 = vld [vmem:[%s1154 + $0x30] sm:$0xe]
  %v1328 = vld [vmem:[%s1154 + $0x34] sm:$0x1]
  %v1329 = vld [vmem:[%s1154 + $0x38] sm:$0xe]
  %v1330 = vld [vmem:[%s1154 + $0x3c] sm:$0x1]
  %v1347 = vrot.slane %v1315, 5
  %v1348 = vrot.slane %v1347, 4
  %v1349 = vrot.slane %v1316, 5
  %v1350 = vsel %vm624, %v1348, %v1349
  %v1351 = vrot.slane %v1317, 5
  %v1352 = vrot.slane %v1351, 4
  %v1353 = vrot.slane %v1318, 5
  %v1354 = vsel %vm624, %v1352, %v1353
  %v1355 = vrot.slane %v1319, 5
  %v1356 = vrot.slane %v1355, 4
  %v1357 = vrot.slane %v1320, 5
  %v1358 = vsel %vm624, %v1356, %v1357
  %v1359 = vrot.slane %v1321, 5
  %v1360 = vrot.slane %v1359, 4
  %v1361 = vrot.slane %v1322, 5
  %v1362 = vsel %vm624, %v1360, %v1361
  %v1363 = vrot.slane %v1323, 5
  %v1364 = vrot.slane %v1363, 4
  %v1365 = vrot.slane %v1324, 5
  %v1366 = vsel %vm624, %v1364, %v1365
  %v1367 = vrot.slane %v1325, 5
  %v1368 = vrot.slane %v1367, 4
  %v1369 = vrot.slane %v1326, 5
  %v1370 = vsel %vm624, %v1368, %v1369
  %v1371 = vrot.slane %v1327, 5
  %v1372 = vrot.slane %v1371, 4
  %v1373 = vrot.slane %v1328, 5
  %v1374 = vsel %vm624, %v1372, %v1373
  %v1375 = vrot.slane %v1329, 5
  %v1376 = vrot.slane %v1375, 4
  %v1377 = vrot.slane %v1330, 5
  %v1378 = vsel %vm624, %v1376, %v1377
  %1387 = vst [vmem:[#allocation3 + $0x128] sm:$0xf] %v1350
  %1388 = vst [vmem:[#allocation3 + $0x14c] sm:$0xf] %v1354
  %1389 = vst [vmem:[#allocation3 + $0x170] sm:$0xf] %v1358
  %1390 = vst [vmem:[#allocation3 + $0x194] sm:$0xf] %v1362
  %1391 = vst [vmem:[#allocation3 + $0x1b8] sm:$0xf] %v1366
  %1392 = vst [vmem:[#allocation3 + $0x1dc] sm:$0xf] %v1370
  %1393 = vst [vmem:[#allocation3 + $0x200] sm:$0xf] %v1374
  %1394 = vst [vmem:[#allocation3 + $0x224] sm:$0xf] %v1378
  %s1395 = scalar_lea.vmem [#allocation2], 88
  %v1396 = vld [vmem:[%s1395] sm:$0xf]
  %v1397 = vld [vmem:[%s1395 + $0x8] sm:$0xf]
  %v1398 = vld [vmem:[%s1395 + $0x10] sm:$0xf]
  %v1399 = vld [vmem:[%s1395 + $0x18] sm:$0xf]
  %v1400 = vld [vmem:[%s1395 + $0x20] sm:$0xf]
  %v1401 = vld [vmem:[%s1395 + $0x28] sm:$0xf]
  %v1402 = vld [vmem:[%s1395 + $0x30] sm:$0xf]
  %v1403 = vld [vmem:[%s1395 + $0x38] sm:$0xf]
  %1404 = vst [vmem:[#allocation3 + $0x12c] sm:$0xf] %v1396
  %1405 = vst [vmem:[#allocation3 + $0x150] sm:$0xf] %v1397
  %1406 = vst [vmem:[#allocation3 + $0x174] sm:$0xf] %v1398
  %1407 = vst [vmem:[#allocation3 + $0x198] sm:$0xf] %v1399
  %1408 = vst [vmem:[#allocation3 + $0x1bc] sm:$0xf] %v1400
  %1409 = vst [vmem:[#allocation3 + $0x1e0] sm:$0xf] %v1401
  %1410 = vst [vmem:[#allocation3 + $0x204] sm:$0xf] %v1402
  %1411 = vst [vmem:[#allocation3 + $0x228] sm:$0xf] %v1403
  %v1412 = vld [vmem:[%s1395] sm:$0xf]
  %v1413 = vld [vmem:[%s1395 + $0x4] sm:$0x1]
  %v1414 = vld [vmem:[%s1395 + $0x8] sm:$0xf]
  %v1415 = vld [vmem:[%s1395 + $0xc] sm:$0x1]
  %v1416 = vld [vmem:[%s1395 + $0x10] sm:$0xf]
  %v1417 = vld [vmem:[%s1395 + $0x14] sm:$0x1]
  %v1418 = vld [vmem:[%s1395 + $0x18] sm:$0xf]
  %v1419 = vld [vmem:[%s1395 + $0x1c] sm:$0x1]
  %v1420 = vld [vmem:[%s1395 + $0x20] sm:$0xf]
  %v1421 = vld [vmem:[%s1395 + $0x24] sm:$0x1]
  %v1422 = vld [vmem:[%s1395 + $0x28] sm:$0xf]
  %v1423 = vld [vmem:[%s1395 + $0x2c] sm:$0x1]
  %v1424 = vld [vmem:[%s1395 + $0x30] sm:$0xf]
  %v1425 = vld [vmem:[%s1395 + $0x34] sm:$0x1]
  %v1426 = vld [vmem:[%s1395 + $0x38] sm:$0xf]
  %v1427 = vld [vmem:[%s1395 + $0x3c] sm:$0x1]
  %v1429 = vshrl.u32 %v1412, 16
  %v1431 = vrot.slane %v1429, 4
  %v1432 = vshll.u32 %v1412, 16
  %v1434 = vrot.slane %v1432, 5
  %v1435 = vor.u32 %v1431, %v1434
  %v1436 = vrot.slane %v1435, 4
  %v1438 = vshll.u32 %v1413, 16
  %v1440 = vrot.slane %v1438, 5
  %v1441 = vsel %vm461, %v1436, %v1440
  %v1443 = vshrl.u32 %v1414, 16
  %v1445 = vrot.slane %v1443, 4
  %v1446 = vshll.u32 %v1414, 16
  %v1448 = vrot.slane %v1446, 5
  %v1449 = vor.u32 %v1445, %v1448
  %v1450 = vrot.slane %v1449, 4
  %v1452 = vshll.u32 %v1415, 16
  %v1454 = vrot.slane %v1452, 5
  %v1455 = vsel %vm461, %v1450, %v1454
  %v1457 = vshrl.u32 %v1416, 16
  %v1459 = vrot.slane %v1457, 4
  %v1460 = vshll.u32 %v1416, 16
  %v1462 = vrot.slane %v1460, 5
  %v1463 = vor.u32 %v1459, %v1462
  %v1464 = vrot.slane %v1463, 4
  %v1466 = vshll.u32 %v1417, 16
  %v1468 = vrot.slane %v1466, 5
  %v1469 = vsel %vm461, %v1464, %v1468
  %v1471 = vshrl.u32 %v1418, 16
  %v1473 = vrot.slane %v1471, 4
  %v1474 = vshll.u32 %v1418, 16
  %v1476 = vrot.slane %v1474, 5
  %v1477 = vor.u32 %v1473, %v1476
  %v1478 = vrot.slane %v1477, 4
  %v1480 = vshll.u32 %v1419, 16
  %v1482 = vrot.slane %v1480, 5
  %v1483 = vsel %vm461, %v1478, %v1482
  %v1485 = vshrl.u32 %v1420, 16
  %v1487 = vrot.slane %v1485, 4
  %v1488 = vshll.u32 %v1420, 16
  %v1490 = vrot.slane %v1488, 5
  %v1491 = vor.u32 %v1487, %v1490
  %v1492 = vrot.slane %v1491, 4
  %v1494 = vshll.u32 %v1421, 16
  %v1496 = vrot.slane %v1494, 5
  %v1497 = vsel %vm461, %v1492, %v1496
  %v1499 = vshrl.u32 %v1422, 16
  %v1501 = vrot.slane %v1499, 4
  %v1502 = vshll.u32 %v1422, 16
  %v1504 = vrot.slane %v1502, 5
  %v1505 = vor.u32 %v1501, %v1504
  %v1506 = vrot.slane %v1505, 4
  %v1508 = vshll.u32 %v1423, 16
  %v1510 = vrot.slane %v1508, 5
  %v1511 = vsel %vm461, %v1506, %v1510
  %v1513 = vshrl.u32 %v1424, 16
  %v1515 = vrot.slane %v1513, 4
  %v1516 = vshll.u32 %v1424, 16
  %v1518 = vrot.slane %v1516, 5
  %v1519 = vor.u32 %v1515, %v1518
  %v1520 = vrot.slane %v1519, 4
  %v1522 = vshll.u32 %v1425, 16
  %v1524 = vrot.slane %v1522, 5
  %v1525 = vsel %vm461, %v1520, %v1524
  %v1527 = vshrl.u32 %v1426, 16
  %v1529 = vrot.slane %v1527, 4
  %v1530 = vshll.u32 %v1426, 16
  %v1532 = vrot.slane %v1530, 5
  %v1533 = vor.u32 %v1529, %v1532
  %v1534 = vrot.slane %v1533, 4
  %v1536 = vshll.u32 %v1427, 16
  %v1538 = vrot.slane %v1536, 5
  %v1539 = vsel %vm461, %v1534, %v1538
  %1548 = vst [vmem:[#allocation3 + $0x130] sm:$0xf] %v1441
  %1549 = vst [vmem:[#allocation3 + $0x154] sm:$0xf] %v1455
  %1550 = vst [vmem:[#allocation3 + $0x178] sm:$0xf] %v1469
  %1551 = vst [vmem:[#allocation3 + $0x19c] sm:$0xf] %v1483
  %1552 = vst [vmem:[#allocation3 + $0x1c0] sm:$0xf] %v1497
  %1553 = vst [vmem:[#allocation3 + $0x1e4] sm:$0xf] %v1511
  %1554 = vst [vmem:[#allocation3 + $0x208] sm:$0xf] %v1525
  %1555 = vst [vmem:[#allocation3 + $0x22c] sm:$0xf] %v1539
  %v1556 = vld [vmem:[%s1395] sm:$0xe]
  %v1557 = vld [vmem:[%s1395 + $0x4] sm:$0x1]
  %v1558 = vld [vmem:[%s1395 + $0x8] sm:$0xe]
  %v1559 = vld [vmem:[%s1395 + $0xc] sm:$0x1]
  %v1560 = vld [vmem:[%s1395 + $0x10] sm:$0xe]
  %v1561 = vld [vmem:[%s1395 + $0x14] sm:$0x1]
  %v1562 = vld [vmem:[%s1395 + $0x18] sm:$0xe]
  %v1563 = vld [vmem:[%s1395 + $0x1c] sm:$0x1]
  %v1564 = vld [vmem:[%s1395 + $0x20] sm:$0xe]
  %v1565 = vld [vmem:[%s1395 + $0x24] sm:$0x1]
  %v1566 = vld [vmem:[%s1395 + $0x28] sm:$0xe]
  %v1567 = vld [vmem:[%s1395 + $0x2c] sm:$0x1]
  %v1568 = vld [vmem:[%s1395 + $0x30] sm:$0xe]
  %v1569 = vld [vmem:[%s1395 + $0x34] sm:$0x1]
  %v1570 = vld [vmem:[%s1395 + $0x38] sm:$0xe]
  %v1571 = vld [vmem:[%s1395 + $0x3c] sm:$0x1]
  %v1588 = vrot.slane %v1556, 5
  %v1589 = vrot.slane %v1588, 4
  %v1590 = vrot.slane %v1557, 5
  %v1591 = vsel %vm624, %v1589, %v1590
  %v1592 = vrot.slane %v1558, 5
  %v1593 = vrot.slane %v1592, 4
  %v1594 = vrot.slane %v1559, 5
  %v1595 = vsel %vm624, %v1593, %v1594
  %v1596 = vrot.slane %v1560, 5
  %v1597 = vrot.slane %v1596, 4
  %v1598 = vrot.slane %v1561, 5
  %v1599 = vsel %vm624, %v1597, %v1598
  %v1600 = vrot.slane %v1562, 5
  %v1601 = vrot.slane %v1600, 4
  %v1602 = vrot.slane %v1563, 5
  %v1603 = vsel %vm624, %v1601, %v1602
  %v1604 = vrot.slane %v1564, 5
  %v1605 = vrot.slane %v1604, 4
  %v1606 = vrot.slane %v1565, 5
  %v1607 = vsel %vm624, %v1605, %v1606
  %v1608 = vrot.slane %v1566, 5
  %v1609 = vrot.slane %v1608, 4
  %v1610 = vrot.slane %v1567, 5
  %v1611 = vsel %vm624, %v1609, %v1610
  %v1612 = vrot.slane %v1568, 5
  %v1613 = vrot.slane %v1612, 4
  %v1614 = vrot.slane %v1569, 5
  %v1615 = vsel %vm624, %v1613, %v1614
  %v1616 = vrot.slane %v1570, 5
  %v1617 = vrot.slane %v1616, 4
  %v1618 = vrot.slane %v1571, 5
  %v1619 = vsel %vm624, %v1617, %v1618
  %1628 = vst [vmem:[#allocation3 + $0x134] sm:$0xf] %v1591
  %1629 = vst [vmem:[#allocation3 + $0x158] sm:$0xf] %v1595
  %1630 = vst [vmem:[#allocation3 + $0x17c] sm:$0xf] %v1599
  %1631 = vst [vmem:[#allocation3 + $0x1a0] sm:$0xf] %v1603
  %1632 = vst [vmem:[#allocation3 + $0x1c4] sm:$0xf] %v1607
  %1633 = vst [vmem:[#allocation3 + $0x1e8] sm:$0xf] %v1611
  %1634 = vst [vmem:[#allocation3 + $0x20c] sm:$0xf] %v1615
  %1635 = vst [vmem:[#allocation3 + $0x230] sm:$0xf] %v1619
  %s1636 = scalar_lea.vmem [#allocation2], 96
  %v1637 = vld [vmem:[%s1636] sm:$0xf]
  %v1638 = vld [vmem:[%s1636 + $0x8] sm:$0xf]
  %v1639 = vld [vmem:[%s1636 + $0x10] sm:$0xf]
  %v1640 = vld [vmem:[%s1636 + $0x18] sm:$0xf]
  %v1641 = vld [vmem:[%s1636 + $0x20] sm:$0xf]
  %v1642 = vld [vmem:[%s1636 + $0x28] sm:$0xf]
  %v1643 = vld [vmem:[%s1636 + $0x30] sm:$0xf]
  %v1644 = vld [vmem:[%s1636 + $0x38] sm:$0xf]
  %1645 = vst [vmem:[#allocation3 + $0x138] sm:$0xf] %v1637
  %1646 = vst [vmem:[#allocation3 + $0x15c] sm:$0xf] %v1638
  %1647 = vst [vmem:[#allocation3 + $0x180] sm:$0xf] %v1639
  %1648 = vst [vmem:[#allocation3 + $0x1a4] sm:$0xf] %v1640
  %1649 = vst [vmem:[#allocation3 + $0x1c8] sm:$0xf] %v1641
  %1650 = vst [vmem:[#allocation3 + $0x1ec] sm:$0xf] %v1642
  %1651 = vst [vmem:[#allocation3 + $0x210] sm:$0xf] %v1643
  %1652 = vst [vmem:[#allocation3 + $0x234] sm:$0xf] %v1644
  %v1653 = vld [vmem:[%s1636] sm:$0xf]
  %v1654 = vld [vmem:[%s1636 + $0x4] sm:$0x1]
  %v1655 = vld [vmem:[%s1636 + $0x8] sm:$0xf]
  %v1656 = vld [vmem:[%s1636 + $0xc] sm:$0x1]
  %v1657 = vld [vmem:[%s1636 + $0x10] sm:$0xf]
  %v1658 = vld [vmem:[%s1636 + $0x14] sm:$0x1]
  %v1659 = vld [vmem:[%s1636 + $0x18] sm:$0xf]
  %v1660 = vld [vmem:[%s1636 + $0x1c] sm:$0x1]
  %v1661 = vld [vmem:[%s1636 + $0x20] sm:$0xf]
  %v1662 = vld [vmem:[%s1636 + $0x24] sm:$0x1]
  %v1663 = vld [vmem:[%s1636 + $0x28] sm:$0xf]
  %v1664 = vld [vmem:[%s1636 + $0x2c] sm:$0x1]
  %v1665 = vld [vmem:[%s1636 + $0x30] sm:$0xf]
  %v1666 = vld [vmem:[%s1636 + $0x34] sm:$0x1]
  %v1667 = vld [vmem:[%s1636 + $0x38] sm:$0xf]
  %v1668 = vld [vmem:[%s1636 + $0x3c] sm:$0x1]
  %v1670 = vshrl.u32 %v1653, 16
  %v1672 = vrot.slane %v1670, 4
  %v1673 = vshll.u32 %v1653, 16
  %v1675 = vrot.slane %v1673, 5
  %v1676 = vor.u32 %v1672, %v1675
  %v1677 = vrot.slane %v1676, 4
  %v1679 = vshll.u32 %v1654, 16
  %v1681 = vrot.slane %v1679, 5
  %v1682 = vsel %vm461, %v1677, %v1681
  %v1684 = vshrl.u32 %v1655, 16
  %v1686 = vrot.slane %v1684, 4
  %v1687 = vshll.u32 %v1655, 16
  %v1689 = vrot.slane %v1687, 5
  %v1690 = vor.u32 %v1686, %v1689
  %v1691 = vrot.slane %v1690, 4
  %v1693 = vshll.u32 %v1656, 16
  %v1695 = vrot.slane %v1693, 5
  %v1696 = vsel %vm461, %v1691, %v1695
  %v1698 = vshrl.u32 %v1657, 16
  %v1700 = vrot.slane %v1698, 4
  %v1701 = vshll.u32 %v1657, 16
  %v1703 = vrot.slane %v1701, 5
  %v1704 = vor.u32 %v1700, %v1703
  %v1705 = vrot.slane %v1704, 4
  %v1707 = vshll.u32 %v1658, 16
  %v1709 = vrot.slane %v1707, 5
  %v1710 = vsel %vm461, %v1705, %v1709
  %v1712 = vshrl.u32 %v1659, 16
  %v1714 = vrot.slane %v1712, 4
  %v1715 = vshll.u32 %v1659, 16
  %v1717 = vrot.slane %v1715, 5
  %v1718 = vor.u32 %v1714, %v1717
  %v1719 = vrot.slane %v1718, 4
  %v1721 = vshll.u32 %v1660, 16
  %v1723 = vrot.slane %v1721, 5
  %v1724 = vsel %vm461, %v1719, %v1723
  %v1726 = vshrl.u32 %v1661, 16
  %v1728 = vrot.slane %v1726, 4
  %v1729 = vshll.u32 %v1661, 16
  %v1731 = vrot.slane %v1729, 5
  %v1732 = vor.u32 %v1728, %v1731
  %v1733 = vrot.slane %v1732, 4
  %v1735 = vshll.u32 %v1662, 16
  %v1737 = vrot.slane %v1735, 5
  %v1738 = vsel %vm461, %v1733, %v1737
  %v1740 = vshrl.u32 %v1663, 16
  %v1742 = vrot.slane %v1740, 4
  %v1743 = vshll.u32 %v1663, 16
  %v1745 = vrot.slane %v1743, 5
  %v1746 = vor.u32 %v1742, %v1745
  %v1747 = vrot.slane %v1746, 4
  %v1749 = vshll.u32 %v1664, 16
  %v1751 = vrot.slane %v1749, 5
  %v1752 = vsel %vm461, %v1747, %v1751
  %v1754 = vshrl.u32 %v1665, 16
  %v1756 = vrot.slane %v1754, 4
  %v1757 = vshll.u32 %v1665, 16
  %v1759 = vrot.slane %v1757, 5
  %v1760 = vor.u32 %v1756, %v1759
  %v1761 = vrot.slane %v1760, 4
  %v1763 = vshll.u32 %v1666, 16
  %v1765 = vrot.slane %v1763, 5
  %v1766 = vsel %vm461, %v1761, %v1765
  %v1768 = vshrl.u32 %v1667, 16
  %v1770 = vrot.slane %v1768, 4
  %v1771 = vshll.u32 %v1667, 16
  %v1773 = vrot.slane %v1771, 5
  %v1774 = vor.u32 %v1770, %v1773
  %v1775 = vrot.slane %v1774, 4
  %v1777 = vshll.u32 %v1668, 16
  %v1779 = vrot.slane %v1777, 5
  %v1780 = vsel %vm461, %v1775, %v1779
  %1789 = vst [vmem:[#allocation3 + $0x13c] sm:$0xf] %v1682
  %1790 = vst [vmem:[#allocation3 + $0x160] sm:$0xf] %v1696
  %1791 = vst [vmem:[#allocation3 + $0x184] sm:$0xf] %v1710
  %1792 = vst [vmem:[#allocation3 + $0x1a8] sm:$0xf] %v1724
  %1793 = vst [vmem:[#allocation3 + $0x1cc] sm:$0xf] %v1738
  %1794 = vst [vmem:[#allocation3 + $0x1f0] sm:$0xf] %v1752
  %1795 = vst [vmem:[#allocation3 + $0x214] sm:$0xf] %v1766
  %1796 = vst [vmem:[#allocation3 + $0x238] sm:$0xf] %v1780
  %v1797 = vld [vmem:[%s1636] sm:$0xe]
  %v1798 = vld [vmem:[%s1636 + $0x4] sm:$0x1]
  %v1799 = vld [vmem:[%s1636 + $0x8] sm:$0xe]
  %v1800 = vld [vmem:[%s1636 + $0xc] sm:$0x1]
  %v1801 = vld [vmem:[%s1636 + $0x10] sm:$0xe]
  %v1802 = vld [vmem:[%s1636 + $0x14] sm:$0x1]
  %v1803 = vld [vmem:[%s1636 + $0x18] sm:$0xe]
  %v1804 = vld [vmem:[%s1636 + $0x1c] sm:$0x1]
  %v1805 = vld [vmem:[%s1636 + $0x20] sm:$0xe]
  %v1806 = vld [vmem:[%s1636 + $0x24] sm:$0x1]
  %v1807 = vld [vmem:[%s1636 + $0x28] sm:$0xe]
  %v1808 = vld [vmem:[%s1636 + $0x2c] sm:$0x1]
  %v1809 = vld [vmem:[%s1636 + $0x30] sm:$0xe]
  %v1810 = vld [vmem:[%s1636 + $0x34] sm:$0x1]
  %v1811 = vld [vmem:[%s1636 + $0x38] sm:$0xe]
  %v1812 = vld [vmem:[%s1636 + $0x3c] sm:$0x1]
  %v1829 = vrot.slane %v1797, 5
  %v1830 = vrot.slane %v1829, 4
  %v1831 = vrot.slane %v1798, 5
  %v1832 = vsel %vm624, %v1830, %v1831
  %v1833 = vrot.slane %v1799, 5
  %v1834 = vrot.slane %v1833, 4
  %v1835 = vrot.slane %v1800, 5
  %v1836 = vsel %vm624, %v1834, %v1835
  %v1837 = vrot.slane %v1801, 5
  %v1838 = vrot.slane %v1837, 4
  %v1839 = vrot.slane %v1802, 5
  %v1840 = vsel %vm624, %v1838, %v1839
  %v1841 = vrot.slane %v1803, 5
  %v1842 = vrot.slane %v1841, 4
  %v1843 = vrot.slane %v1804, 5
  %v1844 = vsel %vm624, %v1842, %v1843
  %v1845 = vrot.slane %v1805, 5
  %v1846 = vrot.slane %v1845, 4
  %v1847 = vrot.slane %v1806, 5
  %v1848 = vsel %vm624, %v1846, %v1847
  %v1849 = vrot.slane %v1807, 5
  %v1850 = vrot.slane %v1849, 4
  %v1851 = vrot.slane %v1808, 5
  %v1852 = vsel %vm624, %v1850, %v1851
  %v1853 = vrot.slane %v1809, 5
  %v1854 = vrot.slane %v1853, 4
  %v1855 = vrot.slane %v1810, 5
  %v1856 = vsel %vm624, %v1854, %v1855
  %v1857 = vrot.slane %v1811, 5
  %v1858 = vrot.slane %v1857, 4
  %v1859 = vrot.slane %v1812, 5
  %v1860 = vsel %vm624, %v1858, %v1859
  %1869 = vst [vmem:[#allocation3 + $0x140] sm:$0xf] %v1832
  %1870 = vst [vmem:[#allocation3 + $0x164] sm:$0xf] %v1836
  %1871 = vst [vmem:[#allocation3 + $0x188] sm:$0xf] %v1840
  %1872 = vst [vmem:[#allocation3 + $0x1ac] sm:$0xf] %v1844
  %1873 = vst [vmem:[#allocation3 + $0x1d0] sm:$0xf] %v1848
  %1874 = vst [vmem:[#allocation3 + $0x1f4] sm:$0xf] %v1852
  %1875 = vst [vmem:[#allocation3 + $0x218] sm:$0xf] %v1856
  %1876 = vst [vmem:[#allocation3 + $0x23c] sm:$0xf] %v1860
  %v1877 = vld [vmem:[#allocation3] sm:$0xff]
  %v1878 = vld [vmem:[#allocation3 + $0x8] sm:$0xff]
  %v1879 = vld [vmem:[#allocation3 + $0x10] sm:$0xff]
  %v1880 = vld [vmem:[#allocation3 + $0x18] sm:$0xff]
  %v1881 = vld [vmem:[#allocation3 + $0x20] sm:$0xf]
  %v1882 = vld [vmem:[#allocation3 + $0x24] sm:$0xff]
  %v1883 = vld [vmem:[#allocation3 + $0x2c] sm:$0xff]
  %v1884 = vld [vmem:[#allocation3 + $0x34] sm:$0xff]
  %v1885 = vld [vmem:[#allocation3 + $0x3c] sm:$0xff]
  %v1886 = vld [vmem:[#allocation3 + $0x44] sm:$0xf]
  %v1887 = vld [vmem:[#allocation3 + $0x48] sm:$0xff]
  %v1888 = vld [vmem:[#allocation3 + $0x50] sm:$0xff]
  %v1889 = vld [vmem:[#allocation3 + $0x58] sm:$0xff]
  %v1890 = vld [vmem:[#allocation3 + $0x60] sm:$0xff]
  %v1891 = vld [vmem:[#allocation3 + $0x68] sm:$0xf]
  %v1892 = vld [vmem:[#allocation3 + $0x6c] sm:$0xff]
  %v1893 = vld [vmem:[#allocation3 + $0x74] sm:$0xff]
  %v1894 = vld [vmem:[#allocation3 + $0x7c] sm:$0xff]
  %v1895 = vld [vmem:[#allocation3 + $0x84] sm:$0xff]
  %v1896 = vld [vmem:[#allocation3 + $0x8c] sm:$0xf]
  %v1897 = vld [vmem:[#allocation3 + $0x90] sm:$0xff]
  %v1898 = vld [vmem:[#allocation3 + $0x98] sm:$0xff]
  %v1899 = vld [vmem:[#allocation3 + $0xa0] sm:$0xff]
  %v1900 = vld [vmem:[#allocation3 + $0xa8] sm:$0xff]
  %v1901 = vld [vmem:[#allocation3 + $0xb0] sm:$0xf]
  %v1902 = vld [vmem:[#allocation3 + $0xb4] sm:$0xff]
  %v1903 = vld [vmem:[#allocation3 + $0xbc] sm:$0xff]
  %v1904 = vld [vmem:[#allocation3 + $0xc4] sm:$0xff]
  %v1905 = vld [vmem:[#allocation3 + $0xcc] sm:$0xff]
  %v1906 = vld [vmem:[#allocation3 + $0xd4] sm:$0xf]
  %v1907 = vld [vmem:[#allocation3 + $0xd8] sm:$0xff]
  %v1908 = vld [vmem:[#allocation3 + $0xe0] sm:$0xff]
  %v1909 = vld [vmem:[#allocation3 + $0xe8] sm:$0xff]
  %v1910 = vld [vmem:[#allocation3 + $0xf0] sm:$0xff]
  %v1911 = vld [vmem:[#allocation3 + $0xf8] sm:$0xf]
  %v1912 = vld [vmem:[#allocation3 + $0xfc] sm:$0xff]
  %v1913 = vld [vmem:[#allocation3 + $0x104] sm:$0xff]
  %v1914 = vld [vmem:[#allocation3 + $0x10c] sm:$0xff]
  %v1915 = vld [vmem:[#allocation3 + $0x114] sm:$0xff]
  %v1916 = vld [vmem:[#allocation3 + $0x11c] sm:$0xf]
  %v1917 = vld [vmem:[#allocation3 + $0x120] sm:$0xff]
  %v1918 = vld [vmem:[#allocation3 + $0x128] sm:$0xff]
  %v1919 = vld [vmem:[#allocation3 + $0x130] sm:$0xff]
  %v1920 = vld [vmem:[#allocation3 + $0x138] sm:$0xff]
  %v1921 = vld [vmem:[#allocation3 + $0x140] sm:$0xf]
  %v1922 = vld [vmem:[#allocation3 + $0x144] sm:$0xff]
  %v1923 = vld [vmem:[#allocation3 + $0x14c] sm:$0xff]
  %v1924 = vld [vmem:[#allocation3 + $0x154] sm:$0xff]
  %v1925 = vld [vmem:[#allocation3 + $0x15c] sm:$0xff]
  %v1926 = vld [vmem:[#allocation3 + $0x164] sm:$0xf]
  %v1927 = vld [vmem:[#allocation3 + $0x168] sm:$0xff]
  %v1928 = vld [vmem:[#allocation3 + $0x170] sm:$0xff]
  %v1929 = vld [vmem:[#allocation3 + $0x178] sm:$0xff]
  %v1930 = vld [vmem:[#allocation3 + $0x180] sm:$0xff]
  %v1931 = vld [vmem:[#allocation3 + $0x188] sm:$0xf]
  %v1932 = vld [vmem:[#allocation3 + $0x18c] sm:$0xff]
  %v1933 = vld [vmem:[#allocation3 + $0x194] sm:$0xff]
  %v1934 = vld [vmem:[#allocation3 + $0x19c] sm:$0xff]
  %v1935 = vld [vmem:[#allocation3 + $0x1a4] sm:$0xff]
  %v1936 = vld [vmem:[#allocation3 + $0x1ac] sm:$0xf]
  %v1937 = vld [vmem:[#allocation3 + $0x1b0] sm:$0xff]
  %v1938 = vld [vmem:[#allocation3 + $0x1b8] sm:$0xff]
  %v1939 = vld [vmem:[#allocation3 + $0x1c0] sm:$0xff]
  %v1940 = vld [vmem:[#allocation3 + $0x1c8] sm:$0xff]
  %v1941 = vld [vmem:[#allocation3 + $0x1d0] sm:$0xf]
  %v1942 = vld [vmem:[#allocation3 + $0x1d4] sm:$0xff]
  %v1943 = vld [vmem:[#allocation3 + $0x1dc] sm:$0xff]
  %v1944 = vld [vmem:[#allocation3 + $0x1e4] sm:$0xff]
  %v1945 = vld [vmem:[#allocation3 + $0x1ec] sm:$0xff]
  %v1946 = vld [vmem:[#allocation3 + $0x1f4] sm:$0xf]
  %v1947 = vld [vmem:[#allocation3 + $0x1f8] sm:$0xff]
  %v1948 = vld [vmem:[#allocation3 + $0x200] sm:$0xff]
  %v1949 = vld [vmem:[#allocation3 + $0x208] sm:$0xff]
  %v1950 = vld [vmem:[#allocation3 + $0x210] sm:$0xff]
  %v1951 = vld [vmem:[#allocation3 + $0x218] sm:$0xf]
  %v1952 = vld [vmem:[#allocation3 + $0x21c] sm:$0xff]
  %v1953 = vld [vmem:[#allocation3 + $0x224] sm:$0xff]
  %v1954 = vld [vmem:[#allocation3 + $0x22c] sm:$0xff]
  %v1955 = vld [vmem:[#allocation3 + $0x234] sm:$0xff]
  %v1956 = vld [vmem:[#allocation3 + $0x23c] sm:$0xf]
  %v1957 = vld [vmem:[%s1] sm:$0xf]
  %v1958 = vld [vmem:[%s1 + $0x4] sm:$0xf]
  %v1959 = vld [vmem:[%s1 + $0x8] sm:$0xf]
  %v1960 = vld [vmem:[%s1 + $0xc] sm:$0xf]
  %v1961 = vld [vmem:[%s1 + $0x10] sm:$0xf]
  %v1962 = vld [vmem:[%s1 + $0x14] sm:$0xf]
  %v1963 = vld [vmem:[%s1 + $0x18] sm:$0xf]
  %v1964 = vld [vmem:[%s1 + $0x1c] sm:$0xf]
  %v1965 = vld [vmem:[%s1 + $0x20] sm:$0xf]
  %v1966 = vld [vmem:[%s1 + $0x24] sm:$0xf]
  %v1967 = vld [vmem:[%s1 + $0x28] sm:$0xf]
  %v1968 = vld [vmem:[%s1 + $0x2c] sm:$0xf]
  %v1969 = vld [vmem:[%s1 + $0x30] sm:$0xf]
  %v1970 = vld [vmem:[%s1 + $0x34] sm:$0xf]
  %v1971 = vld [vmem:[%s1 + $0x38] sm:$0xf]
  %v1972 = vld [vmem:[%s1 + $0x3c] sm:$0xf]
  %v1973 = vld [vmem:[%s1 + $0x40] sm:$0xf]
  %v1974 = vld [vmem:[%s1 + $0x44] sm:$0xf]
  %v1975 = vld [vmem:[%s1 + $0x48] sm:$0xf]
  %v1976 = vld [vmem:[%s1 + $0x4c] sm:$0xf]
  %v1977 = vld [vmem:[%s1 + $0x50] sm:$0xf]
  %v1978 = vld [vmem:[%s1 + $0x54] sm:$0xf]
  %v1979 = vld [vmem:[%s1 + $0x58] sm:$0xf]
  %v1980 = vld [vmem:[%s1 + $0x5c] sm:$0xf]
  %v1981 = vld [vmem:[%s1 + $0x60] sm:$0xf]
  %v1982 = vld [vmem:[%s1 + $0x64] sm:$0xf]
  %v1983 = vld [vmem:[%s1 + $0x68] sm:$0xf]
  %v1984 = vld [vmem:[%s1 + $0x6c] sm:$0xf]
  %v1985 = vld [vmem:[%s1 + $0x70] sm:$0xf]
  %v1986 = vld [vmem:[%s1 + $0x74] sm:$0xf]
  %v1987 = vld [vmem:[%s1 + $0x78] sm:$0xf]
  %v1988 = vld [vmem:[%s1 + $0x7c] sm:$0xf]
  %v1989 = vld [vmem:[%s1 + $0x80] sm:$0xf]
  %v1990 = vld [vmem:[%s1 + $0x84] sm:$0xf]
  %v1991 = vld [vmem:[%s1 + $0x88] sm:$0xf]
  %v1992 = vld [vmem:[%s1 + $0x8c] sm:$0xf]
  %v1993 = vld [vmem:[%s1 + $0x90] sm:$0xf]
  %v1994 = vld [vmem:[%s1 + $0x94] sm:$0xf]
  %v1995 = vld [vmem:[%s1 + $0x98] sm:$0xf]
  %v1996 = vld [vmem:[%s1 + $0x9c] sm:$0xf]
  %v1997 = vld [vmem:[%s1 + $0xa0] sm:$0xf]
  %v1998 = vld [vmem:[%s1 + $0xa4] sm:$0xf]
  %v1999 = vld [vmem:[%s1 + $0xa8] sm:$0xf]
  %v2000 = vld [vmem:[%s1 + $0xac] sm:$0xf]
  %v2001 = vld [vmem:[%s1 + $0xb0] sm:$0xf]
  %v2002 = vld [vmem:[%s1 + $0xb4] sm:$0xf]
  %v2003 = vld [vmem:[%s1 + $0xb8] sm:$0xf]
  %v2004 = vld [vmem:[%s1 + $0xbc] sm:$0xf]
  %v2005 = vld [vmem:[%s1 + $0xc0] sm:$0xf]
  %v2006 = vld [vmem:[%s1 + $0xc4] sm:$0xf]
  %v2007 = vld [vmem:[%s1 + $0xc8] sm:$0xf]
  %v2008 = vld [vmem:[%s1 + $0xcc] sm:$0xf]
  %v2009 = vld [vmem:[%s1 + $0xd0] sm:$0xf]
  %v2010 = vld [vmem:[%s1 + $0xd4] sm:$0xf]
  %v2011 = vld [vmem:[%s1 + $0xd8] sm:$0xf]
  %v2012 = vld [vmem:[%s1 + $0xdc] sm:$0xf]
  %v2013 = vld [vmem:[%s1 + $0xe0] sm:$0xf]
  %v2014 = vld [vmem:[%s1 + $0xe4] sm:$0xf]
  %v2015 = vld [vmem:[%s1 + $0xe8] sm:$0xf]
  %v2016 = vld [vmem:[%s1 + $0xec] sm:$0xf]
  %v2017 = vld [vmem:[%s1 + $0xf0] sm:$0xf]
  %v2018 = vld [vmem:[%s1 + $0xf4] sm:$0xf]
  %v2019 = vld [vmem:[%s1 + $0xf8] sm:$0xf]
  %v2020 = vld [vmem:[%s1 + $0xfc] sm:$0xf]
  %v2021 = vld [vmem:[%s1 + $0x100] sm:$0xf]
  %v2022 = vld [vmem:[%s1 + $0x104] sm:$0xf]
  %v2023 = vld [vmem:[%s1 + $0x108] sm:$0xf]
  %v2024 = vld [vmem:[%s1 + $0x10c] sm:$0xf]
  %v2025 = vld [vmem:[%s1 + $0x110] sm:$0xf]
  %v2026 = vld [vmem:[%s1 + $0x114] sm:$0xf]
  %v2027 = vld [vmem:[%s1 + $0x118] sm:$0xf]
  %v2028 = vld [vmem:[%s1 + $0x11c] sm:$0xf]
  %v2029 = vld [vmem:[%s1 + $0x120] sm:$0xf]
  %v2030 = vld [vmem:[%s1 + $0x124] sm:$0xf]
  %v2031 = vld [vmem:[%s1 + $0x128] sm:$0xf]
  %v2032 = vld [vmem:[%s1 + $0x12c] sm:$0xf]
  %v2033 = vld [vmem:[%s1 + $0x130] sm:$0xf]
  %v2034 = vld [vmem:[%s1 + $0x134] sm:$0xf]
  %v2035 = vld [vmem:[%s1 + $0x138] sm:$0xf]
  %v2036 = vld [vmem:[%s1 + $0x13c] sm:$0xf]
  %v2037 = vld [vmem:[%s1 + $0x140] sm:$0xf]
  %v2038 = vld [vmem:[%s1 + $0x144] sm:$0xf]
  %v2039 = vld [vmem:[%s1 + $0x148] sm:$0xf]
  %v2040 = vld [vmem:[%s1 + $0x14c] sm:$0xf]
  %v2041 = vld [vmem:[%s1 + $0x150] sm:$0xf]
  %v2042 = vld [vmem:[%s1 + $0x154] sm:$0xf]
  %v2043 = vld [vmem:[%s1 + $0x158] sm:$0xf]
  %v2044 = vld [vmem:[%s1 + $0x15c] sm:$0xf]
  %v2045 = vld [vmem:[%s1 + $0x160] sm:$0xf]
  %v2046 = vld [vmem:[%s1 + $0x164] sm:$0xf]
  %v2047 = vld [vmem:[%s1 + $0x168] sm:$0xf]
  %v2048 = vld [vmem:[%s1 + $0x16c] sm:$0xf]
  %v2049 = vld [vmem:[%s1 + $0x170] sm:$0xf]
  %v2050 = vld [vmem:[%s1 + $0x174] sm:$0xf]
  %v2051 = vld [vmem:[%s1 + $0x178] sm:$0xf]
  %v2052 = vld [vmem:[%s1 + $0x17c] sm:$0xf]
  %v2053 = vld [vmem:[%s1 + $0x180] sm:$0xf]
  %v2054 = vld [vmem:[%s1 + $0x184] sm:$0xf]
  %v2055 = vld [vmem:[%s1 + $0x188] sm:$0xf]
  %v2056 = vld [vmem:[%s1 + $0x18c] sm:$0xf]
  %v2057 = vld [vmem:[%s1 + $0x190] sm:$0xf]
  %v2058 = vld [vmem:[%s1 + $0x194] sm:$0xf]
  %v2059 = vld [vmem:[%s1 + $0x198] sm:$0xf]
  %v2060 = vld [vmem:[%s1 + $0x19c] sm:$0xf]
  %v2061 = vld [vmem:[%s1 + $0x1a0] sm:$0xf]
  %v2062 = vld [vmem:[%s1 + $0x1a4] sm:$0xf]
  %v2063 = vld [vmem:[%s1 + $0x1a8] sm:$0xf]
  %v2064 = vld [vmem:[%s1 + $0x1ac] sm:$0xf]
  %v2065 = vld [vmem:[%s1 + $0x1b0] sm:$0xf]
  %v2066 = vld [vmem:[%s1 + $0x1b4] sm:$0xf]
  %v2067 = vld [vmem:[%s1 + $0x1b8] sm:$0xf]
  %v2068 = vld [vmem:[%s1 + $0x1bc] sm:$0xf]
  %v2069 = vld [vmem:[%s1 + $0x1c0] sm:$0xf]
  %v2070 = vld [vmem:[%s1 + $0x1c4] sm:$0xf]
  %v2071 = vld [vmem:[%s1 + $0x1c8] sm:$0xf]
  %v2072 = vld [vmem:[%s1 + $0x1cc] sm:$0xf]
  %v2073 = vld [vmem:[%s1 + $0x1d0] sm:$0xf]
  %v2074 = vld [vmem:[%s1 + $0x1d4] sm:$0xf]
  %v2075 = vld [vmem:[%s1 + $0x1d8] sm:$0xf]
  %v2076 = vld [vmem:[%s1 + $0x1dc] sm:$0xf]
  %v2077 = vld [vmem:[%s1 + $0x1e0] sm:$0xf]
  %v2078 = vld [vmem:[%s1 + $0x1e4] sm:$0xf]
  %v2079 = vld [vmem:[%s1 + $0x1e8] sm:$0xf]
  %v2080 = vld [vmem:[%s1 + $0x1ec] sm:$0xf]
  %v2081 = vld [vmem:[%s1 + $0x1f0] sm:$0xf]
  %v2082 = vld [vmem:[%s1 + $0x1f4] sm:$0xf]
  %v2083 = vld [vmem:[%s1 + $0x1f8] sm:$0xf]
  %v2084 = vld [vmem:[%s1 + $0x1fc] sm:$0xf]
  %v2085 = vld [vmem:[%s1 + $0x200] sm:$0xf]
  %v2086 = vld [vmem:[%s1 + $0x204] sm:$0xf]
  %v2087 = vld [vmem:[%s1 + $0x208] sm:$0xf]
  %v2088 = vld [vmem:[%s1 + $0x20c] sm:$0xf]
  %v2089 = vld [vmem:[%s1 + $0x210] sm:$0xf]
  %v2090 = vld [vmem:[%s1 + $0x214] sm:$0xf]
  %v2091 = vld [vmem:[%s1 + $0x218] sm:$0xf]
  %v2092 = vld [vmem:[%s1 + $0x21c] sm:$0xf]
  %v2093 = vld [vmem:[%s1 + $0x220] sm:$0xf]
  %v2094 = vld [vmem:[%s1 + $0x224] sm:$0xf]
  %v2095 = vld [vmem:[%s1 + $0x228] sm:$0xf]
  %v2096 = vld [vmem:[%s1 + $0x22c] sm:$0xf]
  %v2097 = vld [vmem:[%s1 + $0x230] sm:$0xf]
  %v2098 = vld [vmem:[%s1 + $0x234] sm:$0xf]
  %v2099 = vld [vmem:[%s1 + $0x238] sm:$0xf]
  %v2100 = vld [vmem:[%s1 + $0x23c] sm:$0xf]
  %v2181 = vunpack.c.l.b16 %v1877
  %v2182 = vunpack.c.h.b16 %v1877
  %v2183 = vunpack.c.l.b16 %v1878
  %v2184 = vunpack.c.h.b16 %v1878
  %v2185 = vunpack.c.l.b16 %v1879
  %v2186 = vunpack.c.h.b16 %v1879
  %v2187 = vunpack.c.l.b16 %v1880
  %v2188 = vunpack.c.h.b16 %v1880
  %v2189 = vunpack.c.l.b16 %v1881
  %v2190 = vunpack.c.l.b16 %v1882
  %v2191 = vunpack.c.h.b16 %v1882
  %v2192 = vunpack.c.l.b16 %v1883
  %v2193 = vunpack.c.h.b16 %v1883
  %v2194 = vunpack.c.l.b16 %v1884
  %v2195 = vunpack.c.h.b16 %v1884
  %v2196 = vunpack.c.l.b16 %v1885
  %v2197 = vunpack.c.h.b16 %v1885
  %v2198 = vunpack.c.l.b16 %v1886
  %v2199 = vunpack.c.l.b16 %v1887
  %v2200 = vunpack.c.h.b16 %v1887
  %v2201 = vunpack.c.l.b16 %v1888
  %v2202 = vunpack.c.h.b16 %v1888
  %v2203 = vunpack.c.l.b16 %v1889
  %v2204 = vunpack.c.h.b16 %v1889
  %v2205 = vunpack.c.l.b16 %v1890
  %v2206 = vunpack.c.h.b16 %v1890
  %v2207 = vunpack.c.l.b16 %v1891
  %v2208 = vunpack.c.l.b16 %v1892
  %v2209 = vunpack.c.h.b16 %v1892
  %v2210 = vunpack.c.l.b16 %v1893
  %v2211 = vunpack.c.h.b16 %v1893
  %v2212 = vunpack.c.l.b16 %v1894
  %v2213 = vunpack.c.h.b16 %v1894
  %v2214 = vunpack.c.l.b16 %v1895
  %v2215 = vunpack.c.h.b16 %v1895
  %v2216 = vunpack.c.l.b16 %v1896
  %v2217 = vunpack.c.l.b16 %v1897
  %v2218 = vunpack.c.h.b16 %v1897
  %v2219 = vunpack.c.l.b16 %v1898
  %v2220 = vunpack.c.h.b16 %v1898
  %v2221 = vunpack.c.l.b16 %v1899
  %v2222 = vunpack.c.h.b16 %v1899
  %v2223 = vunpack.c.l.b16 %v1900
  %v2224 = vunpack.c.h.b16 %v1900
  %v2225 = vunpack.c.l.b16 %v1901
  %v2226 = vunpack.c.l.b16 %v1902
  %v2227 = vunpack.c.h.b16 %v1902
  %v2228 = vunpack.c.l.b16 %v1903
  %v2229 = vunpack.c.h.b16 %v1903
  %v2230 = vunpack.c.l.b16 %v1904
  %v2231 = vunpack.c.h.b16 %v1904
  %v2232 = vunpack.c.l.b16 %v1905
  %v2233 = vunpack.c.h.b16 %v1905
  %v2234 = vunpack.c.l.b16 %v1906
  %v2235 = vunpack.c.l.b16 %v1907
  %v2236 = vunpack.c.h.b16 %v1907
  %v2237 = vunpack.c.l.b16 %v1908
  %v2238 = vunpack.c.h.b16 %v1908
  %v2239 = vunpack.c.l.b16 %v1909
  %v2240 = vunpack.c.h.b16 %v1909
  %v2241 = vunpack.c.l.b16 %v1910
  %v2242 = vunpack.c.h.b16 %v1910
  %v2243 = vunpack.c.l.b16 %v1911
  %v2244 = vunpack.c.l.b16 %v1912
  %v2245 = vunpack.c.h.b16 %v1912
  %v2246 = vunpack.c.l.b16 %v1913
  %v2247 = vunpack.c.h.b16 %v1913
  %v2248 = vunpack.c.l.b16 %v1914
  %v2249 = vunpack.c.h.b16 %v1914
  %v2250 = vunpack.c.l.b16 %v1915
  %v2251 = vunpack.c.h.b16 %v1915
  %v2252 = vunpack.c.l.b16 %v1916
  %v2253 = vunpack.c.l.b16 %v1917
  %v2254 = vunpack.c.h.b16 %v1917
  %v2255 = vunpack.c.l.b16 %v1918
  %v2256 = vunpack.c.h.b16 %v1918
  %v2257 = vunpack.c.l.b16 %v1919
  %v2258 = vunpack.c.h.b16 %v1919
  %v2259 = vunpack.c.l.b16 %v1920
  %v2260 = vunpack.c.h.b16 %v1920
  %v2261 = vunpack.c.l.b16 %v1921
  %v2262 = vunpack.c.l.b16 %v1922
  %v2263 = vunpack.c.h.b16 %v1922
  %v2264 = vunpack.c.l.b16 %v1923
  %v2265 = vunpack.c.h.b16 %v1923
  %v2266 = vunpack.c.l.b16 %v1924
  %v2267 = vunpack.c.h.b16 %v1924
  %v2268 = vunpack.c.l.b16 %v1925
  %v2269 = vunpack.c.h.b16 %v1925
  %v2270 = vunpack.c.l.b16 %v1926
  %v2271 = vunpack.c.l.b16 %v1927
  %v2272 = vunpack.c.h.b16 %v1927
  %v2273 = vunpack.c.l.b16 %v1928
  %v2274 = vunpack.c.h.b16 %v1928
  %v2275 = vunpack.c.l.b16 %v1929
  %v2276 = vunpack.c.h.b16 %v1929
  %v2277 = vunpack.c.l.b16 %v1930
  %v2278 = vunpack.c.h.b16 %v1930
  %v2279 = vunpack.c.l.b16 %v1931
  %v2280 = vunpack.c.l.b16 %v1932
  %v2281 = vunpack.c.h.b16 %v1932
  %v2282 = vunpack.c.l.b16 %v1933
  %v2283 = vunpack.c.h.b16 %v1933
  %v2284 = vunpack.c.l.b16 %v1934
  %v2285 = vunpack.c.h.b16 %v1934
  %v2286 = vunpack.c.l.b16 %v1935
  %v2287 = vunpack.c.h.b16 %v1935
  %v2288 = vunpack.c.l.b16 %v1936
  %v2289 = vunpack.c.l.b16 %v1937
  %v2290 = vunpack.c.h.b16 %v1937
  %v2291 = vunpack.c.l.b16 %v1938
  %v2292 = vunpack.c.h.b16 %v1938
  %v2293 = vunpack.c.l.b16 %v1939
  %v2294 = vunpack.c.h.b16 %v1939
  %v2295 = vunpack.c.l.b16 %v1940
  %v2296 = vunpack.c.h.b16 %v1940
  %v2297 = vunpack.c.l.b16 %v1941
  %v2298 = vunpack.c.l.b16 %v1942
  %v2299 = vunpack.c.h.b16 %v1942
  %v2300 = vunpack.c.l.b16 %v1943
  %v2301 = vunpack.c.h.b16 %v1943
  %v2302 = vunpack.c.l.b16 %v1944
  %v2303 = vunpack.c.h.b16 %v1944
  %v2304 = vunpack.c.l.b16 %v1945
  %v2305 = vunpack.c.h.b16 %v1945
  %v2306 = vunpack.c.l.b16 %v1946
  %v2307 = vunpack.c.l.b16 %v1947
  %v2308 = vunpack.c.h.b16 %v1947
  %v2309 = vunpack.c.l.b16 %v1948
  %v2310 = vunpack.c.h.b16 %v1948
  %v2311 = vunpack.c.l.b16 %v1949
  %v2312 = vunpack.c.h.b16 %v1949
  %v2313 = vunpack.c.l.b16 %v1950
  %v2314 = vunpack.c.h.b16 %v1950
  %v2315 = vunpack.c.l.b16 %v1951
  %v2316 = vunpack.c.l.b16 %v1952
  %v2317 = vunpack.c.h.b16 %v1952
  %v2318 = vunpack.c.l.b16 %v1953
  %v2319 = vunpack.c.h.b16 %v1953
  %v2320 = vunpack.c.l.b16 %v1954
  %v2321 = vunpack.c.h.b16 %v1954
  %v2322 = vunpack.c.l.b16 %v1955
  %v2323 = vunpack.c.h.b16 %v1955
  %v2324 = vunpack.c.l.b16 %v1956
  %v2325 = vpack.c.b16 %v2190, %v2181
  %v2326 = vpack.c.b16 %v2191, %v2182
  %v2327 = vpack.c.b16 %v2192, %v2183
  %v2328 = vpack.c.b16 %v2193, %v2184
  %v2329 = vpack.c.b16 %v2194, %v2185
  %v2330 = vpack.c.b16 %v2195, %v2186
  %v2331 = vpack.c.b16 %v2196, %v2187
  %v2332 = vpack.c.b16 %v2197, %v2188
  %v2333 = vpack.c.b16 %v2198, %v2189
  %v2334 = vpack.c.b16 %v2208, %v2199
  %v2335 = vpack.c.b16 %v2209, %v2200
  %v2336 = vpack.c.b16 %v2210, %v2201
  %v2337 = vpack.c.b16 %v2211, %v2202
  %v2338 = vpack.c.b16 %v2212, %v2203
  %v2339 = vpack.c.b16 %v2213, %v2204
  %v2340 = vpack.c.b16 %v2214, %v2205
  %v2341 = vpack.c.b16 %v2215, %v2206
  %v2342 = vpack.c.b16 %v2216, %v2207
  %v2343 = vpack.c.b16 %v2226, %v2217
  %v2344 = vpack.c.b16 %v2227, %v2218
  %v2345 = vpack.c.b16 %v2228, %v2219
  %v2346 = vpack.c.b16 %v2229, %v2220
  %v2347 = vpack.c.b16 %v2230, %v2221
  %v2348 = vpack.c.b16 %v2231, %v2222
  %v2349 = vpack.c.b16 %v2232, %v2223
  %v2350 = vpack.c.b16 %v2233, %v2224
  %v2351 = vpack.c.b16 %v2234, %v2225
  %v2352 = vpack.c.b16 %v2244, %v2235
  %v2353 = vpack.c.b16 %v2245, %v2236
  %v2354 = vpack.c.b16 %v2246, %v2237
  %v2355 = vpack.c.b16 %v2247, %v2238
  %v2356 = vpack.c.b16 %v2248, %v2239
  %v2357 = vpack.c.b16 %v2249, %v2240
  %v2358 = vpack.c.b16 %v2250, %v2241
  %v2359 = vpack.c.b16 %v2251, %v2242
  %v2360 = vpack.c.b16 %v2252, %v2243
  %v2361 = vpack.c.b16 %v2262, %v2253
  %v2362 = vpack.c.b16 %v2263, %v2254
  %v2363 = vpack.c.b16 %v2264, %v2255
  %v2364 = vpack.c.b16 %v2265, %v2256
  %v2365 = vpack.c.b16 %v2266, %v2257
  %v2366 = vpack.c.b16 %v2267, %v2258
  %v2367 = vpack.c.b16 %v2268, %v2259
  %v2368 = vpack.c.b16 %v2269, %v2260
  %v2369 = vpack.c.b16 %v2270, %v2261
  %v2370 = vpack.c.b16 %v2280, %v2271
  %v2371 = vpack.c.b16 %v2281, %v2272
  %v2372 = vpack.c.b16 %v2282, %v2273
  %v2373 = vpack.c.b16 %v2283, %v2274
  %v2374 = vpack.c.b16 %v2284, %v2275
  %v2375 = vpack.c.b16 %v2285, %v2276
  %v2376 = vpack.c.b16 %v2286, %v2277
  %v2377 = vpack.c.b16 %v2287, %v2278
  %v2378 = vpack.c.b16 %v2288, %v2279
  %v2379 = vpack.c.b16 %v2298, %v2289
  %v2380 = vpack.c.b16 %v2299, %v2290
  %v2381 = vpack.c.b16 %v2300, %v2291
  %v2382 = vpack.c.b16 %v2301, %v2292
  %v2383 = vpack.c.b16 %v2302, %v2293
  %v2384 = vpack.c.b16 %v2303, %v2294
  %v2385 = vpack.c.b16 %v2304, %v2295
  %v2386 = vpack.c.b16 %v2305, %v2296
  %v2387 = vpack.c.b16 %v2306, %v2297
  %v2388 = vpack.c.b16 %v2316, %v2307
  %v2389 = vpack.c.b16 %v2317, %v2308
  %v2390 = vpack.c.b16 %v2318, %v2309
  %v2391 = vpack.c.b16 %v2319, %v2310
  %v2392 = vpack.c.b16 %v2320, %v2311
  %v2393 = vpack.c.b16 %v2321, %v2312
  %v2394 = vpack.c.b16 %v2322, %v2313
  %v2395 = vpack.c.b16 %v2323, %v2314
  %v2396 = vpack.c.b16 %v2324, %v2315
  %v2613 = vunpack.c.l.b16 %v1957
  %v2614 = vunpack.c.l.b16 %v1958
  %v2615 = vunpack.c.l.b16 %v1959
  %v2616 = vunpack.c.l.b16 %v1960
  %v2617 = vunpack.c.l.b16 %v1961
  %v2618 = vunpack.c.l.b16 %v1962
  %v2619 = vunpack.c.l.b16 %v1963
  %v2620 = vunpack.c.l.b16 %v1964
  %v2621 = vunpack.c.l.b16 %v1965
  %v2622 = vunpack.c.l.b16 %v1966
  %v2623 = vunpack.c.l.b16 %v1967
  %v2624 = vunpack.c.l.b16 %v1968
  %v2625 = vunpack.c.l.b16 %v1969
  %v2626 = vunpack.c.l.b16 %v1970
  %v2627 = vunpack.c.l.b16 %v1971
  %v2628 = vunpack.c.l.b16 %v1972
  %v2629 = vunpack.c.l.b16 %v1973
  %v2630 = vunpack.c.l.b16 %v1974
  %v2631 = vunpack.c.l.b16 %v1975
  %v2632 = vunpack.c.l.b16 %v1976
  %v2633 = vunpack.c.l.b16 %v1977
  %v2634 = vunpack.c.l.b16 %v1978
  %v2635 = vunpack.c.l.b16 %v1979
  %v2636 = vunpack.c.l.b16 %v1980
  %v2637 = vunpack.c.l.b16 %v1981
  %v2638 = vunpack.c.l.b16 %v1982
  %v2639 = vunpack.c.l.b16 %v1983
  %v2640 = vunpack.c.l.b16 %v1984
  %v2641 = vunpack.c.l.b16 %v1985
  %v2642 = vunpack.c.l.b16 %v1986
  %v2643 = vunpack.c.l.b16 %v1987
  %v2644 = vunpack.c.l.b16 %v1988
  %v2645 = vunpack.c.l.b16 %v1989
  %v2646 = vunpack.c.l.b16 %v1990
  %v2647 = vunpack.c.l.b16 %v1991
  %v2648 = vunpack.c.l.b16 %v1992
  %v2649 = vunpack.c.l.b16 %v1993
  %v2650 = vunpack.c.l.b16 %v1994
  %v2651 = vunpack.c.l.b16 %v1995
  %v2652 = vunpack.c.l.b16 %v1996
  %v2653 = vunpack.c.l.b16 %v1997
  %v2654 = vunpack.c.l.b16 %v1998
  %v2655 = vunpack.c.l.b16 %v1999
  %v2656 = vunpack.c.l.b16 %v2000
  %v2657 = vunpack.c.l.b16 %v2001
  %v2658 = vunpack.c.l.b16 %v2002
  %v2659 = vunpack.c.l.b16 %v2003
  %v2660 = vunpack.c.l.b16 %v2004
  %v2661 = vunpack.c.l.b16 %v2005
  %v2662 = vunpack.c.l.b16 %v2006
  %v2663 = vunpack.c.l.b16 %v2007
  %v2664 = vunpack.c.l.b16 %v2008
  %v2665 = vunpack.c.l.b16 %v2009
  %v2666 = vunpack.c.l.b16 %v2010
  %v2667 = vunpack.c.l.b16 %v2011
  %v2668 = vunpack.c.l.b16 %v2012
  %v2669 = vunpack.c.l.b16 %v2013
  %v2670 = vunpack.c.l.b16 %v2014
  %v2671 = vunpack.c.l.b16 %v2015
  %v2672 = vunpack.c.l.b16 %v2016
  %v2673 = vunpack.c.l.b16 %v2017
  %v2674 = vunpack.c.l.b16 %v2018
  %v2675 = vunpack.c.l.b16 %v2019
  %v2676 = vunpack.c.l.b16 %v2020
  %v2677 = vunpack.c.l.b16 %v2021
  %v2678 = vunpack.c.l.b16 %v2022
  %v2679 = vunpack.c.l.b16 %v2023
  %v2680 = vunpack.c.l.b16 %v2024
  %v2681 = vunpack.c.l.b16 %v2025
  %v2682 = vunpack.c.l.b16 %v2026
  %v2683 = vunpack.c.l.b16 %v2027
  %v2684 = vunpack.c.l.b16 %v2028
  %v2685 = vunpack.c.l.b16 %v2029
  %v2686 = vunpack.c.l.b16 %v2030
  %v2687 = vunpack.c.l.b16 %v2031
  %v2688 = vunpack.c.l.b16 %v2032
  %v2689 = vunpack.c.l.b16 %v2033
  %v2690 = vunpack.c.l.b16 %v2034
  %v2691 = vunpack.c.l.b16 %v2035
  %v2692 = vunpack.c.l.b16 %v2036
  %v2693 = vunpack.c.l.b16 %v2037
  %v2694 = vunpack.c.l.b16 %v2038
  %v2695 = vunpack.c.l.b16 %v2039
  %v2696 = vunpack.c.l.b16 %v2040
  %v2697 = vunpack.c.l.b16 %v2041
  %v2698 = vunpack.c.l.b16 %v2042
  %v2699 = vunpack.c.l.b16 %v2043
  %v2700 = vunpack.c.l.b16 %v2044
  %v2701 = vunpack.c.l.b16 %v2045
  %v2702 = vunpack.c.l.b16 %v2046
  %v2703 = vunpack.c.l.b16 %v2047
  %v2704 = vunpack.c.l.b16 %v2048
  %v2705 = vunpack.c.l.b16 %v2049
  %v2706 = vunpack.c.l.b16 %v2050
  %v2707 = vunpack.c.l.b16 %v2051
  %v2708 = vunpack.c.l.b16 %v2052
  %v2709 = vunpack.c.l.b16 %v2053
  %v2710 = vunpack.c.l.b16 %v2054
  %v2711 = vunpack.c.l.b16 %v2055
  %v2712 = vunpack.c.l.b16 %v2056
  %v2713 = vunpack.c.l.b16 %v2057
  %v2714 = vunpack.c.l.b16 %v2058
  %v2715 = vunpack.c.l.b16 %v2059
  %v2716 = vunpack.c.l.b16 %v2060
  %v2717 = vunpack.c.l.b16 %v2061
  %v2718 = vunpack.c.l.b16 %v2062
  %v2719 = vunpack.c.l.b16 %v2063
  %v2720 = vunpack.c.l.b16 %v2064
  %v2721 = vunpack.c.l.b16 %v2065
  %v2722 = vunpack.c.l.b16 %v2066
  %v2723 = vunpack.c.l.b16 %v2067
  %v2724 = vunpack.c.l.b16 %v2068
  %v2725 = vunpack.c.l.b16 %v2069
  %v2726 = vunpack.c.l.b16 %v2070
  %v2727 = vunpack.c.l.b16 %v2071
  %v2728 = vunpack.c.l.b16 %v2072
  %v2729 = vunpack.c.l.b16 %v2073
  %v2730 = vunpack.c.l.b16 %v2074
  %v2731 = vunpack.c.l.b16 %v2075
  %v2732 = vunpack.c.l.b16 %v2076
  %v2733 = vunpack.c.l.b16 %v2077
  %v2734 = vunpack.c.l.b16 %v2078
  %v2735 = vunpack.c.l.b16 %v2079
  %v2736 = vunpack.c.l.b16 %v2080
  %v2737 = vunpack.c.l.b16 %v2081
  %v2738 = vunpack.c.l.b16 %v2082
  %v2739 = vunpack.c.l.b16 %v2083
  %v2740 = vunpack.c.l.b16 %v2084
  %v2741 = vunpack.c.l.b16 %v2085
  %v2742 = vunpack.c.l.b16 %v2086
  %v2743 = vunpack.c.l.b16 %v2087
  %v2744 = vunpack.c.l.b16 %v2088
  %v2745 = vunpack.c.l.b16 %v2089
  %v2746 = vunpack.c.l.b16 %v2090
  %v2747 = vunpack.c.l.b16 %v2091
  %v2748 = vunpack.c.l.b16 %v2092
  %v2749 = vunpack.c.l.b16 %v2093
  %v2750 = vunpack.c.l.b16 %v2094
  %v2751 = vunpack.c.l.b16 %v2095
  %v2752 = vunpack.c.l.b16 %v2096
  %v2753 = vunpack.c.l.b16 %v2097
  %v2754 = vunpack.c.l.b16 %v2098
  %v2755 = vunpack.c.l.b16 %v2099
  %v2756 = vunpack.c.l.b16 %v2100
  %v2757 = vpack.c.b16 %v2614, %v2613
  %v2758 = vpack.c.b16 %v2616, %v2615
  %v2759 = vpack.c.b16 %v2618, %v2617
  %v2760 = vpack.c.b16 %v2620, %v2619
  %v2761 = vpack.c.b16 %v2622, %v2621
  %v2762 = vpack.c.b16 %v2624, %v2623
  %v2763 = vpack.c.b16 %v2626, %v2625
  %v2764 = vpack.c.b16 %v2628, %v2627
  %v2765 = vpack.c.b16 %v2630, %v2629
  %v2766 = vpack.c.b16 %v2632, %v2631
  %v2767 = vpack.c.b16 %v2634, %v2633
  %v2768 = vpack.c.b16 %v2636, %v2635
  %v2769 = vpack.c.b16 %v2638, %v2637
  %v2770 = vpack.c.b16 %v2640, %v2639
  %v2771 = vpack.c.b16 %v2642, %v2641
  %v2772 = vpack.c.b16 %v2644, %v2643
  %v2773 = vpack.c.b16 %v2646, %v2645
  %v2774 = vpack.c.b16 %v2648, %v2647
  %v2775 = vpack.c.b16 %v2650, %v2649
  %v2776 = vpack.c.b16 %v2652, %v2651
  %v2777 = vpack.c.b16 %v2654, %v2653
  %v2778 = vpack.c.b16 %v2656, %v2655
  %v2779 = vpack.c.b16 %v2658, %v2657
  %v2780 = vpack.c.b16 %v2660, %v2659
  %v2781 = vpack.c.b16 %v2662, %v2661
  %v2782 = vpack.c.b16 %v2664, %v2663
  %v2783 = vpack.c.b16 %v2666, %v2665
  %v2784 = vpack.c.b16 %v2668, %v2667
  %v2785 = vpack.c.b16 %v2670, %v2669
  %v2786 = vpack.c.b16 %v2672, %v2671
  %v2787 = vpack.c.b16 %v2674, %v2673
  %v2788 = vpack.c.b16 %v2676, %v2675
  %v2789 = vpack.c.b16 %v2678, %v2677
  %v2790 = vpack.c.b16 %v2680, %v2679
  %v2791 = vpack.c.b16 %v2682, %v2681
  %v2792 = vpack.c.b16 %v2684, %v2683
  %v2793 = vpack.c.b16 %v2686, %v2685
  %v2794 = vpack.c.b16 %v2688, %v2687
  %v2795 = vpack.c.b16 %v2690, %v2689
  %v2796 = vpack.c.b16 %v2692, %v2691
  %v2797 = vpack.c.b16 %v2694, %v2693
  %v2798 = vpack.c.b16 %v2696, %v2695
  %v2799 = vpack.c.b16 %v2698, %v2697
  %v2800 = vpack.c.b16 %v2700, %v2699
  %v2801 = vpack.c.b16 %v2702, %v2701
  %v2802 = vpack.c.b16 %v2704, %v2703
  %v2803 = vpack.c.b16 %v2706, %v2705
  %v2804 = vpack.c.b16 %v2708, %v2707
  %v2805 = vpack.c.b16 %v2710, %v2709
  %v2806 = vpack.c.b16 %v2712, %v2711
  %v2807 = vpack.c.b16 %v2714, %v2713
  %v2808 = vpack.c.b16 %v2716, %v2715
  %v2809 = vpack.c.b16 %v2718, %v2717
  %v2810 = vpack.c.b16 %v2720, %v2719
  %v2811 = vpack.c.b16 %v2722, %v2721
  %v2812 = vpack.c.b16 %v2724, %v2723
  %v2813 = vpack.c.b16 %v2726, %v2725
  %v2814 = vpack.c.b16 %v2728, %v2727
  %v2815 = vpack.c.b16 %v2730, %v2729
  %v2816 = vpack.c.b16 %v2732, %v2731
  %v2817 = vpack.c.b16 %v2734, %v2733
  %v2818 = vpack.c.b16 %v2736, %v2735
  %v2819 = vpack.c.b16 %v2738, %v2737
  %v2820 = vpack.c.b16 %v2740, %v2739
  %v2821 = vpack.c.b16 %v2742, %v2741
  %v2822 = vpack.c.b16 %v2744, %v2743
  %v2823 = vpack.c.b16 %v2746, %v2745
  %v2824 = vpack.c.b16 %v2748, %v2747
  %v2825 = vpack.c.b16 %v2750, %v2749
  %v2826 = vpack.c.b16 %v2752, %v2751
  %v2827 = vpack.c.b16 %v2754, %v2753
  %v2828 = vpack.c.b16 %v2756, %v2755
  %2901 = vmatpush.bf16.msra.mxu0 %v2764
  %2902 = vmatpush.bf16.msra.mxu0 %v2763
  %2903 = vmatpush.bf16.msra.mxu0 %v2762
  %2904 = vmatpush.bf16.msra.mxu0 %v2761
  %2905 = vmatpush.bf16.msra.mxu0 %v2760
  %2906 = vmatpush.bf16.msra.mxu0 %v2759
  %2907 = vmatpush.bf16.msra.mxu0 %v2758
  %2908 = vmatpush.bf16.msra.mxu0 %v2757
  %2909 = vmatmul.bf16.gmra.mxu0 %v2325
  %v2910 = vpop.f32.mrf.mxu0
  %v2911 = vadd.f32 0.0, %v2910
  %v2912 = vpop.f32.mrf.mxu0
  %v2913 = vadd.f32 0.0, %v2912
  %2914 = vmatmul.bf16.gmra.mxu0 %v2334
  %v2915 = vpop.f32.mrf.mxu0
  %v2916 = vadd.f32 0.0, %v2915
  %v2917 = vpop.f32.mrf.mxu0
  %v2918 = vadd.f32 0.0, %v2917
  %2919 = vmatmul.bf16.gmra.mxu0 %v2343
  %v2920 = vpop.f32.mrf.mxu0
  %v2921 = vadd.f32 0.0, %v2920
  %v2922 = vpop.f32.mrf.mxu0
  %v2923 = vadd.f32 0.0, %v2922
  %2924 = vmatmul.bf16.gmra.mxu0 %v2352
  %v2925 = vpop.f32.mrf.mxu0
  %v2926 = vadd.f32 0.0, %v2925
  %v2927 = vpop.f32.mrf.mxu0
  %v2928 = vadd.f32 0.0, %v2927
  %2929 = vmatmul.bf16.gmra.mxu0 %v2361
  %v2930 = vpop.f32.mrf.mxu0
  %v2931 = vadd.f32 0.0, %v2930
  %v2932 = vpop.f32.mrf.mxu0
  %v2933 = vadd.f32 0.0, %v2932
  %2934 = vmatmul.bf16.gmra.mxu0 %v2370
  %v2935 = vpop.f32.mrf.mxu0
  %v2936 = vadd.f32 0.0, %v2935
  %v2937 = vpop.f32.mrf.mxu0
  %v2938 = vadd.f32 0.0, %v2937
  %2939 = vmatmul.bf16.gmra.mxu0 %v2379
  %v2940 = vpop.f32.mrf.mxu0
  %v2941 = vadd.f32 0.0, %v2940
  %v2942 = vpop.f32.mrf.mxu0
  %v2943 = vadd.f32 0.0, %v2942
  %2944 = vmatmul.bf16.gmra.mxu0 %v2388
  %v2945 = vpop.f32.mrf.mxu0
  %v2946 = vadd.f32 0.0, %v2945
  %v2947 = vpop.f32.mrf.mxu0
  %v2948 = vadd.f32 0.0, %v2947
  %2949 = vdwg.mxu0
  %2950 = vmatpush.bf16.msra.mxu0 %v2772
  %2951 = vmatpush.bf16.msra.mxu0 %v2771
  %2952 = vmatpush.bf16.msra.mxu0 %v2770
  %2953 = vmatpush.bf16.msra.mxu0 %v2769
  %2954 = vmatpush.bf16.msra.mxu0 %v2768
  %2955 = vmatpush.bf16.msra.mxu0 %v2767
  %2956 = vmatpush.bf16.msra.mxu0 %v2766
  %2957 = vmatpush.bf16.msra.mxu0 %v2765
  %2958 = vmatmul.bf16.gmra.mxu0 %v2326
  %v2959 = vpop.f32.mrf.mxu0
  %v2960 = vadd.f32 %v2911, %v2959
  %v2961 = vpop.f32.mrf.mxu0
  %v2962 = vadd.f32 %v2913, %v2961
  %2963 = vmatmul.bf16.gmra.mxu0 %v2335
  %v2964 = vpop.f32.mrf.mxu0
  %v2965 = vadd.f32 %v2916, %v2964
  %v2966 = vpop.f32.mrf.mxu0
  %v2967 = vadd.f32 %v2918, %v2966
  %2968 = vmatmul.bf16.gmra.mxu0 %v2344
  %v2969 = vpop.f32.mrf.mxu0
  %v2970 = vadd.f32 %v2921, %v2969
  %v2971 = vpop.f32.mrf.mxu0
  %v2972 = vadd.f32 %v2923, %v2971
  %2973 = vmatmul.bf16.gmra.mxu0 %v2353
  %v2974 = vpop.f32.mrf.mxu0
  %v2975 = vadd.f32 %v2926, %v2974
  %v2976 = vpop.f32.mrf.mxu0
  %v2977 = vadd.f32 %v2928, %v2976
  %2978 = vmatmul.bf16.gmra.mxu0 %v2362
  %v2979 = vpop.f32.mrf.mxu0
  %v2980 = vadd.f32 %v2931, %v2979
  %v2981 = vpop.f32.mrf.mxu0
  %v2982 = vadd.f32 %v2933, %v2981
  %2983 = vmatmul.bf16.gmra.mxu0 %v2371
  %v2984 = vpop.f32.mrf.mxu0
  %v2985 = vadd.f32 %v2936, %v2984
  %v2986 = vpop.f32.mrf.mxu0
  %v2987 = vadd.f32 %v2938, %v2986
  %2988 = vmatmul.bf16.gmra.mxu0 %v2380
  %v2989 = vpop.f32.mrf.mxu0
  %v2990 = vadd.f32 %v2941, %v2989
  %v2991 = vpop.f32.mrf.mxu0
  %v2992 = vadd.f32 %v2943, %v2991
  %2993 = vmatmul.bf16.gmra.mxu0 %v2389
  %v2994 = vpop.f32.mrf.mxu0
  %v2995 = vadd.f32 %v2946, %v2994
  %v2996 = vpop.f32.mrf.mxu0
  %v2997 = vadd.f32 %v2948, %v2996
  %2998 = vdwg.mxu0
  %2999 = vmatpush.bf16.msra.mxu0 %v2780
  %3000 = vmatpush.bf16.msra.mxu0 %v2779
  %3001 = vmatpush.bf16.msra.mxu0 %v2778
  %3002 = vmatpush.bf16.msra.mxu0 %v2777
  %3003 = vmatpush.bf16.msra.mxu0 %v2776
  %3004 = vmatpush.bf16.msra.mxu0 %v2775
  %3005 = vmatpush.bf16.msra.mxu0 %v2774
  %3006 = vmatpush.bf16.msra.mxu0 %v2773
  %3007 = vmatmul.bf16.gmra.mxu0 %v2327
  %v3008 = vpop.f32.mrf.mxu0
  %v3009 = vadd.f32 %v2960, %v3008
  %v3010 = vpop.f32.mrf.mxu0
  %v3011 = vadd.f32 %v2962, %v3010
  %3012 = vmatmul.bf16.gmra.mxu0 %v2336
  %v3013 = vpop.f32.mrf.mxu0
  %v3014 = vadd.f32 %v2965, %v3013
  %v3015 = vpop.f32.mrf.mxu0
  %v3016 = vadd.f32 %v2967, %v3015
  %3017 = vmatmul.bf16.gmra.mxu0 %v2345
  %v3018 = vpop.f32.mrf.mxu0
  %v3019 = vadd.f32 %v2970, %v3018
  %v3020 = vpop.f32.mrf.mxu0
  %v3021 = vadd.f32 %v2972, %v3020
  %3022 = vmatmul.bf16.gmra.mxu0 %v2354
  %v3023 = vpop.f32.mrf.mxu0
  %v3024 = vadd.f32 %v2975, %v3023
  %v3025 = vpop.f32.mrf.mxu0
  %v3026 = vadd.f32 %v2977, %v3025
  %3027 = vmatmul.bf16.gmra.mxu0 %v2363
  %v3028 = vpop.f32.mrf.mxu0
  %v3029 = vadd.f32 %v2980, %v3028
  %v3030 = vpop.f32.mrf.mxu0
  %v3031 = vadd.f32 %v2982, %v3030
  %3032 = vmatmul.bf16.gmra.mxu0 %v2372
  %v3033 = vpop.f32.mrf.mxu0
  %v3034 = vadd.f32 %v2985, %v3033
  %v3035 = vpop.f32.mrf.mxu0
  %v3036 = vadd.f32 %v2987, %v3035
  %3037 = vmatmul.bf16.gmra.mxu0 %v2381
  %v3038 = vpop.f32.mrf.mxu0
  %v3039 = vadd.f32 %v2990, %v3038
  %v3040 = vpop.f32.mrf.mxu0
  %v3041 = vadd.f32 %v2992, %v3040
  %3042 = vmatmul.bf16.gmra.mxu0 %v2390
  %v3043 = vpop.f32.mrf.mxu0
  %v3044 = vadd.f32 %v2995, %v3043
  %v3045 = vpop.f32.mrf.mxu0
  %v3046 = vadd.f32 %v2997, %v3045
  %3047 = vdwg.mxu0
  %3048 = vmatpush.bf16.msra.mxu0 %v2788
  %3049 = vmatpush.bf16.msra.mxu0 %v2787
  %3050 = vmatpush.bf16.msra.mxu0 %v2786
  %3051 = vmatpush.bf16.msra.mxu0 %v2785
  %3052 = vmatpush.bf16.msra.mxu0 %v2784
  %3053 = vmatpush.bf16.msra.mxu0 %v2783
  %3054 = vmatpush.bf16.msra.mxu0 %v2782
  %3055 = vmatpush.bf16.msra.mxu0 %v2781
  %3056 = vmatmul.bf16.gmra.mxu0 %v2328
  %v3057 = vpop.f32.mrf.mxu0
  %v3058 = vadd.f32 %v3009, %v3057
  %v3059 = vpop.f32.mrf.mxu0
  %v3060 = vadd.f32 %v3011, %v3059
  %3061 = vmatmul.bf16.gmra.mxu0 %v2337
  %v3062 = vpop.f32.mrf.mxu0
  %v3063 = vadd.f32 %v3014, %v3062
  %v3064 = vpop.f32.mrf.mxu0
  %v3065 = vadd.f32 %v3016, %v3064
  %3066 = vmatmul.bf16.gmra.mxu0 %v2346
  %v3067 = vpop.f32.mrf.mxu0
  %v3068 = vadd.f32 %v3019, %v3067
  %v3069 = vpop.f32.mrf.mxu0
  %v3070 = vadd.f32 %v3021, %v3069
  %3071 = vmatmul.bf16.gmra.mxu0 %v2355
  %v3072 = vpop.f32.mrf.mxu0
  %v3073 = vadd.f32 %v3024, %v3072
  %v3074 = vpop.f32.mrf.mxu0
  %v3075 = vadd.f32 %v3026, %v3074
  %3076 = vmatmul.bf16.gmra.mxu0 %v2364
  %v3077 = vpop.f32.mrf.mxu0
  %v3078 = vadd.f32 %v3029, %v3077
  %v3079 = vpop.f32.mrf.mxu0
  %v3080 = vadd.f32 %v3031, %v3079
  %3081 = vmatmul.bf16.gmra.mxu0 %v2373
  %v3082 = vpop.f32.mrf.mxu0
  %v3083 = vadd.f32 %v3034, %v3082
  %v3084 = vpop.f32.mrf.mxu0
  %v3085 = vadd.f32 %v3036, %v3084
  %3086 = vmatmul.bf16.gmra.mxu0 %v2382
  %v3087 = vpop.f32.mrf.mxu0
  %v3088 = vadd.f32 %v3039, %v3087
  %v3089 = vpop.f32.mrf.mxu0
  %v3090 = vadd.f32 %v3041, %v3089
  %3091 = vmatmul.bf16.gmra.mxu0 %v2391
  %v3092 = vpop.f32.mrf.mxu0
  %v3093 = vadd.f32 %v3044, %v3092
  %v3094 = vpop.f32.mrf.mxu0
  %v3095 = vadd.f32 %v3046, %v3094
  %3096 = vdwg.mxu0
  %3097 = vmatpush.bf16.msra.mxu0 %v2796
  %3098 = vmatpush.bf16.msra.mxu0 %v2795
  %3099 = vmatpush.bf16.msra.mxu0 %v2794
  %3100 = vmatpush.bf16.msra.mxu0 %v2793
  %3101 = vmatpush.bf16.msra.mxu0 %v2792
  %3102 = vmatpush.bf16.msra.mxu0 %v2791
  %3103 = vmatpush.bf16.msra.mxu0 %v2790
  %3104 = vmatpush.bf16.msra.mxu0 %v2789
  %3105 = vmatmul.bf16.gmra.mxu0 %v2329
  %v3106 = vpop.f32.mrf.mxu0
  %v3107 = vadd.f32 %v3058, %v3106
  %v3108 = vpop.f32.mrf.mxu0
  %v3109 = vadd.f32 %v3060, %v3108
  %3110 = vmatmul.bf16.gmra.mxu0 %v2338
  %v3111 = vpop.f32.mrf.mxu0
  %v3112 = vadd.f32 %v3063, %v3111
  %v3113 = vpop.f32.mrf.mxu0
  %v3114 = vadd.f32 %v3065, %v3113
  %3115 = vmatmul.bf16.gmra.mxu0 %v2347
  %v3116 = vpop.f32.mrf.mxu0
  %v3117 = vadd.f32 %v3068, %v3116
  %v3118 = vpop.f32.mrf.mxu0
  %v3119 = vadd.f32 %v3070, %v3118
  %3120 = vmatmul.bf16.gmra.mxu0 %v2356
  %v3121 = vpop.f32.mrf.mxu0
  %v3122 = vadd.f32 %v3073, %v3121
  %v3123 = vpop.f32.mrf.mxu0
  %v3124 = vadd.f32 %v3075, %v3123
  %3125 = vmatmul.bf16.gmra.mxu0 %v2365
  %v3126 = vpop.f32.mrf.mxu0
  %v3127 = vadd.f32 %v3078, %v3126
  %v3128 = vpop.f32.mrf.mxu0
  %v3129 = vadd.f32 %v3080, %v3128
  %3130 = vmatmul.bf16.gmra.mxu0 %v2374
  %v3131 = vpop.f32.mrf.mxu0
  %v3132 = vadd.f32 %v3083, %v3131
  %v3133 = vpop.f32.mrf.mxu0
  %v3134 = vadd.f32 %v3085, %v3133
  %3135 = vmatmul.bf16.gmra.mxu0 %v2383
  %v3136 = vpop.f32.mrf.mxu0
  %v3137 = vadd.f32 %v3088, %v3136
  %v3138 = vpop.f32.mrf.mxu0
  %v3139 = vadd.f32 %v3090, %v3138
  %3140 = vmatmul.bf16.gmra.mxu0 %v2392
  %v3141 = vpop.f32.mrf.mxu0
  %v3142 = vadd.f32 %v3093, %v3141
  %v3143 = vpop.f32.mrf.mxu0
  %v3144 = vadd.f32 %v3095, %v3143
  %3145 = vdwg.mxu0
  %3146 = vmatpush.bf16.msra.mxu0 %v2804
  %3147 = vmatpush.bf16.msra.mxu0 %v2803
  %3148 = vmatpush.bf16.msra.mxu0 %v2802
  %3149 = vmatpush.bf16.msra.mxu0 %v2801
  %3150 = vmatpush.bf16.msra.mxu0 %v2800
  %3151 = vmatpush.bf16.msra.mxu0 %v2799
  %3152 = vmatpush.bf16.msra.mxu0 %v2798
  %3153 = vmatpush.bf16.msra.mxu0 %v2797
  %3154 = vmatmul.bf16.gmra.mxu0 %v2330
  %v3155 = vpop.f32.mrf.mxu0
  %v3156 = vadd.f32 %v3107, %v3155
  %v3157 = vpop.f32.mrf.mxu0
  %v3158 = vadd.f32 %v3109, %v3157
  %3159 = vmatmul.bf16.gmra.mxu0 %v2339
  %v3160 = vpop.f32.mrf.mxu0
  %v3161 = vadd.f32 %v3112, %v3160
  %v3162 = vpop.f32.mrf.mxu0
  %v3163 = vadd.f32 %v3114, %v3162
  %3164 = vmatmul.bf16.gmra.mxu0 %v2348
  %v3165 = vpop.f32.mrf.mxu0
  %v3166 = vadd.f32 %v3117, %v3165
  %v3167 = vpop.f32.mrf.mxu0
  %v3168 = vadd.f32 %v3119, %v3167
  %3169 = vmatmul.bf16.gmra.mxu0 %v2357
  %v3170 = vpop.f32.mrf.mxu0
  %v3171 = vadd.f32 %v3122, %v3170
  %v3172 = vpop.f32.mrf.mxu0
  %v3173 = vadd.f32 %v3124, %v3172
  %3174 = vmatmul.bf16.gmra.mxu0 %v2366
  %v3175 = vpop.f32.mrf.mxu0
  %v3176 = vadd.f32 %v3127, %v3175
  %v3177 = vpop.f32.mrf.mxu0
  %v3178 = vadd.f32 %v3129, %v3177
  %3179 = vmatmul.bf16.gmra.mxu0 %v2375
  %v3180 = vpop.f32.mrf.mxu0
  %v3181 = vadd.f32 %v3132, %v3180
  %v3182 = vpop.f32.mrf.mxu0
  %v3183 = vadd.f32 %v3134, %v3182
  %3184 = vmatmul.bf16.gmra.mxu0 %v2384
  %v3185 = vpop.f32.mrf.mxu0
  %v3186 = vadd.f32 %v3137, %v3185
  %v3187 = vpop.f32.mrf.mxu0
  %v3188 = vadd.f32 %v3139, %v3187
  %3189 = vmatmul.bf16.gmra.mxu0 %v2393
  %v3190 = vpop.f32.mrf.mxu0
  %v3191 = vadd.f32 %v3142, %v3190
  %v3192 = vpop.f32.mrf.mxu0
  %v3193 = vadd.f32 %v3144, %v3192
  %3194 = vdwg.mxu0
  %3195 = vmatpush.bf16.msra.mxu0 %v2812
  %3196 = vmatpush.bf16.msra.mxu0 %v2811
  %3197 = vmatpush.bf16.msra.mxu0 %v2810
  %3198 = vmatpush.bf16.msra.mxu0 %v2809
  %3199 = vmatpush.bf16.msra.mxu0 %v2808
  %3200 = vmatpush.bf16.msra.mxu0 %v2807
  %3201 = vmatpush.bf16.msra.mxu0 %v2806
  %3202 = vmatpush.bf16.msra.mxu0 %v2805
  %3203 = vmatmul.bf16.gmra.mxu0 %v2331
  %v3204 = vpop.f32.mrf.mxu0
  %v3205 = vadd.f32 %v3156, %v3204
  %v3206 = vpop.f32.mrf.mxu0
  %v3207 = vadd.f32 %v3158, %v3206
  %3208 = vmatmul.bf16.gmra.mxu0 %v2340
  %v3209 = vpop.f32.mrf.mxu0
  %v3210 = vadd.f32 %v3161, %v3209
  %v3211 = vpop.f32.mrf.mxu0
  %v3212 = vadd.f32 %v3163, %v3211
  %3213 = vmatmul.bf16.gmra.mxu0 %v2349
  %v3214 = vpop.f32.mrf.mxu0
  %v3215 = vadd.f32 %v3166, %v3214
  %v3216 = vpop.f32.mrf.mxu0
  %v3217 = vadd.f32 %v3168, %v3216
  %3218 = vmatmul.bf16.gmra.mxu0 %v2358
  %v3219 = vpop.f32.mrf.mxu0
  %v3220 = vadd.f32 %v3171, %v3219
  %v3221 = vpop.f32.mrf.mxu0
  %v3222 = vadd.f32 %v3173, %v3221
  %3223 = vmatmul.bf16.gmra.mxu0 %v2367
  %v3224 = vpop.f32.mrf.mxu0
  %v3225 = vadd.f32 %v3176, %v3224
  %v3226 = vpop.f32.mrf.mxu0
  %v3227 = vadd.f32 %v3178, %v3226
  %3228 = vmatmul.bf16.gmra.mxu0 %v2376
  %v3229 = vpop.f32.mrf.mxu0
  %v3230 = vadd.f32 %v3181, %v3229
  %v3231 = vpop.f32.mrf.mxu0
  %v3232 = vadd.f32 %v3183, %v3231
  %3233 = vmatmul.bf16.gmra.mxu0 %v2385
  %v3234 = vpop.f32.mrf.mxu0
  %v3235 = vadd.f32 %v3186, %v3234
  %v3236 = vpop.f32.mrf.mxu0
  %v3237 = vadd.f32 %v3188, %v3236
  %3238 = vmatmul.bf16.gmra.mxu0 %v2394
  %v3239 = vpop.f32.mrf.mxu0
  %v3240 = vadd.f32 %v3191, %v3239
  %v3241 = vpop.f32.mrf.mxu0
  %v3242 = vadd.f32 %v3193, %v3241
  %3243 = vdwg.mxu0
  %3244 = vmatpush.bf16.msra.mxu0 %v2820
  %3245 = vmatpush.bf16.msra.mxu0 %v2819
  %3246 = vmatpush.bf16.msra.mxu0 %v2818
  %3247 = vmatpush.bf16.msra.mxu0 %v2817
  %3248 = vmatpush.bf16.msra.mxu0 %v2816
  %3249 = vmatpush.bf16.msra.mxu0 %v2815
  %3250 = vmatpush.bf16.msra.mxu0 %v2814
  %3251 = vmatpush.bf16.msra.mxu0 %v2813
  %3252 = vmatmul.bf16.gmra.mxu0 %v2332
  %v3253 = vpop.f32.mrf.mxu0
  %v3254 = vadd.f32 %v3205, %v3253
  %v3255 = vpop.f32.mrf.mxu0
  %v3256 = vadd.f32 %v3207, %v3255
  %3257 = vmatmul.bf16.gmra.mxu0 %v2341
  %v3258 = vpop.f32.mrf.mxu0
  %v3259 = vadd.f32 %v3210, %v3258
  %v3260 = vpop.f32.mrf.mxu0
  %v3261 = vadd.f32 %v3212, %v3260
  %3262 = vmatmul.bf16.gmra.mxu0 %v2350
  %v3263 = vpop.f32.mrf.mxu0
  %v3264 = vadd.f32 %v3215, %v3263
  %v3265 = vpop.f32.mrf.mxu0
  %v3266 = vadd.f32 %v3217, %v3265
  %3267 = vmatmul.bf16.gmra.mxu0 %v2359
  %v3268 = vpop.f32.mrf.mxu0
  %v3269 = vadd.f32 %v3220, %v3268
  %v3270 = vpop.f32.mrf.mxu0
  %v3271 = vadd.f32 %v3222, %v3270
  %3272 = vmatmul.bf16.gmra.mxu0 %v2368
  %v3273 = vpop.f32.mrf.mxu0
  %v3274 = vadd.f32 %v3225, %v3273
  %v3275 = vpop.f32.mrf.mxu0
  %v3276 = vadd.f32 %v3227, %v3275
  %3277 = vmatmul.bf16.gmra.mxu0 %v2377
  %v3278 = vpop.f32.mrf.mxu0
  %v3279 = vadd.f32 %v3230, %v3278
  %v3280 = vpop.f32.mrf.mxu0
  %v3281 = vadd.f32 %v3232, %v3280
  %3282 = vmatmul.bf16.gmra.mxu0 %v2386
  %v3283 = vpop.f32.mrf.mxu0
  %v3284 = vadd.f32 %v3235, %v3283
  %v3285 = vpop.f32.mrf.mxu0
  %v3286 = vadd.f32 %v3237, %v3285
  %3287 = vmatmul.bf16.gmra.mxu0 %v2395
  %v3288 = vpop.f32.mrf.mxu0
  %v3289 = vadd.f32 %v3240, %v3288
  %v3290 = vpop.f32.mrf.mxu0
  %v3291 = vadd.f32 %v3242, %v3290
  %3292 = vdwg.mxu0
  %3293 = vmatpush.bf16.msra.mxu0 %v2828
  %3294 = vmatpush.bf16.msra.mxu0 %v2827
  %3295 = vmatpush.bf16.msra.mxu0 %v2826
  %3296 = vmatpush.bf16.msra.mxu0 %v2825
  %3297 = vmatpush.bf16.msra.mxu0 %v2824
  %3298 = vmatpush.bf16.msra.mxu0 %v2823
  %3299 = vmatpush.bf16.msra.mxu0 %v2822
  %3300 = vmatpush.bf16.msra.mxu0 %v2821
  %3301 = vmatmul.bf16.gmra.mxu0 %v2333
  %v3302 = vpop.f32.mrf.mxu0
  %v3303 = vadd.f32 %v3254, %v3302
  %v3304 = vpop.f32.mrf.mxu0
  %v3305 = vadd.f32 %v3256, %v3304
  %3306 = vmatmul.bf16.gmra.mxu0 %v2342
  %v3307 = vpop.f32.mrf.mxu0
  %v3308 = vadd.f32 %v3259, %v3307
  %v3309 = vpop.f32.mrf.mxu0
  %v3310 = vadd.f32 %v3261, %v3309
  %3311 = vmatmul.bf16.gmra.mxu0 %v2351
  %v3312 = vpop.f32.mrf.mxu0
  %v3313 = vadd.f32 %v3264, %v3312
  %v3314 = vpop.f32.mrf.mxu0
  %v3315 = vadd.f32 %v3266, %v3314
  %3316 = vmatmul.bf16.gmra.mxu0 %v2360
  %v3317 = vpop.f32.mrf.mxu0
  %v3318 = vadd.f32 %v3269, %v3317
  %v3319 = vpop.f32.mrf.mxu0
  %v3320 = vadd.f32 %v3271, %v3319
  %3321 = vmatmul.bf16.gmra.mxu0 %v2369
  %v3322 = vpop.f32.mrf.mxu0
  %v3323 = vadd.f32 %v3274, %v3322
  %v3324 = vpop.f32.mrf.mxu0
  %v3325 = vadd.f32 %v3276, %v3324
  %3326 = vmatmul.bf16.gmra.mxu0 %v2378
  %v3327 = vpop.f32.mrf.mxu0
  %v3328 = vadd.f32 %v3279, %v3327
  %v3329 = vpop.f32.mrf.mxu0
  %v3330 = vadd.f32 %v3281, %v3329
  %3331 = vmatmul.bf16.gmra.mxu0 %v2387
  %v3332 = vpop.f32.mrf.mxu0
  %v3333 = vadd.f32 %v3284, %v3332
  %v3334 = vpop.f32.mrf.mxu0
  %v3335 = vadd.f32 %v3286, %v3334
  %3336 = vmatmul.bf16.gmra.mxu0 %v2396
  %v3337 = vpop.f32.mrf.mxu0
  %v3338 = vadd.f32 %v3289, %v3337
  %v3339 = vpop.f32.mrf.mxu0
  %v3340 = vadd.f32 %v3291, %v3339
  %3341 = vdwg.mxu0
  %v3342 = vadd.f32 %v3303, %v3305
  %v3343 = vadd.f32 %v3342, %v3308
  %v3344 = vadd.f32 %v3343, %v3310
  %v3345 = vadd.f32 %v3344, %v3313
  %v3346 = vadd.f32 %v3345, %v3315
  %v3347 = vadd.f32 %v3346, %v3318
  %v3348 = vadd.f32 %v3347, %v3320
  %v3349 = vadd.f32 %v3348, %v3323
  %v3350 = vadd.f32 %v3349, %v3325
  %v3351 = vadd.f32 %v3350, %v3328
  %v3352 = vadd.f32 %v3351, %v3330
  %v3353 = vadd.f32 %v3352, %v3333
  %v3354 = vadd.f32 %v3353, %v3335
  %v3355 = vadd.f32 %v3354, %v3338
  %v3356 = vadd.f32 %v3355, %v3340
  %v3357 = vrot.slane %v3356, 4
  %v3358 = vadd.f32 %v3356, %v3357
  %v3359 = vrot.slane %v3358, 2
  %v3360 = vadd.f32 %v3358, %v3359
  %v3361 = vrot.slane %v3360, 1
  %v3362 = vadd.f32 %v3360, %v3361
  %v3363 = vmul.f32 %v3303, %v3303
  %v3364 = vmul.f32 %v3305, %v3305
  %v3365 = vmul.f32 %v3308, %v3308
  %v3366 = vmul.f32 %v3310, %v3310
  %v3367 = vmul.f32 %v3313, %v3313
  %v3368 = vmul.f32 %v3315, %v3315
  %v3369 = vmul.f32 %v3318, %v3318
  %v3370 = vmul.f32 %v3320, %v3320
  %v3371 = vmul.f32 %v3323, %v3323
  %v3372 = vmul.f32 %v3325, %v3325
  %v3373 = vmul.f32 %v3328, %v3328
  %v3374 = vmul.f32 %v3330, %v3330
  %v3375 = vmul.f32 %v3333, %v3333
  %v3376 = vmul.f32 %v3335, %v3335
  %v3377 = vmul.f32 %v3338, %v3338
  %v3378 = vmul.f32 %v3340, %v3340
  %v3379 = vadd.f32 %v3363, %v3364
  %v3380 = vadd.f32 %v3379, %v3365
  %v3381 = vadd.f32 %v3380, %v3366
  %v3382 = vadd.f32 %v3381, %v3367
  %v3383 = vadd.f32 %v3382, %v3368
  %v3384 = vadd.f32 %v3383, %v3369
  %v3385 = vadd.f32 %v3384, %v3370
  %v3386 = vadd.f32 %v3385, %v3371
  %v3387 = vadd.f32 %v3386, %v3372
  %v3388 = vadd.f32 %v3387, %v3373
  %v3389 = vadd.f32 %v3388, %v3374
  %v3390 = vadd.f32 %v3389, %v3375
  %v3391 = vadd.f32 %v3390, %v3376
  %v3392 = vadd.f32 %v3391, %v3377
  %v3393 = vadd.f32 %v3392, %v3378
  %v3394 = vrot.slane %v3393, 4
  %v3395 = vadd.f32 %v3393, %v3394
  %v3396 = vrot.slane %v3395, 2
  %v3397 = vadd.f32 %v3395, %v3396
  %v3398 = vrot.slane %v3397, 1
  %v3399 = vadd.f32 %v3397, %v3398
  %vm3400 = vcmask 1040384
  %v3401 = vsel %vm3400, %v3362, %v3399
  %3402 = vst [vmem:[%s5] sm:$0x3] %v3401
  %v3403 = vpack.c.bf16 %v3303, %v3303
  %v3404 = vpack.c.bf16 %v3305, %v3305
  %v3405 = vpack.c.bf16 %v3308, %v3308
  %v3406 = vpack.c.bf16 %v3310, %v3310
  %v3407 = vpack.c.bf16 %v3313, %v3313
  %v3408 = vpack.c.bf16 %v3315, %v3315
  %v3409 = vpack.c.bf16 %v3318, %v3318
  %v3410 = vpack.c.bf16 %v3320, %v3320
  %v3411 = vpack.c.bf16 %v3323, %v3323
  %v3412 = vpack.c.bf16 %v3325, %v3325
  %v3413 = vpack.c.bf16 %v3328, %v3328
  %v3414 = vpack.c.bf16 %v3330, %v3330
  %v3415 = vpack.c.bf16 %v3333, %v3333
  %v3416 = vpack.c.bf16 %v3335, %v3335
  %v3417 = vpack.c.bf16 %v3338, %v3338
  %v3418 = vpack.c.bf16 %v3340, %v3340
  %3419 = vst [vmem:[%s4] sm:$0xf] %v3403
  %3420 = vst [vmem:[%s4 + $0x4] sm:$0xf] %v3404
  %3421 = vst [vmem:[%s4 + $0x8] sm:$0xf] %v3405
  %3422 = vst [vmem:[%s4 + $0xc] sm:$0xf] %v3406
  %3423 = vst [vmem:[%s4 + $0x10] sm:$0xf] %v3407
  %3424 = vst [vmem:[%s4 + $0x14] sm:$0xf] %v3408
  %3425 = vst [vmem:[%s4 + $0x18] sm:$0xf] %v3409
  %3426 = vst [vmem:[%s4 + $0x1c] sm:$0xf] %v3410
  %3427 = vst [vmem:[%s4 + $0x20] sm:$0xf] %v3411
  %3428 = vst [vmem:[%s4 + $0x24] sm:$0xf] %v3412
  %3429 = vst [vmem:[%s4 + $0x28] sm:$0xf] %v3413
  %3430 = vst [vmem:[%s4 + $0x2c] sm:$0xf] %v3414
  %3431 = vst [vmem:[%s4 + $0x30] sm:$0xf] %v3415
  %3432 = vst [vmem:[%s4 + $0x34] sm:$0xf] %v3416
  %3433 = vst [vmem:[%s4 + $0x38] sm:$0xf] %v3417
  %3434 = vst [vmem:[%s4 + $0x3c] sm:$0xf] %v3418
  // Predicated region
  $region18: #{basic_block_forward.4} parent=0 // pred_check
    _
  $region19: #{basic_block_forward.4} parent=0 // pred_check_branch
    %3436 = sbr.rel (0) target = $region21
  $region20: #{basic_block_forward.4} parent=0 // pred_region
    _
  $region21: #{basic_block_forward.4} parent=0 // pred_fallthru
    _
  // Predicated region
  $region22: #{basic_block_forward.4} parent=0 // pred_check
    _
  $region23: #{basic_block_forward.4} parent=0 // pred_check_branch
    %3438 = sbr.rel (0) target = $region25
  $region24: #{basic_block_forward.4} parent=0 // pred_region
    _
  $region25: #{basic_block_forward.4} parent=0 // pred_fallthru
    _
  // Predicated region
  $region26: #{basic_block_forward.4} parent=0 // pred_check
    _
  $region27: #{basic_block_forward.4} parent=0 // pred_check_branch
    %3440 = sbr.rel (0) target = $region29
  $region28: #{basic_block_forward.4} parent=0 // pred_region
    _
  $region29: #{basic_block_forward.4} parent=0 // pred_fallthru
    _
  // Predicated region
  $region30: #{basic_block_forward.4} parent=0 // pred_check
    _
  $region31: #{basic_block_forward.4} parent=0 // pred_check_branch
    %3442 = sbr.rel (0) target = $region33
  $region32: #{basic_block_forward.4} parent=0 // pred_region
    _
  $region33: #{basic_block_forward.4} parent=0 // pred_fallthru
    _

</llo_original>
